<compile_context>
chip_gen: v5e
topology: v5e:2x2
jax: 0.10.0
libtpu: 0.0.40
codegen_flags: <defaults>
</compile_context>

<pallas_src>
import jax
import jax.numpy as jnp
from jax.experimental import pallas as pl
from jax.experimental.pallas import tpu as pltpu

NEG_LOGIT = -1e30  # bias for padded class lanes -> exp() underflows to 0 in softmax


def _round_up(n, m):
    return ((n + m - 1) // m) * m


def _make_kernel(H, C_PAD):
    """Kernel closure over the static hidden width and padded class width."""

    def kernel(x_ref, w1_ref, w2_ref, b_ref, probs_ref, logits_ref):
        # x arrives in its HBM dtype (f32 or bf16).  Cast to bf16 here so FC1
        # takes the single-pass bf16 MXU path; the cast is a VPU op hidden
        # under the DMA stream (a wrapper-side cast would add HBM traffic).
        x = x_ref[...].astype(jnp.bfloat16)                               # [TB, K]

        # ---- FC1 on the MXU: bf16 operands, f32 accumulation ----
        h = jnp.dot(x, w1_ref[...], preferred_element_type=jnp.float32)  # [TB, H]
        h = h + b_ref[0:1, :H]                                            # bias row 0

        # ---- Sigmoid (EUP exp + VPU), f32 ----
        h = 1.0 / (1.0 + jnp.exp(-h))

        # ---- FC2 in f32, lane-dense padded output width C_PAD ----
        logits = jnp.dot(h, w2_ref[...], preferred_element_type=jnp.float32)  # [TB, C_PAD]
        logits = logits + b_ref[1:2, :C_PAD]                              # padded lanes -> -1e30

        # ---- Row softmax.  Padded lanes hold -1e30, so the row max is always
        # a real, finite class logit; exp(pad - max) underflows to exactly 0,
        # contributing nothing to the sum (and never producing NaN). ----
        m = jnp.max(logits, axis=-1, keepdims=True)
        e = jnp.exp(logits - m)
        denom = jnp.sum(e, axis=-1, keepdims=True)
        # approx reciprocal runs on the EUP slot (effectively free vs a VPU
        # divide); its ~1e-3 relative error is inside the self-check tolerance.
        probs_ref[...] = e * pl.reciprocal(denom, approx=True)
        logits_ref[...] = logits

    return kernel


def prepare_params(w1, b1, w2, b2):
    """One-time parameter prep (call once, NOT per forward):
      * W1 pre-transposed and stored bf16 (halves the dominant weight stream);
      * W2 pre-transposed, class dim zero-padded to a full 128-lane group, f32;
      * both biases packed into a single (8, 128)-aligned f32 block -> one DMA.
    """
    H, K = w1.shape                     # [hidden, fc_input_dim]
    C, H2 = w2.shape                    # [num_classes, hidden]
    assert H == H2
    assert H % 128 == 0, "hidden_dim must be a multiple of 128 for this kernel"

    C_PAD = _round_up(C, 128)
    PACK_W = max(H, C_PAD)

    w1_t = jnp.asarray(w1, jnp.float32).T.astype(jnp.bfloat16)    # [K, H] bf16
    w2_t = jnp.zeros((H, C_PAD), jnp.float32)
    w2_t = w2_t.at[:, :C].set(jnp.asarray(w2, jnp.float32).T)     # [H, C_PAD] f32

    b_packed = jnp.zeros((8, PACK_W), jnp.float32)
    b_packed = b_packed.at[0, :H].set(jnp.asarray(b1, jnp.float32))
    b_packed = b_packed.at[1, :].set(NEG_LOGIT)
    b_packed = b_packed.at[1, :C].set(jnp.asarray(b2, jnp.float32))

    return dict(w1_t=w1_t, w2_t=w2_t, b_packed=b_packed,
                num_classes=C, hidden=H, c_pad=C_PAD, fc_in=K)


def _pick_tiling(B, block_b):
    """Pick (TB, padded_B).  Preference order:
      1. a single tile covering the (8-rounded) batch -> at most 7 pad rows;
      2. for big single-tile batches, split in two so v7x's second TensorCore
         gets work (only once per-core x traffic amortizes re-loading W1);
      3. a tile size that divides the batch -> no full padded copy of x in HBM
         (this kernel is input-traffic bound);
      4. fall back to padding the batch up to a tile multiple.
    """
    Bp = _round_up(B, 8)                      # sublane granularity
    if Bp <= block_b:
        if Bp >= 256 and (Bp // 2) % 8 == 0:  # two parallel tiles, pad-free
            return Bp // 2, Bp
        return Bp, Bp
    tb = _round_up(min(block_b, Bp), 8)
    if Bp % tb == 0:
        return tb, Bp
    for cand in range(tb - 8, max(8, tb // 2) - 1, -8):
        if Bp % cand == 0:
            return cand, Bp
    return tb, _round_up(Bp, tb)


def _build_specs(TB, K, H, C_PAD, b_shape, single_buffer_weights):
    def resident(shape):
        if single_buffer_weights:
            try:
                # Grid-invariant operands are fetched once; one buffer suffices.
                return pl.BlockSpec(shape, lambda i: (0, 0),
                                    pipeline_mode=pl.Buffered(1))
            except (AttributeError, TypeError):
                pass
        return pl.BlockSpec(shape, lambda i: (0, 0))

    in_specs = [
        pl.BlockSpec((TB, K), lambda i: (i, 0)),   # x batch tile (streamed)
        resident((K, H)),                          # W1^T bf16 (resident)
        resident((H, C_PAD)),                      # W2^T f32 padded (resident)
        resident(b_shape),                         # packed biases
    ]
    out_specs = (
        pl.BlockSpec((TB, C_PAD), lambda i: (i, 0)),   # probs (lane-dense)
        pl.BlockSpec((TB, C_PAD), lambda i: (i, 0)),   # logits (lane-dense)
    )
    return in_specs, out_specs


def class_classifier_forward(x, params, *, block_b=512):
    """x: [B, input_dim, seq_length] (or already-flat [B, fc_in]), f32 or bf16.
    Returns (softmax(logits), logits), each [B, num_classes] in f32."""
    w1_t, w2_t, b_packed = params["w1_t"], params["w2_t"], params["b_packed"]
    H, C_PAD, C, K = params["hidden"], params["c_pad"], params["num_classes"], params["fc_in"]

    B = x.shape[0]
    xf = jnp.reshape(x, (B, -1))                   # x.view(B, -1); contiguous, free
    assert xf.shape[1] == K

    TB, Bp = _pick_tiling(B, block_b)
    if Bp != B:
        # A padded copy of x is unavoidable here; fuse the bf16 down-cast into
        # that same copy so it (and the kernel's read of it) moves half the bytes.
        xf = jnp.pad(xf.astype(jnp.bfloat16), ((0, Bp - B), (0, 0)))

    out_shape = (jax.ShapeDtypeStruct((Bp, C_PAD), jnp.float32),
                 jax.ShapeDtypeStruct((Bp, C_PAD), jnp.float32))
    compiler_params = pltpu.CompilerParams(
        dimension_semantics=("parallel",),         # batch tiles are independent
        # Working set at TB=512: two streamed x tiles + resident weights +
        # double-buffered outputs ~= 20-32 MiB; 48 MiB leaves headroom and
        # stays under v7x's 64 MiB physical VMEM (v5e/v6e scoped defaults of
        # 16/32 MiB would otherwise be the limiter).
        vmem_limit_bytes=48 * 1024 * 1024,
    )

    def _run(single_buffer_weights):
        in_specs, out_specs = _build_specs(TB, K, H, C_PAD, b_packed.shape,
                                           single_buffer_weights)
        return pl.pallas_call(
            _make_kernel(H, C_PAD),
            out_shape=out_shape,
            grid=(Bp // TB,),
            in_specs=in_specs,
            out_specs=out_specs,
            compiler_params=compiler_params,
        )(xf, w1_t, w2_t, b_packed)

    try:
        probs_p, logits_p = _run(True)
    except Exception:   # jax without pipeline_mode / Buffered(1): double-buffer fallback
        probs_p, logits_p = _run(False)

    return probs_p[:B, :C], logits_p[:B, :C]


def _reference(x, w1, b1, w2, b2):
    xf = x.reshape(x.shape[0], -1).astype(jnp.float32)
    h = jax.nn.sigmoid(xf @ w1.T + b1)
    logits = h @ w2.T + b2
    return jax.nn.softmax(logits, axis=1), logits


if __name__ == "__main__":
    key = jax.random.PRNGKey(0)
    kx, k1, k2 = jax.random.split(key, 3)

    B, INPUT_DIM, SEQ_LEN, HIDDEN, NUM_CLASSES = 2, 22, 360, 128, 2
    FC_IN = INPUT_DIM * SEQ_LEN  # 7920

    x = jax.random.normal(kx, (B, INPUT_DIM, SEQ_LEN), jnp.float32)

    # kaiming_normal_ (fan_in, gain sqrt(2)) weights, zero biases — as in the module.
    w1 = jax.random.normal(k1, (HIDDEN, FC_IN), jnp.float32) * (2.0 / FC_IN) ** 0.5
    b1 = jnp.zeros((HIDDEN,), jnp.float32)
    w2 = jax.random.normal(k2, (NUM_CLASSES, HIDDEN), jnp.float32) * (2.0 / HIDDEN) ** 0.5
    b2 = jnp.zeros((NUM_CLASSES,), jnp.float32)

    params = prepare_params(w1, b1, w2, b2)          # one-time prep (no per-call transpose/cast)
    probs, logits = class_classifier_forward(x, params)
    probs, logits = jax.block_until_ready((probs, logits))

    ref_probs, ref_logits = _reference(x, w1, b1, w2, b2)
    assert probs.shape == (B, NUM_CLASSES) and logits.shape == (B, NUM_CLASSES)
    # Tolerance covers the deliberate bf16 FC1 stream (W1 bf16 + in-kernel x
    # cast, ~0.1-0.3% relative on the 7920-deep contraction) and the EUP
    # approx reciprocal in the softmax (~1e-3 relative).
    assert jnp.allclose(logits, ref_logits, atol=5e-3, rtol=5e-3), "logits mismatch"
    assert jnp.allclose(probs, ref_probs, atol=5e-3, rtol=5e-3), "softmax mismatch"
    assert jnp.allclose(jnp.sum(probs, axis=1), 1.0, atol=3e-3), "probs do not sum to 1"

    print("KERNEL_OK")
</pallas_src>

<mosaic_0001>
module attributes {stable_mosaic.version = 11 : i64} {
  func.func @kernel(%arg0: i32, %arg1: memref<8x7920xbf16, #tpu.memory_space<vmem>>, %arg2: memref<7920x128xbf16, #tpu.memory_space<vmem>>, %arg3: memref<128x128xf32, #tpu.memory_space<vmem>>, %arg4: memref<8x128xf32, #tpu.memory_space<vmem>>, %arg5: memref<8x128xf32, #tpu.memory_space<vmem>>, %arg6: memref<8x128xf32, #tpu.memory_space<vmem>>) attributes {dimension_semantics = [#tpu.dimension_semantics<parallel>], iteration_bounds = array<i64: 1>, scalar_prefetch = 0 : i64, scratch_operands = 0 : i64, tpu.core_type = #tpu.core_type<tc>, window_params = [{transform_indices = @transform_0, window_bounds = array<i64: 8, 7920>}, {pipeline_mode = #tpu.pipeline_mode<synchronous>, transform_indices = @transform_1, window_bounds = array<i64: 7920, 128>}, {pipeline_mode = #tpu.pipeline_mode<synchronous>, transform_indices = @transform_2, window_bounds = array<i64: 128, 128>}, {pipeline_mode = #tpu.pipeline_mode<synchronous>, transform_indices = @transform_3, window_bounds = array<i64: 8, 128>}, {transform_indices = @transform_4, window_bounds = array<i64: 8, 128>}, {transform_indices = @transform_5, window_bounds = array<i64: 8, 128>}]} {
    %c0 = arith.constant 0 : index
    %c0_0 = arith.constant 0 : index
    %0 = vector.load %arg1[%c0, %c0_0] : memref<8x7920xbf16, #tpu.memory_space<vmem>>, vector<8x7920xbf16>
    %c0_1 = arith.constant 0 : index
    %c0_2 = arith.constant 0 : index
    %1 = vector.load %arg2[%c0_1, %c0_2] : memref<7920x128xbf16, #tpu.memory_space<vmem>>, vector<7920x128xbf16>
    %cst = arith.constant dense<0.000000e+00> : vector<8x128xf32>
    %2 = tpu.matmul %0, %1, %cst {dimension_numbers = #tpu.dot_dimension_numbers<[1], [0], [0], [1], [0, 0, 1, 1], [], []>} : vector<8x7920xbf16>, vector<7920x128xbf16>, vector<8x128xf32> -> vector<8x128xf32>
    %c0_3 = arith.constant 0 : index
    %c0_4 = arith.constant 0 : index
    %3 = vector.load %arg4[%c0_3, %c0_4] : memref<8x128xf32, #tpu.memory_space<vmem>>, vector<1x128xf32>
    %4 = vector.broadcast %3 : vector<1x128xf32> to vector<8x128xf32>
    %5 = arith.addf %2, %4 : vector<8x128xf32>
    %cst_5 = arith.constant 0.000000e+00 : f32
    %6 = vector.broadcast %cst_5 : f32 to vector<8x128xf32>
    %7 = arith.subf %6, %5 : vector<8x128xf32>
    %8 = math.exp %7 : vector<8x128xf32>
    %cst_6 = arith.constant 1.000000e+00 : f32
    %9 = vector.broadcast %cst_6 : f32 to vector<8x128xf32>
    %10 = arith.addf %9, %8 : vector<8x128xf32>
    %cst_7 = arith.constant 1.000000e+00 : f32
    %11 = vector.broadcast %cst_7 : f32 to vector<8x128xf32>
    %12 = arith.divf %11, %10 : vector<8x128xf32>
    %c0_8 = arith.constant 0 : index
    %c0_9 = arith.constant 0 : index
    %13 = vector.load %arg3[%c0_8, %c0_9] : memref<128x128xf32, #tpu.memory_space<vmem>>, vector<128x128xf32>
    %cst_10 = arith.constant dense<0.000000e+00> : vector<8x128xf32>
    %14 = tpu.matmul %12, %13, %cst_10 {dimension_numbers = #tpu.dot_dimension_numbers<[1], [0], [0], [1], [0, 0, 1, 1], [], []>} : vector<8x128xf32>, vector<128x128xf32>, vector<8x128xf32> -> vector<8x128xf32>
    %c1 = arith.constant 1 : index
    %c0_11 = arith.constant 0 : index
    %15 = vector.load %arg4[%c1, %c0_11] : memref<8x128xf32, #tpu.memory_space<vmem>>, vector<1x128xf32>
    %16 = vector.broadcast %15 : vector<1x128xf32> to vector<8x128xf32>
    %17 = arith.addf %14, %16 : vector<8x128xf32>
    %cst_12 = arith.constant dense<0xFF800000> : vector<8xf32>
    %18 = vector.multi_reduction <maximumf>, %17, %cst_12 [1] : vector<8x128xf32> to vector<8xf32>
    %19 = vector.shape_cast %18 : vector<8xf32> to vector<8x1xf32>
    %20 = vector.broadcast %19 : vector<8x1xf32> to vector<8x128xf32>
    %21 = arith.subf %17, %20 : vector<8x128xf32>
    %22 = math.exp %21 : vector<8x128xf32>
    %cst_13 = arith.constant dense<0.000000e+00> : vector<8xf32>
    %23 = vector.multi_reduction <add>, %22, %cst_13 [1] : vector<8x128xf32> to vector<8xf32>
    %24 = vector.shape_cast %23 : vector<8xf32> to vector<8x1xf32>
    %25 = tpu.reciprocal %24 {approx = true} : vector<8x1xf32> -> vector<8x1xf32>
    %26 = vector.broadcast %25 : vector<8x1xf32> to vector<8x128xf32>
    %27 = arith.mulf %22, %26 : vector<8x128xf32>
    %c0_14 = arith.constant 0 : index
    %c0_15 = arith.constant 0 : index
    %28 = vector.load %arg5[%c0_14, %c0_15] : memref<8x128xf32, #tpu.memory_space<vmem>>, vector<8x128xf32>
    tpu.vector_store %arg5[%c0_14, %c0_15], %27 {strides = array<i32>} : memref<8x128xf32, #tpu.memory_space<vmem>>, vector<8x128xf32>,
    %c0_16 = arith.constant 0 : index
    %c0_17 = arith.constant 0 : index
    %29 = vector.load %arg6[%c0_16, %c0_17] : memref<8x128xf32, #tpu.memory_space<vmem>>, vector<8x128xf32>
    tpu.vector_store %arg6[%c0_16, %c0_17], %17 {strides = array<i32>} : memref<8x128xf32, #tpu.memory_space<vmem>>, vector<8x128xf32>,
    return
  }
  func.func @transform_0(%arg0: i32) -> (i32, i32) {
    %c0_i32 = arith.constant 0 : i32
    %c0_i32_0 = arith.constant 0 : i32
    return %arg0, %c0_i32 : i32, i32
  }
  func.func @transform_1(%arg0: i32) -> (i32, i32) {
    %c0_i32 = arith.constant 0 : i32
    %c0_i32_0 = arith.constant 0 : i32
    %c0_i32_1 = arith.constant 0 : i32
    return %c0_i32, %c0_i32_0 : i32, i32
  }
  func.func @transform_2(%arg0: i32) -> (i32, i32) {
    %c0_i32 = arith.constant 0 : i32
    %c0_i32_0 = arith.constant 0 : i32
    %c0_i32_1 = arith.constant 0 : i32
    return %c0_i32, %c0_i32_0 : i32, i32
  }
  func.func @transform_3(%arg0: i32) -> (i32, i32) {
    %c0_i32 = arith.constant 0 : i32
    %c0_i32_0 = arith.constant 0 : i32
    %c0_i32_1 = arith.constant 0 : i32
    return %c0_i32, %c0_i32_0 : i32, i32
  }
  func.func @transform_4(%arg0: i32) -> (i32, i32) {
    %c0_i32 = arith.constant 0 : i32
    %c0_i32_0 = arith.constant 0 : i32
    return %arg0, %c0_i32 : i32, i32
  }
  func.func @transform_5(%arg0: i32) -> (i32, i32) {
    %c0_i32 = arith.constant 0 : i32
    %c0_i32_0 = arith.constant 0 : i32
    return %arg0, %c0_i32 : i32, i32
  }
}

module attributes {stable_mosaic.version = 11 : i64} {
  func.func @kernel(%arg0: i32, %arg1: memref<8x7920xbf16, #tpu.memory_space<vmem>>, %arg2: memref<7920x128xbf16, #tpu.memory_space<vmem>>, %arg3: memref<128x128xf32, #tpu.memory_space<vmem>>, %arg4: memref<8x128xf32, #tpu.memory_space<vmem>>, %arg5: memref<8x128xf32, #tpu.memory_space<vmem>>, %arg6: memref<8x128xf32, #tpu.memory_space<vmem>>) attributes {dimension_semantics = [#tpu.dimension_semantics<parallel>], iteration_bounds = array<i64: 1>, scalar_prefetch = 0 : i64, scratch_operands = 0 : i64, tpu.core_type = #tpu.core_type<tc>, window_params = [{transform_indices = @transform_0, window_bounds = array<i64: 8, 7920>}, {pipeline_mode = #tpu.pipeline_mode<synchronous>, transform_indices = @transform_1, window_bounds = array<i64: 7920, 128>}, {pipeline_mode = #tpu.pipeline_mode<synchronous>, transform_indices = @transform_2, window_bounds = array<i64: 128, 128>}, {pipeline_mode = #tpu.pipeline_mode<synchronous>, transform_indices = @transform_3, window_bounds = array<i64: 8, 128>}, {transform_indices = @transform_4, window_bounds = array<i64: 8, 128>}, {transform_indices = @transform_5, window_bounds = array<i64: 8, 128>}]} {
    %c0 = arith.constant 0 : index
    %c0_0 = arith.constant 0 : index
    %0 = vector.load %arg1[%c0, %c0_0] : memref<8x7920xbf16, #tpu.memory_space<vmem>>, vector<8x7920xbf16>
    %c0_1 = arith.constant 0 : index
    %c0_2 = arith.constant 0 : index
    %1 = vector.load %arg2[%c0_1, %c0_2] : memref<7920x128xbf16, #tpu.memory_space<vmem>>, vector<7920x128xbf16>
    %cst = arith.constant dense<0.000000e+00> : vector<8x128xf32>
    %2 = tpu.matmul %0, %1, %cst {dimension_numbers = #tpu.dot_dimension_numbers<[1], [0], [0], [1], [0, 0, 1, 1], [], []>} : vector<8x7920xbf16>, vector<7920x128xbf16>, vector<8x128xf32> -> vector<8x128xf32>
    %c0_3 = arith.constant 0 : index
    %c0_4 = arith.constant 0 : index
    %3 = vector.load %arg4[%c0_3, %c0_4] : memref<8x128xf32, #tpu.memory_space<vmem>>, vector<1x128xf32>
    %4 = vector.broadcast %3 : vector<1x128xf32> to vector<8x128xf32>
    %5 = arith.addf %2, %4 : vector<8x128xf32>
    %cst_5 = arith.constant 0.000000e+00 : f32
    %6 = vector.broadcast %cst_5 : f32 to vector<8x128xf32>
    %7 = arith.subf %6, %5 : vector<8x128xf32>
    %8 = math.exp %7 : vector<8x128xf32>
    %cst_6 = arith.constant 1.000000e+00 : f32
    %9 = vector.broadcast %cst_6 : f32 to vector<8x128xf32>
    %10 = arith.addf %9, %8 : vector<8x128xf32>
    %cst_7 = arith.constant 1.000000e+00 : f32
    %11 = vector.broadcast %cst_7 : f32 to vector<8x128xf32>
    %12 = arith.divf %11, %10 : vector<8x128xf32>
    %c0_8 = arith.constant 0 : index
    %c0_9 = arith.constant 0 : index
    %13 = vector.load %arg3[%c0_8, %c0_9] : memref<128x128xf32, #tpu.memory_space<vmem>>, vector<128x128xf32>
    %cst_10 = arith.constant dense<0.000000e+00> : vector<8x128xf32>
    %14 = tpu.matmul %12, %13, %cst_10 {dimension_numbers = #tpu.dot_dimension_numbers<[1], [0], [0], [1], [0, 0, 1, 1], [], []>} : vector<8x128xf32>, vector<128x128xf32>, vector<8x128xf32> -> vector<8x128xf32>
    %c1 = arith.constant 1 : index
    %c0_11 = arith.constant 0 : index
    %15 = vector.load %arg4[%c1, %c0_11] : memref<8x128xf32, #tpu.memory_space<vmem>>, vector<1x128xf32>
    %16 = vector.broadcast %15 : vector<1x128xf32> to vector<8x128xf32>
    %17 = arith.addf %14, %16 : vector<8x128xf32>
    %cst_12 = arith.constant dense<0xFF800000> : vector<8xf32>
    %18 = vector.multi_reduction <maximumf>, %17, %cst_12 [1] : vector<8x128xf32> to vector<8xf32>
    %19 = vector.shape_cast %18 : vector<8xf32> to vector<8x1xf32>
    %20 = vector.broadcast %19 : vector<8x1xf32> to vector<8x128xf32>
    %21 = arith.subf %17, %20 : vector<8x128xf32>
    %22 = math.exp %21 : vector<8x128xf32>
    %cst_13 = arith.constant dense<0.000000e+00> : vector<8xf32>
    %23 = vector.multi_reduction <add>, %22, %cst_13 [1] : vector<8x128xf32> to vector<8xf32>
    %24 = vector.shape_cast %23 : vector<8xf32> to vector<8x1xf32>
    %25 = tpu.reciprocal %24 {approx = true} : vector<8x1xf32> -> vector<8x1xf32>
    %26 = vector.broadcast %25 : vector<8x1xf32> to vector<8x128xf32>
    %27 = arith.mulf %22, %26 : vector<8x128xf32>
    %c0_14 = arith.constant 0 : index
    %c0_15 = arith.constant 0 : index
    %28 = vector.load %arg5[%c0_14, %c0_15] : memref<8x128xf32, #tpu.memory_space<vmem>>, vector<8x128xf32>
    tpu.vector_store %arg5[%c0_14, %c0_15], %27 {strides = array<i32>} : memref<8x128xf32, #tpu.memory_space<vmem>>, vector<8x128xf32>,
    %c0_16 = arith.constant 0 : index
    %c0_17 = arith.constant 0 : index
    %29 = vector.load %arg6[%c0_16, %c0_17] : memref<8x128xf32, #tpu.memory_space<vmem>>, vector<8x128xf32>
    tpu.vector_store %arg6[%c0_16, %c0_17], %17 {strides = array<i32>} : memref<8x128xf32, #tpu.memory_space<vmem>>, vector<8x128xf32>,
    return
  }
  func.func @transform_0(%arg0: i32) -> (i32, i32) {
    %c0_i32 = arith.constant 0 : i32
    %c0_i32_0 = arith.constant 0 : i32
    return %arg0, %c0_i32 : i32, i32
  }
  func.func @transform_1(%arg0: i32) -> (i32, i32) {
    %c0_i32 = arith.constant 0 : i32
    %c0_i32_0 = arith.constant 0 : i32
    %c0_i32_1 = arith.constant 0 : i32
    return %c0_i32, %c0_i32_0 : i32, i32
  }
  func.func @transform_2(%arg0: i32) -> (i32, i32) {
    %c0_i32 = arith.constant 0 : i32
    %c0_i32_0 = arith.constant 0 : i32
    %c0_i32_1 = arith.constant 0 : i32
    return %c0_i32, %c0_i32_0 : i32, i32
  }
  func.func @transform_3(%arg0: i32) -> (i32, i32) {
    %c0_i32 = arith.constant 0 : i32
    %c0_i32_0 = arith.constant 0 : i32
    %c0_i32_1 = arith.constant 0 : i32
    return %c0_i32, %c0_i32_0 : i32, i32
  }
  func.func @transform_4(%arg0: i32) -> (i32, i32) {
    %c0_i32 = arith.constant 0 : i32
    %c0_i32_0 = arith.constant 0 : i32
    return %arg0, %c0_i32 : i32, i32
  }
  func.func @transform_5(%arg0: i32) -> (i32, i32) {
    %c0_i32 = arith.constant 0 : i32
    %c0_i32_0 = arith.constant 0 : i32
    return %arg0, %c0_i32 : i32, i32
  }
}

</mosaic_0001>

<llo_original>
// kernel: tpu_custom_call.1
$region0: #{tpu_custom_call.1}
  #allocation0 [shape = 'u32[]', space=smem, size = 0x4, offset = 0x4, fixed_abs, tag = 'smem constant byte address 0x4 - core index']
  #allocation1 [shape = 'u32[72,128]{1,0:T(1,128)}', space=vmem, size = 0x9000, scoped, tag = 'internal scratch']
  %s0 = inlined_call_operand.hbm [shape: bf16[8,7920], index: 0, kind: input, shape index: {}]
  %s1 = inlined_call_operand.hbm [shape: bf16[7920,128], index: 1, kind: input, shape index: {}]
  %s2 = inlined_call_operand.hbm [shape: f32[128,128], index: 2, kind: input, shape index: {}]
  %s3 = inlined_call_operand.hbm [shape: f32[8,128], index: 3, kind: input, shape index: {}]
  %s4 = inlined_call_operand.hbm [shape: f32[8,128], index: 4, kind: output, shape index: {0}]
  %s5 = inlined_call_operand.hbm [shape: f32[8,128], index: 5, kind: output, shape index: {1}]
  %6 = xla_tuple %s4, %s5
  %s7 = sld [smem:[#allocation0]]
  $region50: #{tpu_custom_call.1} parent=0
    _
  %s9 = ssub.s32 1, %s7
  %s10 = scalar_select 0, %s9, %s7
  $region1: #{tpu_custom_call.1} parent=0
    #allocation2 [shape = 'u8[126976]{0}', space=vmem, size = 0x1f000, scoped, tag = 'input window, operand 0, single buffered']
    #allocation3 [shape = 's32[1]{0}', space=sflag, size = 0x4, scoped, tag = 'scoped memory for tpu_custom_call.1']
    #allocation4 [shape = 's32[1]{0}', space=sflag, size = 0x4, scoped, tag = 'scoped memory for tpu_custom_call.1']
    #allocation5 [shape = 'u8[2027520]{0}', space=vmem, size = 0x1ef000, scoped, tag = 'input window, operand 1, single buffered']
    #allocation6 [shape = 's32[1]{0}', space=sflag, size = 0x4, scoped, tag = 'scoped memory for tpu_custom_call.1']
    #allocation7 [shape = 'u8[65536]{0}', space=vmem, size = 0x10000, scoped, tag = 'input window, operand 2, single buffered']
    #allocation8 [shape = 'u8[4096]{0}', space=vmem, size = 0x1000, scoped, tag = 'input window, operand 3, single buffered']
    #allocation9 [shape = 's32[1]{0}', space=sflag, size = 0x4, scoped, tag = 'scoped memory for tpu_custom_call.1']
    #allocation10 [shape = 'u8[4096]{0}', space=vmem, size = 0x1000, scoped, tag = 'output window, operand 0, single buffered']
    #allocation11 [shape = 'u8[4096]{0}', space=vmem, size = 0x1000, scoped, tag = 'output window, operand 1, single buffered']
    #allocation12 [shape = 's32[1]{0}', space=sflag, size = 0x4, scoped, tag = 'scoped memory for tpu_custom_call.1']
    %11 = vsyncpa [#allocation3], 0
    %12 = vsyncpa [#allocation6], 0
    %13 = vsyncpa [#allocation9], 0
    %14 = vsyncpa [#allocation4], 0
    %15 = vsyncpa [#allocation12], 0
    // Predicated region
    $region2: #{tpu_custom_call.1} parent=1 // pred_check
      _
    $region3: #{tpu_custom_call.1} parent=1 // pred_check_branch
      %17 = sbr.rel (0) target = $region5
    $region4: #{tpu_custom_call.1} parent=1 // pred_region
      %19 = vsyncadd [#allocation3], 0
      %s21 = sshll.u32 %s0, 4
      %s22 = int_to_ptr.hbm [resolvable:$true] %s21
      %s23 = sshll.u32 [#allocation2], 4
      %s24 = int_to_ptr.vmem [resolvable:$true] %s23
      %26 = dma.hbm_to_vmem [thread:$0]  %s22, 3968, %s24, [#allocation3]
    $region5: #{tpu_custom_call.1} parent=1 // pred_fallthru
      _
    // Predicated region
    $region6: #{tpu_custom_call.1} parent=1 // pred_check
      _
    $region7: #{tpu_custom_call.1} parent=1 // pred_check_branch
      %28 = sbr.rel (0) target = $region9
    $region8: #{tpu_custom_call.1} parent=1 // pred_region
      %30 = vsyncadd [#allocation6], 0
      %s31 = sshll.u32 %s1, 4
      %s32 = int_to_ptr.hbm [resolvable:$true] %s31
      %s33 = sshll.u32 [#allocation5], 4
      %s34 = int_to_ptr.vmem [resolvable:$true] %s33
      %39 = dma.hbm_to_vmem [thread:$0]  %s32, 63360, %s34, [#allocation6], 64, 64, 4
    $region9: #{tpu_custom_call.1} parent=1 // pred_fallthru
      _
    // Predicated region
    $region10: #{tpu_custom_call.1} parent=1 // pred_check
      _
    $region11: #{tpu_custom_call.1} parent=1 // pred_check_branch
      %41 = sbr.rel (0) target = $region13
    $region12: #{tpu_custom_call.1} parent=1 // pred_region
      %43 = vsyncadd [#allocation6], 0
      %s44 = sshll.u32 %s2, 4
      %s45 = int_to_ptr.hbm [resolvable:$true] %s44
      %s46 = sshll.u32 [#allocation7], 4
      %s47 = int_to_ptr.vmem [resolvable:$true] %s46
      %52 = dma.hbm_to_vmem [thread:$0]  %s45, 2048, %s47, [#allocation6], 128, 128, 8
    $region13: #{tpu_custom_call.1} parent=1 // pred_fallthru
      _
    // Predicated region
    $region14: #{tpu_custom_call.1} parent=1 // pred_check
      _
    $region15: #{tpu_custom_call.1} parent=1 // pred_check_branch
      %54 = sbr.rel (0) target = $region17
    $region16: #{tpu_custom_call.1} parent=1 // pred_region
      %56 = vsyncadd [#allocation9], 0
      %s58 = sshll.u32 %s3, 4
      %s59 = int_to_ptr.hbm [resolvable:$true] %s58
      %s60 = sshll.u32 [#allocation8], 4
      %s61 = int_to_ptr.vmem [resolvable:$true] %s60
      %63 = dma.hbm_to_vmem [thread:$0]  %s59, 128, %s61, [#allocation9]
    $region17: #{tpu_custom_call.1} parent=1 // pred_fallthru
      _
    // Predicated region
    $region18: #{tpu_custom_call.1} parent=1 // pred_check
      _
    $region19: #{tpu_custom_call.1} parent=1 // pred_check_branch
      %65 = sbr.rel (0) target = $region21
    $region20: #{tpu_custom_call.1} parent=1 // pred_region
      %67 = dma.done [#allocation3], 3968
    $region21: #{tpu_custom_call.1} parent=1 // pred_fallthru
      _
    // Predicated region
    $region22: #{tpu_custom_call.1} parent=1 // pred_check
      _
    $region23: #{tpu_custom_call.1} parent=1 // pred_check_branch
      %69 = sbr.rel (0) target = $region25
    $region24: #{tpu_custom_call.1} parent=1 // pred_region
      %71 = dma.done [#allocation6], 63360
    $region25: #{tpu_custom_call.1} parent=1 // pred_fallthru
      _
    // Predicated region
    $region26: #{tpu_custom_call.1} parent=1 // pred_check
      _
    $region27: #{tpu_custom_call.1} parent=1 // pred_check_branch
      %73 = sbr.rel (0) target = $region29
    $region28: #{tpu_custom_call.1} parent=1 // pred_region
      %75 = dma.done [#allocation6], 2048
    $region29: #{tpu_custom_call.1} parent=1 // pred_fallthru
      _
    // Predicated region
    $region30: #{tpu_custom_call.1} parent=1 // pred_check
      _
    $region31: #{tpu_custom_call.1} parent=1 // pred_check_branch
      %77 = sbr.rel (0) target = $region33
    $region32: #{tpu_custom_call.1} parent=1 // pred_region
      %79 = dma.done [#allocation9], 128
    $region33: #{tpu_custom_call.1} parent=1 // pred_fallthru
      _
    %v81 = vld [vmem:[#allocation2] sm:$0xff]
    %v82 = vld [vmem:[#allocation2 + $0x8] sm:$0xff]
    %v83 = vld [vmem:[#allocation2 + $0x10] sm:$0xff]
    %v84 = vld [vmem:[#allocation2 + $0x18] sm:$0xff]
    %v85 = vld [vmem:[#allocation2 + $0x20] sm:$0xff]
    %v86 = vld [vmem:[#allocation2 + $0x28] sm:$0xff]
    %v87 = vld [vmem:[#allocation2 + $0x30] sm:$0xff]
    %v88 = vld [vmem:[#allocation2 + $0x38] sm:$0xff]
    %v89 = vld [vmem:[#allocation2 + $0x40] sm:$0xff]
    %v90 = vld [vmem:[#allocation2 + $0x48] sm:$0xff]
    %v91 = vld [vmem:[#allocation2 + $0x50] sm:$0xff]
    %v92 = vld [vmem:[#allocation2 + $0x58] sm:$0xff]
    %v93 = vld [vmem:[#allocation2 + $0x60] sm:$0xff]
    %v94 = vld [vmem:[#allocation2 + $0x68] sm:$0xff]
    %v95 = vld [vmem:[#allocation2 + $0x70] sm:$0xff]
    %v96 = vld [vmem:[#allocation2 + $0x78] sm:$0xff]
    %v97 = vld [vmem:[#allocation2 + $0x80] sm:$0xff]
    %v98 = vld [vmem:[#allocation2 + $0x88] sm:$0xff]
    %v99 = vld [vmem:[#allocation2 + $0x90] sm:$0xff]
    %v100 = vld [vmem:[#allocation2 + $0x98] sm:$0xff]
    %v101 = vld [vmem:[#allocation2 + $0xa0] sm:$0xff]
    %v102 = vld [vmem:[#allocation2 + $0xa8] sm:$0xff]
    %v103 = vld [vmem:[#allocation2 + $0xb0] sm:$0xff]
    %v104 = vld [vmem:[#allocation2 + $0xb8] sm:$0xff]
    %v105 = vld [vmem:[#allocation2 + $0xc0] sm:$0xff]
    %v106 = vld [vmem:[#allocation2 + $0xc8] sm:$0xff]
    %v107 = vld [vmem:[#allocation2 + $0xd0] sm:$0xff]
    %v108 = vld [vmem:[#allocation2 + $0xd8] sm:$0xff]
    %v109 = vld [vmem:[#allocation2 + $0xe0] sm:$0xff]
    %v110 = vld [vmem:[#allocation2 + $0xe8] sm:$0xff]
    %v111 = vld [vmem:[#allocation2 + $0xf0] sm:$0xff]
    %v112 = vld [vmem:[#allocation5] sm:$0xf]
    %v113 = vld [vmem:[#allocation5 + $0x4] sm:$0xf]
    %v114 = vld [vmem:[#allocation5 + $0x8] sm:$0xf]
    %v115 = vld [vmem:[#allocation5 + $0xc] sm:$0xf]
    %v116 = vld [vmem:[#allocation5 + $0x10] sm:$0xf]
    %v117 = vld [vmem:[#allocation5 + $0x14] sm:$0xf]
    %v118 = vld [vmem:[#allocation5 + $0x18] sm:$0xf]
    %v119 = vld [vmem:[#allocation5 + $0x1c] sm:$0xf]
    %v120 = vld [vmem:[#allocation5 + $0x20] sm:$0xf]
    %v121 = vld [vmem:[#allocation5 + $0x24] sm:$0xf]
    %v122 = vld [vmem:[#allocation5 + $0x28] sm:$0xf]
    %v123 = vld [vmem:[#allocation5 + $0x2c] sm:$0xf]
    %v124 = vld [vmem:[#allocation5 + $0x30] sm:$0xf]
    %v125 = vld [vmem:[#allocation5 + $0x34] sm:$0xf]
    %v126 = vld [vmem:[#allocation5 + $0x38] sm:$0xf]
    %v127 = vld [vmem:[#allocation5 + $0x3c] sm:$0xf]
    %v128 = vld [vmem:[#allocation5 + $0x40] sm:$0xf]
    %v129 = vld [vmem:[#allocation5 + $0x44] sm:$0xf]
    %v130 = vld [vmem:[#allocation5 + $0x48] sm:$0xf]
    %v131 = vld [vmem:[#allocation5 + $0x4c] sm:$0xf]
    %v132 = vld [vmem:[#allocation5 + $0x50] sm:$0xf]
    %v133 = vld [vmem:[#allocation5 + $0x54] sm:$0xf]
    %v134 = vld [vmem:[#allocation5 + $0x58] sm:$0xf]
    %v135 = vld [vmem:[#allocation5 + $0x5c] sm:$0xf]
    %v136 = vld [vmem:[#allocation5 + $0x60] sm:$0xf]
    %v137 = vld [vmem:[#allocation5 + $0x64] sm:$0xf]
    %v138 = vld [vmem:[#allocation5 + $0x68] sm:$0xf]
    %v139 = vld [vmem:[#allocation5 + $0x6c] sm:$0xf]
    %v140 = vld [vmem:[#allocation5 + $0x70] sm:$0xf]
    %v141 = vld [vmem:[#allocation5 + $0x74] sm:$0xf]
    %v142 = vld [vmem:[#allocation5 + $0x78] sm:$0xf]
    %v143 = vld [vmem:[#allocation5 + $0x7c] sm:$0xf]
    %v144 = vld [vmem:[#allocation5 + $0x80] sm:$0xf]
    %v145 = vld [vmem:[#allocation5 + $0x84] sm:$0xf]
    %v146 = vld [vmem:[#allocation5 + $0x88] sm:$0xf]
    %v147 = vld [vmem:[#allocation5 + $0x8c] sm:$0xf]
    %v148 = vld [vmem:[#allocation5 + $0x90] sm:$0xf]
    %v149 = vld [vmem:[#allocation5 + $0x94] sm:$0xf]
    %v150 = vld [vmem:[#allocation5 + $0x98] sm:$0xf]
    %v151 = vld [vmem:[#allocation5 + $0x9c] sm:$0xf]
    %v152 = vld [vmem:[#allocation5 + $0xa0] sm:$0xf]
    %v153 = vld [vmem:[#allocation5 + $0xa4] sm:$0xf]
    %v154 = vld [vmem:[#allocation5 + $0xa8] sm:$0xf]
    %v155 = vld [vmem:[#allocation5 + $0xac] sm:$0xf]
    %v156 = vld [vmem:[#allocation5 + $0xb0] sm:$0xf]
    %v157 = vld [vmem:[#allocation5 + $0xb4] sm:$0xf]
    %v158 = vld [vmem:[#allocation5 + $0xb8] sm:$0xf]
    %v159 = vld [vmem:[#allocation5 + $0xbc] sm:$0xf]
    %v160 = vld [vmem:[#allocation5 + $0xc0] sm:$0xf]
    %v161 = vld [vmem:[#allocation5 + $0xc4] sm:$0xf]
    %v162 = vld [vmem:[#allocation5 + $0xc8] sm:$0xf]
    %v163 = vld [vmem:[#allocation5 + $0xcc] sm:$0xf]
    %v164 = vld [vmem:[#allocation5 + $0xd0] sm:$0xf]
    %v165 = vld [vmem:[#allocation5 + $0xd4] sm:$0xf]
    %v166 = vld [vmem:[#allocation5 + $0xd8] sm:$0xf]
    %v167 = vld [vmem:[#allocation5 + $0xdc] sm:$0xf]
    %v168 = vld [vmem:[#allocation5 + $0xe0] sm:$0xf]
    %v169 = vld [vmem:[#allocation5 + $0xe4] sm:$0xf]
    %v170 = vld [vmem:[#allocation5 + $0xe8] sm:$0xf]
    %v171 = vld [vmem:[#allocation5 + $0xec] sm:$0xf]
    %v172 = vld [vmem:[#allocation5 + $0xf0] sm:$0xf]
    %v173 = vld [vmem:[#allocation5 + $0xf4] sm:$0xf]
    %v174 = vld [vmem:[#allocation5 + $0xf8] sm:$0xf]
    %v175 = vld [vmem:[#allocation5 + $0xfc] sm:$0xf]
    %v176 = vld [vmem:[#allocation5 + $0x100] sm:$0xf]
    %v177 = vld [vmem:[#allocation5 + $0x104] sm:$0xf]
    %v178 = vld [vmem:[#allocation5 + $0x108] sm:$0xf]
    %v179 = vld [vmem:[#allocation5 + $0x10c] sm:$0xf]
    %v180 = vld [vmem:[#allocation5 + $0x110] sm:$0xf]
    %v181 = vld [vmem:[#allocation5 + $0x114] sm:$0xf]
    %v182 = vld [vmem:[#allocation5 + $0x118] sm:$0xf]
    %v183 = vld [vmem:[#allocation5 + $0x11c] sm:$0xf]
    %v184 = vld [vmem:[#allocation5 + $0x120] sm:$0xf]
    %v185 = vld [vmem:[#allocation5 + $0x124] sm:$0xf]
    %v186 = vld [vmem:[#allocation5 + $0x128] sm:$0xf]
    %v187 = vld [vmem:[#allocation5 + $0x12c] sm:$0xf]
    %v188 = vld [vmem:[#allocation5 + $0x130] sm:$0xf]
    %v189 = vld [vmem:[#allocation5 + $0x134] sm:$0xf]
    %v190 = vld [vmem:[#allocation5 + $0x138] sm:$0xf]
    %v191 = vld [vmem:[#allocation5 + $0x13c] sm:$0xf]
    %v192 = vld [vmem:[#allocation5 + $0x140] sm:$0xf]
    %v193 = vld [vmem:[#allocation5 + $0x144] sm:$0xf]
    %v194 = vld [vmem:[#allocation5 + $0x148] sm:$0xf]
    %v195 = vld [vmem:[#allocation5 + $0x14c] sm:$0xf]
    %v196 = vld [vmem:[#allocation5 + $0x150] sm:$0xf]
    %v197 = vld [vmem:[#allocation5 + $0x154] sm:$0xf]
    %v198 = vld [vmem:[#allocation5 + $0x158] sm:$0xf]
    %v199 = vld [vmem:[#allocation5 + $0x15c] sm:$0xf]
    %v200 = vld [vmem:[#allocation5 + $0x160] sm:$0xf]
    %v201 = vld [vmem:[#allocation5 + $0x164] sm:$0xf]
    %v202 = vld [vmem:[#allocation5 + $0x168] sm:$0xf]
    %v203 = vld [vmem:[#allocation5 + $0x16c] sm:$0xf]
    %v204 = vld [vmem:[#allocation5 + $0x170] sm:$0xf]
    %v205 = vld [vmem:[#allocation5 + $0x174] sm:$0xf]
    %v206 = vld [vmem:[#allocation5 + $0x178] sm:$0xf]
    %v207 = vld [vmem:[#allocation5 + $0x17c] sm:$0xf]
    %v208 = vld [vmem:[#allocation5 + $0x180] sm:$0xf]
    %v209 = vld [vmem:[#allocation5 + $0x184] sm:$0xf]
    %v210 = vld [vmem:[#allocation5 + $0x188] sm:$0xf]
    %v211 = vld [vmem:[#allocation5 + $0x18c] sm:$0xf]
    %v212 = vld [vmem:[#allocation5 + $0x190] sm:$0xf]
    %v213 = vld [vmem:[#allocation5 + $0x194] sm:$0xf]
    %v214 = vld [vmem:[#allocation5 + $0x198] sm:$0xf]
    %v215 = vld [vmem:[#allocation5 + $0x19c] sm:$0xf]
    %v216 = vld [vmem:[#allocation5 + $0x1a0] sm:$0xf]
    %v217 = vld [vmem:[#allocation5 + $0x1a4] sm:$0xf]
    %v218 = vld [vmem:[#allocation5 + $0x1a8] sm:$0xf]
    %v219 = vld [vmem:[#allocation5 + $0x1ac] sm:$0xf]
    %v220 = vld [vmem:[#allocation5 + $0x1b0] sm:$0xf]
    %v221 = vld [vmem:[#allocation5 + $0x1b4] sm:$0xf]
    %v222 = vld [vmem:[#allocation5 + $0x1b8] sm:$0xf]
    %v223 = vld [vmem:[#allocation5 + $0x1bc] sm:$0xf]
    %v224 = vld [vmem:[#allocation5 + $0x1c0] sm:$0xf]
    %v225 = vld [vmem:[#allocation5 + $0x1c4] sm:$0xf]
    %v226 = vld [vmem:[#allocation5 + $0x1c8] sm:$0xf]
    %v227 = vld [vmem:[#allocation5 + $0x1cc] sm:$0xf]
    %v228 = vld [vmem:[#allocation5 + $0x1d0] sm:$0xf]
    %v229 = vld [vmem:[#allocation5 + $0x1d4] sm:$0xf]
    %v230 = vld [vmem:[#allocation5 + $0x1d8] sm:$0xf]
    %v231 = vld [vmem:[#allocation5 + $0x1dc] sm:$0xf]
    %v232 = vld [vmem:[#allocation5 + $0x1e0] sm:$0xf]
    %v233 = vld [vmem:[#allocation5 + $0x1e4] sm:$0xf]
    %v234 = vld [vmem:[#allocation5 + $0x1e8] sm:$0xf]
    %v235 = vld [vmem:[#allocation5 + $0x1ec] sm:$0xf]
    %v236 = vld [vmem:[#allocation5 + $0x1f0] sm:$0xf]
    %v237 = vld [vmem:[#allocation5 + $0x1f4] sm:$0xf]
    %v238 = vld [vmem:[#allocation5 + $0x1f8] sm:$0xf]
    %v239 = vld [vmem:[#allocation5 + $0x1fc] sm:$0xf]
    %v240 = vld [vmem:[#allocation5 + $0x200] sm:$0xf]
    %v241 = vld [vmem:[#allocation5 + $0x204] sm:$0xf]
    %v242 = vld [vmem:[#allocation5 + $0x208] sm:$0xf]
    %v243 = vld [vmem:[#allocation5 + $0x20c] sm:$0xf]
    %v244 = vld [vmem:[#allocation5 + $0x210] sm:$0xf]
    %v245 = vld [vmem:[#allocation5 + $0x214] sm:$0xf]
    %v246 = vld [vmem:[#allocation5 + $0x218] sm:$0xf]
    %v247 = vld [vmem:[#allocation5 + $0x21c] sm:$0xf]
    %v248 = vld [vmem:[#allocation5 + $0x220] sm:$0xf]
    %v249 = vld [vmem:[#allocation5 + $0x224] sm:$0xf]
    %v250 = vld [vmem:[#allocation5 + $0x228] sm:$0xf]
    %v251 = vld [vmem:[#allocation5 + $0x22c] sm:$0xf]
    %v252 = vld [vmem:[#allocation5 + $0x230] sm:$0xf]
    %v253 = vld [vmem:[#allocation5 + $0x234] sm:$0xf]
    %v254 = vld [vmem:[#allocation5 + $0x238] sm:$0xf]
    %v255 = vld [vmem:[#allocation5 + $0x23c] sm:$0xf]
    %v256 = vld [vmem:[#allocation5 + $0x240] sm:$0xf]
    %v257 = vld [vmem:[#allocation5 + $0x244] sm:$0xf]
    %v258 = vld [vmem:[#allocation5 + $0x248] sm:$0xf]
    %v259 = vld [vmem:[#allocation5 + $0x24c] sm:$0xf]
    %v260 = vld [vmem:[#allocation5 + $0x250] sm:$0xf]
    %v261 = vld [vmem:[#allocation5 + $0x254] sm:$0xf]
    %v262 = vld [vmem:[#allocation5 + $0x258] sm:$0xf]
    %v263 = vld [vmem:[#allocation5 + $0x25c] sm:$0xf]
    %v264 = vld [vmem:[#allocation5 + $0x260] sm:$0xf]
    %v265 = vld [vmem:[#allocation5 + $0x264] sm:$0xf]
    %v266 = vld [vmem:[#allocation5 + $0x268] sm:$0xf]
    %v267 = vld [vmem:[#allocation5 + $0x26c] sm:$0xf]
    %v268 = vld [vmem:[#allocation5 + $0x270] sm:$0xf]
    %v269 = vld [vmem:[#allocation5 + $0x274] sm:$0xf]
    %v270 = vld [vmem:[#allocation5 + $0x278] sm:$0xf]
    %v271 = vld [vmem:[#allocation5 + $0x27c] sm:$0xf]
    %v272 = vld [vmem:[#allocation5 + $0x280] sm:$0xf]
    %v273 = vld [vmem:[#allocation5 + $0x284] sm:$0xf]
    %v274 = vld [vmem:[#allocation5 + $0x288] sm:$0xf]
    %v275 = vld [vmem:[#allocation5 + $0x28c] sm:$0xf]
    %v276 = vld [vmem:[#allocation5 + $0x290] sm:$0xf]
    %v277 = vld [vmem:[#allocation5 + $0x294] sm:$0xf]
    %v278 = vld [vmem:[#allocation5 + $0x298] sm:$0xf]
    %v279 = vld [vmem:[#allocation5 + $0x29c] sm:$0xf]
    %v280 = vld [vmem:[#allocation5 + $0x2a0] sm:$0xf]
    %v281 = vld [vmem:[#allocation5 + $0x2a4] sm:$0xf]
    %v282 = vld [vmem:[#allocation5 + $0x2a8] sm:$0xf]
    %v283 = vld [vmem:[#allocation5 + $0x2ac] sm:$0xf]
    %v284 = vld [vmem:[#allocation5 + $0x2b0] sm:$0xf]
    %v285 = vld [vmem:[#allocation5 + $0x2b4] sm:$0xf]
    %v286 = vld [vmem:[#allocation5 + $0x2b8] sm:$0xf]
    %v287 = vld [vmem:[#allocation5 + $0x2bc] sm:$0xf]
    %v288 = vld [vmem:[#allocation5 + $0x2c0] sm:$0xf]
    %v289 = vld [vmem:[#allocation5 + $0x2c4] sm:$0xf]
    %v290 = vld [vmem:[#allocation5 + $0x2c8] sm:$0xf]
    %v291 = vld [vmem:[#allocation5 + $0x2cc] sm:$0xf]
    %v292 = vld [vmem:[#allocation5 + $0x2d0] sm:$0xf]
    %v293 = vld [vmem:[#allocation5 + $0x2d4] sm:$0xf]
    %v294 = vld [vmem:[#allocation5 + $0x2d8] sm:$0xf]
    %v295 = vld [vmem:[#allocation5 + $0x2dc] sm:$0xf]
    %v296 = vld [vmem:[#allocation5 + $0x2e0] sm:$0xf]
    %v297 = vld [vmem:[#allocation5 + $0x2e4] sm:$0xf]
    %v298 = vld [vmem:[#allocation5 + $0x2e8] sm:$0xf]
    %v299 = vld [vmem:[#allocation5 + $0x2ec] sm:$0xf]
    %v300 = vld [vmem:[#allocation5 + $0x2f0] sm:$0xf]
    %v301 = vld [vmem:[#allocation5 + $0x2f4] sm:$0xf]
    %v302 = vld [vmem:[#allocation5 + $0x2f8] sm:$0xf]
    %v303 = vld [vmem:[#allocation5 + $0x2fc] sm:$0xf]
    %v304 = vld [vmem:[#allocation5 + $0x300] sm:$0xf]
    %v305 = vld [vmem:[#allocation5 + $0x304] sm:$0xf]
    %v306 = vld [vmem:[#allocation5 + $0x308] sm:$0xf]
    %v307 = vld [vmem:[#allocation5 + $0x30c] sm:$0xf]
    %v308 = vld [vmem:[#allocation5 + $0x310] sm:$0xf]
    %v309 = vld [vmem:[#allocation5 + $0x314] sm:$0xf]
    %v310 = vld [vmem:[#allocation5 + $0x318] sm:$0xf]
    %v311 = vld [vmem:[#allocation5 + $0x31c] sm:$0xf]
    %v312 = vld [vmem:[#allocation5 + $0x320] sm:$0xf]
    %v313 = vld [vmem:[#allocation5 + $0x324] sm:$0xf]
    %v314 = vld [vmem:[#allocation5 + $0x328] sm:$0xf]
    %v315 = vld [vmem:[#allocation5 + $0x32c] sm:$0xf]
    %v316 = vld [vmem:[#allocation5 + $0x330] sm:$0xf]
    %v317 = vld [vmem:[#allocation5 + $0x334] sm:$0xf]
    %v318 = vld [vmem:[#allocation5 + $0x338] sm:$0xf]
    %v319 = vld [vmem:[#allocation5 + $0x33c] sm:$0xf]
    %v320 = vld [vmem:[#allocation5 + $0x340] sm:$0xf]
    %v321 = vld [vmem:[#allocation5 + $0x344] sm:$0xf]
    %v322 = vld [vmem:[#allocation5 + $0x348] sm:$0xf]
    %v323 = vld [vmem:[#allocation5 + $0x34c] sm:$0xf]
    %v324 = vld [vmem:[#allocation5 + $0x350] sm:$0xf]
    %v325 = vld [vmem:[#allocation5 + $0x354] sm:$0xf]
    %v326 = vld [vmem:[#allocation5 + $0x358] sm:$0xf]
    %v327 = vld [vmem:[#allocation5 + $0x35c] sm:$0xf]
    %v328 = vld [vmem:[#allocation5 + $0x360] sm:$0xf]
    %v329 = vld [vmem:[#allocation5 + $0x364] sm:$0xf]
    %v330 = vld [vmem:[#allocation5 + $0x368] sm:$0xf]
    %v331 = vld [vmem:[#allocation5 + $0x36c] sm:$0xf]
    %v332 = vld [vmem:[#allocation5 + $0x370] sm:$0xf]
    %v333 = vld [vmem:[#allocation5 + $0x374] sm:$0xf]
    %v334 = vld [vmem:[#allocation5 + $0x378] sm:$0xf]
    %v335 = vld [vmem:[#allocation5 + $0x37c] sm:$0xf]
    %v336 = vld [vmem:[#allocation5 + $0x380] sm:$0xf]
    %v337 = vld [vmem:[#allocation5 + $0x384] sm:$0xf]
    %v338 = vld [vmem:[#allocation5 + $0x388] sm:$0xf]
    %v339 = vld [vmem:[#allocation5 + $0x38c] sm:$0xf]
    %v340 = vld [vmem:[#allocation5 + $0x390] sm:$0xf]
    %v341 = vld [vmem:[#allocation5 + $0x394] sm:$0xf]
    %v342 = vld [vmem:[#allocation5 + $0x398] sm:$0xf]
    %v343 = vld [vmem:[#allocation5 + $0x39c] sm:$0xf]
    %v344 = vld [vmem:[#allocation5 + $0x3a0] sm:$0xf]
    %v345 = vld [vmem:[#allocation5 + $0x3a4] sm:$0xf]
    %v346 = vld [vmem:[#allocation5 + $0x3a8] sm:$0xf]
    %v347 = vld [vmem:[#allocation5 + $0x3ac] sm:$0xf]
    %v348 = vld [vmem:[#allocation5 + $0x3b0] sm:$0xf]
    %v349 = vld [vmem:[#allocation5 + $0x3b4] sm:$0xf]
    %v350 = vld [vmem:[#allocation5 + $0x3b8] sm:$0xf]
    %v351 = vld [vmem:[#allocation5 + $0x3bc] sm:$0xf]
    %v352 = vld [vmem:[#allocation5 + $0x3c0] sm:$0xf]
    %v353 = vld [vmem:[#allocation5 + $0x3c4] sm:$0xf]
    %v354 = vld [vmem:[#allocation5 + $0x3c8] sm:$0xf]
    %v355 = vld [vmem:[#allocation5 + $0x3cc] sm:$0xf]
    %v356 = vld [vmem:[#allocation5 + $0x3d0] sm:$0xf]
    %v357 = vld [vmem:[#allocation5 + $0x3d4] sm:$0xf]
    %v358 = vld [vmem:[#allocation5 + $0x3d8] sm:$0xf]
    %v359 = vld [vmem:[#allocation5 + $0x3dc] sm:$0xf]
    %v360 = vld [vmem:[#allocation5 + $0x3e0] sm:$0xf]
    %v361 = vld [vmem:[#allocation5 + $0x3e4] sm:$0xf]
    %v362 = vld [vmem:[#allocation5 + $0x3e8] sm:$0xf]
    %v363 = vld [vmem:[#allocation5 + $0x3ec] sm:$0xf]
    %v364 = vld [vmem:[#allocation5 + $0x3f0] sm:$0xf]
    %v365 = vld [vmem:[#allocation5 + $0x3f4] sm:$0xf]
    %v366 = vld [vmem:[#allocation5 + $0x3f8] sm:$0xf]
    %v367 = vld [vmem:[#allocation5 + $0x3fc] sm:$0xf]
    %v368 = vld [vmem:[#allocation5 + $0x400] sm:$0xf]
    %v369 = vld [vmem:[#allocation5 + $0x404] sm:$0xf]
    %v370 = vld [vmem:[#allocation5 + $0x408] sm:$0xf]
    %v371 = vld [vmem:[#allocation5 + $0x40c] sm:$0xf]
    %v372 = vld [vmem:[#allocation5 + $0x410] sm:$0xf]
    %v373 = vld [vmem:[#allocation5 + $0x414] sm:$0xf]
    %v374 = vld [vmem:[#allocation5 + $0x418] sm:$0xf]
    %v375 = vld [vmem:[#allocation5 + $0x41c] sm:$0xf]
    %v376 = vld [vmem:[#allocation5 + $0x420] sm:$0xf]
    %v377 = vld [vmem:[#allocation5 + $0x424] sm:$0xf]
    %v378 = vld [vmem:[#allocation5 + $0x428] sm:$0xf]
    %v379 = vld [vmem:[#allocation5 + $0x42c] sm:$0xf]
    %v380 = vld [vmem:[#allocation5 + $0x430] sm:$0xf]
    %v381 = vld [vmem:[#allocation5 + $0x434] sm:$0xf]
    %v382 = vld [vmem:[#allocation5 + $0x438] sm:$0xf]
    %v383 = vld [vmem:[#allocation5 + $0x43c] sm:$0xf]
    %v384 = vld [vmem:[#allocation5 + $0x440] sm:$0xf]
    %v385 = vld [vmem:[#allocation5 + $0x444] sm:$0xf]
    %v386 = vld [vmem:[#allocation5 + $0x448] sm:$0xf]
    %v387 = vld [vmem:[#allocation5 + $0x44c] sm:$0xf]
    %v388 = vld [vmem:[#allocation5 + $0x450] sm:$0xf]
    %v389 = vld [vmem:[#allocation5 + $0x454] sm:$0xf]
    %v390 = vld [vmem:[#allocation5 + $0x458] sm:$0xf]
    %v391 = vld [vmem:[#allocation5 + $0x45c] sm:$0xf]
    %v392 = vld [vmem:[#allocation5 + $0x460] sm:$0xf]
    %v393 = vld [vmem:[#allocation5 + $0x464] sm:$0xf]
    %v394 = vld [vmem:[#allocation5 + $0x468] sm:$0xf]
    %v395 = vld [vmem:[#allocation5 + $0x46c] sm:$0xf]
    %v396 = vld [vmem:[#allocation5 + $0x470] sm:$0xf]
    %v397 = vld [vmem:[#allocation5 + $0x474] sm:$0xf]
    %v398 = vld [vmem:[#allocation5 + $0x478] sm:$0xf]
    %v399 = vld [vmem:[#allocation5 + $0x47c] sm:$0xf]
    %v400 = vld [vmem:[#allocation5 + $0x480] sm:$0xf]
    %v401 = vld [vmem:[#allocation5 + $0x484] sm:$0xf]
    %v402 = vld [vmem:[#allocation5 + $0x488] sm:$0xf]
    %v403 = vld [vmem:[#allocation5 + $0x48c] sm:$0xf]
    %v404 = vld [vmem:[#allocation5 + $0x490] sm:$0xf]
    %v405 = vld [vmem:[#allocation5 + $0x494] sm:$0xf]
    %v406 = vld [vmem:[#allocation5 + $0x498] sm:$0xf]
    %v407 = vld [vmem:[#allocation5 + $0x49c] sm:$0xf]
    %v408 = vld [vmem:[#allocation5 + $0x4a0] sm:$0xf]
    %v409 = vld [vmem:[#allocation5 + $0x4a4] sm:$0xf]
    %v410 = vld [vmem:[#allocation5 + $0x4a8] sm:$0xf]
    %v411 = vld [vmem:[#allocation5 + $0x4ac] sm:$0xf]
    %v412 = vld [vmem:[#allocation5 + $0x4b0] sm:$0xf]
    %v413 = vld [vmem:[#allocation5 + $0x4b4] sm:$0xf]
    %v414 = vld [vmem:[#allocation5 + $0x4b8] sm:$0xf]
    %v415 = vld [vmem:[#allocation5 + $0x4bc] sm:$0xf]
    %v416 = vld [vmem:[#allocation5 + $0x4c0] sm:$0xf]
    %v417 = vld [vmem:[#allocation5 + $0x4c4] sm:$0xf]
    %v418 = vld [vmem:[#allocation5 + $0x4c8] sm:$0xf]
    %v419 = vld [vmem:[#allocation5 + $0x4cc] sm:$0xf]
    %v420 = vld [vmem:[#allocation5 + $0x4d0] sm:$0xf]
    %v421 = vld [vmem:[#allocation5 + $0x4d4] sm:$0xf]
    %v422 = vld [vmem:[#allocation5 + $0x4d8] sm:$0xf]
    %v423 = vld [vmem:[#allocation5 + $0x4dc] sm:$0xf]
    %v424 = vld [vmem:[#allocation5 + $0x4e0] sm:$0xf]
    %v425 = vld [vmem:[#allocation5 + $0x4e4] sm:$0xf]
    %v426 = vld [vmem:[#allocation5 + $0x4e8] sm:$0xf]
    %v427 = vld [vmem:[#allocation5 + $0x4ec] sm:$0xf]
    %v428 = vld [vmem:[#allocation5 + $0x4f0] sm:$0xf]
    %v429 = vld [vmem:[#allocation5 + $0x4f4] sm:$0xf]
    %v430 = vld [vmem:[#allocation5 + $0x4f8] sm:$0xf]
    %v431 = vld [vmem:[#allocation5 + $0x4fc] sm:$0xf]
    %v432 = vld [vmem:[#allocation5 + $0x500] sm:$0xf]
    %v433 = vld [vmem:[#allocation5 + $0x504] sm:$0xf]
    %v434 = vld [vmem:[#allocation5 + $0x508] sm:$0xf]
    %v435 = vld [vmem:[#allocation5 + $0x50c] sm:$0xf]
    %v436 = vld [vmem:[#allocation5 + $0x510] sm:$0xf]
    %v437 = vld [vmem:[#allocation5 + $0x514] sm:$0xf]
    %v438 = vld [vmem:[#allocation5 + $0x518] sm:$0xf]
    %v439 = vld [vmem:[#allocation5 + $0x51c] sm:$0xf]
    %v440 = vld [vmem:[#allocation5 + $0x520] sm:$0xf]
    %v441 = vld [vmem:[#allocation5 + $0x524] sm:$0xf]
    %v442 = vld [vmem:[#allocation5 + $0x528] sm:$0xf]
    %v443 = vld [vmem:[#allocation5 + $0x52c] sm:$0xf]
    %v444 = vld [vmem:[#allocation5 + $0x530] sm:$0xf]
    %v445 = vld [vmem:[#allocation5 + $0x534] sm:$0xf]
    %v446 = vld [vmem:[#allocation5 + $0x538] sm:$0xf]
    %v447 = vld [vmem:[#allocation5 + $0x53c] sm:$0xf]
    %v448 = vld [vmem:[#allocation5 + $0x540] sm:$0xf]
    %v449 = vld [vmem:[#allocation5 + $0x544] sm:$0xf]
    %v450 = vld [vmem:[#allocation5 + $0x548] sm:$0xf]
    %v451 = vld [vmem:[#allocation5 + $0x54c] sm:$0xf]
    %v452 = vld [vmem:[#allocation5 + $0x550] sm:$0xf]
    %v453 = vld [vmem:[#allocation5 + $0x554] sm:$0xf]
    %v454 = vld [vmem:[#allocation5 + $0x558] sm:$0xf]
    %v455 = vld [vmem:[#allocation5 + $0x55c] sm:$0xf]
    %v456 = vld [vmem:[#allocation5 + $0x560] sm:$0xf]
    %v457 = vld [vmem:[#allocation5 + $0x564] sm:$0xf]
    %v458 = vld [vmem:[#allocation5 + $0x568] sm:$0xf]
    %v459 = vld [vmem:[#allocation5 + $0x56c] sm:$0xf]
    %v460 = vld [vmem:[#allocation5 + $0x570] sm:$0xf]
    %v461 = vld [vmem:[#allocation5 + $0x574] sm:$0xf]
    %v462 = vld [vmem:[#allocation5 + $0x578] sm:$0xf]
    %v463 = vld [vmem:[#allocation5 + $0x57c] sm:$0xf]
    %v464 = vld [vmem:[#allocation5 + $0x580] sm:$0xf]
    %v465 = vld [vmem:[#allocation5 + $0x584] sm:$0xf]
    %v466 = vld [vmem:[#allocation5 + $0x588] sm:$0xf]
    %v467 = vld [vmem:[#allocation5 + $0x58c] sm:$0xf]
    %v468 = vld [vmem:[#allocation5 + $0x590] sm:$0xf]
    %v469 = vld [vmem:[#allocation5 + $0x594] sm:$0xf]
    %v470 = vld [vmem:[#allocation5 + $0x598] sm:$0xf]
    %v471 = vld [vmem:[#allocation5 + $0x59c] sm:$0xf]
    %v472 = vld [vmem:[#allocation5 + $0x5a0] sm:$0xf]
    %v473 = vld [vmem:[#allocation5 + $0x5a4] sm:$0xf]
    %v474 = vld [vmem:[#allocation5 + $0x5a8] sm:$0xf]
    %v475 = vld [vmem:[#allocation5 + $0x5ac] sm:$0xf]
    %v476 = vld [vmem:[#allocation5 + $0x5b0] sm:$0xf]
    %v477 = vld [vmem:[#allocation5 + $0x5b4] sm:$0xf]
    %v478 = vld [vmem:[#allocation5 + $0x5b8] sm:$0xf]
    %v479 = vld [vmem:[#allocation5 + $0x5bc] sm:$0xf]
    %v480 = vld [vmem:[#allocation5 + $0x5c0] sm:$0xf]
    %v481 = vld [vmem:[#allocation5 + $0x5c4] sm:$0xf]
    %v482 = vld [vmem:[#allocation5 + $0x5c8] sm:$0xf]
    %v483 = vld [vmem:[#allocation5 + $0x5cc] sm:$0xf]
    %v484 = vld [vmem:[#allocation5 + $0x5d0] sm:$0xf]
    %v485 = vld [vmem:[#allocation5 + $0x5d4] sm:$0xf]
    %v486 = vld [vmem:[#allocation5 + $0x5d8] sm:$0xf]
    %v487 = vld [vmem:[#allocation5 + $0x5dc] sm:$0xf]
    %v488 = vld [vmem:[#allocation5 + $0x5e0] sm:$0xf]
    %v489 = vld [vmem:[#allocation5 + $0x5e4] sm:$0xf]
    %v490 = vld [vmem:[#allocation5 + $0x5e8] sm:$0xf]
    %v491 = vld [vmem:[#allocation5 + $0x5ec] sm:$0xf]
    %v492 = vld [vmem:[#allocation5 + $0x5f0] sm:$0xf]
    %v493 = vld [vmem:[#allocation5 + $0x5f4] sm:$0xf]
    %v494 = vld [vmem:[#allocation5 + $0x5f8] sm:$0xf]
    %v495 = vld [vmem:[#allocation5 + $0x5fc] sm:$0xf]
    %v496 = vld [vmem:[#allocation5 + $0x600] sm:$0xf]
    %v497 = vld [vmem:[#allocation5 + $0x604] sm:$0xf]
    %v498 = vld [vmem:[#allocation5 + $0x608] sm:$0xf]
    %v499 = vld [vmem:[#allocation5 + $0x60c] sm:$0xf]
    %v500 = vld [vmem:[#allocation5 + $0x610] sm:$0xf]
    %v501 = vld [vmem:[#allocation5 + $0x614] sm:$0xf]
    %v502 = vld [vmem:[#allocation5 + $0x618] sm:$0xf]
    %v503 = vld [vmem:[#allocation5 + $0x61c] sm:$0xf]
    %v504 = vld [vmem:[#allocation5 + $0x620] sm:$0xf]
    %v505 = vld [vmem:[#allocation5 + $0x624] sm:$0xf]
    %v506 = vld [vmem:[#allocation5 + $0x628] sm:$0xf]
    %v507 = vld [vmem:[#allocation5 + $0x62c] sm:$0xf]
    %v508 = vld [vmem:[#allocation5 + $0x630] sm:$0xf]
    %v509 = vld [vmem:[#allocation5 + $0x634] sm:$0xf]
    %v510 = vld [vmem:[#allocation5 + $0x638] sm:$0xf]
    %v511 = vld [vmem:[#allocation5 + $0x63c] sm:$0xf]
    %v512 = vld [vmem:[#allocation5 + $0x640] sm:$0xf]
    %v513 = vld [vmem:[#allocation5 + $0x644] sm:$0xf]
    %v514 = vld [vmem:[#allocation5 + $0x648] sm:$0xf]
    %v515 = vld [vmem:[#allocation5 + $0x64c] sm:$0xf]
    %v516 = vld [vmem:[#allocation5 + $0x650] sm:$0xf]
    %v517 = vld [vmem:[#allocation5 + $0x654] sm:$0xf]
    %v518 = vld [vmem:[#allocation5 + $0x658] sm:$0xf]
    %v519 = vld [vmem:[#allocation5 + $0x65c] sm:$0xf]
    %v520 = vld [vmem:[#allocation5 + $0x660] sm:$0xf]
    %v521 = vld [vmem:[#allocation5 + $0x664] sm:$0xf]
    %v522 = vld [vmem:[#allocation5 + $0x668] sm:$0xf]
    %v523 = vld [vmem:[#allocation5 + $0x66c] sm:$0xf]
    %v524 = vld [vmem:[#allocation5 + $0x670] sm:$0xf]
    %v525 = vld [vmem:[#allocation5 + $0x674] sm:$0xf]
    %v526 = vld [vmem:[#allocation5 + $0x678] sm:$0xf]
    %v527 = vld [vmem:[#allocation5 + $0x67c] sm:$0xf]
    %v528 = vld [vmem:[#allocation5 + $0x680] sm:$0xf]
    %v529 = vld [vmem:[#allocation5 + $0x684] sm:$0xf]
    %v530 = vld [vmem:[#allocation5 + $0x688] sm:$0xf]
    %v531 = vld [vmem:[#allocation5 + $0x68c] sm:$0xf]
    %v532 = vld [vmem:[#allocation5 + $0x690] sm:$0xf]
    %v533 = vld [vmem:[#allocation5 + $0x694] sm:$0xf]
    %v534 = vld [vmem:[#allocation5 + $0x698] sm:$0xf]
    %v535 = vld [vmem:[#allocation5 + $0x69c] sm:$0xf]
    %v536 = vld [vmem:[#allocation5 + $0x6a0] sm:$0xf]
    %v537 = vld [vmem:[#allocation5 + $0x6a4] sm:$0xf]
    %v538 = vld [vmem:[#allocation5 + $0x6a8] sm:$0xf]
    %v539 = vld [vmem:[#allocation5 + $0x6ac] sm:$0xf]
    %v540 = vld [vmem:[#allocation5 + $0x6b0] sm:$0xf]
    %v541 = vld [vmem:[#allocation5 + $0x6b4] sm:$0xf]
    %v542 = vld [vmem:[#allocation5 + $0x6b8] sm:$0xf]
    %v543 = vld [vmem:[#allocation5 + $0x6bc] sm:$0xf]
    %v544 = vld [vmem:[#allocation5 + $0x6c0] sm:$0xf]
    %v545 = vld [vmem:[#allocation5 + $0x6c4] sm:$0xf]
    %v546 = vld [vmem:[#allocation5 + $0x6c8] sm:$0xf]
    %v547 = vld [vmem:[#allocation5 + $0x6cc] sm:$0xf]
    %v548 = vld [vmem:[#allocation5 + $0x6d0] sm:$0xf]
    %v549 = vld [vmem:[#allocation5 + $0x6d4] sm:$0xf]
    %v550 = vld [vmem:[#allocation5 + $0x6d8] sm:$0xf]
    %v551 = vld [vmem:[#allocation5 + $0x6dc] sm:$0xf]
    %v552 = vld [vmem:[#allocation5 + $0x6e0] sm:$0xf]
    %v553 = vld [vmem:[#allocation5 + $0x6e4] sm:$0xf]
    %v554 = vld [vmem:[#allocation5 + $0x6e8] sm:$0xf]
    %v555 = vld [vmem:[#allocation5 + $0x6ec] sm:$0xf]
    %v556 = vld [vmem:[#allocation5 + $0x6f0] sm:$0xf]
    %v557 = vld [vmem:[#allocation5 + $0x6f4] sm:$0xf]
    %v558 = vld [vmem:[#allocation5 + $0x6f8] sm:$0xf]
    %v559 = vld [vmem:[#allocation5 + $0x6fc] sm:$0xf]
    %v560 = vld [vmem:[#allocation5 + $0x700] sm:$0xf]
    %v561 = vld [vmem:[#allocation5 + $0x704] sm:$0xf]
    %v562 = vld [vmem:[#allocation5 + $0x708] sm:$0xf]
    %v563 = vld [vmem:[#allocation5 + $0x70c] sm:$0xf]
    %v564 = vld [vmem:[#allocation5 + $0x710] sm:$0xf]
    %v565 = vld [vmem:[#allocation5 + $0x714] sm:$0xf]
    %v566 = vld [vmem:[#allocation5 + $0x718] sm:$0xf]
    %v567 = vld [vmem:[#allocation5 + $0x71c] sm:$0xf]
    %v568 = vld [vmem:[#allocation5 + $0x720] sm:$0xf]
    %v569 = vld [vmem:[#allocation5 + $0x724] sm:$0xf]
    %v570 = vld [vmem:[#allocation5 + $0x728] sm:$0xf]
    %v571 = vld [vmem:[#allocation5 + $0x72c] sm:$0xf]
    %v572 = vld [vmem:[#allocation5 + $0x730] sm:$0xf]
    %v573 = vld [vmem:[#allocation5 + $0x734] sm:$0xf]
    %v574 = vld [vmem:[#allocation5 + $0x738] sm:$0xf]
    %v575 = vld [vmem:[#allocation5 + $0x73c] sm:$0xf]
    %v576 = vld [vmem:[#allocation5 + $0x740] sm:$0xf]
    %v577 = vld [vmem:[#allocation5 + $0x744] sm:$0xf]
    %v578 = vld [vmem:[#allocation5 + $0x748] sm:$0xf]
    %v579 = vld [vmem:[#allocation5 + $0x74c] sm:$0xf]
    %v580 = vld [vmem:[#allocation5 + $0x750] sm:$0xf]
    %v581 = vld [vmem:[#allocation5 + $0x754] sm:$0xf]
    %v582 = vld [vmem:[#allocation5 + $0x758] sm:$0xf]
    %v583 = vld [vmem:[#allocation5 + $0x75c] sm:$0xf]
    %v584 = vld [vmem:[#allocation5 + $0x760] sm:$0xf]
    %v585 = vld [vmem:[#allocation5 + $0x764] sm:$0xf]
    %v586 = vld [vmem:[#allocation5 + $0x768] sm:$0xf]
    %v587 = vld [vmem:[#allocation5 + $0x76c] sm:$0xf]
    %v588 = vld [vmem:[#allocation5 + $0x770] sm:$0xf]
    %v589 = vld [vmem:[#allocation5 + $0x774] sm:$0xf]
    %v590 = vld [vmem:[#allocation5 + $0x778] sm:$0xf]
    %v591 = vld [vmem:[#allocation5 + $0x77c] sm:$0xf]
    %v592 = vld [vmem:[#allocation5 + $0x780] sm:$0xf]
    %v593 = vld [vmem:[#allocation5 + $0x784] sm:$0xf]
    %v594 = vld [vmem:[#allocation5 + $0x788] sm:$0xf]
    %v595 = vld [vmem:[#allocation5 + $0x78c] sm:$0xf]
    %v596 = vld [vmem:[#allocation5 + $0x790] sm:$0xf]
    %v597 = vld [vmem:[#allocation5 + $0x794] sm:$0xf]
    %v598 = vld [vmem:[#allocation5 + $0x798] sm:$0xf]
    %v599 = vld [vmem:[#allocation5 + $0x79c] sm:$0xf]
    %v600 = vld [vmem:[#allocation5 + $0x7a0] sm:$0xf]
    %v601 = vld [vmem:[#allocation5 + $0x7a4] sm:$0xf]
    %v602 = vld [vmem:[#allocation5 + $0x7a8] sm:$0xf]
    %v603 = vld [vmem:[#allocation5 + $0x7ac] sm:$0xf]
    %v604 = vld [vmem:[#allocation5 + $0x7b0] sm:$0xf]
    %v605 = vld [vmem:[#allocation5 + $0x7b4] sm:$0xf]
    %v606 = vld [vmem:[#allocation5 + $0x7b8] sm:$0xf]
    %v607 = vld [vmem:[#allocation5 + $0x7bc] sm:$0xf]
    %v608 = vld [vmem:[#allocation5 + $0x7c0] sm:$0xf]
    %v609 = vld [vmem:[#allocation5 + $0x7c4] sm:$0xf]
    %v610 = vld [vmem:[#allocation5 + $0x7c8] sm:$0xf]
    %v611 = vld [vmem:[#allocation5 + $0x7cc] sm:$0xf]
    %v612 = vld [vmem:[#allocation5 + $0x7d0] sm:$0xf]
    %v613 = vld [vmem:[#allocation5 + $0x7d4] sm:$0xf]
    %v614 = vld [vmem:[#allocation5 + $0x7d8] sm:$0xf]
    %v615 = vld [vmem:[#allocation5 + $0x7dc] sm:$0xf]
    %v616 = vld [vmem:[#allocation5 + $0x7e0] sm:$0xf]
    %v617 = vld [vmem:[#allocation5 + $0x7e4] sm:$0xf]
    %v618 = vld [vmem:[#allocation5 + $0x7e8] sm:$0xf]
    %v619 = vld [vmem:[#allocation5 + $0x7ec] sm:$0xf]
    %v620 = vld [vmem:[#allocation5 + $0x7f0] sm:$0xf]
    %v621 = vld [vmem:[#allocation5 + $0x7f4] sm:$0xf]
    %v622 = vld [vmem:[#allocation5 + $0x7f8] sm:$0xf]
    %v623 = vld [vmem:[#allocation5 + $0x7fc] sm:$0xf]
    %v624 = vld [vmem:[#allocation5 + $0x800] sm:$0xf]
    %v625 = vld [vmem:[#allocation5 + $0x804] sm:$0xf]
    %v626 = vld [vmem:[#allocation5 + $0x808] sm:$0xf]
    %v627 = vld [vmem:[#allocation5 + $0x80c] sm:$0xf]
    %v628 = vld [vmem:[#allocation5 + $0x810] sm:$0xf]
    %v629 = vld [vmem:[#allocation5 + $0x814] sm:$0xf]
    %v630 = vld [vmem:[#allocation5 + $0x818] sm:$0xf]
    %v631 = vld [vmem:[#allocation5 + $0x81c] sm:$0xf]
    %v632 = vld [vmem:[#allocation5 + $0x820] sm:$0xf]
    %v633 = vld [vmem:[#allocation5 + $0x824] sm:$0xf]
    %v634 = vld [vmem:[#allocation5 + $0x828] sm:$0xf]
    %v635 = vld [vmem:[#allocation5 + $0x82c] sm:$0xf]
    %v636 = vld [vmem:[#allocation5 + $0x830] sm:$0xf]
    %v637 = vld [vmem:[#allocation5 + $0x834] sm:$0xf]
    %v638 = vld [vmem:[#allocation5 + $0x838] sm:$0xf]
    %v639 = vld [vmem:[#allocation5 + $0x83c] sm:$0xf]
    %v640 = vld [vmem:[#allocation5 + $0x840] sm:$0xf]
    %v641 = vld [vmem:[#allocation5 + $0x844] sm:$0xf]
    %v642 = vld [vmem:[#allocation5 + $0x848] sm:$0xf]
    %v643 = vld [vmem:[#allocation5 + $0x84c] sm:$0xf]
    %v644 = vld [vmem:[#allocation5 + $0x850] sm:$0xf]
    %v645 = vld [vmem:[#allocation5 + $0x854] sm:$0xf]
    %v646 = vld [vmem:[#allocation5 + $0x858] sm:$0xf]
    %v647 = vld [vmem:[#allocation5 + $0x85c] sm:$0xf]
    %v648 = vld [vmem:[#allocation5 + $0x860] sm:$0xf]
    %v649 = vld [vmem:[#allocation5 + $0x864] sm:$0xf]
    %v650 = vld [vmem:[#allocation5 + $0x868] sm:$0xf]
    %v651 = vld [vmem:[#allocation5 + $0x86c] sm:$0xf]
    %v652 = vld [vmem:[#allocation5 + $0x870] sm:$0xf]
    %v653 = vld [vmem:[#allocation5 + $0x874] sm:$0xf]
    %v654 = vld [vmem:[#allocation5 + $0x878] sm:$0xf]
    %v655 = vld [vmem:[#allocation5 + $0x87c] sm:$0xf]
    %v656 = vld [vmem:[#allocation5 + $0x880] sm:$0xf]
    %v657 = vld [vmem:[#allocation5 + $0x884] sm:$0xf]
    %v658 = vld [vmem:[#allocation5 + $0x888] sm:$0xf]
    %v659 = vld [vmem:[#allocation5 + $0x88c] sm:$0xf]
    %v660 = vld [vmem:[#allocation5 + $0x890] sm:$0xf]
    %v661 = vld [vmem:[#allocation5 + $0x894] sm:$0xf]
    %v662 = vld [vmem:[#allocation5 + $0x898] sm:$0xf]
    %v663 = vld [vmem:[#allocation5 + $0x89c] sm:$0xf]
    %v664 = vld [vmem:[#allocation5 + $0x8a0] sm:$0xf]
    %v665 = vld [vmem:[#allocation5 + $0x8a4] sm:$0xf]
    %v666 = vld [vmem:[#allocation5 + $0x8a8] sm:$0xf]
    %v667 = vld [vmem:[#allocation5 + $0x8ac] sm:$0xf]
    %v668 = vld [vmem:[#allocation5 + $0x8b0] sm:$0xf]
    %v669 = vld [vmem:[#allocation5 + $0x8b4] sm:$0xf]
    %v670 = vld [vmem:[#allocation5 + $0x8b8] sm:$0xf]
    %v671 = vld [vmem:[#allocation5 + $0x8bc] sm:$0xf]
    %v672 = vld [vmem:[#allocation5 + $0x8c0] sm:$0xf]
    %v673 = vld [vmem:[#allocation5 + $0x8c4] sm:$0xf]
    %v674 = vld [vmem:[#allocation5 + $0x8c8] sm:$0xf]
    %v675 = vld [vmem:[#allocation5 + $0x8cc] sm:$0xf]
    %v676 = vld [vmem:[#allocation5 + $0x8d0] sm:$0xf]
    %v677 = vld [vmem:[#allocation5 + $0x8d4] sm:$0xf]
    %v678 = vld [vmem:[#allocation5 + $0x8d8] sm:$0xf]
    %v679 = vld [vmem:[#allocation5 + $0x8dc] sm:$0xf]
    %v680 = vld [vmem:[#allocation5 + $0x8e0] sm:$0xf]
    %v681 = vld [vmem:[#allocation5 + $0x8e4] sm:$0xf]
    %v682 = vld [vmem:[#allocation5 + $0x8e8] sm:$0xf]
    %v683 = vld [vmem:[#allocation5 + $0x8ec] sm:$0xf]
    %v684 = vld [vmem:[#allocation5 + $0x8f0] sm:$0xf]
    %v685 = vld [vmem:[#allocation5 + $0x8f4] sm:$0xf]
    %v686 = vld [vmem:[#allocation5 + $0x8f8] sm:$0xf]
    %v687 = vld [vmem:[#allocation5 + $0x8fc] sm:$0xf]
    %v688 = vld [vmem:[#allocation5 + $0x900] sm:$0xf]
    %v689 = vld [vmem:[#allocation5 + $0x904] sm:$0xf]
    %v690 = vld [vmem:[#allocation5 + $0x908] sm:$0xf]
    %v691 = vld [vmem:[#allocation5 + $0x90c] sm:$0xf]
    %v692 = vld [vmem:[#allocation5 + $0x910] sm:$0xf]
    %v693 = vld [vmem:[#allocation5 + $0x914] sm:$0xf]
    %v694 = vld [vmem:[#allocation5 + $0x918] sm:$0xf]
    %v695 = vld [vmem:[#allocation5 + $0x91c] sm:$0xf]
    %v696 = vld [vmem:[#allocation5 + $0x920] sm:$0xf]
    %v697 = vld [vmem:[#allocation5 + $0x924] sm:$0xf]
    %v698 = vld [vmem:[#allocation5 + $0x928] sm:$0xf]
    %v699 = vld [vmem:[#allocation5 + $0x92c] sm:$0xf]
    %v700 = vld [vmem:[#allocation5 + $0x930] sm:$0xf]
    %v701 = vld [vmem:[#allocation5 + $0x934] sm:$0xf]
    %v702 = vld [vmem:[#allocation5 + $0x938] sm:$0xf]
    %v703 = vld [vmem:[#allocation5 + $0x93c] sm:$0xf]
    %v704 = vld [vmem:[#allocation5 + $0x940] sm:$0xf]
    %v705 = vld [vmem:[#allocation5 + $0x944] sm:$0xf]
    %v706 = vld [vmem:[#allocation5 + $0x948] sm:$0xf]
    %v707 = vld [vmem:[#allocation5 + $0x94c] sm:$0xf]
    %v708 = vld [vmem:[#allocation5 + $0x950] sm:$0xf]
    %v709 = vld [vmem:[#allocation5 + $0x954] sm:$0xf]
    %v710 = vld [vmem:[#allocation5 + $0x958] sm:$0xf]
    %v711 = vld [vmem:[#allocation5 + $0x95c] sm:$0xf]
    %v712 = vld [vmem:[#allocation5 + $0x960] sm:$0xf]
    %v713 = vld [vmem:[#allocation5 + $0x964] sm:$0xf]
    %v714 = vld [vmem:[#allocation5 + $0x968] sm:$0xf]
    %v715 = vld [vmem:[#allocation5 + $0x96c] sm:$0xf]
    %v716 = vld [vmem:[#allocation5 + $0x970] sm:$0xf]
    %v717 = vld [vmem:[#allocation5 + $0x974] sm:$0xf]
    %v718 = vld [vmem:[#allocation5 + $0x978] sm:$0xf]
    %v719 = vld [vmem:[#allocation5 + $0x97c] sm:$0xf]
    %v720 = vld [vmem:[#allocation5 + $0x980] sm:$0xf]
    %v721 = vld [vmem:[#allocation5 + $0x984] sm:$0xf]
    %v722 = vld [vmem:[#allocation5 + $0x988] sm:$0xf]
    %v723 = vld [vmem:[#allocation5 + $0x98c] sm:$0xf]
    %v724 = vld [vmem:[#allocation5 + $0x990] sm:$0xf]
    %v725 = vld [vmem:[#allocation5 + $0x994] sm:$0xf]
    %v726 = vld [vmem:[#allocation5 + $0x998] sm:$0xf]
    %v727 = vld [vmem:[#allocation5 + $0x99c] sm:$0xf]
    %v728 = vld [vmem:[#allocation5 + $0x9a0] sm:$0xf]
    %v729 = vld [vmem:[#allocation5 + $0x9a4] sm:$0xf]
    %v730 = vld [vmem:[#allocation5 + $0x9a8] sm:$0xf]
    %v731 = vld [vmem:[#allocation5 + $0x9ac] sm:$0xf]
    %v732 = vld [vmem:[#allocation5 + $0x9b0] sm:$0xf]
    %v733 = vld [vmem:[#allocation5 + $0x9b4] sm:$0xf]
    %v734 = vld [vmem:[#allocation5 + $0x9b8] sm:$0xf]
    %v735 = vld [vmem:[#allocation5 + $0x9bc] sm:$0xf]
    %v736 = vld [vmem:[#allocation5 + $0x9c0] sm:$0xf]
    %v737 = vld [vmem:[#allocation5 + $0x9c4] sm:$0xf]
    %v738 = vld [vmem:[#allocation5 + $0x9c8] sm:$0xf]
    %v739 = vld [vmem:[#allocation5 + $0x9cc] sm:$0xf]
    %v740 = vld [vmem:[#allocation5 + $0x9d0] sm:$0xf]
    %v741 = vld [vmem:[#allocation5 + $0x9d4] sm:$0xf]
    %v742 = vld [vmem:[#allocation5 + $0x9d8] sm:$0xf]
    %v743 = vld [vmem:[#allocation5 + $0x9dc] sm:$0xf]
    %v744 = vld [vmem:[#allocation5 + $0x9e0] sm:$0xf]
    %v745 = vld [vmem:[#allocation5 + $0x9e4] sm:$0xf]
    %v746 = vld [vmem:[#allocation5 + $0x9e8] sm:$0xf]
    %v747 = vld [vmem:[#allocation5 + $0x9ec] sm:$0xf]
    %v748 = vld [vmem:[#allocation5 + $0x9f0] sm:$0xf]
    %v749 = vld [vmem:[#allocation5 + $0x9f4] sm:$0xf]
    %v750 = vld [vmem:[#allocation5 + $0x9f8] sm:$0xf]
    %v751 = vld [vmem:[#allocation5 + $0x9fc] sm:$0xf]
    %v752 = vld [vmem:[#allocation5 + $0xa00] sm:$0xf]
    %v753 = vld [vmem:[#allocation5 + $0xa04] sm:$0xf]
    %v754 = vld [vmem:[#allocation5 + $0xa08] sm:$0xf]
    %v755 = vld [vmem:[#allocation5 + $0xa0c] sm:$0xf]
    %v756 = vld [vmem:[#allocation5 + $0xa10] sm:$0xf]
    %v757 = vld [vmem:[#allocation5 + $0xa14] sm:$0xf]
    %v758 = vld [vmem:[#allocation5 + $0xa18] sm:$0xf]
    %v759 = vld [vmem:[#allocation5 + $0xa1c] sm:$0xf]
    %v760 = vld [vmem:[#allocation5 + $0xa20] sm:$0xf]
    %v761 = vld [vmem:[#allocation5 + $0xa24] sm:$0xf]
    %v762 = vld [vmem:[#allocation5 + $0xa28] sm:$0xf]
    %v763 = vld [vmem:[#allocation5 + $0xa2c] sm:$0xf]
    %v764 = vld [vmem:[#allocation5 + $0xa30] sm:$0xf]
    %v765 = vld [vmem:[#allocation5 + $0xa34] sm:$0xf]
    %v766 = vld [vmem:[#allocation5 + $0xa38] sm:$0xf]
    %v767 = vld [vmem:[#allocation5 + $0xa3c] sm:$0xf]
    %v768 = vld [vmem:[#allocation5 + $0xa40] sm:$0xf]
    %v769 = vld [vmem:[#allocation5 + $0xa44] sm:$0xf]
    %v770 = vld [vmem:[#allocation5 + $0xa48] sm:$0xf]
    %v771 = vld [vmem:[#allocation5 + $0xa4c] sm:$0xf]
    %v772 = vld [vmem:[#allocation5 + $0xa50] sm:$0xf]
    %v773 = vld [vmem:[#allocation5 + $0xa54] sm:$0xf]
    %v774 = vld [vmem:[#allocation5 + $0xa58] sm:$0xf]
    %v775 = vld [vmem:[#allocation5 + $0xa5c] sm:$0xf]
    %v776 = vld [vmem:[#allocation5 + $0xa60] sm:$0xf]
    %v777 = vld [vmem:[#allocation5 + $0xa64] sm:$0xf]
    %v778 = vld [vmem:[#allocation5 + $0xa68] sm:$0xf]
    %v779 = vld [vmem:[#allocation5 + $0xa6c] sm:$0xf]
    %v780 = vld [vmem:[#allocation5 + $0xa70] sm:$0xf]
    %v781 = vld [vmem:[#allocation5 + $0xa74] sm:$0xf]
    %v782 = vld [vmem:[#allocation5 + $0xa78] sm:$0xf]
    %v783 = vld [vmem:[#allocation5 + $0xa7c] sm:$0xf]
    %v784 = vld [vmem:[#allocation5 + $0xa80] sm:$0xf]
    %v785 = vld [vmem:[#allocation5 + $0xa84] sm:$0xf]
    %v786 = vld [vmem:[#allocation5 + $0xa88] sm:$0xf]
    %v787 = vld [vmem:[#allocation5 + $0xa8c] sm:$0xf]
    %v788 = vld [vmem:[#allocation5 + $0xa90] sm:$0xf]
    %v789 = vld [vmem:[#allocation5 + $0xa94] sm:$0xf]
    %v790 = vld [vmem:[#allocation5 + $0xa98] sm:$0xf]
    %v791 = vld [vmem:[#allocation5 + $0xa9c] sm:$0xf]
    %v792 = vld [vmem:[#allocation5 + $0xaa0] sm:$0xf]
    %v793 = vld [vmem:[#allocation5 + $0xaa4] sm:$0xf]
    %v794 = vld [vmem:[#allocation5 + $0xaa8] sm:$0xf]
    %v795 = vld [vmem:[#allocation5 + $0xaac] sm:$0xf]
    %v796 = vld [vmem:[#allocation5 + $0xab0] sm:$0xf]
    %v797 = vld [vmem:[#allocation5 + $0xab4] sm:$0xf]
    %v798 = vld [vmem:[#allocation5 + $0xab8] sm:$0xf]
    %v799 = vld [vmem:[#allocation5 + $0xabc] sm:$0xf]
    %v800 = vld [vmem:[#allocation5 + $0xac0] sm:$0xf]
    %v801 = vld [vmem:[#allocation5 + $0xac4] sm:$0xf]
    %v802 = vld [vmem:[#allocation5 + $0xac8] sm:$0xf]
    %v803 = vld [vmem:[#allocation5 + $0xacc] sm:$0xf]
    %v804 = vld [vmem:[#allocation5 + $0xad0] sm:$0xf]
    %v805 = vld [vmem:[#allocation5 + $0xad4] sm:$0xf]
    %v806 = vld [vmem:[#allocation5 + $0xad8] sm:$0xf]
    %v807 = vld [vmem:[#allocation5 + $0xadc] sm:$0xf]
    %v808 = vld [vmem:[#allocation5 + $0xae0] sm:$0xf]
    %v809 = vld [vmem:[#allocation5 + $0xae4] sm:$0xf]
    %v810 = vld [vmem:[#allocation5 + $0xae8] sm:$0xf]
    %v811 = vld [vmem:[#allocation5 + $0xaec] sm:$0xf]
    %v812 = vld [vmem:[#allocation5 + $0xaf0] sm:$0xf]
    %v813 = vld [vmem:[#allocation5 + $0xaf4] sm:$0xf]
    %v814 = vld [vmem:[#allocation5 + $0xaf8] sm:$0xf]
    %v815 = vld [vmem:[#allocation5 + $0xafc] sm:$0xf]
    %v816 = vld [vmem:[#allocation5 + $0xb00] sm:$0xf]
    %v817 = vld [vmem:[#allocation5 + $0xb04] sm:$0xf]
    %v818 = vld [vmem:[#allocation5 + $0xb08] sm:$0xf]
    %v819 = vld [vmem:[#allocation5 + $0xb0c] sm:$0xf]
    %v820 = vld [vmem:[#allocation5 + $0xb10] sm:$0xf]
    %v821 = vld [vmem:[#allocation5 + $0xb14] sm:$0xf]
    %v822 = vld [vmem:[#allocation5 + $0xb18] sm:$0xf]
    %v823 = vld [vmem:[#allocation5 + $0xb1c] sm:$0xf]
    %v824 = vld [vmem:[#allocation5 + $0xb20] sm:$0xf]
    %v825 = vld [vmem:[#allocation5 + $0xb24] sm:$0xf]
    %v826 = vld [vmem:[#allocation5 + $0xb28] sm:$0xf]
    %v827 = vld [vmem:[#allocation5 + $0xb2c] sm:$0xf]
    %v828 = vld [vmem:[#allocation5 + $0xb30] sm:$0xf]
    %v829 = vld [vmem:[#allocation5 + $0xb34] sm:$0xf]
    %v830 = vld [vmem:[#allocation5 + $0xb38] sm:$0xf]
    %v831 = vld [vmem:[#allocation5 + $0xb3c] sm:$0xf]
    %v832 = vld [vmem:[#allocation5 + $0xb40] sm:$0xf]
    %v833 = vld [vmem:[#allocation5 + $0xb44] sm:$0xf]
    %v834 = vld [vmem:[#allocation5 + $0xb48] sm:$0xf]
    %v835 = vld [vmem:[#allocation5 + $0xb4c] sm:$0xf]
    %v836 = vld [vmem:[#allocation5 + $0xb50] sm:$0xf]
    %v837 = vld [vmem:[#allocation5 + $0xb54] sm:$0xf]
    %v838 = vld [vmem:[#allocation5 + $0xb58] sm:$0xf]
    %v839 = vld [vmem:[#allocation5 + $0xb5c] sm:$0xf]
    %v840 = vld [vmem:[#allocation5 + $0xb60] sm:$0xf]
    %v841 = vld [vmem:[#allocation5 + $0xb64] sm:$0xf]
    %v842 = vld [vmem:[#allocation5 + $0xb68] sm:$0xf]
    %v843 = vld [vmem:[#allocation5 + $0xb6c] sm:$0xf]
    %v844 = vld [vmem:[#allocation5 + $0xb70] sm:$0xf]
    %v845 = vld [vmem:[#allocation5 + $0xb74] sm:$0xf]
    %v846 = vld [vmem:[#allocation5 + $0xb78] sm:$0xf]
    %v847 = vld [vmem:[#allocation5 + $0xb7c] sm:$0xf]
    %v848 = vld [vmem:[#allocation5 + $0xb80] sm:$0xf]
    %v849 = vld [vmem:[#allocation5 + $0xb84] sm:$0xf]
    %v850 = vld [vmem:[#allocation5 + $0xb88] sm:$0xf]
    %v851 = vld [vmem:[#allocation5 + $0xb8c] sm:$0xf]
    %v852 = vld [vmem:[#allocation5 + $0xb90] sm:$0xf]
    %v853 = vld [vmem:[#allocation5 + $0xb94] sm:$0xf]
    %v854 = vld [vmem:[#allocation5 + $0xb98] sm:$0xf]
    %v855 = vld [vmem:[#allocation5 + $0xb9c] sm:$0xf]
    %v856 = vld [vmem:[#allocation5 + $0xba0] sm:$0xf]
    %v857 = vld [vmem:[#allocation5 + $0xba4] sm:$0xf]
    %v858 = vld [vmem:[#allocation5 + $0xba8] sm:$0xf]
    %v859 = vld [vmem:[#allocation5 + $0xbac] sm:$0xf]
    %v860 = vld [vmem:[#allocation5 + $0xbb0] sm:$0xf]
    %v861 = vld [vmem:[#allocation5 + $0xbb4] sm:$0xf]
    %v862 = vld [vmem:[#allocation5 + $0xbb8] sm:$0xf]
    %v863 = vld [vmem:[#allocation5 + $0xbbc] sm:$0xf]
    %v864 = vld [vmem:[#allocation5 + $0xbc0] sm:$0xf]
    %v865 = vld [vmem:[#allocation5 + $0xbc4] sm:$0xf]
    %v866 = vld [vmem:[#allocation5 + $0xbc8] sm:$0xf]
    %v867 = vld [vmem:[#allocation5 + $0xbcc] sm:$0xf]
    %v868 = vld [vmem:[#allocation5 + $0xbd0] sm:$0xf]
    %v869 = vld [vmem:[#allocation5 + $0xbd4] sm:$0xf]
    %v870 = vld [vmem:[#allocation5 + $0xbd8] sm:$0xf]
    %v871 = vld [vmem:[#allocation5 + $0xbdc] sm:$0xf]
    %v872 = vld [vmem:[#allocation5 + $0xbe0] sm:$0xf]
    %v873 = vld [vmem:[#allocation5 + $0xbe4] sm:$0xf]
    %v874 = vld [vmem:[#allocation5 + $0xbe8] sm:$0xf]
    %v875 = vld [vmem:[#allocation5 + $0xbec] sm:$0xf]
    %v876 = vld [vmem:[#allocation5 + $0xbf0] sm:$0xf]
    %v877 = vld [vmem:[#allocation5 + $0xbf4] sm:$0xf]
    %v878 = vld [vmem:[#allocation5 + $0xbf8] sm:$0xf]
    %v879 = vld [vmem:[#allocation5 + $0xbfc] sm:$0xf]
    %v880 = vld [vmem:[#allocation5 + $0xc00] sm:$0xf]
    %v881 = vld [vmem:[#allocation5 + $0xc04] sm:$0xf]
    %v882 = vld [vmem:[#allocation5 + $0xc08] sm:$0xf]
    %v883 = vld [vmem:[#allocation5 + $0xc0c] sm:$0xf]
    %v884 = vld [vmem:[#allocation5 + $0xc10] sm:$0xf]
    %v885 = vld [vmem:[#allocation5 + $0xc14] sm:$0xf]
    %v886 = vld [vmem:[#allocation5 + $0xc18] sm:$0xf]
    %v887 = vld [vmem:[#allocation5 + $0xc1c] sm:$0xf]
    %v888 = vld [vmem:[#allocation5 + $0xc20] sm:$0xf]
    %v889 = vld [vmem:[#allocation5 + $0xc24] sm:$0xf]
    %v890 = vld [vmem:[#allocation5 + $0xc28] sm:$0xf]
    %v891 = vld [vmem:[#allocation5 + $0xc2c] sm:$0xf]
    %v892 = vld [vmem:[#allocation5 + $0xc30] sm:$0xf]
    %v893 = vld [vmem:[#allocation5 + $0xc34] sm:$0xf]
    %v894 = vld [vmem:[#allocation5 + $0xc38] sm:$0xf]
    %v895 = vld [vmem:[#allocation5 + $0xc3c] sm:$0xf]
    %v896 = vld [vmem:[#allocation5 + $0xc40] sm:$0xf]
    %v897 = vld [vmem:[#allocation5 + $0xc44] sm:$0xf]
    %v898 = vld [vmem:[#allocation5 + $0xc48] sm:$0xf]
    %v899 = vld [vmem:[#allocation5 + $0xc4c] sm:$0xf]
    %v900 = vld [vmem:[#allocation5 + $0xc50] sm:$0xf]
    %v901 = vld [vmem:[#allocation5 + $0xc54] sm:$0xf]
    %v902 = vld [vmem:[#allocation5 + $0xc58] sm:$0xf]
    %v903 = vld [vmem:[#allocation5 + $0xc5c] sm:$0xf]
    %v904 = vld [vmem:[#allocation5 + $0xc60] sm:$0xf]
    %v905 = vld [vmem:[#allocation5 + $0xc64] sm:$0xf]
    %v906 = vld [vmem:[#allocation5 + $0xc68] sm:$0xf]
    %v907 = vld [vmem:[#allocation5 + $0xc6c] sm:$0xf]
    %v908 = vld [vmem:[#allocation5 + $0xc70] sm:$0xf]
    %v909 = vld [vmem:[#allocation5 + $0xc74] sm:$0xf]
    %v910 = vld [vmem:[#allocation5 + $0xc78] sm:$0xf]
    %v911 = vld [vmem:[#allocation5 + $0xc7c] sm:$0xf]
    %v912 = vld [vmem:[#allocation5 + $0xc80] sm:$0xf]
    %v913 = vld [vmem:[#allocation5 + $0xc84] sm:$0xf]
    %v914 = vld [vmem:[#allocation5 + $0xc88] sm:$0xf]
    %v915 = vld [vmem:[#allocation5 + $0xc8c] sm:$0xf]
    %v916 = vld [vmem:[#allocation5 + $0xc90] sm:$0xf]
    %v917 = vld [vmem:[#allocation5 + $0xc94] sm:$0xf]
    %v918 = vld [vmem:[#allocation5 + $0xc98] sm:$0xf]
    %v919 = vld [vmem:[#allocation5 + $0xc9c] sm:$0xf]
    %v920 = vld [vmem:[#allocation5 + $0xca0] sm:$0xf]
    %v921 = vld [vmem:[#allocation5 + $0xca4] sm:$0xf]
    %v922 = vld [vmem:[#allocation5 + $0xca8] sm:$0xf]
    %v923 = vld [vmem:[#allocation5 + $0xcac] sm:$0xf]
    %v924 = vld [vmem:[#allocation5 + $0xcb0] sm:$0xf]
    %v925 = vld [vmem:[#allocation5 + $0xcb4] sm:$0xf]
    %v926 = vld [vmem:[#allocation5 + $0xcb8] sm:$0xf]
    %v927 = vld [vmem:[#allocation5 + $0xcbc] sm:$0xf]
    %v928 = vld [vmem:[#allocation5 + $0xcc0] sm:$0xf]
    %v929 = vld [vmem:[#allocation5 + $0xcc4] sm:$0xf]
    %v930 = vld [vmem:[#allocation5 + $0xcc8] sm:$0xf]
    %v931 = vld [vmem:[#allocation5 + $0xccc] sm:$0xf]
    %v932 = vld [vmem:[#allocation5 + $0xcd0] sm:$0xf]
    %v933 = vld [vmem:[#allocation5 + $0xcd4] sm:$0xf]
    %v934 = vld [vmem:[#allocation5 + $0xcd8] sm:$0xf]
    %v935 = vld [vmem:[#allocation5 + $0xcdc] sm:$0xf]
    %v936 = vld [vmem:[#allocation5 + $0xce0] sm:$0xf]
    %v937 = vld [vmem:[#allocation5 + $0xce4] sm:$0xf]
    %v938 = vld [vmem:[#allocation5 + $0xce8] sm:$0xf]
    %v939 = vld [vmem:[#allocation5 + $0xcec] sm:$0xf]
    %v940 = vld [vmem:[#allocation5 + $0xcf0] sm:$0xf]
    %v941 = vld [vmem:[#allocation5 + $0xcf4] sm:$0xf]
    %v942 = vld [vmem:[#allocation5 + $0xcf8] sm:$0xf]
    %v943 = vld [vmem:[#allocation5 + $0xcfc] sm:$0xf]
    %v944 = vld [vmem:[#allocation5 + $0xd00] sm:$0xf]
    %v945 = vld [vmem:[#allocation5 + $0xd04] sm:$0xf]
    %v946 = vld [vmem:[#allocation5 + $0xd08] sm:$0xf]
    %v947 = vld [vmem:[#allocation5 + $0xd0c] sm:$0xf]
    %v948 = vld [vmem:[#allocation5 + $0xd10] sm:$0xf]
    %v949 = vld [vmem:[#allocation5 + $0xd14] sm:$0xf]
    %v950 = vld [vmem:[#allocation5 + $0xd18] sm:$0xf]
    %v951 = vld [vmem:[#allocation5 + $0xd1c] sm:$0xf]
    %v952 = vld [vmem:[#allocation5 + $0xd20] sm:$0xf]
    %v953 = vld [vmem:[#allocation5 + $0xd24] sm:$0xf]
    %v954 = vld [vmem:[#allocation5 + $0xd28] sm:$0xf]
    %v955 = vld [vmem:[#allocation5 + $0xd2c] sm:$0xf]
    %v956 = vld [vmem:[#allocation5 + $0xd30] sm:$0xf]
    %v957 = vld [vmem:[#allocation5 + $0xd34] sm:$0xf]
    %v958 = vld [vmem:[#allocation5 + $0xd38] sm:$0xf]
    %v959 = vld [vmem:[#allocation5 + $0xd3c] sm:$0xf]
    %v960 = vld [vmem:[#allocation5 + $0xd40] sm:$0xf]
    %v961 = vld [vmem:[#allocation5 + $0xd44] sm:$0xf]
    %v962 = vld [vmem:[#allocation5 + $0xd48] sm:$0xf]
    %v963 = vld [vmem:[#allocation5 + $0xd4c] sm:$0xf]
    %v964 = vld [vmem:[#allocation5 + $0xd50] sm:$0xf]
    %v965 = vld [vmem:[#allocation5 + $0xd54] sm:$0xf]
    %v966 = vld [vmem:[#allocation5 + $0xd58] sm:$0xf]
    %v967 = vld [vmem:[#allocation5 + $0xd5c] sm:$0xf]
    %v968 = vld [vmem:[#allocation5 + $0xd60] sm:$0xf]
    %v969 = vld [vmem:[#allocation5 + $0xd64] sm:$0xf]
    %v970 = vld [vmem:[#allocation5 + $0xd68] sm:$0xf]
    %v971 = vld [vmem:[#allocation5 + $0xd6c] sm:$0xf]
    %v972 = vld [vmem:[#allocation5 + $0xd70] sm:$0xf]
    %v973 = vld [vmem:[#allocation5 + $0xd74] sm:$0xf]
    %v974 = vld [vmem:[#allocation5 + $0xd78] sm:$0xf]
    %v975 = vld [vmem:[#allocation5 + $0xd7c] sm:$0xf]
    %v976 = vld [vmem:[#allocation5 + $0xd80] sm:$0xf]
    %v977 = vld [vmem:[#allocation5 + $0xd84] sm:$0xf]
    %v978 = vld [vmem:[#allocation5 + $0xd88] sm:$0xf]
    %v979 = vld [vmem:[#allocation5 + $0xd8c] sm:$0xf]
    %v980 = vld [vmem:[#allocation5 + $0xd90] sm:$0xf]
    %v981 = vld [vmem:[#allocation5 + $0xd94] sm:$0xf]
    %v982 = vld [vmem:[#allocation5 + $0xd98] sm:$0xf]
    %v983 = vld [vmem:[#allocation5 + $0xd9c] sm:$0xf]
    %v984 = vld [vmem:[#allocation5 + $0xda0] sm:$0xf]
    %v985 = vld [vmem:[#allocation5 + $0xda4] sm:$0xf]
    %v986 = vld [vmem:[#allocation5 + $0xda8] sm:$0xf]
    %v987 = vld [vmem:[#allocation5 + $0xdac] sm:$0xf]
    %v988 = vld [vmem:[#allocation5 + $0xdb0] sm:$0xf]
    %v989 = vld [vmem:[#allocation5 + $0xdb4] sm:$0xf]
    %v990 = vld [vmem:[#allocation5 + $0xdb8] sm:$0xf]
    %v991 = vld [vmem:[#allocation5 + $0xdbc] sm:$0xf]
    %v992 = vld [vmem:[#allocation5 + $0xdc0] sm:$0xf]
    %v993 = vld [vmem:[#allocation5 + $0xdc4] sm:$0xf]
    %v994 = vld [vmem:[#allocation5 + $0xdc8] sm:$0xf]
    %v995 = vld [vmem:[#allocation5 + $0xdcc] sm:$0xf]
    %v996 = vld [vmem:[#allocation5 + $0xdd0] sm:$0xf]
    %v997 = vld [vmem:[#allocation5 + $0xdd4] sm:$0xf]
    %v998 = vld [vmem:[#allocation5 + $0xdd8] sm:$0xf]
    %v999 = vld [vmem:[#allocation5 + $0xddc] sm:$0xf]
    %v1000 = vld [vmem:[#allocation5 + $0xde0] sm:$0xf]
    %v1001 = vld [vmem:[#allocation5 + $0xde4] sm:$0xf]
    %v1002 = vld [vmem:[#allocation5 + $0xde8] sm:$0xf]
    %v1003 = vld [vmem:[#allocation5 + $0xdec] sm:$0xf]
    %v1004 = vld [vmem:[#allocation5 + $0xdf0] sm:$0xf]
    %v1005 = vld [vmem:[#allocation5 + $0xdf4] sm:$0xf]
    %v1006 = vld [vmem:[#allocation5 + $0xdf8] sm:$0xf]
    %v1007 = vld [vmem:[#allocation5 + $0xdfc] sm:$0xf]
    %v1008 = vld [vmem:[#allocation5 + $0xe00] sm:$0xf]
    %v1009 = vld [vmem:[#allocation5 + $0xe04] sm:$0xf]
    %v1010 = vld [vmem:[#allocation5 + $0xe08] sm:$0xf]
    %v1011 = vld [vmem:[#allocation5 + $0xe0c] sm:$0xf]
    %v1012 = vld [vmem:[#allocation5 + $0xe10] sm:$0xf]
    %v1013 = vld [vmem:[#allocation5 + $0xe14] sm:$0xf]
    %v1014 = vld [vmem:[#allocation5 + $0xe18] sm:$0xf]
    %v1015 = vld [vmem:[#allocation5 + $0xe1c] sm:$0xf]
    %v1016 = vld [vmem:[#allocation5 + $0xe20] sm:$0xf]
    %v1017 = vld [vmem:[#allocation5 + $0xe24] sm:$0xf]
    %v1018 = vld [vmem:[#allocation5 + $0xe28] sm:$0xf]
    %v1019 = vld [vmem:[#allocation5 + $0xe2c] sm:$0xf]
    %v1020 = vld [vmem:[#allocation5 + $0xe30] sm:$0xf]
    %v1021 = vld [vmem:[#allocation5 + $0xe34] sm:$0xf]
    %v1022 = vld [vmem:[#allocation5 + $0xe38] sm:$0xf]
    %v1023 = vld [vmem:[#allocation5 + $0xe3c] sm:$0xf]
    %v1024 = vld [vmem:[#allocation5 + $0xe40] sm:$0xf]
    %v1025 = vld [vmem:[#allocation5 + $0xe44] sm:$0xf]
    %v1026 = vld [vmem:[#allocation5 + $0xe48] sm:$0xf]
    %v1027 = vld [vmem:[#allocation5 + $0xe4c] sm:$0xf]
    %v1028 = vld [vmem:[#allocation5 + $0xe50] sm:$0xf]
    %v1029 = vld [vmem:[#allocation5 + $0xe54] sm:$0xf]
    %v1030 = vld [vmem:[#allocation5 + $0xe58] sm:$0xf]
    %v1031 = vld [vmem:[#allocation5 + $0xe5c] sm:$0xf]
    %v1032 = vld [vmem:[#allocation5 + $0xe60] sm:$0xf]
    %v1033 = vld [vmem:[#allocation5 + $0xe64] sm:$0xf]
    %v1034 = vld [vmem:[#allocation5 + $0xe68] sm:$0xf]
    %v1035 = vld [vmem:[#allocation5 + $0xe6c] sm:$0xf]
    %v1036 = vld [vmem:[#allocation5 + $0xe70] sm:$0xf]
    %v1037 = vld [vmem:[#allocation5 + $0xe74] sm:$0xf]
    %v1038 = vld [vmem:[#allocation5 + $0xe78] sm:$0xf]
    %v1039 = vld [vmem:[#allocation5 + $0xe7c] sm:$0xf]
    %v1040 = vld [vmem:[#allocation5 + $0xe80] sm:$0xf]
    %v1041 = vld [vmem:[#allocation5 + $0xe84] sm:$0xf]
    %v1042 = vld [vmem:[#allocation5 + $0xe88] sm:$0xf]
    %v1043 = vld [vmem:[#allocation5 + $0xe8c] sm:$0xf]
    %v1044 = vld [vmem:[#allocation5 + $0xe90] sm:$0xf]
    %v1045 = vld [vmem:[#allocation5 + $0xe94] sm:$0xf]
    %v1046 = vld [vmem:[#allocation5 + $0xe98] sm:$0xf]
    %v1047 = vld [vmem:[#allocation5 + $0xe9c] sm:$0xf]
    %v1048 = vld [vmem:[#allocation5 + $0xea0] sm:$0xf]
    %v1049 = vld [vmem:[#allocation5 + $0xea4] sm:$0xf]
    %v1050 = vld [vmem:[#allocation5 + $0xea8] sm:$0xf]
    %v1051 = vld [vmem:[#allocation5 + $0xeac] sm:$0xf]
    %v1052 = vld [vmem:[#allocation5 + $0xeb0] sm:$0xf]
    %v1053 = vld [vmem:[#allocation5 + $0xeb4] sm:$0xf]
    %v1054 = vld [vmem:[#allocation5 + $0xeb8] sm:$0xf]
    %v1055 = vld [vmem:[#allocation5 + $0xebc] sm:$0xf]
    %v1056 = vld [vmem:[#allocation5 + $0xec0] sm:$0xf]
    %v1057 = vld [vmem:[#allocation5 + $0xec4] sm:$0xf]
    %v1058 = vld [vmem:[#allocation5 + $0xec8] sm:$0xf]
    %v1059 = vld [vmem:[#allocation5 + $0xecc] sm:$0xf]
    %v1060 = vld [vmem:[#allocation5 + $0xed0] sm:$0xf]
    %v1061 = vld [vmem:[#allocation5 + $0xed4] sm:$0xf]
    %v1062 = vld [vmem:[#allocation5 + $0xed8] sm:$0xf]
    %v1063 = vld [vmem:[#allocation5 + $0xedc] sm:$0xf]
    %v1064 = vld [vmem:[#allocation5 + $0xee0] sm:$0xf]
    %v1065 = vld [vmem:[#allocation5 + $0xee4] sm:$0xf]
    %v1066 = vld [vmem:[#allocation5 + $0xee8] sm:$0xf]
    %v1067 = vld [vmem:[#allocation5 + $0xeec] sm:$0xf]
    %v1068 = vld [vmem:[#allocation5 + $0xef0] sm:$0xf]
    %v1069 = vld [vmem:[#allocation5 + $0xef4] sm:$0xf]
    %v1070 = vld [vmem:[#allocation5 + $0xef8] sm:$0xf]
    %v1071 = vld [vmem:[#allocation5 + $0xefc] sm:$0xf]
    %v1072 = vld [vmem:[#allocation5 + $0xf00] sm:$0xf]
    %v1073 = vld [vmem:[#allocation5 + $0xf04] sm:$0xf]
    %v1074 = vld [vmem:[#allocation5 + $0xf08] sm:$0xf]
    %v1075 = vld [vmem:[#allocation5 + $0xf0c] sm:$0xf]
    %v1076 = vld [vmem:[#allocation5 + $0xf10] sm:$0xf]
    %v1077 = vld [vmem:[#allocation5 + $0xf14] sm:$0xf]
    %v1078 = vld [vmem:[#allocation5 + $0xf18] sm:$0xf]
    %v1079 = vld [vmem:[#allocation5 + $0xf1c] sm:$0xf]
    %v1080 = vld [vmem:[#allocation5 + $0xf20] sm:$0xf]
    %v1081 = vld [vmem:[#allocation5 + $0xf24] sm:$0xf]
    %v1082 = vld [vmem:[#allocation5 + $0xf28] sm:$0xf]
    %v1083 = vld [vmem:[#allocation5 + $0xf2c] sm:$0xf]
    %v1084 = vld [vmem:[#allocation5 + $0xf30] sm:$0xf]
    %v1085 = vld [vmem:[#allocation5 + $0xf34] sm:$0xf]
    %v1086 = vld [vmem:[#allocation5 + $0xf38] sm:$0xf]
    %v1087 = vld [vmem:[#allocation5 + $0xf3c] sm:$0xf]
    %v1088 = vld [vmem:[#allocation5 + $0xf40] sm:$0xf]
    %v1089 = vld [vmem:[#allocation5 + $0xf44] sm:$0xf]
    %v1090 = vld [vmem:[#allocation5 + $0xf48] sm:$0xf]
    %v1091 = vld [vmem:[#allocation5 + $0xf4c] sm:$0xf]
    %v1092 = vld [vmem:[#allocation5 + $0xf50] sm:$0xf]
    %v1093 = vld [vmem:[#allocation5 + $0xf54] sm:$0xf]
    %v1094 = vld [vmem:[#allocation5 + $0xf58] sm:$0xf]
    %v1095 = vld [vmem:[#allocation5 + $0xf5c] sm:$0xf]
    %v1096 = vld [vmem:[#allocation5 + $0xf60] sm:$0xf]
    %v1097 = vld [vmem:[#allocation5 + $0xf64] sm:$0xf]
    %v1098 = vld [vmem:[#allocation5 + $0xf68] sm:$0xf]
    %v1099 = vld [vmem:[#allocation5 + $0xf6c] sm:$0xf]
    %v1100 = vld [vmem:[#allocation5 + $0xf70] sm:$0xf]
    %v1101 = vld [vmem:[#allocation5 + $0xf74] sm:$0xf]
    %v1102 = vld [vmem:[#allocation8] sm:$0x1]
    %v1103 = vperm.slane %v1102, 0
    %v1135 = vunpack.c.l.b16 %v81
    %v1136 = vunpack.c.h.b16 %v81
    %v1137 = vunpack.c.l.b16 %v82
    %v1138 = vunpack.c.h.b16 %v82
    %v1139 = vunpack.c.l.b16 %v83
    %v1140 = vunpack.c.h.b16 %v83
    %v1141 = vunpack.c.l.b16 %v84
    %v1142 = vunpack.c.h.b16 %v84
    %v1143 = vunpack.c.l.b16 %v85
    %v1144 = vunpack.c.h.b16 %v85
    %v1145 = vunpack.c.l.b16 %v86
    %v1146 = vunpack.c.h.b16 %v86
    %v1147 = vunpack.c.l.b16 %v87
    %v1148 = vunpack.c.h.b16 %v87
    %v1149 = vunpack.c.l.b16 %v88
    %v1150 = vunpack.c.h.b16 %v88
    %v1151 = vunpack.c.l.b16 %v89
    %v1152 = vunpack.c.h.b16 %v89
    %v1153 = vunpack.c.l.b16 %v90
    %v1154 = vunpack.c.h.b16 %v90
    %v1155 = vunpack.c.l.b16 %v91
    %v1156 = vunpack.c.h.b16 %v91
    %v1157 = vunpack.c.l.b16 %v92
    %v1158 = vunpack.c.h.b16 %v92
    %v1159 = vunpack.c.l.b16 %v93
    %v1160 = vunpack.c.h.b16 %v93
    %v1161 = vunpack.c.l.b16 %v94
    %v1162 = vunpack.c.h.b16 %v94
    %v1163 = vunpack.c.l.b16 %v95
    %v1164 = vunpack.c.h.b16 %v95
    %v1165 = vunpack.c.l.b16 %v96
    %v1166 = vunpack.c.h.b16 %v96
    %v1167 = vunpack.c.l.b16 %v97
    %v1168 = vunpack.c.h.b16 %v97
    %v1169 = vunpack.c.l.b16 %v98
    %v1170 = vunpack.c.h.b16 %v98
    %v1171 = vunpack.c.l.b16 %v99
    %v1172 = vunpack.c.h.b16 %v99
    %v1173 = vunpack.c.l.b16 %v100
    %v1174 = vunpack.c.h.b16 %v100
    %v1175 = vunpack.c.l.b16 %v101
    %v1176 = vunpack.c.h.b16 %v101
    %v1177 = vunpack.c.l.b16 %v102
    %v1178 = vunpack.c.h.b16 %v102
    %v1179 = vunpack.c.l.b16 %v103
    %v1180 = vunpack.c.h.b16 %v103
    %v1181 = vunpack.c.l.b16 %v104
    %v1182 = vunpack.c.h.b16 %v104
    %v1183 = vunpack.c.l.b16 %v105
    %v1184 = vunpack.c.h.b16 %v105
    %v1185 = vunpack.c.l.b16 %v106
    %v1186 = vunpack.c.h.b16 %v106
    %v1187 = vunpack.c.l.b16 %v107
    %v1188 = vunpack.c.h.b16 %v107
    %v1189 = vunpack.c.l.b16 %v108
    %v1190 = vunpack.c.h.b16 %v108
    %v1191 = vunpack.c.l.b16 %v109
    %v1192 = vunpack.c.h.b16 %v109
    %v1193 = vunpack.c.l.b16 %v110
    %v1194 = vunpack.c.h.b16 %v110
    %v1195 = vunpack.c.l.b16 %v111
    %v1196 = vunpack.c.h.b16 %v111
    %v1197 = vpack.c.b16 %v1135, %v1135
    %v1198 = vpack.c.b16 %v1136, %v1136
    %v1199 = vpack.c.b16 %v1137, %v1137
    %v1200 = vpack.c.b16 %v1138, %v1138
    %v1201 = vpack.c.b16 %v1139, %v1139
    %v1202 = vpack.c.b16 %v1140, %v1140
    %v1203 = vpack.c.b16 %v1141, %v1141
    %v1204 = vpack.c.b16 %v1142, %v1142
    %v1205 = vpack.c.b16 %v1143, %v1143
    %v1206 = vpack.c.b16 %v1144, %v1144
    %v1207 = vpack.c.b16 %v1145, %v1145
    %v1208 = vpack.c.b16 %v1146, %v1146
    %v1209 = vpack.c.b16 %v1147, %v1147
    %v1210 = vpack.c.b16 %v1148, %v1148
    %v1211 = vpack.c.b16 %v1149, %v1149
    %v1212 = vpack.c.b16 %v1150, %v1150
    %v1213 = vpack.c.b16 %v1151, %v1151
    %v1214 = vpack.c.b16 %v1152, %v1152
    %v1215 = vpack.c.b16 %v1153, %v1153
    %v1216 = vpack.c.b16 %v1154, %v1154
    %v1217 = vpack.c.b16 %v1155, %v1155
    %v1218 = vpack.c.b16 %v1156, %v1156
    %v1219 = vpack.c.b16 %v1157, %v1157
    %v1220 = vpack.c.b16 %v1158, %v1158
    %v1221 = vpack.c.b16 %v1159, %v1159
    %v1222 = vpack.c.b16 %v1160, %v1160
    %v1223 = vpack.c.b16 %v1161, %v1161
    %v1224 = vpack.c.b16 %v1162, %v1162
    %v1225 = vpack.c.b16 %v1163, %v1163
    %v1226 = vpack.c.b16 %v1164, %v1164
    %v1227 = vpack.c.b16 %v1165, %v1165
    %v1228 = vpack.c.b16 %v1166, %v1166
    %v1229 = vpack.c.b16 %v1167, %v1167
    %v1230 = vpack.c.b16 %v1168, %v1168
    %v1231 = vpack.c.b16 %v1169, %v1169
    %v1232 = vpack.c.b16 %v1170, %v1170
    %v1233 = vpack.c.b16 %v1171, %v1171
    %v1234 = vpack.c.b16 %v1172, %v1172
    %v1235 = vpack.c.b16 %v1173, %v1173
    %v1236 = vpack.c.b16 %v1174, %v1174
    %v1237 = vpack.c.b16 %v1175, %v1175
    %v1238 = vpack.c.b16 %v1176, %v1176
    %v1239 = vpack.c.b16 %v1177, %v1177
    %v1240 = vpack.c.b16 %v1178, %v1178
    %v1241 = vpack.c.b16 %v1179, %v1179
    %v1242 = vpack.c.b16 %v1180, %v1180
    %v1243 = vpack.c.b16 %v1181, %v1181
    %v1244 = vpack.c.b16 %v1182, %v1182
    %v1245 = vpack.c.b16 %v1183, %v1183
    %v1246 = vpack.c.b16 %v1184, %v1184
    %v1247 = vpack.c.b16 %v1185, %v1185
    %v1248 = vpack.c.b16 %v1186, %v1186
    %v1249 = vpack.c.b16 %v1187, %v1187
    %v1250 = vpack.c.b16 %v1188, %v1188
    %v1251 = vpack.c.b16 %v1189, %v1189
    %v1252 = vpack.c.b16 %v1190, %v1190
    %v1253 = vpack.c.b16 %v1191, %v1191
    %v1254 = vpack.c.b16 %v1192, %v1192
    %v1255 = vpack.c.b16 %v1193, %v1193
    %v1256 = vpack.c.b16 %v1194, %v1194
    %v1257 = vpack.c.b16 %v1195, %v1195
    %v1258 = vpack.c.b16 %v1196, %v1196
    %v2310 = vunpack.c.l.b16 %v112
    %v2311 = vunpack.c.l.b16 %v113
    %v2312 = vunpack.c.l.b16 %v114
    %v2313 = vunpack.c.l.b16 %v115
    %v2314 = vunpack.c.l.b16 %v116
    %v2315 = vunpack.c.l.b16 %v117
    %v2316 = vunpack.c.l.b16 %v118
    %v2317 = vunpack.c.l.b16 %v119
    %v2318 = vunpack.c.l.b16 %v120
    %v2319 = vunpack.c.l.b16 %v121
    %v2320 = vunpack.c.l.b16 %v122
    %v2321 = vunpack.c.l.b16 %v123
    %v2322 = vunpack.c.l.b16 %v124
    %v2323 = vunpack.c.l.b16 %v125
    %v2324 = vunpack.c.l.b16 %v126
    %v2325 = vunpack.c.l.b16 %v127
    %v2326 = vunpack.c.l.b16 %v128
    %v2327 = vunpack.c.l.b16 %v129
    %v2328 = vunpack.c.l.b16 %v130
    %v2329 = vunpack.c.l.b16 %v131
    %v2330 = vunpack.c.l.b16 %v132
    %v2331 = vunpack.c.l.b16 %v133
    %v2332 = vunpack.c.l.b16 %v134
    %v2333 = vunpack.c.l.b16 %v135
    %v2334 = vunpack.c.l.b16 %v136
    %v2335 = vunpack.c.l.b16 %v137
    %v2336 = vunpack.c.l.b16 %v138
    %v2337 = vunpack.c.l.b16 %v139
    %v2338 = vunpack.c.l.b16 %v140
    %v2339 = vunpack.c.l.b16 %v141
    %v2340 = vunpack.c.l.b16 %v142
    %v2341 = vunpack.c.l.b16 %v143
    %v2342 = vunpack.c.l.b16 %v144
    %v2343 = vunpack.c.l.b16 %v145
    %v2344 = vunpack.c.l.b16 %v146
    %v2345 = vunpack.c.l.b16 %v147
    %v2346 = vunpack.c.l.b16 %v148
    %v2347 = vunpack.c.l.b16 %v149
    %v2348 = vunpack.c.l.b16 %v150
    %v2349 = vunpack.c.l.b16 %v151
    %v2350 = vunpack.c.l.b16 %v152
    %v2351 = vunpack.c.l.b16 %v153
    %v2352 = vunpack.c.l.b16 %v154
    %v2353 = vunpack.c.l.b16 %v155
    %v2354 = vunpack.c.l.b16 %v156
    %v2355 = vunpack.c.l.b16 %v157
    %v2356 = vunpack.c.l.b16 %v158
    %v2357 = vunpack.c.l.b16 %v159
    %v2358 = vunpack.c.l.b16 %v160
    %v2359 = vunpack.c.l.b16 %v161
    %v2360 = vunpack.c.l.b16 %v162
    %v2361 = vunpack.c.l.b16 %v163
    %v2362 = vunpack.c.l.b16 %v164
    %v2363 = vunpack.c.l.b16 %v165
    %v2364 = vunpack.c.l.b16 %v166
    %v2365 = vunpack.c.l.b16 %v167
    %v2366 = vunpack.c.l.b16 %v168
    %v2367 = vunpack.c.l.b16 %v169
    %v2368 = vunpack.c.l.b16 %v170
    %v2369 = vunpack.c.l.b16 %v171
    %v2370 = vunpack.c.l.b16 %v172
    %v2371 = vunpack.c.l.b16 %v173
    %v2372 = vunpack.c.l.b16 %v174
    %v2373 = vunpack.c.l.b16 %v175
    %v2374 = vunpack.c.l.b16 %v176
    %v2375 = vunpack.c.l.b16 %v177
    %v2376 = vunpack.c.l.b16 %v178
    %v2377 = vunpack.c.l.b16 %v179
    %v2378 = vunpack.c.l.b16 %v180
    %v2379 = vunpack.c.l.b16 %v181
    %v2380 = vunpack.c.l.b16 %v182
    %v2381 = vunpack.c.l.b16 %v183
    %v2382 = vunpack.c.l.b16 %v184
    %v2383 = vunpack.c.l.b16 %v185
    %v2384 = vunpack.c.l.b16 %v186
    %v2385 = vunpack.c.l.b16 %v187
    %v2386 = vunpack.c.l.b16 %v188
    %v2387 = vunpack.c.l.b16 %v189
    %v2388 = vunpack.c.l.b16 %v190
    %v2389 = vunpack.c.l.b16 %v191
    %v2390 = vunpack.c.l.b16 %v192
    %v2391 = vunpack.c.l.b16 %v193
    %v2392 = vunpack.c.l.b16 %v194
    %v2393 = vunpack.c.l.b16 %v195
    %v2394 = vunpack.c.l.b16 %v196
    %v2395 = vunpack.c.l.b16 %v197
    %v2396 = vunpack.c.l.b16 %v198
    %v2397 = vunpack.c.l.b16 %v199
    %v2398 = vunpack.c.l.b16 %v200
    %v2399 = vunpack.c.l.b16 %v201
    %v2400 = vunpack.c.l.b16 %v202
    %v2401 = vunpack.c.l.b16 %v203
    %v2402 = vunpack.c.l.b16 %v204
    %v2403 = vunpack.c.l.b16 %v205
    %v2404 = vunpack.c.l.b16 %v206
    %v2405 = vunpack.c.l.b16 %v207
    %v2406 = vunpack.c.l.b16 %v208
    %v2407 = vunpack.c.l.b16 %v209
    %v2408 = vunpack.c.l.b16 %v210
    %v2409 = vunpack.c.l.b16 %v211
    %v2410 = vunpack.c.l.b16 %v212
    %v2411 = vunpack.c.l.b16 %v213
    %v2412 = vunpack.c.l.b16 %v214
    %v2413 = vunpack.c.l.b16 %v215
    %v2414 = vunpack.c.l.b16 %v216
    %v2415 = vunpack.c.l.b16 %v217
    %v2416 = vunpack.c.l.b16 %v218
    %v2417 = vunpack.c.l.b16 %v219
    %v2418 = vunpack.c.l.b16 %v220
    %v2419 = vunpack.c.l.b16 %v221
    %v2420 = vunpack.c.l.b16 %v222
    %v2421 = vunpack.c.l.b16 %v223
    %v2422 = vunpack.c.l.b16 %v224
    %v2423 = vunpack.c.l.b16 %v225
    %v2424 = vunpack.c.l.b16 %v226
    %v2425 = vunpack.c.l.b16 %v227
    %v2426 = vunpack.c.l.b16 %v228
    %v2427 = vunpack.c.l.b16 %v229
    %v2428 = vunpack.c.l.b16 %v230
    %v2429 = vunpack.c.l.b16 %v231
    %v2430 = vunpack.c.l.b16 %v232
    %v2431 = vunpack.c.l.b16 %v233
    %v2432 = vunpack.c.l.b16 %v234
    %v2433 = vunpack.c.l.b16 %v235
    %v2434 = vunpack.c.l.b16 %v236
    %v2435 = vunpack.c.l.b16 %v237
    %v2436 = vunpack.c.l.b16 %v238
    %v2437 = vunpack.c.l.b16 %v239
    %v2438 = vunpack.c.l.b16 %v240
    %v2439 = vunpack.c.l.b16 %v241
    %v2440 = vunpack.c.l.b16 %v242
    %v2441 = vunpack.c.l.b16 %v243
    %v2442 = vunpack.c.l.b16 %v244
    %v2443 = vunpack.c.l.b16 %v245
    %v2444 = vunpack.c.l.b16 %v246
    %v2445 = vunpack.c.l.b16 %v247
    %v2446 = vunpack.c.l.b16 %v248
    %v2447 = vunpack.c.l.b16 %v249
    %v2448 = vunpack.c.l.b16 %v250
    %v2449 = vunpack.c.l.b16 %v251
    %v2450 = vunpack.c.l.b16 %v252
    %v2451 = vunpack.c.l.b16 %v253
    %v2452 = vunpack.c.l.b16 %v254
    %v2453 = vunpack.c.l.b16 %v255
    %v2454 = vunpack.c.l.b16 %v256
    %v2455 = vunpack.c.l.b16 %v257
    %v2456 = vunpack.c.l.b16 %v258
    %v2457 = vunpack.c.l.b16 %v259
    %v2458 = vunpack.c.l.b16 %v260
    %v2459 = vunpack.c.l.b16 %v261
    %v2460 = vunpack.c.l.b16 %v262
    %v2461 = vunpack.c.l.b16 %v263
    %v2462 = vunpack.c.l.b16 %v264
    %v2463 = vunpack.c.l.b16 %v265
    %v2464 = vunpack.c.l.b16 %v266
    %v2465 = vunpack.c.l.b16 %v267
    %v2466 = vunpack.c.l.b16 %v268
    %v2467 = vunpack.c.l.b16 %v269
    %v2468 = vunpack.c.l.b16 %v270
    %v2469 = vunpack.c.l.b16 %v271
    %v2470 = vunpack.c.l.b16 %v272
    %v2471 = vunpack.c.l.b16 %v273
    %v2472 = vunpack.c.l.b16 %v274
    %v2473 = vunpack.c.l.b16 %v275
    %v2474 = vunpack.c.l.b16 %v276
    %v2475 = vunpack.c.l.b16 %v277
    %v2476 = vunpack.c.l.b16 %v278
    %v2477 = vunpack.c.l.b16 %v279
    %v2478 = vunpack.c.l.b16 %v280
    %v2479 = vunpack.c.l.b16 %v281
    %v2480 = vunpack.c.l.b16 %v282
    %v2481 = vunpack.c.l.b16 %v283
    %v2482 = vunpack.c.l.b16 %v284
    %v2483 = vunpack.c.l.b16 %v285
    %v2484 = vunpack.c.l.b16 %v286
    %v2485 = vunpack.c.l.b16 %v287
    %v2486 = vunpack.c.l.b16 %v288
    %v2487 = vunpack.c.l.b16 %v289
    %v2488 = vunpack.c.l.b16 %v290
    %v2489 = vunpack.c.l.b16 %v291
    %v2490 = vunpack.c.l.b16 %v292
    %v2491 = vunpack.c.l.b16 %v293
    %v2492 = vunpack.c.l.b16 %v294
    %v2493 = vunpack.c.l.b16 %v295
    %v2494 = vunpack.c.l.b16 %v296
    %v2495 = vunpack.c.l.b16 %v297
    %v2496 = vunpack.c.l.b16 %v298
    %v2497 = vunpack.c.l.b16 %v299
    %v2498 = vunpack.c.l.b16 %v300
    %v2499 = vunpack.c.l.b16 %v301
    %v2500 = vunpack.c.l.b16 %v302
    %v2501 = vunpack.c.l.b16 %v303
    %v2502 = vunpack.c.l.b16 %v304
    %v2503 = vunpack.c.l.b16 %v305
    %v2504 = vunpack.c.l.b16 %v306
    %v2505 = vunpack.c.l.b16 %v307
    %v2506 = vunpack.c.l.b16 %v308
    %v2507 = vunpack.c.l.b16 %v309
    %v2508 = vunpack.c.l.b16 %v310
    %v2509 = vunpack.c.l.b16 %v311
    %v2510 = vunpack.c.l.b16 %v312
    %v2511 = vunpack.c.l.b16 %v313
    %v2512 = vunpack.c.l.b16 %v314
    %v2513 = vunpack.c.l.b16 %v315
    %v2514 = vunpack.c.l.b16 %v316
    %v2515 = vunpack.c.l.b16 %v317
    %v2516 = vunpack.c.l.b16 %v318
    %v2517 = vunpack.c.l.b16 %v319
    %v2518 = vunpack.c.l.b16 %v320
    %v2519 = vunpack.c.l.b16 %v321
    %v2520 = vunpack.c.l.b16 %v322
    %v2521 = vunpack.c.l.b16 %v323
    %v2522 = vunpack.c.l.b16 %v324
    %v2523 = vunpack.c.l.b16 %v325
    %v2524 = vunpack.c.l.b16 %v326
    %v2525 = vunpack.c.l.b16 %v327
    %v2526 = vunpack.c.l.b16 %v328
    %v2527 = vunpack.c.l.b16 %v329
    %v2528 = vunpack.c.l.b16 %v330
    %v2529 = vunpack.c.l.b16 %v331
    %v2530 = vunpack.c.l.b16 %v332
    %v2531 = vunpack.c.l.b16 %v333
    %v2532 = vunpack.c.l.b16 %v334
    %v2533 = vunpack.c.l.b16 %v335
    %v2534 = vunpack.c.l.b16 %v336
    %v2535 = vunpack.c.l.b16 %v337
    %v2536 = vunpack.c.l.b16 %v338
    %v2537 = vunpack.c.l.b16 %v339
    %v2538 = vunpack.c.l.b16 %v340
    %v2539 = vunpack.c.l.b16 %v341
    %v2540 = vunpack.c.l.b16 %v342
    %v2541 = vunpack.c.l.b16 %v343
    %v2542 = vunpack.c.l.b16 %v344
    %v2543 = vunpack.c.l.b16 %v345
    %v2544 = vunpack.c.l.b16 %v346
    %v2545 = vunpack.c.l.b16 %v347
    %v2546 = vunpack.c.l.b16 %v348
    %v2547 = vunpack.c.l.b16 %v349
    %v2548 = vunpack.c.l.b16 %v350
    %v2549 = vunpack.c.l.b16 %v351
    %v2550 = vunpack.c.l.b16 %v352
    %v2551 = vunpack.c.l.b16 %v353
    %v2552 = vunpack.c.l.b16 %v354
    %v2553 = vunpack.c.l.b16 %v355
    %v2554 = vunpack.c.l.b16 %v356
    %v2555 = vunpack.c.l.b16 %v357
    %v2556 = vunpack.c.l.b16 %v358
    %v2557 = vunpack.c.l.b16 %v359
    %v2558 = vunpack.c.l.b16 %v360
    %v2559 = vunpack.c.l.b16 %v361
    %v2560 = vunpack.c.l.b16 %v362
    %v2561 = vunpack.c.l.b16 %v363
    %v2562 = vunpack.c.l.b16 %v364
    %v2563 = vunpack.c.l.b16 %v365
    %v2564 = vunpack.c.l.b16 %v366
    %v2565 = vunpack.c.l.b16 %v367
    %v2566 = vunpack.c.l.b16 %v368
    %v2567 = vunpack.c.l.b16 %v369
    %v2568 = vunpack.c.l.b16 %v370
    %v2569 = vunpack.c.l.b16 %v371
    %v2570 = vunpack.c.l.b16 %v372
    %v2571 = vunpack.c.l.b16 %v373
    %v2572 = vunpack.c.l.b16 %v374
    %v2573 = vunpack.c.l.b16 %v375
    %v2574 = vunpack.c.l.b16 %v376
    %v2575 = vunpack.c.l.b16 %v377
    %v2576 = vunpack.c.l.b16 %v378
    %v2577 = vunpack.c.l.b16 %v379
    %v2578 = vunpack.c.l.b16 %v380
    %v2579 = vunpack.c.l.b16 %v381
    %v2580 = vunpack.c.l.b16 %v382
    %v2581 = vunpack.c.l.b16 %v383
    %v2582 = vunpack.c.l.b16 %v384
    %v2583 = vunpack.c.l.b16 %v385
    %v2584 = vunpack.c.l.b16 %v386
    %v2585 = vunpack.c.l.b16 %v387
    %v2586 = vunpack.c.l.b16 %v388
    %v2587 = vunpack.c.l.b16 %v389
    %v2588 = vunpack.c.l.b16 %v390
    %v2589 = vunpack.c.l.b16 %v391
    %v2590 = vunpack.c.l.b16 %v392
    %v2591 = vunpack.c.l.b16 %v393
    %v2592 = vunpack.c.l.b16 %v394
    %v2593 = vunpack.c.l.b16 %v395
    %v2594 = vunpack.c.l.b16 %v396
    %v2595 = vunpack.c.l.b16 %v397
    %v2596 = vunpack.c.l.b16 %v398
    %v2597 = vunpack.c.l.b16 %v399
    %v2598 = vunpack.c.l.b16 %v400
    %v2599 = vunpack.c.l.b16 %v401
    %v2600 = vunpack.c.l.b16 %v402
    %v2601 = vunpack.c.l.b16 %v403
    %v2602 = vunpack.c.l.b16 %v404
    %v2603 = vunpack.c.l.b16 %v405
    %v2604 = vunpack.c.l.b16 %v406
    %v2605 = vunpack.c.l.b16 %v407
    %v2606 = vunpack.c.l.b16 %v408
    %v2607 = vunpack.c.l.b16 %v409
    %v2608 = vunpack.c.l.b16 %v410
    %v2609 = vunpack.c.l.b16 %v411
    %v2610 = vunpack.c.l.b16 %v412
    %v2611 = vunpack.c.l.b16 %v413
    %v2612 = vunpack.c.l.b16 %v414
    %v2613 = vunpack.c.l.b16 %v415
    %v2614 = vunpack.c.l.b16 %v416
    %v2615 = vunpack.c.l.b16 %v417
    %v2616 = vunpack.c.l.b16 %v418
    %v2617 = vunpack.c.l.b16 %v419
    %v2618 = vunpack.c.l.b16 %v420
    %v2619 = vunpack.c.l.b16 %v421
    %v2620 = vunpack.c.l.b16 %v422
    %v2621 = vunpack.c.l.b16 %v423
    %v2622 = vunpack.c.l.b16 %v424
    %v2623 = vunpack.c.l.b16 %v425
    %v2624 = vunpack.c.l.b16 %v426
    %v2625 = vunpack.c.l.b16 %v427
    %v2626 = vunpack.c.l.b16 %v428
    %v2627 = vunpack.c.l.b16 %v429
    %v2628 = vunpack.c.l.b16 %v430
    %v2629 = vunpack.c.l.b16 %v431
    %v2630 = vunpack.c.l.b16 %v432
    %v2631 = vunpack.c.l.b16 %v433
    %v2632 = vunpack.c.l.b16 %v434
    %v2633 = vunpack.c.l.b16 %v435
    %v2634 = vunpack.c.l.b16 %v436
    %v2635 = vunpack.c.l.b16 %v437
    %v2636 = vunpack.c.l.b16 %v438
    %v2637 = vunpack.c.l.b16 %v439
    %v2638 = vunpack.c.l.b16 %v440
    %v2639 = vunpack.c.l.b16 %v441
    %v2640 = vunpack.c.l.b16 %v442
    %v2641 = vunpack.c.l.b16 %v443
    %v2642 = vunpack.c.l.b16 %v444
    %v2643 = vunpack.c.l.b16 %v445
    %v2644 = vunpack.c.l.b16 %v446
    %v2645 = vunpack.c.l.b16 %v447
    %v2646 = vunpack.c.l.b16 %v448
    %v2647 = vunpack.c.l.b16 %v449
    %v2648 = vunpack.c.l.b16 %v450
    %v2649 = vunpack.c.l.b16 %v451
    %v2650 = vunpack.c.l.b16 %v452
    %v2651 = vunpack.c.l.b16 %v453
    %v2652 = vunpack.c.l.b16 %v454
    %v2653 = vunpack.c.l.b16 %v455
    %v2654 = vunpack.c.l.b16 %v456
    %v2655 = vunpack.c.l.b16 %v457
    %v2656 = vunpack.c.l.b16 %v458
    %v2657 = vunpack.c.l.b16 %v459
    %v2658 = vunpack.c.l.b16 %v460
    %v2659 = vunpack.c.l.b16 %v461
    %v2660 = vunpack.c.l.b16 %v462
    %v2661 = vunpack.c.l.b16 %v463
    %v2662 = vunpack.c.l.b16 %v464
    %v2663 = vunpack.c.l.b16 %v465
    %v2664 = vunpack.c.l.b16 %v466
    %v2665 = vunpack.c.l.b16 %v467
    %v2666 = vunpack.c.l.b16 %v468
    %v2667 = vunpack.c.l.b16 %v469
    %v2668 = vunpack.c.l.b16 %v470
    %v2669 = vunpack.c.l.b16 %v471
    %v2670 = vunpack.c.l.b16 %v472
    %v2671 = vunpack.c.l.b16 %v473
    %v2672 = vunpack.c.l.b16 %v474
    %v2673 = vunpack.c.l.b16 %v475
    %v2674 = vunpack.c.l.b16 %v476
    %v2675 = vunpack.c.l.b16 %v477
    %v2676 = vunpack.c.l.b16 %v478
    %v2677 = vunpack.c.l.b16 %v479
    %v2678 = vunpack.c.l.b16 %v480
    %v2679 = vunpack.c.l.b16 %v481
    %v2680 = vunpack.c.l.b16 %v482
    %v2681 = vunpack.c.l.b16 %v483
    %v2682 = vunpack.c.l.b16 %v484
    %v2683 = vunpack.c.l.b16 %v485
    %v2684 = vunpack.c.l.b16 %v486
    %v2685 = vunpack.c.l.b16 %v487
    %v2686 = vunpack.c.l.b16 %v488
    %v2687 = vunpack.c.l.b16 %v489
    %v2688 = vunpack.c.l.b16 %v490
    %v2689 = vunpack.c.l.b16 %v491
    %v2690 = vunpack.c.l.b16 %v492
    %v2691 = vunpack.c.l.b16 %v493
    %v2692 = vunpack.c.l.b16 %v494
    %v2693 = vunpack.c.l.b16 %v495
    %v2694 = vunpack.c.l.b16 %v496
    %v2695 = vunpack.c.l.b16 %v497
    %v2696 = vunpack.c.l.b16 %v498
    %v2697 = vunpack.c.l.b16 %v499
    %v2698 = vunpack.c.l.b16 %v500
    %v2699 = vunpack.c.l.b16 %v501
    %v2700 = vunpack.c.l.b16 %v502
    %v2701 = vunpack.c.l.b16 %v503
    %v2702 = vunpack.c.l.b16 %v504
    %v2703 = vunpack.c.l.b16 %v505
    %v2704 = vunpack.c.l.b16 %v506
    %v2705 = vunpack.c.l.b16 %v507
    %v2706 = vunpack.c.l.b16 %v508
    %v2707 = vunpack.c.l.b16 %v509
    %v2708 = vunpack.c.l.b16 %v510
    %v2709 = vunpack.c.l.b16 %v511
    %v2710 = vunpack.c.l.b16 %v512
    %v2711 = vunpack.c.l.b16 %v513
    %v2712 = vunpack.c.l.b16 %v514
    %v2713 = vunpack.c.l.b16 %v515
    %v2714 = vunpack.c.l.b16 %v516
    %v2715 = vunpack.c.l.b16 %v517
    %v2716 = vunpack.c.l.b16 %v518
    %v2717 = vunpack.c.l.b16 %v519
    %v2718 = vunpack.c.l.b16 %v520
    %v2719 = vunpack.c.l.b16 %v521
    %v2720 = vunpack.c.l.b16 %v522
    %v2721 = vunpack.c.l.b16 %v523
    %v2722 = vunpack.c.l.b16 %v524
    %v2723 = vunpack.c.l.b16 %v525
    %v2724 = vunpack.c.l.b16 %v526
    %v2725 = vunpack.c.l.b16 %v527
    %v2726 = vunpack.c.l.b16 %v528
    %v2727 = vunpack.c.l.b16 %v529
    %v2728 = vunpack.c.l.b16 %v530
    %v2729 = vunpack.c.l.b16 %v531
    %v2730 = vunpack.c.l.b16 %v532
    %v2731 = vunpack.c.l.b16 %v533
    %v2732 = vunpack.c.l.b16 %v534
    %v2733 = vunpack.c.l.b16 %v535
    %v2734 = vunpack.c.l.b16 %v536
    %v2735 = vunpack.c.l.b16 %v537
    %v2736 = vunpack.c.l.b16 %v538
    %v2737 = vunpack.c.l.b16 %v539
    %v2738 = vunpack.c.l.b16 %v540
    %v2739 = vunpack.c.l.b16 %v541
    %v2740 = vunpack.c.l.b16 %v542
    %v2741 = vunpack.c.l.b16 %v543
    %v2742 = vunpack.c.l.b16 %v544
    %v2743 = vunpack.c.l.b16 %v545
    %v2744 = vunpack.c.l.b16 %v546
    %v2745 = vunpack.c.l.b16 %v547
    %v2746 = vunpack.c.l.b16 %v548
    %v2747 = vunpack.c.l.b16 %v549
    %v2748 = vunpack.c.l.b16 %v550
    %v2749 = vunpack.c.l.b16 %v551
    %v2750 = vunpack.c.l.b16 %v552
    %v2751 = vunpack.c.l.b16 %v553
    %v2752 = vunpack.c.l.b16 %v554
    %v2753 = vunpack.c.l.b16 %v555
    %v2754 = vunpack.c.l.b16 %v556
    %v2755 = vunpack.c.l.b16 %v557
    %v2756 = vunpack.c.l.b16 %v558
    %v2757 = vunpack.c.l.b16 %v559
    %v2758 = vunpack.c.l.b16 %v560
    %v2759 = vunpack.c.l.b16 %v561
    %v2760 = vunpack.c.l.b16 %v562
    %v2761 = vunpack.c.l.b16 %v563
    %v2762 = vunpack.c.l.b16 %v564
    %v2763 = vunpack.c.l.b16 %v565
    %v2764 = vunpack.c.l.b16 %v566
    %v2765 = vunpack.c.l.b16 %v567
    %v2766 = vunpack.c.l.b16 %v568
    %v2767 = vunpack.c.l.b16 %v569
    %v2768 = vunpack.c.l.b16 %v570
    %v2769 = vunpack.c.l.b16 %v571
    %v2770 = vunpack.c.l.b16 %v572
    %v2771 = vunpack.c.l.b16 %v573
    %v2772 = vunpack.c.l.b16 %v574
    %v2773 = vunpack.c.l.b16 %v575
    %v2774 = vunpack.c.l.b16 %v576
    %v2775 = vunpack.c.l.b16 %v577
    %v2776 = vunpack.c.l.b16 %v578
    %v2777 = vunpack.c.l.b16 %v579
    %v2778 = vunpack.c.l.b16 %v580
    %v2779 = vunpack.c.l.b16 %v581
    %v2780 = vunpack.c.l.b16 %v582
    %v2781 = vunpack.c.l.b16 %v583
    %v2782 = vunpack.c.l.b16 %v584
    %v2783 = vunpack.c.l.b16 %v585
    %v2784 = vunpack.c.l.b16 %v586
    %v2785 = vunpack.c.l.b16 %v587
    %v2786 = vunpack.c.l.b16 %v588
    %v2787 = vunpack.c.l.b16 %v589
    %v2788 = vunpack.c.l.b16 %v590
    %v2789 = vunpack.c.l.b16 %v591
    %v2790 = vunpack.c.l.b16 %v592
    %v2791 = vunpack.c.l.b16 %v593
    %v2792 = vunpack.c.l.b16 %v594
    %v2793 = vunpack.c.l.b16 %v595
    %v2794 = vunpack.c.l.b16 %v596
    %v2795 = vunpack.c.l.b16 %v597
    %v2796 = vunpack.c.l.b16 %v598
    %v2797 = vunpack.c.l.b16 %v599
    %v2798 = vunpack.c.l.b16 %v600
    %v2799 = vunpack.c.l.b16 %v601
    %v2800 = vunpack.c.l.b16 %v602
    %v2801 = vunpack.c.l.b16 %v603
    %v2802 = vunpack.c.l.b16 %v604
    %v2803 = vunpack.c.l.b16 %v605
    %v2804 = vunpack.c.l.b16 %v606
    %v2805 = vunpack.c.l.b16 %v607
    %v2806 = vunpack.c.l.b16 %v608
    %v2807 = vunpack.c.l.b16 %v609
    %v2808 = vunpack.c.l.b16 %v610
    %v2809 = vunpack.c.l.b16 %v611
    %v2810 = vunpack.c.l.b16 %v612
    %v2811 = vunpack.c.l.b16 %v613
    %v2812 = vunpack.c.l.b16 %v614
    %v2813 = vunpack.c.l.b16 %v615
    %v2814 = vunpack.c.l.b16 %v616
    %v2815 = vunpack.c.l.b16 %v617
    %v2816 = vunpack.c.l.b16 %v618
    %v2817 = vunpack.c.l.b16 %v619
    %v2818 = vunpack.c.l.b16 %v620
    %v2819 = vunpack.c.l.b16 %v621
    %v2820 = vunpack.c.l.b16 %v622
    %v2821 = vunpack.c.l.b16 %v623
    %v2822 = vunpack.c.l.b16 %v624
    %v2823 = vunpack.c.l.b16 %v625
    %v2824 = vunpack.c.l.b16 %v626
    %v2825 = vunpack.c.l.b16 %v627
    %v2826 = vunpack.c.l.b16 %v628
    %v2827 = vunpack.c.l.b16 %v629
    %v2828 = vunpack.c.l.b16 %v630
    %v2829 = vunpack.c.l.b16 %v631
    %v2830 = vunpack.c.l.b16 %v632
    %v2831 = vunpack.c.l.b16 %v633
    %v2832 = vunpack.c.l.b16 %v634
    %v2833 = vunpack.c.l.b16 %v635
    %v2834 = vunpack.c.l.b16 %v636
    %v2835 = vunpack.c.l.b16 %v637
    %v2836 = vunpack.c.l.b16 %v638
    %v2837 = vunpack.c.l.b16 %v639
    %v2838 = vunpack.c.l.b16 %v640
    %v2839 = vunpack.c.l.b16 %v641
    %v2840 = vunpack.c.l.b16 %v642
    %v2841 = vunpack.c.l.b16 %v643
    %v2842 = vunpack.c.l.b16 %v644
    %v2843 = vunpack.c.l.b16 %v645
    %v2844 = vunpack.c.l.b16 %v646
    %v2845 = vunpack.c.l.b16 %v647
    %v2846 = vunpack.c.l.b16 %v648
    %v2847 = vunpack.c.l.b16 %v649
    %v2848 = vunpack.c.l.b16 %v650
    %v2849 = vunpack.c.l.b16 %v651
    %v2850 = vunpack.c.l.b16 %v652
    %v2851 = vunpack.c.l.b16 %v653
    %v2852 = vunpack.c.l.b16 %v654
    %v2853 = vunpack.c.l.b16 %v655
    %v2854 = vunpack.c.l.b16 %v656
    %v2855 = vunpack.c.l.b16 %v657
    %v2856 = vunpack.c.l.b16 %v658
    %v2857 = vunpack.c.l.b16 %v659
    %v2858 = vunpack.c.l.b16 %v660
    %v2859 = vunpack.c.l.b16 %v661
    %v2860 = vunpack.c.l.b16 %v662
    %v2861 = vunpack.c.l.b16 %v663
    %v2862 = vunpack.c.l.b16 %v664
    %v2863 = vunpack.c.l.b16 %v665
    %v2864 = vunpack.c.l.b16 %v666
    %v2865 = vunpack.c.l.b16 %v667
    %v2866 = vunpack.c.l.b16 %v668
    %v2867 = vunpack.c.l.b16 %v669
    %v2868 = vunpack.c.l.b16 %v670
    %v2869 = vunpack.c.l.b16 %v671
    %v2870 = vunpack.c.l.b16 %v672
    %v2871 = vunpack.c.l.b16 %v673
    %v2872 = vunpack.c.l.b16 %v674
    %v2873 = vunpack.c.l.b16 %v675
    %v2874 = vunpack.c.l.b16 %v676
    %v2875 = vunpack.c.l.b16 %v677
    %v2876 = vunpack.c.l.b16 %v678
    %v2877 = vunpack.c.l.b16 %v679
    %v2878 = vunpack.c.l.b16 %v680
    %v2879 = vunpack.c.l.b16 %v681
    %v2880 = vunpack.c.l.b16 %v682
    %v2881 = vunpack.c.l.b16 %v683
    %v2882 = vunpack.c.l.b16 %v684
    %v2883 = vunpack.c.l.b16 %v685
    %v2884 = vunpack.c.l.b16 %v686
    %v2885 = vunpack.c.l.b16 %v687
    %v2886 = vunpack.c.l.b16 %v688
    %v2887 = vunpack.c.l.b16 %v689
    %v2888 = vunpack.c.l.b16 %v690
    %v2889 = vunpack.c.l.b16 %v691
    %v2890 = vunpack.c.l.b16 %v692
    %v2891 = vunpack.c.l.b16 %v693
    %v2892 = vunpack.c.l.b16 %v694
    %v2893 = vunpack.c.l.b16 %v695
    %v2894 = vunpack.c.l.b16 %v696
    %v2895 = vunpack.c.l.b16 %v697
    %v2896 = vunpack.c.l.b16 %v698
    %v2897 = vunpack.c.l.b16 %v699
    %v2898 = vunpack.c.l.b16 %v700
    %v2899 = vunpack.c.l.b16 %v701
    %v2900 = vunpack.c.l.b16 %v702
    %v2901 = vunpack.c.l.b16 %v703
    %v2902 = vunpack.c.l.b16 %v704
    %v2903 = vunpack.c.l.b16 %v705
    %v2904 = vunpack.c.l.b16 %v706
    %v2905 = vunpack.c.l.b16 %v707
    %v2906 = vunpack.c.l.b16 %v708
    %v2907 = vunpack.c.l.b16 %v709
    %v2908 = vunpack.c.l.b16 %v710
    %v2909 = vunpack.c.l.b16 %v711
    %v2910 = vunpack.c.l.b16 %v712
    %v2911 = vunpack.c.l.b16 %v713
    %v2912 = vunpack.c.l.b16 %v714
    %v2913 = vunpack.c.l.b16 %v715
    %v2914 = vunpack.c.l.b16 %v716
    %v2915 = vunpack.c.l.b16 %v717
    %v2916 = vunpack.c.l.b16 %v718
    %v2917 = vunpack.c.l.b16 %v719
    %v2918 = vunpack.c.l.b16 %v720
    %v2919 = vunpack.c.l.b16 %v721
    %v2920 = vunpack.c.l.b16 %v722
    %v2921 = vunpack.c.l.b16 %v723
    %v2922 = vunpack.c.l.b16 %v724
    %v2923 = vunpack.c.l.b16 %v725
    %v2924 = vunpack.c.l.b16 %v726
    %v2925 = vunpack.c.l.b16 %v727
    %v2926 = vunpack.c.l.b16 %v728
    %v2927 = vunpack.c.l.b16 %v729
    %v2928 = vunpack.c.l.b16 %v730
    %v2929 = vunpack.c.l.b16 %v731
    %v2930 = vunpack.c.l.b16 %v732
    %v2931 = vunpack.c.l.b16 %v733
    %v2932 = vunpack.c.l.b16 %v734
    %v2933 = vunpack.c.l.b16 %v735
    %v2934 = vunpack.c.l.b16 %v736
    %v2935 = vunpack.c.l.b16 %v737
    %v2936 = vunpack.c.l.b16 %v738
    %v2937 = vunpack.c.l.b16 %v739
    %v2938 = vunpack.c.l.b16 %v740
    %v2939 = vunpack.c.l.b16 %v741
    %v2940 = vunpack.c.l.b16 %v742
    %v2941 = vunpack.c.l.b16 %v743
    %v2942 = vunpack.c.l.b16 %v744
    %v2943 = vunpack.c.l.b16 %v745
    %v2944 = vunpack.c.l.b16 %v746
    %v2945 = vunpack.c.l.b16 %v747
    %v2946 = vunpack.c.l.b16 %v748
    %v2947 = vunpack.c.l.b16 %v749
    %v2948 = vunpack.c.l.b16 %v750
    %v2949 = vunpack.c.l.b16 %v751
    %v2950 = vunpack.c.l.b16 %v752
    %v2951 = vunpack.c.l.b16 %v753
    %v2952 = vunpack.c.l.b16 %v754
    %v2953 = vunpack.c.l.b16 %v755
    %v2954 = vunpack.c.l.b16 %v756
    %v2955 = vunpack.c.l.b16 %v757
    %v2956 = vunpack.c.l.b16 %v758
    %v2957 = vunpack.c.l.b16 %v759
    %v2958 = vunpack.c.l.b16 %v760
    %v2959 = vunpack.c.l.b16 %v761
    %v2960 = vunpack.c.l.b16 %v762
    %v2961 = vunpack.c.l.b16 %v763
    %v2962 = vunpack.c.l.b16 %v764
    %v2963 = vunpack.c.l.b16 %v765
    %v2964 = vunpack.c.l.b16 %v766
    %v2965 = vunpack.c.l.b16 %v767
    %v2966 = vunpack.c.l.b16 %v768
    %v2967 = vunpack.c.l.b16 %v769
    %v2968 = vunpack.c.l.b16 %v770
    %v2969 = vunpack.c.l.b16 %v771
    %v2970 = vunpack.c.l.b16 %v772
    %v2971 = vunpack.c.l.b16 %v773
    %v2972 = vunpack.c.l.b16 %v774
    %v2973 = vunpack.c.l.b16 %v775
    %v2974 = vunpack.c.l.b16 %v776
    %v2975 = vunpack.c.l.b16 %v777
    %v2976 = vunpack.c.l.b16 %v778
    %v2977 = vunpack.c.l.b16 %v779
    %v2978 = vunpack.c.l.b16 %v780
    %v2979 = vunpack.c.l.b16 %v781
    %v2980 = vunpack.c.l.b16 %v782
    %v2981 = vunpack.c.l.b16 %v783
    %v2982 = vunpack.c.l.b16 %v784
    %v2983 = vunpack.c.l.b16 %v785
    %v2984 = vunpack.c.l.b16 %v786
    %v2985 = vunpack.c.l.b16 %v787
    %v2986 = vunpack.c.l.b16 %v788
    %v2987 = vunpack.c.l.b16 %v789
    %v2988 = vunpack.c.l.b16 %v790
    %v2989 = vunpack.c.l.b16 %v791
    %v2990 = vunpack.c.l.b16 %v792
    %v2991 = vunpack.c.l.b16 %v793
    %v2992 = vunpack.c.l.b16 %v794
    %v2993 = vunpack.c.l.b16 %v795
    %v2994 = vunpack.c.l.b16 %v796
    %v2995 = vunpack.c.l.b16 %v797
    %v2996 = vunpack.c.l.b16 %v798
    %v2997 = vunpack.c.l.b16 %v799
    %v2998 = vunpack.c.l.b16 %v800
    %v2999 = vunpack.c.l.b16 %v801
    %v3000 = vunpack.c.l.b16 %v802
    %v3001 = vunpack.c.l.b16 %v803
    %v3002 = vunpack.c.l.b16 %v804
    %v3003 = vunpack.c.l.b16 %v805
    %v3004 = vunpack.c.l.b16 %v806
    %v3005 = vunpack.c.l.b16 %v807
    %v3006 = vunpack.c.l.b16 %v808
    %v3007 = vunpack.c.l.b16 %v809
    %v3008 = vunpack.c.l.b16 %v810
    %v3009 = vunpack.c.l.b16 %v811
    %v3010 = vunpack.c.l.b16 %v812
    %v3011 = vunpack.c.l.b16 %v813
    %v3012 = vunpack.c.l.b16 %v814
    %v3013 = vunpack.c.l.b16 %v815
    %v3014 = vunpack.c.l.b16 %v816
    %v3015 = vunpack.c.l.b16 %v817
    %v3016 = vunpack.c.l.b16 %v818
    %v3017 = vunpack.c.l.b16 %v819
    %v3018 = vunpack.c.l.b16 %v820
    %v3019 = vunpack.c.l.b16 %v821
    %v3020 = vunpack.c.l.b16 %v822
    %v3021 = vunpack.c.l.b16 %v823
    %v3022 = vunpack.c.l.b16 %v824
    %v3023 = vunpack.c.l.b16 %v825
    %v3024 = vunpack.c.l.b16 %v826
    %v3025 = vunpack.c.l.b16 %v827
    %v3026 = vunpack.c.l.b16 %v828
    %v3027 = vunpack.c.l.b16 %v829
    %v3028 = vunpack.c.l.b16 %v830
    %v3029 = vunpack.c.l.b16 %v831
    %v3030 = vunpack.c.l.b16 %v832
    %v3031 = vunpack.c.l.b16 %v833
    %v3032 = vunpack.c.l.b16 %v834
    %v3033 = vunpack.c.l.b16 %v835
    %v3034 = vunpack.c.l.b16 %v836
    %v3035 = vunpack.c.l.b16 %v837
    %v3036 = vunpack.c.l.b16 %v838
    %v3037 = vunpack.c.l.b16 %v839
    %v3038 = vunpack.c.l.b16 %v840
    %v3039 = vunpack.c.l.b16 %v841
    %v3040 = vunpack.c.l.b16 %v842
    %v3041 = vunpack.c.l.b16 %v843
    %v3042 = vunpack.c.l.b16 %v844
    %v3043 = vunpack.c.l.b16 %v845
    %v3044 = vunpack.c.l.b16 %v846
    %v3045 = vunpack.c.l.b16 %v847
    %v3046 = vunpack.c.l.b16 %v848
    %v3047 = vunpack.c.l.b16 %v849
    %v3048 = vunpack.c.l.b16 %v850
    %v3049 = vunpack.c.l.b16 %v851
    %v3050 = vunpack.c.l.b16 %v852
    %v3051 = vunpack.c.l.b16 %v853
    %v3052 = vunpack.c.l.b16 %v854
    %v3053 = vunpack.c.l.b16 %v855
    %v3054 = vunpack.c.l.b16 %v856
    %v3055 = vunpack.c.l.b16 %v857
    %v3056 = vunpack.c.l.b16 %v858
    %v3057 = vunpack.c.l.b16 %v859
    %v3058 = vunpack.c.l.b16 %v860
    %v3059 = vunpack.c.l.b16 %v861
    %v3060 = vunpack.c.l.b16 %v862
    %v3061 = vunpack.c.l.b16 %v863
    %v3062 = vunpack.c.l.b16 %v864
    %v3063 = vunpack.c.l.b16 %v865
    %v3064 = vunpack.c.l.b16 %v866
    %v3065 = vunpack.c.l.b16 %v867
    %v3066 = vunpack.c.l.b16 %v868
    %v3067 = vunpack.c.l.b16 %v869
    %v3068 = vunpack.c.l.b16 %v870
    %v3069 = vunpack.c.l.b16 %v871
    %v3070 = vunpack.c.l.b16 %v872
    %v3071 = vunpack.c.l.b16 %v873
    %v3072 = vunpack.c.l.b16 %v874
    %v3073 = vunpack.c.l.b16 %v875
    %v3074 = vunpack.c.l.b16 %v876
    %v3075 = vunpack.c.l.b16 %v877
    %v3076 = vunpack.c.l.b16 %v878
    %v3077 = vunpack.c.l.b16 %v879
    %v3078 = vunpack.c.l.b16 %v880
    %v3079 = vunpack.c.l.b16 %v881
    %v3080 = vunpack.c.l.b16 %v882
    %v3081 = vunpack.c.l.b16 %v883
    %v3082 = vunpack.c.l.b16 %v884
    %v3083 = vunpack.c.l.b16 %v885
    %v3084 = vunpack.c.l.b16 %v886
    %v3085 = vunpack.c.l.b16 %v887
    %v3086 = vunpack.c.l.b16 %v888
    %v3087 = vunpack.c.l.b16 %v889
    %v3088 = vunpack.c.l.b16 %v890
    %v3089 = vunpack.c.l.b16 %v891
    %v3090 = vunpack.c.l.b16 %v892
    %v3091 = vunpack.c.l.b16 %v893
    %v3092 = vunpack.c.l.b16 %v894
    %v3093 = vunpack.c.l.b16 %v895
    %v3094 = vunpack.c.l.b16 %v896
    %v3095 = vunpack.c.l.b16 %v897
    %v3096 = vunpack.c.l.b16 %v898
    %v3097 = vunpack.c.l.b16 %v899
    %v3098 = vunpack.c.l.b16 %v900
    %v3099 = vunpack.c.l.b16 %v901
    %v3100 = vunpack.c.l.b16 %v902
    %v3101 = vunpack.c.l.b16 %v903
    %v3102 = vunpack.c.l.b16 %v904
    %v3103 = vunpack.c.l.b16 %v905
    %v3104 = vunpack.c.l.b16 %v906
    %v3105 = vunpack.c.l.b16 %v907
    %v3106 = vunpack.c.l.b16 %v908
    %v3107 = vunpack.c.l.b16 %v909
    %v3108 = vunpack.c.l.b16 %v910
    %v3109 = vunpack.c.l.b16 %v911
    %v3110 = vunpack.c.l.b16 %v912
    %v3111 = vunpack.c.l.b16 %v913
    %v3112 = vunpack.c.l.b16 %v914
    %v3113 = vunpack.c.l.b16 %v915
    %v3114 = vunpack.c.l.b16 %v916
    %v3115 = vunpack.c.l.b16 %v917
    %v3116 = vunpack.c.l.b16 %v918
    %v3117 = vunpack.c.l.b16 %v919
    %v3118 = vunpack.c.l.b16 %v920
    %v3119 = vunpack.c.l.b16 %v921
    %v3120 = vunpack.c.l.b16 %v922
    %v3121 = vunpack.c.l.b16 %v923
    %v3122 = vunpack.c.l.b16 %v924
    %v3123 = vunpack.c.l.b16 %v925
    %v3124 = vunpack.c.l.b16 %v926
    %v3125 = vunpack.c.l.b16 %v927
    %v3126 = vunpack.c.l.b16 %v928
    %v3127 = vunpack.c.l.b16 %v929
    %v3128 = vunpack.c.l.b16 %v930
    %v3129 = vunpack.c.l.b16 %v931
    %v3130 = vunpack.c.l.b16 %v932
    %v3131 = vunpack.c.l.b16 %v933
    %v3132 = vunpack.c.l.b16 %v934
    %v3133 = vunpack.c.l.b16 %v935
    %v3134 = vunpack.c.l.b16 %v936
    %v3135 = vunpack.c.l.b16 %v937
    %v3136 = vunpack.c.l.b16 %v938
    %v3137 = vunpack.c.l.b16 %v939
    %v3138 = vunpack.c.l.b16 %v940
    %v3139 = vunpack.c.l.b16 %v941
    %v3140 = vunpack.c.l.b16 %v942
    %v3141 = vunpack.c.l.b16 %v943
    %v3142 = vunpack.c.l.b16 %v944
    %v3143 = vunpack.c.l.b16 %v945
    %v3144 = vunpack.c.l.b16 %v946
    %v3145 = vunpack.c.l.b16 %v947
    %v3146 = vunpack.c.l.b16 %v948
    %v3147 = vunpack.c.l.b16 %v949
    %v3148 = vunpack.c.l.b16 %v950
    %v3149 = vunpack.c.l.b16 %v951
    %v3150 = vunpack.c.l.b16 %v952
    %v3151 = vunpack.c.l.b16 %v953
    %v3152 = vunpack.c.l.b16 %v954
    %v3153 = vunpack.c.l.b16 %v955
    %v3154 = vunpack.c.l.b16 %v956
    %v3155 = vunpack.c.l.b16 %v957
    %v3156 = vunpack.c.l.b16 %v958
    %v3157 = vunpack.c.l.b16 %v959
    %v3158 = vunpack.c.l.b16 %v960
    %v3159 = vunpack.c.l.b16 %v961
    %v3160 = vunpack.c.l.b16 %v962
    %v3161 = vunpack.c.l.b16 %v963
    %v3162 = vunpack.c.l.b16 %v964
    %v3163 = vunpack.c.l.b16 %v965
    %v3164 = vunpack.c.l.b16 %v966
    %v3165 = vunpack.c.l.b16 %v967
    %v3166 = vunpack.c.l.b16 %v968
    %v3167 = vunpack.c.l.b16 %v969
    %v3168 = vunpack.c.l.b16 %v970
    %v3169 = vunpack.c.l.b16 %v971
    %v3170 = vunpack.c.l.b16 %v972
    %v3171 = vunpack.c.l.b16 %v973
    %v3172 = vunpack.c.l.b16 %v974
    %v3173 = vunpack.c.l.b16 %v975
    %v3174 = vunpack.c.l.b16 %v976
    %v3175 = vunpack.c.l.b16 %v977
    %v3176 = vunpack.c.l.b16 %v978
    %v3177 = vunpack.c.l.b16 %v979
    %v3178 = vunpack.c.l.b16 %v980
    %v3179 = vunpack.c.l.b16 %v981
    %v3180 = vunpack.c.l.b16 %v982
    %v3181 = vunpack.c.l.b16 %v983
    %v3182 = vunpack.c.l.b16 %v984
    %v3183 = vunpack.c.l.b16 %v985
    %v3184 = vunpack.c.l.b16 %v986
    %v3185 = vunpack.c.l.b16 %v987
    %v3186 = vunpack.c.l.b16 %v988
    %v3187 = vunpack.c.l.b16 %v989
    %v3188 = vunpack.c.l.b16 %v990
    %v3189 = vunpack.c.l.b16 %v991
    %v3190 = vunpack.c.l.b16 %v992
    %v3191 = vunpack.c.l.b16 %v993
    %v3192 = vunpack.c.l.b16 %v994
    %v3193 = vunpack.c.l.b16 %v995
    %v3194 = vunpack.c.l.b16 %v996
    %v3195 = vunpack.c.l.b16 %v997
    %v3196 = vunpack.c.l.b16 %v998
    %v3197 = vunpack.c.l.b16 %v999
    %v3198 = vunpack.c.l.b16 %v1000
    %v3199 = vunpack.c.l.b16 %v1001
    %v3200 = vunpack.c.l.b16 %v1002
    %v3201 = vunpack.c.l.b16 %v1003
    %v3202 = vunpack.c.l.b16 %v1004
    %v3203 = vunpack.c.l.b16 %v1005
    %v3204 = vunpack.c.l.b16 %v1006
    %v3205 = vunpack.c.l.b16 %v1007
    %v3206 = vunpack.c.l.b16 %v1008
    %v3207 = vunpack.c.l.b16 %v1009
    %v3208 = vunpack.c.l.b16 %v1010
    %v3209 = vunpack.c.l.b16 %v1011
    %v3210 = vunpack.c.l.b16 %v1012
    %v3211 = vunpack.c.l.b16 %v1013
    %v3212 = vunpack.c.l.b16 %v1014
    %v3213 = vunpack.c.l.b16 %v1015
    %v3214 = vunpack.c.l.b16 %v1016
    %v3215 = vunpack.c.l.b16 %v1017
    %v3216 = vunpack.c.l.b16 %v1018
    %v3217 = vunpack.c.l.b16 %v1019
    %v3218 = vunpack.c.l.b16 %v1020
    %v3219 = vunpack.c.l.b16 %v1021
    %v3220 = vunpack.c.l.b16 %v1022
    %v3221 = vunpack.c.l.b16 %v1023
    %v3222 = vunpack.c.l.b16 %v1024
    %v3223 = vunpack.c.l.b16 %v1025
    %v3224 = vunpack.c.l.b16 %v1026
    %v3225 = vunpack.c.l.b16 %v1027
    %v3226 = vunpack.c.l.b16 %v1028
    %v3227 = vunpack.c.l.b16 %v1029
    %v3228 = vunpack.c.l.b16 %v1030
    %v3229 = vunpack.c.l.b16 %v1031
    %v3230 = vunpack.c.l.b16 %v1032
    %v3231 = vunpack.c.l.b16 %v1033
    %v3232 = vunpack.c.l.b16 %v1034
    %v3233 = vunpack.c.l.b16 %v1035
    %v3234 = vunpack.c.l.b16 %v1036
    %v3235 = vunpack.c.l.b16 %v1037
    %v3236 = vunpack.c.l.b16 %v1038
    %v3237 = vunpack.c.l.b16 %v1039
    %v3238 = vunpack.c.l.b16 %v1040
    %v3239 = vunpack.c.l.b16 %v1041
    %v3240 = vunpack.c.l.b16 %v1042
    %v3241 = vunpack.c.l.b16 %v1043
    %v3242 = vunpack.c.l.b16 %v1044
    %v3243 = vunpack.c.l.b16 %v1045
    %v3244 = vunpack.c.l.b16 %v1046
    %v3245 = vunpack.c.l.b16 %v1047
    %v3246 = vunpack.c.l.b16 %v1048
    %v3247 = vunpack.c.l.b16 %v1049
    %v3248 = vunpack.c.l.b16 %v1050
    %v3249 = vunpack.c.l.b16 %v1051
    %v3250 = vunpack.c.l.b16 %v1052
    %v3251 = vunpack.c.l.b16 %v1053
    %v3252 = vunpack.c.l.b16 %v1054
    %v3253 = vunpack.c.l.b16 %v1055
    %v3254 = vunpack.c.l.b16 %v1056
    %v3255 = vunpack.c.l.b16 %v1057
    %v3256 = vunpack.c.l.b16 %v1058
    %v3257 = vunpack.c.l.b16 %v1059
    %v3258 = vunpack.c.l.b16 %v1060
    %v3259 = vunpack.c.l.b16 %v1061
    %v3260 = vunpack.c.l.b16 %v1062
    %v3261 = vunpack.c.l.b16 %v1063
    %v3262 = vunpack.c.l.b16 %v1064
    %v3263 = vunpack.c.l.b16 %v1065
    %v3264 = vunpack.c.l.b16 %v1066
    %v3265 = vunpack.c.l.b16 %v1067
    %v3266 = vunpack.c.l.b16 %v1068
    %v3267 = vunpack.c.l.b16 %v1069
    %v3268 = vunpack.c.l.b16 %v1070
    %v3269 = vunpack.c.l.b16 %v1071
    %v3270 = vunpack.c.l.b16 %v1072
    %v3271 = vunpack.c.l.b16 %v1073
    %v3272 = vunpack.c.l.b16 %v1074
    %v3273 = vunpack.c.l.b16 %v1075
    %v3274 = vunpack.c.l.b16 %v1076
    %v3275 = vunpack.c.l.b16 %v1077
    %v3276 = vunpack.c.l.b16 %v1078
    %v3277 = vunpack.c.l.b16 %v1079
    %v3278 = vunpack.c.l.b16 %v1080
    %v3279 = vunpack.c.l.b16 %v1081
    %v3280 = vunpack.c.l.b16 %v1082
    %v3281 = vunpack.c.l.b16 %v1083
    %v3282 = vunpack.c.l.b16 %v1084
    %v3283 = vunpack.c.l.b16 %v1085
    %v3284 = vunpack.c.l.b16 %v1086
    %v3285 = vunpack.c.l.b16 %v1087
    %v3286 = vunpack.c.l.b16 %v1088
    %v3287 = vunpack.c.l.b16 %v1089
    %v3288 = vunpack.c.l.b16 %v1090
    %v3289 = vunpack.c.l.b16 %v1091
    %v3290 = vunpack.c.l.b16 %v1092
    %v3291 = vunpack.c.l.b16 %v1093
    %v3292 = vunpack.c.l.b16 %v1094
    %v3293 = vunpack.c.l.b16 %v1095
    %v3294 = vunpack.c.l.b16 %v1096
    %v3295 = vunpack.c.l.b16 %v1097
    %v3296 = vunpack.c.l.b16 %v1098
    %v3297 = vunpack.c.l.b16 %v1099
    %v3298 = vunpack.c.l.b16 %v1100
    %v3299 = vunpack.c.l.b16 %v1101
    %v3300 = vpack.c.b16 %v2311, %v2310
    %v3301 = vpack.c.b16 %v2313, %v2312
    %v3302 = vpack.c.b16 %v2315, %v2314
    %v3303 = vpack.c.b16 %v2317, %v2316
    %v3304 = vpack.c.b16 %v2319, %v2318
    %v3305 = vpack.c.b16 %v2321, %v2320
    %v3306 = vpack.c.b16 %v2323, %v2322
    %v3307 = vpack.c.b16 %v2325, %v2324
    %v3308 = vpack.c.b16 %v2327, %v2326
    %v3309 = vpack.c.b16 %v2329, %v2328
    %v3310 = vpack.c.b16 %v2331, %v2330
    %v3311 = vpack.c.b16 %v2333, %v2332
    %v3312 = vpack.c.b16 %v2335, %v2334
    %v3313 = vpack.c.b16 %v2337, %v2336
    %v3314 = vpack.c.b16 %v2339, %v2338
    %v3315 = vpack.c.b16 %v2341, %v2340
    %v3316 = vpack.c.b16 %v2343, %v2342
    %v3317 = vpack.c.b16 %v2345, %v2344
    %v3318 = vpack.c.b16 %v2347, %v2346
    %v3319 = vpack.c.b16 %v2349, %v2348
    %v3320 = vpack.c.b16 %v2351, %v2350
    %v3321 = vpack.c.b16 %v2353, %v2352
    %v3322 = vpack.c.b16 %v2355, %v2354
    %v3323 = vpack.c.b16 %v2357, %v2356
    %v3324 = vpack.c.b16 %v2359, %v2358
    %v3325 = vpack.c.b16 %v2361, %v2360
    %v3326 = vpack.c.b16 %v2363, %v2362
    %v3327 = vpack.c.b16 %v2365, %v2364
    %v3328 = vpack.c.b16 %v2367, %v2366
    %v3329 = vpack.c.b16 %v2369, %v2368
    %v3330 = vpack.c.b16 %v2371, %v2370
    %v3331 = vpack.c.b16 %v2373, %v2372
    %v3332 = vpack.c.b16 %v2375, %v2374
    %v3333 = vpack.c.b16 %v2377, %v2376
    %v3334 = vpack.c.b16 %v2379, %v2378
    %v3335 = vpack.c.b16 %v2381, %v2380
    %v3336 = vpack.c.b16 %v2383, %v2382
    %v3337 = vpack.c.b16 %v2385, %v2384
    %v3338 = vpack.c.b16 %v2387, %v2386
    %v3339 = vpack.c.b16 %v2389, %v2388
    %v3340 = vpack.c.b16 %v2391, %v2390
    %v3341 = vpack.c.b16 %v2393, %v2392
    %v3342 = vpack.c.b16 %v2395, %v2394
    %v3343 = vpack.c.b16 %v2397, %v2396
    %v3344 = vpack.c.b16 %v2399, %v2398
    %v3345 = vpack.c.b16 %v2401, %v2400
    %v3346 = vpack.c.b16 %v2403, %v2402
    %v3347 = vpack.c.b16 %v2405, %v2404
    %v3348 = vpack.c.b16 %v2407, %v2406
    %v3349 = vpack.c.b16 %v2409, %v2408
    %v3350 = vpack.c.b16 %v2411, %v2410
    %v3351 = vpack.c.b16 %v2413, %v2412
    %v3352 = vpack.c.b16 %v2415, %v2414
    %v3353 = vpack.c.b16 %v2417, %v2416
    %v3354 = vpack.c.b16 %v2419, %v2418
    %v3355 = vpack.c.b16 %v2421, %v2420
    %v3356 = vpack.c.b16 %v2423, %v2422
    %v3357 = vpack.c.b16 %v2425, %v2424
    %v3358 = vpack.c.b16 %v2427, %v2426
    %v3359 = vpack.c.b16 %v2429, %v2428
    %v3360 = vpack.c.b16 %v2431, %v2430
    %v3361 = vpack.c.b16 %v2433, %v2432
    %v3362 = vpack.c.b16 %v2435, %v2434
    %v3363 = vpack.c.b16 %v2437, %v2436
    %v3364 = vpack.c.b16 %v2439, %v2438
    %v3365 = vpack.c.b16 %v2441, %v2440
    %v3366 = vpack.c.b16 %v2443, %v2442
    %v3367 = vpack.c.b16 %v2445, %v2444
    %v3368 = vpack.c.b16 %v2447, %v2446
    %v3369 = vpack.c.b16 %v2449, %v2448
    %v3370 = vpack.c.b16 %v2451, %v2450
    %v3371 = vpack.c.b16 %v2453, %v2452
    %v3372 = vpack.c.b16 %v2455, %v2454
    %v3373 = vpack.c.b16 %v2457, %v2456
    %v3374 = vpack.c.b16 %v2459, %v2458
    %v3375 = vpack.c.b16 %v2461, %v2460
    %v3376 = vpack.c.b16 %v2463, %v2462
    %v3377 = vpack.c.b16 %v2465, %v2464
    %v3378 = vpack.c.b16 %v2467, %v2466
    %v3379 = vpack.c.b16 %v2469, %v2468
    %v3380 = vpack.c.b16 %v2471, %v2470
    %v3381 = vpack.c.b16 %v2473, %v2472
    %v3382 = vpack.c.b16 %v2475, %v2474
    %v3383 = vpack.c.b16 %v2477, %v2476
    %v3384 = vpack.c.b16 %v2479, %v2478
    %v3385 = vpack.c.b16 %v2481, %v2480
    %v3386 = vpack.c.b16 %v2483, %v2482
    %v3387 = vpack.c.b16 %v2485, %v2484
    %v3388 = vpack.c.b16 %v2487, %v2486
    %v3389 = vpack.c.b16 %v2489, %v2488
    %v3390 = vpack.c.b16 %v2491, %v2490
    %v3391 = vpack.c.b16 %v2493, %v2492
    %v3392 = vpack.c.b16 %v2495, %v2494
    %v3393 = vpack.c.b16 %v2497, %v2496
    %v3394 = vpack.c.b16 %v2499, %v2498
    %v3395 = vpack.c.b16 %v2501, %v2500
    %v3396 = vpack.c.b16 %v2503, %v2502
    %v3397 = vpack.c.b16 %v2505, %v2504
    %v3398 = vpack.c.b16 %v2507, %v2506
    %v3399 = vpack.c.b16 %v2509, %v2508
    %v3400 = vpack.c.b16 %v2511, %v2510
    %v3401 = vpack.c.b16 %v2513, %v2512
    %v3402 = vpack.c.b16 %v2515, %v2514
    %v3403 = vpack.c.b16 %v2517, %v2516
    %v3404 = vpack.c.b16 %v2519, %v2518
    %v3405 = vpack.c.b16 %v2521, %v2520
    %v3406 = vpack.c.b16 %v2523, %v2522
    %v3407 = vpack.c.b16 %v2525, %v2524
    %v3408 = vpack.c.b16 %v2527, %v2526
    %v3409 = vpack.c.b16 %v2529, %v2528
    %v3410 = vpack.c.b16 %v2531, %v2530
    %v3411 = vpack.c.b16 %v2533, %v2532
    %v3412 = vpack.c.b16 %v2535, %v2534
    %v3413 = vpack.c.b16 %v2537, %v2536
    %v3414 = vpack.c.b16 %v2539, %v2538
    %v3415 = vpack.c.b16 %v2541, %v2540
    %v3416 = vpack.c.b16 %v2543, %v2542
    %v3417 = vpack.c.b16 %v2545, %v2544
    %v3418 = vpack.c.b16 %v2547, %v2546
    %v3419 = vpack.c.b16 %v2549, %v2548
    %v3420 = vpack.c.b16 %v2551, %v2550
    %v3421 = vpack.c.b16 %v2553, %v2552
    %v3422 = vpack.c.b16 %v2555, %v2554
    %v3423 = vpack.c.b16 %v2557, %v2556
    %v3424 = vpack.c.b16 %v2559, %v2558
    %v3425 = vpack.c.b16 %v2561, %v2560
    %v3426 = vpack.c.b16 %v2563, %v2562
    %v3427 = vpack.c.b16 %v2565, %v2564
    %v3428 = vpack.c.b16 %v2567, %v2566
    %v3429 = vpack.c.b16 %v2569, %v2568
    %v3430 = vpack.c.b16 %v2571, %v2570
    %v3431 = vpack.c.b16 %v2573, %v2572
    %v3432 = vpack.c.b16 %v2575, %v2574
    %v3433 = vpack.c.b16 %v2577, %v2576
    %v3434 = vpack.c.b16 %v2579, %v2578
    %v3435 = vpack.c.b16 %v2581, %v2580
    %v3436 = vpack.c.b16 %v2583, %v2582
    %v3437 = vpack.c.b16 %v2585, %v2584
    %v3438 = vpack.c.b16 %v2587, %v2586
    %v3439 = vpack.c.b16 %v2589, %v2588
    %v3440 = vpack.c.b16 %v2591, %v2590
    %v3441 = vpack.c.b16 %v2593, %v2592
    %v3442 = vpack.c.b16 %v2595, %v2594
    %v3443 = vpack.c.b16 %v2597, %v2596
    %v3444 = vpack.c.b16 %v2599, %v2598
    %v3445 = vpack.c.b16 %v2601, %v2600
    %v3446 = vpack.c.b16 %v2603, %v2602
    %v3447 = vpack.c.b16 %v2605, %v2604
    %v3448 = vpack.c.b16 %v2607, %v2606
    %v3449 = vpack.c.b16 %v2609, %v2608
    %v3450 = vpack.c.b16 %v2611, %v2610
    %v3451 = vpack.c.b16 %v2613, %v2612
    %v3452 = vpack.c.b16 %v2615, %v2614
    %v3453 = vpack.c.b16 %v2617, %v2616
    %v3454 = vpack.c.b16 %v2619, %v2618
    %v3455 = vpack.c.b16 %v2621, %v2620
    %v3456 = vpack.c.b16 %v2623, %v2622
    %v3457 = vpack.c.b16 %v2625, %v2624
    %v3458 = vpack.c.b16 %v2627, %v2626
    %v3459 = vpack.c.b16 %v2629, %v2628
    %v3460 = vpack.c.b16 %v2631, %v2630
    %v3461 = vpack.c.b16 %v2633, %v2632
    %v3462 = vpack.c.b16 %v2635, %v2634
    %v3463 = vpack.c.b16 %v2637, %v2636
    %v3464 = vpack.c.b16 %v2639, %v2638
    %v3465 = vpack.c.b16 %v2641, %v2640
    %v3466 = vpack.c.b16 %v2643, %v2642
    %v3467 = vpack.c.b16 %v2645, %v2644
    %v3468 = vpack.c.b16 %v2647, %v2646
    %v3469 = vpack.c.b16 %v2649, %v2648
    %v3470 = vpack.c.b16 %v2651, %v2650
    %v3471 = vpack.c.b16 %v2653, %v2652
    %v3472 = vpack.c.b16 %v2655, %v2654
    %v3473 = vpack.c.b16 %v2657, %v2656
    %v3474 = vpack.c.b16 %v2659, %v2658
    %v3475 = vpack.c.b16 %v2661, %v2660
    %v3476 = vpack.c.b16 %v2663, %v2662
    %v3477 = vpack.c.b16 %v2665, %v2664
    %v3478 = vpack.c.b16 %v2667, %v2666
    %v3479 = vpack.c.b16 %v2669, %v2668
    %v3480 = vpack.c.b16 %v2671, %v2670
    %v3481 = vpack.c.b16 %v2673, %v2672
    %v3482 = vpack.c.b16 %v2675, %v2674
    %v3483 = vpack.c.b16 %v2677, %v2676
    %v3484 = vpack.c.b16 %v2679, %v2678
    %v3485 = vpack.c.b16 %v2681, %v2680
    %v3486 = vpack.c.b16 %v2683, %v2682
    %v3487 = vpack.c.b16 %v2685, %v2684
    %v3488 = vpack.c.b16 %v2687, %v2686
    %v3489 = vpack.c.b16 %v2689, %v2688
    %v3490 = vpack.c.b16 %v2691, %v2690
    %v3491 = vpack.c.b16 %v2693, %v2692
    %v3492 = vpack.c.b16 %v2695, %v2694
    %v3493 = vpack.c.b16 %v2697, %v2696
    %v3494 = vpack.c.b16 %v2699, %v2698
    %v3495 = vpack.c.b16 %v2701, %v2700
    %v3496 = vpack.c.b16 %v2703, %v2702
    %v3497 = vpack.c.b16 %v2705, %v2704
    %v3498 = vpack.c.b16 %v2707, %v2706
    %v3499 = vpack.c.b16 %v2709, %v2708
    %v3500 = vpack.c.b16 %v2711, %v2710
    %v3501 = vpack.c.b16 %v2713, %v2712
    %v3502 = vpack.c.b16 %v2715, %v2714
    %v3503 = vpack.c.b16 %v2717, %v2716
    %v3504 = vpack.c.b16 %v2719, %v2718
    %v3505 = vpack.c.b16 %v2721, %v2720
    %v3506 = vpack.c.b16 %v2723, %v2722
    %v3507 = vpack.c.b16 %v2725, %v2724
    %v3508 = vpack.c.b16 %v2727, %v2726
    %v3509 = vpack.c.b16 %v2729, %v2728
    %v3510 = vpack.c.b16 %v2731, %v2730
    %v3511 = vpack.c.b16 %v2733, %v2732
    %v3512 = vpack.c.b16 %v2735, %v2734
    %v3513 = vpack.c.b16 %v2737, %v2736
    %v3514 = vpack.c.b16 %v2739, %v2738
    %v3515 = vpack.c.b16 %v2741, %v2740
    %v3516 = vpack.c.b16 %v2743, %v2742
    %v3517 = vpack.c.b16 %v2745, %v2744
    %v3518 = vpack.c.b16 %v2747, %v2746
    %v3519 = vpack.c.b16 %v2749, %v2748
    %v3520 = vpack.c.b16 %v2751, %v2750
    %v3521 = vpack.c.b16 %v2753, %v2752
    %v3522 = vpack.c.b16 %v2755, %v2754
    %v3523 = vpack.c.b16 %v2757, %v2756
    %v3524 = vpack.c.b16 %v2759, %v2758
    %v3525 = vpack.c.b16 %v2761, %v2760
    %v3526 = vpack.c.b16 %v2763, %v2762
    %v3527 = vpack.c.b16 %v2765, %v2764
    %v3528 = vpack.c.b16 %v2767, %v2766
    %v3529 = vpack.c.b16 %v2769, %v2768
    %v3530 = vpack.c.b16 %v2771, %v2770
    %v3531 = vpack.c.b16 %v2773, %v2772
    %v3532 = vpack.c.b16 %v2775, %v2774
    %v3533 = vpack.c.b16 %v2777, %v2776
    %v3534 = vpack.c.b16 %v2779, %v2778
    %v3535 = vpack.c.b16 %v2781, %v2780
    %v3536 = vpack.c.b16 %v2783, %v2782
    %v3537 = vpack.c.b16 %v2785, %v2784
    %v3538 = vpack.c.b16 %v2787, %v2786
    %v3539 = vpack.c.b16 %v2789, %v2788
    %v3540 = vpack.c.b16 %v2791, %v2790
    %v3541 = vpack.c.b16 %v2793, %v2792
    %v3542 = vpack.c.b16 %v2795, %v2794
    %v3543 = vpack.c.b16 %v2797, %v2796
    %v3544 = vpack.c.b16 %v2799, %v2798
    %v3545 = vpack.c.b16 %v2801, %v2800
    %v3546 = vpack.c.b16 %v2803, %v2802
    %v3547 = vpack.c.b16 %v2805, %v2804
    %v3548 = vpack.c.b16 %v2807, %v2806
    %v3549 = vpack.c.b16 %v2809, %v2808
    %v3550 = vpack.c.b16 %v2811, %v2810
    %v3551 = vpack.c.b16 %v2813, %v2812
    %v3552 = vpack.c.b16 %v2815, %v2814
    %v3553 = vpack.c.b16 %v2817, %v2816
    %v3554 = vpack.c.b16 %v2819, %v2818
    %v3555 = vpack.c.b16 %v2821, %v2820
    %v3556 = vpack.c.b16 %v2823, %v2822
    %v3557 = vpack.c.b16 %v2825, %v2824
    %v3558 = vpack.c.b16 %v2827, %v2826
    %v3559 = vpack.c.b16 %v2829, %v2828
    %v3560 = vpack.c.b16 %v2831, %v2830
    %v3561 = vpack.c.b16 %v2833, %v2832
    %v3562 = vpack.c.b16 %v2835, %v2834
    %v3563 = vpack.c.b16 %v2837, %v2836
    %v3564 = vpack.c.b16 %v2839, %v2838
    %v3565 = vpack.c.b16 %v2841, %v2840
    %v3566 = vpack.c.b16 %v2843, %v2842
    %v3567 = vpack.c.b16 %v2845, %v2844
    %v3568 = vpack.c.b16 %v2847, %v2846
    %v3569 = vpack.c.b16 %v2849, %v2848
    %v3570 = vpack.c.b16 %v2851, %v2850
    %v3571 = vpack.c.b16 %v2853, %v2852
    %v3572 = vpack.c.b16 %v2855, %v2854
    %v3573 = vpack.c.b16 %v2857, %v2856
    %v3574 = vpack.c.b16 %v2859, %v2858
    %v3575 = vpack.c.b16 %v2861, %v2860
    %v3576 = vpack.c.b16 %v2863, %v2862
    %v3577 = vpack.c.b16 %v2865, %v2864
    %v3578 = vpack.c.b16 %v2867, %v2866
    %v3579 = vpack.c.b16 %v2869, %v2868
    %v3580 = vpack.c.b16 %v2871, %v2870
    %v3581 = vpack.c.b16 %v2873, %v2872
    %v3582 = vpack.c.b16 %v2875, %v2874
    %v3583 = vpack.c.b16 %v2877, %v2876
    %v3584 = vpack.c.b16 %v2879, %v2878
    %v3585 = vpack.c.b16 %v2881, %v2880
    %v3586 = vpack.c.b16 %v2883, %v2882
    %v3587 = vpack.c.b16 %v2885, %v2884
    %v3588 = vpack.c.b16 %v2887, %v2886
    %v3589 = vpack.c.b16 %v2889, %v2888
    %v3590 = vpack.c.b16 %v2891, %v2890
    %v3591 = vpack.c.b16 %v2893, %v2892
    %v3592 = vpack.c.b16 %v2895, %v2894
    %v3593 = vpack.c.b16 %v2897, %v2896
    %v3594 = vpack.c.b16 %v2899, %v2898
    %v3595 = vpack.c.b16 %v2901, %v2900
    %v3596 = vpack.c.b16 %v2903, %v2902
    %v3597 = vpack.c.b16 %v2905, %v2904
    %v3598 = vpack.c.b16 %v2907, %v2906
    %v3599 = vpack.c.b16 %v2909, %v2908
    %v3600 = vpack.c.b16 %v2911, %v2910
    %v3601 = vpack.c.b16 %v2913, %v2912
    %v3602 = vpack.c.b16 %v2915, %v2914
    %v3603 = vpack.c.b16 %v2917, %v2916
    %v3604 = vpack.c.b16 %v2919, %v2918
    %v3605 = vpack.c.b16 %v2921, %v2920
    %v3606 = vpack.c.b16 %v2923, %v2922
    %v3607 = vpack.c.b16 %v2925, %v2924
    %v3608 = vpack.c.b16 %v2927, %v2926
    %v3609 = vpack.c.b16 %v2929, %v2928
    %v3610 = vpack.c.b16 %v2931, %v2930
    %v3611 = vpack.c.b16 %v2933, %v2932
    %v3612 = vpack.c.b16 %v2935, %v2934
    %v3613 = vpack.c.b16 %v2937, %v2936
    %v3614 = vpack.c.b16 %v2939, %v2938
    %v3615 = vpack.c.b16 %v2941, %v2940
    %v3616 = vpack.c.b16 %v2943, %v2942
    %v3617 = vpack.c.b16 %v2945, %v2944
    %v3618 = vpack.c.b16 %v2947, %v2946
    %v3619 = vpack.c.b16 %v2949, %v2948
    %v3620 = vpack.c.b16 %v2951, %v2950
    %v3621 = vpack.c.b16 %v2953, %v2952
    %v3622 = vpack.c.b16 %v2955, %v2954
    %v3623 = vpack.c.b16 %v2957, %v2956
    %v3624 = vpack.c.b16 %v2959, %v2958
    %v3625 = vpack.c.b16 %v2961, %v2960
    %v3626 = vpack.c.b16 %v2963, %v2962
    %v3627 = vpack.c.b16 %v2965, %v2964
    %v3628 = vpack.c.b16 %v2967, %v2966
    %v3629 = vpack.c.b16 %v2969, %v2968
    %v3630 = vpack.c.b16 %v2971, %v2970
    %v3631 = vpack.c.b16 %v2973, %v2972
    %v3632 = vpack.c.b16 %v2975, %v2974
    %v3633 = vpack.c.b16 %v2977, %v2976
    %v3634 = vpack.c.b16 %v2979, %v2978
    %v3635 = vpack.c.b16 %v2981, %v2980
    %v3636 = vpack.c.b16 %v2983, %v2982
    %v3637 = vpack.c.b16 %v2985, %v2984
    %v3638 = vpack.c.b16 %v2987, %v2986
    %v3639 = vpack.c.b16 %v2989, %v2988
    %v3640 = vpack.c.b16 %v2991, %v2990
    %v3641 = vpack.c.b16 %v2993, %v2992
    %v3642 = vpack.c.b16 %v2995, %v2994
    %v3643 = vpack.c.b16 %v2997, %v2996
    %v3644 = vpack.c.b16 %v2999, %v2998
    %v3645 = vpack.c.b16 %v3001, %v3000
    %v3646 = vpack.c.b16 %v3003, %v3002
    %v3647 = vpack.c.b16 %v3005, %v3004
    %v3648 = vpack.c.b16 %v3007, %v3006
    %v3649 = vpack.c.b16 %v3009, %v3008
    %v3650 = vpack.c.b16 %v3011, %v3010
    %v3651 = vpack.c.b16 %v3013, %v3012
    %v3652 = vpack.c.b16 %v3015, %v3014
    %v3653 = vpack.c.b16 %v3017, %v3016
    %v3654 = vpack.c.b16 %v3019, %v3018
    %v3655 = vpack.c.b16 %v3021, %v3020
    %v3656 = vpack.c.b16 %v3023, %v3022
    %v3657 = vpack.c.b16 %v3025, %v3024
    %v3658 = vpack.c.b16 %v3027, %v3026
    %v3659 = vpack.c.b16 %v3029, %v3028
    %v3660 = vpack.c.b16 %v3031, %v3030
    %v3661 = vpack.c.b16 %v3033, %v3032
    %v3662 = vpack.c.b16 %v3035, %v3034
    %v3663 = vpack.c.b16 %v3037, %v3036
    %v3664 = vpack.c.b16 %v3039, %v3038
    %v3665 = vpack.c.b16 %v3041, %v3040
    %v3666 = vpack.c.b16 %v3043, %v3042
    %v3667 = vpack.c.b16 %v3045, %v3044
    %v3668 = vpack.c.b16 %v3047, %v3046
    %v3669 = vpack.c.b16 %v3049, %v3048
    %v3670 = vpack.c.b16 %v3051, %v3050
    %v3671 = vpack.c.b16 %v3053, %v3052
    %v3672 = vpack.c.b16 %v3055, %v3054
    %v3673 = vpack.c.b16 %v3057, %v3056
    %v3674 = vpack.c.b16 %v3059, %v3058
    %v3675 = vpack.c.b16 %v3061, %v3060
    %v3676 = vpack.c.b16 %v3063, %v3062
    %v3677 = vpack.c.b16 %v3065, %v3064
    %v3678 = vpack.c.b16 %v3067, %v3066
    %v3679 = vpack.c.b16 %v3069, %v3068
    %v3680 = vpack.c.b16 %v3071, %v3070
    %v3681 = vpack.c.b16 %v3073, %v3072
    %v3682 = vpack.c.b16 %v3075, %v3074
    %v3683 = vpack.c.b16 %v3077, %v3076
    %v3684 = vpack.c.b16 %v3079, %v3078
    %v3685 = vpack.c.b16 %v3081, %v3080
    %v3686 = vpack.c.b16 %v3083, %v3082
    %v3687 = vpack.c.b16 %v3085, %v3084
    %v3688 = vpack.c.b16 %v3087, %v3086
    %v3689 = vpack.c.b16 %v3089, %v3088
    %v3690 = vpack.c.b16 %v3091, %v3090
    %v3691 = vpack.c.b16 %v3093, %v3092
    %v3692 = vpack.c.b16 %v3095, %v3094
    %v3693 = vpack.c.b16 %v3097, %v3096
    %v3694 = vpack.c.b16 %v3099, %v3098
    %v3695 = vpack.c.b16 %v3101, %v3100
    %v3696 = vpack.c.b16 %v3103, %v3102
    %v3697 = vpack.c.b16 %v3105, %v3104
    %v3698 = vpack.c.b16 %v3107, %v3106
    %v3699 = vpack.c.b16 %v3109, %v3108
    %v3700 = vpack.c.b16 %v3111, %v3110
    %v3701 = vpack.c.b16 %v3113, %v3112
    %v3702 = vpack.c.b16 %v3115, %v3114
    %v3703 = vpack.c.b16 %v3117, %v3116
    %v3704 = vpack.c.b16 %v3119, %v3118
    %v3705 = vpack.c.b16 %v3121, %v3120
    %v3706 = vpack.c.b16 %v3123, %v3122
    %v3707 = vpack.c.b16 %v3125, %v3124
    %v3708 = vpack.c.b16 %v3127, %v3126
    %v3709 = vpack.c.b16 %v3129, %v3128
    %v3710 = vpack.c.b16 %v3131, %v3130
    %v3711 = vpack.c.b16 %v3133, %v3132
    %v3712 = vpack.c.b16 %v3135, %v3134
    %v3713 = vpack.c.b16 %v3137, %v3136
    %v3714 = vpack.c.b16 %v3139, %v3138
    %v3715 = vpack.c.b16 %v3141, %v3140
    %v3716 = vpack.c.b16 %v3143, %v3142
    %v3717 = vpack.c.b16 %v3145, %v3144
    %v3718 = vpack.c.b16 %v3147, %v3146
    %v3719 = vpack.c.b16 %v3149, %v3148
    %v3720 = vpack.c.b16 %v3151, %v3150
    %v3721 = vpack.c.b16 %v3153, %v3152
    %v3722 = vpack.c.b16 %v3155, %v3154
    %v3723 = vpack.c.b16 %v3157, %v3156
    %v3724 = vpack.c.b16 %v3159, %v3158
    %v3725 = vpack.c.b16 %v3161, %v3160
    %v3726 = vpack.c.b16 %v3163, %v3162
    %v3727 = vpack.c.b16 %v3165, %v3164
    %v3728 = vpack.c.b16 %v3167, %v3166
    %v3729 = vpack.c.b16 %v3169, %v3168
    %v3730 = vpack.c.b16 %v3171, %v3170
    %v3731 = vpack.c.b16 %v3173, %v3172
    %v3732 = vpack.c.b16 %v3175, %v3174
    %v3733 = vpack.c.b16 %v3177, %v3176
    %v3734 = vpack.c.b16 %v3179, %v3178
    %v3735 = vpack.c.b16 %v3181, %v3180
    %v3736 = vpack.c.b16 %v3183, %v3182
    %v3737 = vpack.c.b16 %v3185, %v3184
    %v3738 = vpack.c.b16 %v3187, %v3186
    %v3739 = vpack.c.b16 %v3189, %v3188
    %v3740 = vpack.c.b16 %v3191, %v3190
    %v3741 = vpack.c.b16 %v3193, %v3192
    %v3742 = vpack.c.b16 %v3195, %v3194
    %v3743 = vpack.c.b16 %v3197, %v3196
    %v3744 = vpack.c.b16 %v3199, %v3198
    %v3745 = vpack.c.b16 %v3201, %v3200
    %v3746 = vpack.c.b16 %v3203, %v3202
    %v3747 = vpack.c.b16 %v3205, %v3204
    %v3748 = vpack.c.b16 %v3207, %v3206
    %v3749 = vpack.c.b16 %v3209, %v3208
    %v3750 = vpack.c.b16 %v3211, %v3210
    %v3751 = vpack.c.b16 %v3213, %v3212
    %v3752 = vpack.c.b16 %v3215, %v3214
    %v3753 = vpack.c.b16 %v3217, %v3216
    %v3754 = vpack.c.b16 %v3219, %v3218
    %v3755 = vpack.c.b16 %v3221, %v3220
    %v3756 = vpack.c.b16 %v3223, %v3222
    %v3757 = vpack.c.b16 %v3225, %v3224
    %v3758 = vpack.c.b16 %v3227, %v3226
    %v3759 = vpack.c.b16 %v3229, %v3228
    %v3760 = vpack.c.b16 %v3231, %v3230
    %v3761 = vpack.c.b16 %v3233, %v3232
    %v3762 = vpack.c.b16 %v3235, %v3234
    %v3763 = vpack.c.b16 %v3237, %v3236
    %v3764 = vpack.c.b16 %v3239, %v3238
    %v3765 = vpack.c.b16 %v3241, %v3240
    %v3766 = vpack.c.b16 %v3243, %v3242
    %v3767 = vpack.c.b16 %v3245, %v3244
    %v3768 = vpack.c.b16 %v3247, %v3246
    %v3769 = vpack.c.b16 %v3249, %v3248
    %v3770 = vpack.c.b16 %v3251, %v3250
    %v3771 = vpack.c.b16 %v3253, %v3252
    %v3772 = vpack.c.b16 %v3255, %v3254
    %v3773 = vpack.c.b16 %v3257, %v3256
    %v3774 = vpack.c.b16 %v3259, %v3258
    %v3775 = vpack.c.b16 %v3261, %v3260
    %v3776 = vpack.c.b16 %v3263, %v3262
    %v3777 = vpack.c.b16 %v3265, %v3264
    %v3778 = vpack.c.b16 %v3267, %v3266
    %v3779 = vpack.c.b16 %v3269, %v3268
    %v3780 = vpack.c.b16 %v3271, %v3270
    %v3781 = vpack.c.b16 %v3273, %v3272
    %v3782 = vpack.c.b16 %v3275, %v3274
    %v3783 = vpack.c.b16 %v3277, %v3276
    %v3784 = vpack.c.b16 %v3279, %v3278
    %v3785 = vpack.c.b16 %v3281, %v3280
    %v3786 = vpack.c.b16 %v3283, %v3282
    %v3787 = vpack.c.b16 %v3285, %v3284
    %v3788 = vpack.c.b16 %v3287, %v3286
    %v3789 = vpack.c.b16 %v3289, %v3288
    %v3790 = vpack.c.b16 %v3291, %v3290
    %v3791 = vpack.c.b16 %v3293, %v3292
    %v3792 = vpack.c.b16 %v3295, %v3294
    %v3793 = vpack.c.b16 %v3297, %v3296
    %v3794 = vpack.c.b16 %v3299, %v3298
    %vm4290 = vcmask 916480
    %v4292 = vsel %vm4290, %v1258, 0
    %4294 = vmatpush.bf16.msra.mxu0 %v3307
    %4295 = vmatpush.bf16.msra.mxu0 %v3306
    %4296 = vmatpush.bf16.msra.mxu0 %v3305
    %4297 = vmatpush.bf16.msra.mxu0 %v3304
    %4298 = vmatpush.bf16.msra.mxu0 %v3303
    %4299 = vmatpush.bf16.msra.mxu0 %v3302
    %4300 = vmatpush.bf16.msra.mxu0 %v3301
    %4301 = vmatpush.bf16.msra.mxu0 %v3300
    %4302 = vmatmul.bf16.gmra.mxu0 %v1197
    %v4303 = vpop.f32.mrf.mxu0
    %v4304 = vadd.f32 %v1103, %v4303
    %v4305 = vpop.f32.mrf.mxu0
    %4306 = vdwg.mxu0
    %4307 = vmatpush.bf16.msra.mxu0 %v3315
    %4308 = vmatpush.bf16.msra.mxu0 %v3314
    %4309 = vmatpush.bf16.msra.mxu0 %v3313
    %4310 = vmatpush.bf16.msra.mxu0 %v3312
    %4311 = vmatpush.bf16.msra.mxu0 %v3311
    %4312 = vmatpush.bf16.msra.mxu0 %v3310
    %4313 = vmatpush.bf16.msra.mxu0 %v3309
    %4314 = vmatpush.bf16.msra.mxu0 %v3308
    %4315 = vmatmul.bf16.gmra.mxu0 %v1198
    %v4316 = vpop.f32.mrf.mxu0
    %v4317 = vadd.f32 %v4304, %v4316
    %v4318 = vpop.f32.mrf.mxu0
    %4319 = vdwg.mxu0
    %4320 = vmatpush.bf16.msra.mxu0 %v3323
    %4321 = vmatpush.bf16.msra.mxu0 %v3322
    %4322 = vmatpush.bf16.msra.mxu0 %v3321
    %4323 = vmatpush.bf16.msra.mxu0 %v3320
    %4324 = vmatpush.bf16.msra.mxu0 %v3319
    %4325 = vmatpush.bf16.msra.mxu0 %v3318
    %4326 = vmatpush.bf16.msra.mxu0 %v3317
    %4327 = vmatpush.bf16.msra.mxu0 %v3316
    %4328 = vmatmul.bf16.gmra.mxu0 %v1199
    %v4329 = vpop.f32.mrf.mxu0
    %v4330 = vadd.f32 %v4317, %v4329
    %v4331 = vpop.f32.mrf.mxu0
    %4332 = vdwg.mxu0
    %4333 = vmatpush.bf16.msra.mxu0 %v3331
    %4334 = vmatpush.bf16.msra.mxu0 %v3330
    %4335 = vmatpush.bf16.msra.mxu0 %v3329
    %4336 = vmatpush.bf16.msra.mxu0 %v3328
    %4337 = vmatpush.bf16.msra.mxu0 %v3327
    %4338 = vmatpush.bf16.msra.mxu0 %v3326
    %4339 = vmatpush.bf16.msra.mxu0 %v3325
    %4340 = vmatpush.bf16.msra.mxu0 %v3324
    %4341 = vmatmul.bf16.gmra.mxu0 %v1200
    %v4342 = vpop.f32.mrf.mxu0
    %v4343 = vadd.f32 %v4330, %v4342
    %v4344 = vpop.f32.mrf.mxu0
    %4345 = vdwg.mxu0
    %4346 = vmatpush.bf16.msra.mxu0 %v3339
    %4347 = vmatpush.bf16.msra.mxu0 %v3338
    %4348 = vmatpush.bf16.msra.mxu0 %v3337
    %4349 = vmatpush.bf16.msra.mxu0 %v3336
    %4350 = vmatpush.bf16.msra.mxu0 %v3335
    %4351 = vmatpush.bf16.msra.mxu0 %v3334
    %4352 = vmatpush.bf16.msra.mxu0 %v3333
    %4353 = vmatpush.bf16.msra.mxu0 %v3332
    %4354 = vmatmul.bf16.gmra.mxu0 %v1201
    %v4355 = vpop.f32.mrf.mxu0
    %v4356 = vadd.f32 %v4343, %v4355
    %v4357 = vpop.f32.mrf.mxu0
    %4358 = vdwg.mxu0
    %4359 = vmatpush.bf16.msra.mxu0 %v3347
    %4360 = vmatpush.bf16.msra.mxu0 %v3346
    %4361 = vmatpush.bf16.msra.mxu0 %v3345
    %4362 = vmatpush.bf16.msra.mxu0 %v3344
    %4363 = vmatpush.bf16.msra.mxu0 %v3343
    %4364 = vmatpush.bf16.msra.mxu0 %v3342
    %4365 = vmatpush.bf16.msra.mxu0 %v3341
    %4366 = vmatpush.bf16.msra.mxu0 %v3340
    %4367 = vmatmul.bf16.gmra.mxu0 %v1202
    %v4368 = vpop.f32.mrf.mxu0
    %v4369 = vadd.f32 %v4356, %v4368
    %v4370 = vpop.f32.mrf.mxu0
    %4371 = vdwg.mxu0
    %4372 = vmatpush.bf16.msra.mxu0 %v3355
    %4373 = vmatpush.bf16.msra.mxu0 %v3354
    %4374 = vmatpush.bf16.msra.mxu0 %v3353
    %4375 = vmatpush.bf16.msra.mxu0 %v3352
    %4376 = vmatpush.bf16.msra.mxu0 %v3351
    %4377 = vmatpush.bf16.msra.mxu0 %v3350
    %4378 = vmatpush.bf16.msra.mxu0 %v3349
    %4379 = vmatpush.bf16.msra.mxu0 %v3348
    %4380 = vmatmul.bf16.gmra.mxu0 %v1203
    %v4381 = vpop.f32.mrf.mxu0
    %v4382 = vadd.f32 %v4369, %v4381
    %v4383 = vpop.f32.mrf.mxu0
    %4384 = vdwg.mxu0
    %4385 = vmatpush.bf16.msra.mxu0 %v3363
    %4386 = vmatpush.bf16.msra.mxu0 %v3362
    %4387 = vmatpush.bf16.msra.mxu0 %v3361
    %4388 = vmatpush.bf16.msra.mxu0 %v3360
    %4389 = vmatpush.bf16.msra.mxu0 %v3359
    %4390 = vmatpush.bf16.msra.mxu0 %v3358
    %4391 = vmatpush.bf16.msra.mxu0 %v3357
    %4392 = vmatpush.bf16.msra.mxu0 %v3356
    %4393 = vmatmul.bf16.gmra.mxu0 %v1204
    %v4394 = vpop.f32.mrf.mxu0
    %v4395 = vadd.f32 %v4382, %v4394
    %v4396 = vpop.f32.mrf.mxu0
    %4397 = vdwg.mxu0
    %4398 = vmatpush.bf16.msra.mxu0 %v3371
    %4399 = vmatpush.bf16.msra.mxu0 %v3370
    %4400 = vmatpush.bf16.msra.mxu0 %v3369
    %4401 = vmatpush.bf16.msra.mxu0 %v3368
    %4402 = vmatpush.bf16.msra.mxu0 %v3367
    %4403 = vmatpush.bf16.msra.mxu0 %v3366
    %4404 = vmatpush.bf16.msra.mxu0 %v3365
    %4405 = vmatpush.bf16.msra.mxu0 %v3364
    %4406 = vmatmul.bf16.gmra.mxu0 %v1205
    %v4407 = vpop.f32.mrf.mxu0
    %v4408 = vadd.f32 %v4395, %v4407
    %v4409 = vpop.f32.mrf.mxu0
    %4410 = vdwg.mxu0
    %4411 = vmatpush.bf16.msra.mxu0 %v3379
    %4412 = vmatpush.bf16.msra.mxu0 %v3378
    %4413 = vmatpush.bf16.msra.mxu0 %v3377
    %4414 = vmatpush.bf16.msra.mxu0 %v3376
    %4415 = vmatpush.bf16.msra.mxu0 %v3375
    %4416 = vmatpush.bf16.msra.mxu0 %v3374
    %4417 = vmatpush.bf16.msra.mxu0 %v3373
    %4418 = vmatpush.bf16.msra.mxu0 %v3372
    %4419 = vmatmul.bf16.gmra.mxu0 %v1206
    %v4420 = vpop.f32.mrf.mxu0
    %v4421 = vadd.f32 %v4408, %v4420
    %v4422 = vpop.f32.mrf.mxu0
    %4423 = vdwg.mxu0
    %4424 = vmatpush.bf16.msra.mxu0 %v3387
    %4425 = vmatpush.bf16.msra.mxu0 %v3386
    %4426 = vmatpush.bf16.msra.mxu0 %v3385
    %4427 = vmatpush.bf16.msra.mxu0 %v3384
    %4428 = vmatpush.bf16.msra.mxu0 %v3383
    %4429 = vmatpush.bf16.msra.mxu0 %v3382
    %4430 = vmatpush.bf16.msra.mxu0 %v3381
    %4431 = vmatpush.bf16.msra.mxu0 %v3380
    %4432 = vmatmul.bf16.gmra.mxu0 %v1207
    %v4433 = vpop.f32.mrf.mxu0
    %v4434 = vadd.f32 %v4421, %v4433
    %v4435 = vpop.f32.mrf.mxu0
    %4436 = vdwg.mxu0
    %4437 = vmatpush.bf16.msra.mxu0 %v3395
    %4438 = vmatpush.bf16.msra.mxu0 %v3394
    %4439 = vmatpush.bf16.msra.mxu0 %v3393
    %4440 = vmatpush.bf16.msra.mxu0 %v3392
    %4441 = vmatpush.bf16.msra.mxu0 %v3391
    %4442 = vmatpush.bf16.msra.mxu0 %v3390
    %4443 = vmatpush.bf16.msra.mxu0 %v3389
    %4444 = vmatpush.bf16.msra.mxu0 %v3388
    %4445 = vmatmul.bf16.gmra.mxu0 %v1208
    %v4446 = vpop.f32.mrf.mxu0
    %v4447 = vadd.f32 %v4434, %v4446
    %v4448 = vpop.f32.mrf.mxu0
    %4449 = vdwg.mxu0
    %4450 = vmatpush.bf16.msra.mxu0 %v3403
    %4451 = vmatpush.bf16.msra.mxu0 %v3402
    %4452 = vmatpush.bf16.msra.mxu0 %v3401
    %4453 = vmatpush.bf16.msra.mxu0 %v3400
    %4454 = vmatpush.bf16.msra.mxu0 %v3399
    %4455 = vmatpush.bf16.msra.mxu0 %v3398
    %4456 = vmatpush.bf16.msra.mxu0 %v3397
    %4457 = vmatpush.bf16.msra.mxu0 %v3396
    %4458 = vmatmul.bf16.gmra.mxu0 %v1209
    %v4459 = vpop.f32.mrf.mxu0
    %v4460 = vadd.f32 %v4447, %v4459
    %v4461 = vpop.f32.mrf.mxu0
    %4462 = vdwg.mxu0
    %4463 = vmatpush.bf16.msra.mxu0 %v3411
    %4464 = vmatpush.bf16.msra.mxu0 %v3410
    %4465 = vmatpush.bf16.msra.mxu0 %v3409
    %4466 = vmatpush.bf16.msra.mxu0 %v3408
    %4467 = vmatpush.bf16.msra.mxu0 %v3407
    %4468 = vmatpush.bf16.msra.mxu0 %v3406
    %4469 = vmatpush.bf16.msra.mxu0 %v3405
    %4470 = vmatpush.bf16.msra.mxu0 %v3404
    %4471 = vmatmul.bf16.gmra.mxu0 %v1210
    %v4472 = vpop.f32.mrf.mxu0
    %v4473 = vadd.f32 %v4460, %v4472
    %v4474 = vpop.f32.mrf.mxu0
    %4475 = vdwg.mxu0
    %4476 = vmatpush.bf16.msra.mxu0 %v3419
    %4477 = vmatpush.bf16.msra.mxu0 %v3418
    %4478 = vmatpush.bf16.msra.mxu0 %v3417
    %4479 = vmatpush.bf16.msra.mxu0 %v3416
    %4480 = vmatpush.bf16.msra.mxu0 %v3415
    %4481 = vmatpush.bf16.msra.mxu0 %v3414
    %4482 = vmatpush.bf16.msra.mxu0 %v3413
    %4483 = vmatpush.bf16.msra.mxu0 %v3412
    %4484 = vmatmul.bf16.gmra.mxu0 %v1211
    %v4485 = vpop.f32.mrf.mxu0
    %v4486 = vadd.f32 %v4473, %v4485
    %v4487 = vpop.f32.mrf.mxu0
    %4488 = vdwg.mxu0
    %4489 = vmatpush.bf16.msra.mxu0 %v3427
    %4490 = vmatpush.bf16.msra.mxu0 %v3426
    %4491 = vmatpush.bf16.msra.mxu0 %v3425
    %4492 = vmatpush.bf16.msra.mxu0 %v3424
    %4493 = vmatpush.bf16.msra.mxu0 %v3423
    %4494 = vmatpush.bf16.msra.mxu0 %v3422
    %4495 = vmatpush.bf16.msra.mxu0 %v3421
    %4496 = vmatpush.bf16.msra.mxu0 %v3420
    %4497 = vmatmul.bf16.gmra.mxu0 %v1212
    %v4498 = vpop.f32.mrf.mxu0
    %v4499 = vadd.f32 %v4486, %v4498
    %v4500 = vpop.f32.mrf.mxu0
    %4501 = vdwg.mxu0
    %4502 = vmatpush.bf16.msra.mxu0 %v3435
    %4503 = vmatpush.bf16.msra.mxu0 %v3434
    %4504 = vmatpush.bf16.msra.mxu0 %v3433
    %4505 = vmatpush.bf16.msra.mxu0 %v3432
    %4506 = vmatpush.bf16.msra.mxu0 %v3431
    %4507 = vmatpush.bf16.msra.mxu0 %v3430
    %4508 = vmatpush.bf16.msra.mxu0 %v3429
    %4509 = vmatpush.bf16.msra.mxu0 %v3428
    %4510 = vmatmul.bf16.gmra.mxu0 %v1213
    %v4511 = vpop.f32.mrf.mxu0
    %v4512 = vadd.f32 %v4499, %v4511
    %v4513 = vpop.f32.mrf.mxu0
    %4514 = vdwg.mxu0
    %4515 = vmatpush.bf16.msra.mxu0 %v3443
    %4516 = vmatpush.bf16.msra.mxu0 %v3442
    %4517 = vmatpush.bf16.msra.mxu0 %v3441
    %4518 = vmatpush.bf16.msra.mxu0 %v3440
    %4519 = vmatpush.bf16.msra.mxu0 %v3439
    %4520 = vmatpush.bf16.msra.mxu0 %v3438
    %4521 = vmatpush.bf16.msra.mxu0 %v3437
    %4522 = vmatpush.bf16.msra.mxu0 %v3436
    %4523 = vmatmul.bf16.gmra.mxu0 %v1214
    %v4524 = vpop.f32.mrf.mxu0
    %v4525 = vadd.f32 %v4512, %v4524
    %v4526 = vpop.f32.mrf.mxu0
    %4527 = vdwg.mxu0
    %4528 = vmatpush.bf16.msra.mxu0 %v3451
    %4529 = vmatpush.bf16.msra.mxu0 %v3450
    %4530 = vmatpush.bf16.msra.mxu0 %v3449
    %4531 = vmatpush.bf16.msra.mxu0 %v3448
    %4532 = vmatpush.bf16.msra.mxu0 %v3447
    %4533 = vmatpush.bf16.msra.mxu0 %v3446
    %4534 = vmatpush.bf16.msra.mxu0 %v3445
    %4535 = vmatpush.bf16.msra.mxu0 %v3444
    %4536 = vmatmul.bf16.gmra.mxu0 %v1215
    %v4537 = vpop.f32.mrf.mxu0
    %v4538 = vadd.f32 %v4525, %v4537
    %v4539 = vpop.f32.mrf.mxu0
    %4540 = vdwg.mxu0
    %4541 = vmatpush.bf16.msra.mxu0 %v3459
    %4542 = vmatpush.bf16.msra.mxu0 %v3458
    %4543 = vmatpush.bf16.msra.mxu0 %v3457
    %4544 = vmatpush.bf16.msra.mxu0 %v3456
    %4545 = vmatpush.bf16.msra.mxu0 %v3455
    %4546 = vmatpush.bf16.msra.mxu0 %v3454
    %4547 = vmatpush.bf16.msra.mxu0 %v3453
    %4548 = vmatpush.bf16.msra.mxu0 %v3452
    %4549 = vmatmul.bf16.gmra.mxu0 %v1216
    %v4550 = vpop.f32.mrf.mxu0
    %v4551 = vadd.f32 %v4538, %v4550
    %v4552 = vpop.f32.mrf.mxu0
    %4553 = vdwg.mxu0
    %4554 = vmatpush.bf16.msra.mxu0 %v3467
    %4555 = vmatpush.bf16.msra.mxu0 %v3466
    %4556 = vmatpush.bf16.msra.mxu0 %v3465
    %4557 = vmatpush.bf16.msra.mxu0 %v3464
    %4558 = vmatpush.bf16.msra.mxu0 %v3463
    %4559 = vmatpush.bf16.msra.mxu0 %v3462
    %4560 = vmatpush.bf16.msra.mxu0 %v3461
    %4561 = vmatpush.bf16.msra.mxu0 %v3460
    %4562 = vmatmul.bf16.gmra.mxu0 %v1217
    %v4563 = vpop.f32.mrf.mxu0
    %v4564 = vadd.f32 %v4551, %v4563
    %v4565 = vpop.f32.mrf.mxu0
    %4566 = vdwg.mxu0
    %4567 = vmatpush.bf16.msra.mxu0 %v3475
    %4568 = vmatpush.bf16.msra.mxu0 %v3474
    %4569 = vmatpush.bf16.msra.mxu0 %v3473
    %4570 = vmatpush.bf16.msra.mxu0 %v3472
    %4571 = vmatpush.bf16.msra.mxu0 %v3471
    %4572 = vmatpush.bf16.msra.mxu0 %v3470
    %4573 = vmatpush.bf16.msra.mxu0 %v3469
    %4574 = vmatpush.bf16.msra.mxu0 %v3468
    %4575 = vmatmul.bf16.gmra.mxu0 %v1218
    %v4576 = vpop.f32.mrf.mxu0
    %v4577 = vadd.f32 %v4564, %v4576
    %v4578 = vpop.f32.mrf.mxu0
    %4579 = vdwg.mxu0
    %4580 = vmatpush.bf16.msra.mxu0 %v3483
    %4581 = vmatpush.bf16.msra.mxu0 %v3482
    %4582 = vmatpush.bf16.msra.mxu0 %v3481
    %4583 = vmatpush.bf16.msra.mxu0 %v3480
    %4584 = vmatpush.bf16.msra.mxu0 %v3479
    %4585 = vmatpush.bf16.msra.mxu0 %v3478
    %4586 = vmatpush.bf16.msra.mxu0 %v3477
    %4587 = vmatpush.bf16.msra.mxu0 %v3476
    %4588 = vmatmul.bf16.gmra.mxu0 %v1219
    %v4589 = vpop.f32.mrf.mxu0
    %v4590 = vadd.f32 %v4577, %v4589
    %v4591 = vpop.f32.mrf.mxu0
    %4592 = vdwg.mxu0
    %4593 = vmatpush.bf16.msra.mxu0 %v3491
    %4594 = vmatpush.bf16.msra.mxu0 %v3490
    %4595 = vmatpush.bf16.msra.mxu0 %v3489
    %4596 = vmatpush.bf16.msra.mxu0 %v3488
    %4597 = vmatpush.bf16.msra.mxu0 %v3487
    %4598 = vmatpush.bf16.msra.mxu0 %v3486
    %4599 = vmatpush.bf16.msra.mxu0 %v3485
    %4600 = vmatpush.bf16.msra.mxu0 %v3484
    %4601 = vmatmul.bf16.gmra.mxu0 %v1220
    %v4602 = vpop.f32.mrf.mxu0
    %v4603 = vadd.f32 %v4590, %v4602
    %v4604 = vpop.f32.mrf.mxu0
    %4605 = vdwg.mxu0
    %4606 = vmatpush.bf16.msra.mxu0 %v3499
    %4607 = vmatpush.bf16.msra.mxu0 %v3498
    %4608 = vmatpush.bf16.msra.mxu0 %v3497
    %4609 = vmatpush.bf16.msra.mxu0 %v3496
    %4610 = vmatpush.bf16.msra.mxu0 %v3495
    %4611 = vmatpush.bf16.msra.mxu0 %v3494
    %4612 = vmatpush.bf16.msra.mxu0 %v3493
    %4613 = vmatpush.bf16.msra.mxu0 %v3492
    %4614 = vmatmul.bf16.gmra.mxu0 %v1221
    %v4615 = vpop.f32.mrf.mxu0
    %v4616 = vadd.f32 %v4603, %v4615
    %v4617 = vpop.f32.mrf.mxu0
    %4618 = vdwg.mxu0
    %4619 = vmatpush.bf16.msra.mxu0 %v3507
    %4620 = vmatpush.bf16.msra.mxu0 %v3506
    %4621 = vmatpush.bf16.msra.mxu0 %v3505
    %4622 = vmatpush.bf16.msra.mxu0 %v3504
    %4623 = vmatpush.bf16.msra.mxu0 %v3503
    %4624 = vmatpush.bf16.msra.mxu0 %v3502
    %4625 = vmatpush.bf16.msra.mxu0 %v3501
    %4626 = vmatpush.bf16.msra.mxu0 %v3500
    %4627 = vmatmul.bf16.gmra.mxu0 %v1222
    %v4628 = vpop.f32.mrf.mxu0
    %v4629 = vadd.f32 %v4616, %v4628
    %v4630 = vpop.f32.mrf.mxu0
    %4631 = vdwg.mxu0
    %4632 = vmatpush.bf16.msra.mxu0 %v3515
    %4633 = vmatpush.bf16.msra.mxu0 %v3514
    %4634 = vmatpush.bf16.msra.mxu0 %v3513
    %4635 = vmatpush.bf16.msra.mxu0 %v3512
    %4636 = vmatpush.bf16.msra.mxu0 %v3511
    %4637 = vmatpush.bf16.msra.mxu0 %v3510
    %4638 = vmatpush.bf16.msra.mxu0 %v3509
    %4639 = vmatpush.bf16.msra.mxu0 %v3508
    %4640 = vmatmul.bf16.gmra.mxu0 %v1223
    %v4641 = vpop.f32.mrf.mxu0
    %v4642 = vadd.f32 %v4629, %v4641
    %v4643 = vpop.f32.mrf.mxu0
    %4644 = vdwg.mxu0
    %4645 = vmatpush.bf16.msra.mxu0 %v3523
    %4646 = vmatpush.bf16.msra.mxu0 %v3522
    %4647 = vmatpush.bf16.msra.mxu0 %v3521
    %4648 = vmatpush.bf16.msra.mxu0 %v3520
    %4649 = vmatpush.bf16.msra.mxu0 %v3519
    %4650 = vmatpush.bf16.msra.mxu0 %v3518
    %4651 = vmatpush.bf16.msra.mxu0 %v3517
    %4652 = vmatpush.bf16.msra.mxu0 %v3516
    %4653 = vmatmul.bf16.gmra.mxu0 %v1224
    %v4654 = vpop.f32.mrf.mxu0
    %v4655 = vadd.f32 %v4642, %v4654
    %v4656 = vpop.f32.mrf.mxu0
    %4657 = vdwg.mxu0
    %4658 = vmatpush.bf16.msra.mxu0 %v3531
    %4659 = vmatpush.bf16.msra.mxu0 %v3530
    %4660 = vmatpush.bf16.msra.mxu0 %v3529
    %4661 = vmatpush.bf16.msra.mxu0 %v3528
    %4662 = vmatpush.bf16.msra.mxu0 %v3527
    %4663 = vmatpush.bf16.msra.mxu0 %v3526
    %4664 = vmatpush.bf16.msra.mxu0 %v3525
    %4665 = vmatpush.bf16.msra.mxu0 %v3524
    %4666 = vmatmul.bf16.gmra.mxu0 %v1225
    %v4667 = vpop.f32.mrf.mxu0
    %v4668 = vadd.f32 %v4655, %v4667
    %v4669 = vpop.f32.mrf.mxu0
    %4670 = vdwg.mxu0
    %4671 = vmatpush.bf16.msra.mxu0 %v3539
    %4672 = vmatpush.bf16.msra.mxu0 %v3538
    %4673 = vmatpush.bf16.msra.mxu0 %v3537
    %4674 = vmatpush.bf16.msra.mxu0 %v3536
    %4675 = vmatpush.bf16.msra.mxu0 %v3535
    %4676 = vmatpush.bf16.msra.mxu0 %v3534
    %4677 = vmatpush.bf16.msra.mxu0 %v3533
    %4678 = vmatpush.bf16.msra.mxu0 %v3532
    %4679 = vmatmul.bf16.gmra.mxu0 %v1226
    %v4680 = vpop.f32.mrf.mxu0
    %v4681 = vadd.f32 %v4668, %v4680
    %v4682 = vpop.f32.mrf.mxu0
    %4683 = vdwg.mxu0
    %4684 = vmatpush.bf16.msra.mxu0 %v3547
    %4685 = vmatpush.bf16.msra.mxu0 %v3546
    %4686 = vmatpush.bf16.msra.mxu0 %v3545
    %4687 = vmatpush.bf16.msra.mxu0 %v3544
    %4688 = vmatpush.bf16.msra.mxu0 %v3543
    %4689 = vmatpush.bf16.msra.mxu0 %v3542
    %4690 = vmatpush.bf16.msra.mxu0 %v3541
    %4691 = vmatpush.bf16.msra.mxu0 %v3540
    %4692 = vmatmul.bf16.gmra.mxu0 %v1227
    %v4693 = vpop.f32.mrf.mxu0
    %v4694 = vadd.f32 %v4681, %v4693
    %v4695 = vpop.f32.mrf.mxu0
    %4696 = vdwg.mxu0
    %4697 = vmatpush.bf16.msra.mxu0 %v3555
    %4698 = vmatpush.bf16.msra.mxu0 %v3554
    %4699 = vmatpush.bf16.msra.mxu0 %v3553
    %4700 = vmatpush.bf16.msra.mxu0 %v3552
    %4701 = vmatpush.bf16.msra.mxu0 %v3551
    %4702 = vmatpush.bf16.msra.mxu0 %v3550
    %4703 = vmatpush.bf16.msra.mxu0 %v3549
    %4704 = vmatpush.bf16.msra.mxu0 %v3548
    %4705 = vmatmul.bf16.gmra.mxu0 %v1228
    %v4706 = vpop.f32.mrf.mxu0
    %v4707 = vadd.f32 %v4694, %v4706
    %v4708 = vpop.f32.mrf.mxu0
    %4709 = vdwg.mxu0
    %4710 = vmatpush.bf16.msra.mxu0 %v3563
    %4711 = vmatpush.bf16.msra.mxu0 %v3562
    %4712 = vmatpush.bf16.msra.mxu0 %v3561
    %4713 = vmatpush.bf16.msra.mxu0 %v3560
    %4714 = vmatpush.bf16.msra.mxu0 %v3559
    %4715 = vmatpush.bf16.msra.mxu0 %v3558
    %4716 = vmatpush.bf16.msra.mxu0 %v3557
    %4717 = vmatpush.bf16.msra.mxu0 %v3556
    %4718 = vmatmul.bf16.gmra.mxu0 %v1229
    %v4719 = vpop.f32.mrf.mxu0
    %v4720 = vadd.f32 %v4707, %v4719
    %v4721 = vpop.f32.mrf.mxu0
    %4722 = vdwg.mxu0
    %4723 = vmatpush.bf16.msra.mxu0 %v3571
    %4724 = vmatpush.bf16.msra.mxu0 %v3570
    %4725 = vmatpush.bf16.msra.mxu0 %v3569
    %4726 = vmatpush.bf16.msra.mxu0 %v3568
    %4727 = vmatpush.bf16.msra.mxu0 %v3567
    %4728 = vmatpush.bf16.msra.mxu0 %v3566
    %4729 = vmatpush.bf16.msra.mxu0 %v3565
    %4730 = vmatpush.bf16.msra.mxu0 %v3564
    %4731 = vmatmul.bf16.gmra.mxu0 %v1230
    %v4732 = vpop.f32.mrf.mxu0
    %v4733 = vadd.f32 %v4720, %v4732
    %v4734 = vpop.f32.mrf.mxu0
    %4735 = vdwg.mxu0
    %4736 = vmatpush.bf16.msra.mxu0 %v3579
    %4737 = vmatpush.bf16.msra.mxu0 %v3578
    %4738 = vmatpush.bf16.msra.mxu0 %v3577
    %4739 = vmatpush.bf16.msra.mxu0 %v3576
    %4740 = vmatpush.bf16.msra.mxu0 %v3575
    %4741 = vmatpush.bf16.msra.mxu0 %v3574
    %4742 = vmatpush.bf16.msra.mxu0 %v3573
    %4743 = vmatpush.bf16.msra.mxu0 %v3572
    %4744 = vmatmul.bf16.gmra.mxu0 %v1231
    %v4745 = vpop.f32.mrf.mxu0
    %v4746 = vadd.f32 %v4733, %v4745
    %v4747 = vpop.f32.mrf.mxu0
    %4748 = vdwg.mxu0
    %4749 = vmatpush.bf16.msra.mxu0 %v3587
    %4750 = vmatpush.bf16.msra.mxu0 %v3586
    %4751 = vmatpush.bf16.msra.mxu0 %v3585
    %4752 = vmatpush.bf16.msra.mxu0 %v3584
    %4753 = vmatpush.bf16.msra.mxu0 %v3583
    %4754 = vmatpush.bf16.msra.mxu0 %v3582
    %4755 = vmatpush.bf16.msra.mxu0 %v3581
    %4756 = vmatpush.bf16.msra.mxu0 %v3580
    %4757 = vmatmul.bf16.gmra.mxu0 %v1232
    %v4758 = vpop.f32.mrf.mxu0
    %v4759 = vadd.f32 %v4746, %v4758
    %v4760 = vpop.f32.mrf.mxu0
    %4761 = vdwg.mxu0
    %4762 = vmatpush.bf16.msra.mxu0 %v3595
    %4763 = vmatpush.bf16.msra.mxu0 %v3594
    %4764 = vmatpush.bf16.msra.mxu0 %v3593
    %4765 = vmatpush.bf16.msra.mxu0 %v3592
    %4766 = vmatpush.bf16.msra.mxu0 %v3591
    %4767 = vmatpush.bf16.msra.mxu0 %v3590
    %4768 = vmatpush.bf16.msra.mxu0 %v3589
    %4769 = vmatpush.bf16.msra.mxu0 %v3588
    %4770 = vmatmul.bf16.gmra.mxu0 %v1233
    %v4771 = vpop.f32.mrf.mxu0
    %v4772 = vadd.f32 %v4759, %v4771
    %v4773 = vpop.f32.mrf.mxu0
    %4774 = vdwg.mxu0
    %4775 = vmatpush.bf16.msra.mxu0 %v3603
    %4776 = vmatpush.bf16.msra.mxu0 %v3602
    %4777 = vmatpush.bf16.msra.mxu0 %v3601
    %4778 = vmatpush.bf16.msra.mxu0 %v3600
    %4779 = vmatpush.bf16.msra.mxu0 %v3599
    %4780 = vmatpush.bf16.msra.mxu0 %v3598
    %4781 = vmatpush.bf16.msra.mxu0 %v3597
    %4782 = vmatpush.bf16.msra.mxu0 %v3596
    %4783 = vmatmul.bf16.gmra.mxu0 %v1234
    %v4784 = vpop.f32.mrf.mxu0
    %v4785 = vadd.f32 %v4772, %v4784
    %v4786 = vpop.f32.mrf.mxu0
    %4787 = vdwg.mxu0
    %4788 = vmatpush.bf16.msra.mxu0 %v3611
    %4789 = vmatpush.bf16.msra.mxu0 %v3610
    %4790 = vmatpush.bf16.msra.mxu0 %v3609
    %4791 = vmatpush.bf16.msra.mxu0 %v3608
    %4792 = vmatpush.bf16.msra.mxu0 %v3607
    %4793 = vmatpush.bf16.msra.mxu0 %v3606
    %4794 = vmatpush.bf16.msra.mxu0 %v3605
    %4795 = vmatpush.bf16.msra.mxu0 %v3604
    %4796 = vmatmul.bf16.gmra.mxu0 %v1235
    %v4797 = vpop.f32.mrf.mxu0
    %v4798 = vadd.f32 %v4785, %v4797
    %v4799 = vpop.f32.mrf.mxu0
    %4800 = vdwg.mxu0
    %4801 = vmatpush.bf16.msra.mxu0 %v3619
    %4802 = vmatpush.bf16.msra.mxu0 %v3618
    %4803 = vmatpush.bf16.msra.mxu0 %v3617
    %4804 = vmatpush.bf16.msra.mxu0 %v3616
    %4805 = vmatpush.bf16.msra.mxu0 %v3615
    %4806 = vmatpush.bf16.msra.mxu0 %v3614
    %4807 = vmatpush.bf16.msra.mxu0 %v3613
    %4808 = vmatpush.bf16.msra.mxu0 %v3612
    %4809 = vmatmul.bf16.gmra.mxu0 %v1236
    %v4810 = vpop.f32.mrf.mxu0
    %v4811 = vadd.f32 %v4798, %v4810
    %v4812 = vpop.f32.mrf.mxu0
    %4813 = vdwg.mxu0
    %4814 = vmatpush.bf16.msra.mxu0 %v3627
    %4815 = vmatpush.bf16.msra.mxu0 %v3626
    %4816 = vmatpush.bf16.msra.mxu0 %v3625
    %4817 = vmatpush.bf16.msra.mxu0 %v3624
    %4818 = vmatpush.bf16.msra.mxu0 %v3623
    %4819 = vmatpush.bf16.msra.mxu0 %v3622
    %4820 = vmatpush.bf16.msra.mxu0 %v3621
    %4821 = vmatpush.bf16.msra.mxu0 %v3620
    %4822 = vmatmul.bf16.gmra.mxu0 %v1237
    %v4823 = vpop.f32.mrf.mxu0
    %v4824 = vadd.f32 %v4811, %v4823
    %v4825 = vpop.f32.mrf.mxu0
    %4826 = vdwg.mxu0
    %4827 = vmatpush.bf16.msra.mxu0 %v3635
    %4828 = vmatpush.bf16.msra.mxu0 %v3634
    %4829 = vmatpush.bf16.msra.mxu0 %v3633
    %4830 = vmatpush.bf16.msra.mxu0 %v3632
    %4831 = vmatpush.bf16.msra.mxu0 %v3631
    %4832 = vmatpush.bf16.msra.mxu0 %v3630
    %4833 = vmatpush.bf16.msra.mxu0 %v3629
    %4834 = vmatpush.bf16.msra.mxu0 %v3628
    %4835 = vmatmul.bf16.gmra.mxu0 %v1238
    %v4836 = vpop.f32.mrf.mxu0
    %v4837 = vadd.f32 %v4824, %v4836
    %v4838 = vpop.f32.mrf.mxu0
    %4839 = vdwg.mxu0
    %4840 = vmatpush.bf16.msra.mxu0 %v3643
    %4841 = vmatpush.bf16.msra.mxu0 %v3642
    %4842 = vmatpush.bf16.msra.mxu0 %v3641
    %4843 = vmatpush.bf16.msra.mxu0 %v3640
    %4844 = vmatpush.bf16.msra.mxu0 %v3639
    %4845 = vmatpush.bf16.msra.mxu0 %v3638
    %4846 = vmatpush.bf16.msra.mxu0 %v3637
    %4847 = vmatpush.bf16.msra.mxu0 %v3636
    %4848 = vmatmul.bf16.gmra.mxu0 %v1239
    %v4849 = vpop.f32.mrf.mxu0
    %v4850 = vadd.f32 %v4837, %v4849
    %v4851 = vpop.f32.mrf.mxu0
    %4852 = vdwg.mxu0
    %4853 = vmatpush.bf16.msra.mxu0 %v3651
    %4854 = vmatpush.bf16.msra.mxu0 %v3650
    %4855 = vmatpush.bf16.msra.mxu0 %v3649
    %4856 = vmatpush.bf16.msra.mxu0 %v3648
    %4857 = vmatpush.bf16.msra.mxu0 %v3647
    %4858 = vmatpush.bf16.msra.mxu0 %v3646
    %4859 = vmatpush.bf16.msra.mxu0 %v3645
    %4860 = vmatpush.bf16.msra.mxu0 %v3644
    %4861 = vmatmul.bf16.gmra.mxu0 %v1240
    %v4862 = vpop.f32.mrf.mxu0
    %v4863 = vadd.f32 %v4850, %v4862
    %v4864 = vpop.f32.mrf.mxu0
    %4865 = vdwg.mxu0
    %4866 = vmatpush.bf16.msra.mxu0 %v3659
    %4867 = vmatpush.bf16.msra.mxu0 %v3658
    %4868 = vmatpush.bf16.msra.mxu0 %v3657
    %4869 = vmatpush.bf16.msra.mxu0 %v3656
    %4870 = vmatpush.bf16.msra.mxu0 %v3655
    %4871 = vmatpush.bf16.msra.mxu0 %v3654
    %4872 = vmatpush.bf16.msra.mxu0 %v3653
    %4873 = vmatpush.bf16.msra.mxu0 %v3652
    %4874 = vmatmul.bf16.gmra.mxu0 %v1241
    %v4875 = vpop.f32.mrf.mxu0
    %v4876 = vadd.f32 %v4863, %v4875
    %v4877 = vpop.f32.mrf.mxu0
    %4878 = vdwg.mxu0
    %4879 = vmatpush.bf16.msra.mxu0 %v3667
    %4880 = vmatpush.bf16.msra.mxu0 %v3666
    %4881 = vmatpush.bf16.msra.mxu0 %v3665
    %4882 = vmatpush.bf16.msra.mxu0 %v3664
    %4883 = vmatpush.bf16.msra.mxu0 %v3663
    %4884 = vmatpush.bf16.msra.mxu0 %v3662
    %4885 = vmatpush.bf16.msra.mxu0 %v3661
    %4886 = vmatpush.bf16.msra.mxu0 %v3660
    %4887 = vmatmul.bf16.gmra.mxu0 %v1242
    %v4888 = vpop.f32.mrf.mxu0
    %v4889 = vadd.f32 %v4876, %v4888
    %v4890 = vpop.f32.mrf.mxu0
    %4891 = vdwg.mxu0
    %4892 = vmatpush.bf16.msra.mxu0 %v3675
    %4893 = vmatpush.bf16.msra.mxu0 %v3674
    %4894 = vmatpush.bf16.msra.mxu0 %v3673
    %4895 = vmatpush.bf16.msra.mxu0 %v3672
    %4896 = vmatpush.bf16.msra.mxu0 %v3671
    %4897 = vmatpush.bf16.msra.mxu0 %v3670
    %4898 = vmatpush.bf16.msra.mxu0 %v3669
    %4899 = vmatpush.bf16.msra.mxu0 %v3668
    %4900 = vmatmul.bf16.gmra.mxu0 %v1243
    %v4901 = vpop.f32.mrf.mxu0
    %v4902 = vadd.f32 %v4889, %v4901
    %v4903 = vpop.f32.mrf.mxu0
    %4904 = vdwg.mxu0
    %4905 = vmatpush.bf16.msra.mxu0 %v3683
    %4906 = vmatpush.bf16.msra.mxu0 %v3682
    %4907 = vmatpush.bf16.msra.mxu0 %v3681
    %4908 = vmatpush.bf16.msra.mxu0 %v3680
    %4909 = vmatpush.bf16.msra.mxu0 %v3679
    %4910 = vmatpush.bf16.msra.mxu0 %v3678
    %4911 = vmatpush.bf16.msra.mxu0 %v3677
    %4912 = vmatpush.bf16.msra.mxu0 %v3676
    %4913 = vmatmul.bf16.gmra.mxu0 %v1244
    %v4914 = vpop.f32.mrf.mxu0
    %v4915 = vadd.f32 %v4902, %v4914
    %v4916 = vpop.f32.mrf.mxu0
    %4917 = vdwg.mxu0
    %4918 = vmatpush.bf16.msra.mxu0 %v3691
    %4919 = vmatpush.bf16.msra.mxu0 %v3690
    %4920 = vmatpush.bf16.msra.mxu0 %v3689
    %4921 = vmatpush.bf16.msra.mxu0 %v3688
    %4922 = vmatpush.bf16.msra.mxu0 %v3687
    %4923 = vmatpush.bf16.msra.mxu0 %v3686
    %4924 = vmatpush.bf16.msra.mxu0 %v3685
    %4925 = vmatpush.bf16.msra.mxu0 %v3684
    %4926 = vmatmul.bf16.gmra.mxu0 %v1245
    %v4927 = vpop.f32.mrf.mxu0
    %v4928 = vadd.f32 %v4915, %v4927
    %v4929 = vpop.f32.mrf.mxu0
    %4930 = vdwg.mxu0
    %4931 = vmatpush.bf16.msra.mxu0 %v3699
    %4932 = vmatpush.bf16.msra.mxu0 %v3698
    %4933 = vmatpush.bf16.msra.mxu0 %v3697
    %4934 = vmatpush.bf16.msra.mxu0 %v3696
    %4935 = vmatpush.bf16.msra.mxu0 %v3695
    %4936 = vmatpush.bf16.msra.mxu0 %v3694
    %4937 = vmatpush.bf16.msra.mxu0 %v3693
    %4938 = vmatpush.bf16.msra.mxu0 %v3692
    %4939 = vmatmul.bf16.gmra.mxu0 %v1246
    %v4940 = vpop.f32.mrf.mxu0
    %v4941 = vadd.f32 %v4928, %v4940
    %v4942 = vpop.f32.mrf.mxu0
    %4943 = vdwg.mxu0
    %4944 = vmatpush.bf16.msra.mxu0 %v3707
    %4945 = vmatpush.bf16.msra.mxu0 %v3706
    %4946 = vmatpush.bf16.msra.mxu0 %v3705
    %4947 = vmatpush.bf16.msra.mxu0 %v3704
    %4948 = vmatpush.bf16.msra.mxu0 %v3703
    %4949 = vmatpush.bf16.msra.mxu0 %v3702
    %4950 = vmatpush.bf16.msra.mxu0 %v3701
    %4951 = vmatpush.bf16.msra.mxu0 %v3700
    %4952 = vmatmul.bf16.gmra.mxu0 %v1247
    %v4953 = vpop.f32.mrf.mxu0
    %v4954 = vadd.f32 %v4941, %v4953
    %v4955 = vpop.f32.mrf.mxu0
    %4956 = vdwg.mxu0
    %4957 = vmatpush.bf16.msra.mxu0 %v3715
    %4958 = vmatpush.bf16.msra.mxu0 %v3714
    %4959 = vmatpush.bf16.msra.mxu0 %v3713
    %4960 = vmatpush.bf16.msra.mxu0 %v3712
    %4961 = vmatpush.bf16.msra.mxu0 %v3711
    %4962 = vmatpush.bf16.msra.mxu0 %v3710
    %4963 = vmatpush.bf16.msra.mxu0 %v3709
    %4964 = vmatpush.bf16.msra.mxu0 %v3708
    %4965 = vmatmul.bf16.gmra.mxu0 %v1248
    %v4966 = vpop.f32.mrf.mxu0
    %v4967 = vadd.f32 %v4954, %v4966
    %v4968 = vpop.f32.mrf.mxu0
    %4969 = vdwg.mxu0
    %4970 = vmatpush.bf16.msra.mxu0 %v3723
    %4971 = vmatpush.bf16.msra.mxu0 %v3722
    %4972 = vmatpush.bf16.msra.mxu0 %v3721
    %4973 = vmatpush.bf16.msra.mxu0 %v3720
    %4974 = vmatpush.bf16.msra.mxu0 %v3719
    %4975 = vmatpush.bf16.msra.mxu0 %v3718
    %4976 = vmatpush.bf16.msra.mxu0 %v3717
    %4977 = vmatpush.bf16.msra.mxu0 %v3716
    %4978 = vmatmul.bf16.gmra.mxu0 %v1249
    %v4979 = vpop.f32.mrf.mxu0
    %v4980 = vadd.f32 %v4967, %v4979
    %v4981 = vpop.f32.mrf.mxu0
    %4982 = vdwg.mxu0
    %4983 = vmatpush.bf16.msra.mxu0 %v3731
    %4984 = vmatpush.bf16.msra.mxu0 %v3730
    %4985 = vmatpush.bf16.msra.mxu0 %v3729
    %4986 = vmatpush.bf16.msra.mxu0 %v3728
    %4987 = vmatpush.bf16.msra.mxu0 %v3727
    %4988 = vmatpush.bf16.msra.mxu0 %v3726
    %4989 = vmatpush.bf16.msra.mxu0 %v3725
    %4990 = vmatpush.bf16.msra.mxu0 %v3724
    %4991 = vmatmul.bf16.gmra.mxu0 %v1250
    %v4992 = vpop.f32.mrf.mxu0
    %v4993 = vadd.f32 %v4980, %v4992
    %v4994 = vpop.f32.mrf.mxu0
    %4995 = vdwg.mxu0
    %4996 = vmatpush.bf16.msra.mxu0 %v3739
    %4997 = vmatpush.bf16.msra.mxu0 %v3738
    %4998 = vmatpush.bf16.msra.mxu0 %v3737
    %4999 = vmatpush.bf16.msra.mxu0 %v3736
    %5000 = vmatpush.bf16.msra.mxu0 %v3735
    %5001 = vmatpush.bf16.msra.mxu0 %v3734
    %5002 = vmatpush.bf16.msra.mxu0 %v3733
    %5003 = vmatpush.bf16.msra.mxu0 %v3732
    %5004 = vmatmul.bf16.gmra.mxu0 %v1251
    %v5005 = vpop.f32.mrf.mxu0
    %v5006 = vadd.f32 %v4993, %v5005
    %v5007 = vpop.f32.mrf.mxu0
    %5008 = vdwg.mxu0
    %5009 = vmatpush.bf16.msra.mxu0 %v3747
    %5010 = vmatpush.bf16.msra.mxu0 %v3746
    %5011 = vmatpush.bf16.msra.mxu0 %v3745
    %5012 = vmatpush.bf16.msra.mxu0 %v3744
    %5013 = vmatpush.bf16.msra.mxu0 %v3743
    %5014 = vmatpush.bf16.msra.mxu0 %v3742
    %5015 = vmatpush.bf16.msra.mxu0 %v3741
    %5016 = vmatpush.bf16.msra.mxu0 %v3740
    %5017 = vmatmul.bf16.gmra.mxu0 %v1252
    %v5018 = vpop.f32.mrf.mxu0
    %v5019 = vadd.f32 %v5006, %v5018
    %v5020 = vpop.f32.mrf.mxu0
    %5021 = vdwg.mxu0
    %5022 = vmatpush.bf16.msra.mxu0 %v3755
    %5023 = vmatpush.bf16.msra.mxu0 %v3754
    %5024 = vmatpush.bf16.msra.mxu0 %v3753
    %5025 = vmatpush.bf16.msra.mxu0 %v3752
    %5026 = vmatpush.bf16.msra.mxu0 %v3751
    %5027 = vmatpush.bf16.msra.mxu0 %v3750
    %5028 = vmatpush.bf16.msra.mxu0 %v3749
    %5029 = vmatpush.bf16.msra.mxu0 %v3748
    %5030 = vmatmul.bf16.gmra.mxu0 %v1253
    %v5031 = vpop.f32.mrf.mxu0
    %v5032 = vadd.f32 %v5019, %v5031
    %v5033 = vpop.f32.mrf.mxu0
    %5034 = vdwg.mxu0
    %5035 = vmatpush.bf16.msra.mxu0 %v3763
    %5036 = vmatpush.bf16.msra.mxu0 %v3762
    %5037 = vmatpush.bf16.msra.mxu0 %v3761
    %5038 = vmatpush.bf16.msra.mxu0 %v3760
    %5039 = vmatpush.bf16.msra.mxu0 %v3759
    %5040 = vmatpush.bf16.msra.mxu0 %v3758
    %5041 = vmatpush.bf16.msra.mxu0 %v3757
    %5042 = vmatpush.bf16.msra.mxu0 %v3756
    %5043 = vmatmul.bf16.gmra.mxu0 %v1254
    %v5044 = vpop.f32.mrf.mxu0
    %v5045 = vadd.f32 %v5032, %v5044
    %v5046 = vpop.f32.mrf.mxu0
    %5047 = vdwg.mxu0
    %5048 = vmatpush.bf16.msra.mxu0 %v3771
    %5049 = vmatpush.bf16.msra.mxu0 %v3770
    %5050 = vmatpush.bf16.msra.mxu0 %v3769
    %5051 = vmatpush.bf16.msra.mxu0 %v3768
    %5052 = vmatpush.bf16.msra.mxu0 %v3767
    %5053 = vmatpush.bf16.msra.mxu0 %v3766
    %5054 = vmatpush.bf16.msra.mxu0 %v3765
    %5055 = vmatpush.bf16.msra.mxu0 %v3764
    %5056 = vmatmul.bf16.gmra.mxu0 %v1255
    %v5057 = vpop.f32.mrf.mxu0
    %v5058 = vadd.f32 %v5045, %v5057
    %v5059 = vpop.f32.mrf.mxu0
    %5060 = vdwg.mxu0
    %5061 = vmatpush.bf16.msra.mxu0 %v3779
    %5062 = vmatpush.bf16.msra.mxu0 %v3778
    %5063 = vmatpush.bf16.msra.mxu0 %v3777
    %5064 = vmatpush.bf16.msra.mxu0 %v3776
    %5065 = vmatpush.bf16.msra.mxu0 %v3775
    %5066 = vmatpush.bf16.msra.mxu0 %v3774
    %5067 = vmatpush.bf16.msra.mxu0 %v3773
    %5068 = vmatpush.bf16.msra.mxu0 %v3772
    %5069 = vmatmul.bf16.gmra.mxu0 %v1256
    %v5070 = vpop.f32.mrf.mxu0
    %v5071 = vadd.f32 %v5058, %v5070
    %v5072 = vpop.f32.mrf.mxu0
    %5073 = vdwg.mxu0
    %5074 = vmatpush.bf16.msra.mxu0 %v3787
    %5075 = vmatpush.bf16.msra.mxu0 %v3786
    %5076 = vmatpush.bf16.msra.mxu0 %v3785
    %5077 = vmatpush.bf16.msra.mxu0 %v3784
    %5078 = vmatpush.bf16.msra.mxu0 %v3783
    %5079 = vmatpush.bf16.msra.mxu0 %v3782
    %5080 = vmatpush.bf16.msra.mxu0 %v3781
    %5081 = vmatpush.bf16.msra.mxu0 %v3780
    %5082 = vmatmul.bf16.gmra.mxu0 %v1257
    %v5083 = vpop.f32.mrf.mxu0
    %v5084 = vadd.f32 %v5071, %v5083
    %v5085 = vpop.f32.mrf.mxu0
    %5086 = vdwg.mxu0
    %5087 = vmatpush.bf16.msra.mxu0 0
    %5088 = vmatpush.bf16.msra.mxu0 %v3794
    %5089 = vmatpush.bf16.msra.mxu0 %v3793
    %5090 = vmatpush.bf16.msra.mxu0 %v3792
    %5091 = vmatpush.bf16.msra.mxu0 %v3791
    %5092 = vmatpush.bf16.msra.mxu0 %v3790
    %5093 = vmatpush.bf16.msra.mxu0 %v3789
    %5094 = vmatpush.bf16.msra.mxu0 %v3788
    %5095 = vmatmul.bf16.gmra.mxu0 %v4292
    %v5096 = vpop.f32.mrf.mxu0
    %v5097 = vadd.f32 %v5084, %v5096
    %v5098 = vpop.f32.mrf.mxu0
    %5099 = vdwg.mxu0
    %v5100 = vsub.f32 0.0, %v5097
    %v5101 = vmul.f32 %v5100, 1.442695
    %v5102 = vpow.pop %v5101
    %v5103 = vadd.f32 %v5102, 1.0
    %v5104 = vrcp.pop %v5103
    %v5105 = vmul.f32 %v5103, %v5104
    %v5106 = vsub.f32 1.0, %v5105
    %v5107 = vmul.f32 %v5104, %v5106
    %v5108 = vadd.f32 %v5104, %v5107
    %vm5109 = vweird.f32 %v5103
    %vm5110 = vweird.f32 %v5104
    %vm5111 = vmor %vm5109, %vm5110
    %v5112 = vsel %vm5111, %v5104, %v5108
    %v5113 = vand.u32 2147483647, %v5103
    %vm5114 = vcmp.eq.f32.partialorder %v5113, 8.507059e+37
    %v5115 = vand.u32 %v5103, 2147483648
    %v5116 = vor.u32 1.1754944e-38, %v5115
    %v5117 = vsel %vm5114, %v5116, %v5112
    %v5118 = vmul.f32 1.0, %v5117
    %v5119 = vld [vmem:[#allocation7] sm:$0xff]
    %v5120 = vld [vmem:[#allocation7 + $0x8] sm:$0xff]
    %v5121 = vld [vmem:[#allocation7 + $0x10] sm:$0xff]
    %v5122 = vld [vmem:[#allocation7 + $0x18] sm:$0xff]
    %v5123 = vld [vmem:[#allocation7 + $0x20] sm:$0xff]
    %v5124 = vld [vmem:[#allocation7 + $0x28] sm:$0xff]
    %v5125 = vld [vmem:[#allocation7 + $0x30] sm:$0xff]
    %v5126 = vld [vmem:[#allocation7 + $0x38] sm:$0xff]
    %v5127 = vld [vmem:[#allocation7 + $0x40] sm:$0xff]
    %v5128 = vld [vmem:[#allocation7 + $0x48] sm:$0xff]
    %v5129 = vld [vmem:[#allocation7 + $0x50] sm:$0xff]
    %v5130 = vld [vmem:[#allocation7 + $0x58] sm:$0xff]
    %v5131 = vld [vmem:[#allocation7 + $0x60] sm:$0xff]
    %v5132 = vld [vmem:[#allocation7 + $0x68] sm:$0xff]
    %v5133 = vld [vmem:[#allocation7 + $0x70] sm:$0xff]
    %v5134 = vld [vmem:[#allocation7 + $0x78] sm:$0xff]
    %v5135 = vld [vmem:[#allocation8 + $0x1] sm:$0x1]
    %v5136 = vperm.slane %v5135, 0
    %5137 = vmatpush.msra.mxu0 %v5134
    %5138 = vmatpush.msra.mxu0 %v5133
    %5139 = vmatpush.msra.mxu0 %v5132
    %5140 = vmatpush.msra.mxu0 %v5131
    %5141 = vmatpush.msra.mxu0 %v5130
    %5142 = vmatpush.msra.mxu0 %v5129
    %5143 = vmatpush.msra.mxu0 %v5128
    %5144 = vmatpush.msra.mxu0 %v5127
    %5145 = vmatpush.msra.mxu0 %v5126
    %5146 = vmatpush.msra.mxu0 %v5125
    %5147 = vmatpush.msra.mxu0 %v5124
    %5148 = vmatpush.msra.mxu0 %v5123
    %5149 = vmatpush.msra.mxu0 %v5122
    %5150 = vmatpush.msra.mxu0 %v5121
    %5151 = vmatpush.msra.mxu0 %v5120
    %5152 = vmatpush.msra.mxu0 %v5119
    %5153 = vmatmul.f32.gmra.mxu0 %v5118
    %v5154 = vpop.f32.mrf.mxu0
    %v5155 = vadd.f32 %v5136, %v5154
    %5156 = vdwg.mxu0
    %5157 = vmax.xlane.f32.xlu0 %v5155
    %v5158 = vpop.xlane.xlu0 %5157
    %v5159 = vsub.f32 %v5155, %v5158
    %v5160 = vmul.f32 %v5159, 1.442695
    %v5161 = vpow.pop %v5160
    %5162 = vadd.xlane.f32.xlu0 %v5161
    %v5163 = vpop.xlane.xlu0 %5162
    %v5164 = vrcp.pop %v5163
    %v5165 = vmul.f32 %v5161, %v5164
    %5166 = vst [vmem:[#allocation10] sm:$0xff] %v5165
    %5167 = vst [vmem:[#allocation11] sm:$0xff] %v5155
    // Predicated region
    $region34: #{tpu_custom_call.1} parent=1 // pred_check
      _
    $region35: #{tpu_custom_call.1} parent=1 // pred_check_branch
      %5169 = sbr.rel (0) target = $region37
    $region36: #{tpu_custom_call.1} parent=1 // pred_region
      %5171 = vsyncadd [#allocation4], 0
      %s5173 = sshll.u32 [#allocation10], 4
      %s5174 = int_to_ptr.vmem [resolvable:$true] %s5173
      %s5175 = sshll.u32 %s4, 4
      %s5176 = int_to_ptr.hbm [resolvable:$true] %s5175
      %5178 = dma.vmem_to_hbm [thread:$0]  %s5174, 128, %s5176, [#allocation4]
    $region37: #{tpu_custom_call.1} parent=1 // pred_fallthru
      _
    // Predicated region
    $region38: #{tpu_custom_call.1} parent=1 // pred_check
      _
    $region39: #{tpu_custom_call.1} parent=1 // pred_check_branch
      %5180 = sbr.rel (0) target = $region41
    $region40: #{tpu_custom_call.1} parent=1 // pred_region
      %5182 = vsyncadd [#allocation12], 0
      %s5184 = sshll.u32 [#allocation11], 4
      %s5185 = int_to_ptr.vmem [resolvable:$true] %s5184
      %s5186 = sshll.u32 %s5, 4
      %s5187 = int_to_ptr.hbm [resolvable:$true] %s5186
      %5189 = dma.vmem_to_hbm [thread:$0]  %s5185, 128, %s5187, [#allocation12]
    $region41: #{tpu_custom_call.1} parent=1 // pred_fallthru
      _
    // Predicated region
    $region42: #{tpu_custom_call.1} parent=1 // pred_check
      _
    $region43: #{tpu_custom_call.1} parent=1 // pred_check_branch
      %5191 = sbr.rel (0) target = $region45
    $region44: #{tpu_custom_call.1} parent=1 // pred_region
      %5193 = dma.done [#allocation4], 128
    $region45: #{tpu_custom_call.1} parent=1 // pred_fallthru
      _
    // Predicated region
    $region46: #{tpu_custom_call.1} parent=1 // pred_check
      _
    $region47: #{tpu_custom_call.1} parent=1 // pred_check_branch
      %5195 = sbr.rel (0) target = $region49
    $region48: #{tpu_custom_call.1} parent=1 // pred_region
      %5197 = dma.done [#allocation12], 128
    $region49: #{tpu_custom_call.1} parent=1 // pred_fallthru
      _
    %5198 = vsyncpa [#allocation3], 1
    %5199 = vsyncpa [#allocation6], 1
    %5200 = vsyncpa [#allocation9], 1
    %5201 = vsyncpa [#allocation4], 1
    %5202 = vsyncpa [#allocation12], 1

// kernel: tpu_custom_call.1
$region0: #{tpu_custom_call.1}
  #allocation0 [shape = 'u32[]', space=smem, size = 0x4, offset = 0x4, fixed_abs, tag = 'smem constant byte address 0x4 - core index']
  #allocation1 [shape = 'u32[72,128]{1,0:T(1,128)}', space=vmem, size = 0x9000, scoped, tag = 'internal scratch']
  %s0 = inlined_call_operand.hbm [shape: bf16[8,7920], index: 0, kind: input, shape index: {}]
  %s1 = inlined_call_operand.hbm [shape: bf16[7920,128], index: 1, kind: input, shape index: {}]
  %s2 = inlined_call_operand.hbm [shape: f32[128,128], index: 2, kind: input, shape index: {}]
  %s3 = inlined_call_operand.hbm [shape: f32[8,128], index: 3, kind: input, shape index: {}]
  %s4 = inlined_call_operand.hbm [shape: f32[8,128], index: 4, kind: output, shape index: {0}]
  %s5 = inlined_call_operand.hbm [shape: f32[8,128], index: 5, kind: output, shape index: {1}]
  %6 = xla_tuple %s4, %s5
  %s7 = sld [smem:[#allocation0]]
  $region50: #{tpu_custom_call.1} parent=0
    _
  %s9 = ssub.s32 1, %s7
  %s10 = scalar_select 0, %s9, %s7
  $region1: #{tpu_custom_call.1} parent=0
    #allocation2 [shape = 'u8[126976]{0}', space=vmem, size = 0x1f000, scoped, tag = 'input window, operand 0, single buffered']
    #allocation3 [shape = 's32[1]{0}', space=sflag, size = 0x4, scoped, tag = 'scoped memory for tpu_custom_call.1']
    #allocation4 [shape = 's32[1]{0}', space=sflag, size = 0x4, scoped, tag = 'scoped memory for tpu_custom_call.1']
    #allocation5 [shape = 'u8[2027520]{0}', space=vmem, size = 0x1ef000, scoped, tag = 'input window, operand 1, single buffered']
    #allocation6 [shape = 's32[1]{0}', space=sflag, size = 0x4, scoped, tag = 'scoped memory for tpu_custom_call.1']
    #allocation7 [shape = 'u8[65536]{0}', space=vmem, size = 0x10000, scoped, tag = 'input window, operand 2, single buffered']
    #allocation8 [shape = 'u8[4096]{0}', space=vmem, size = 0x1000, scoped, tag = 'input window, operand 3, single buffered']
    #allocation9 [shape = 's32[1]{0}', space=sflag, size = 0x4, scoped, tag = 'scoped memory for tpu_custom_call.1']
    #allocation10 [shape = 'u8[4096]{0}', space=vmem, size = 0x1000, scoped, tag = 'output window, operand 0, single buffered']
    #allocation11 [shape = 'u8[4096]{0}', space=vmem, size = 0x1000, scoped, tag = 'output window, operand 1, single buffered']
    #allocation12 [shape = 's32[1]{0}', space=sflag, size = 0x4, scoped, tag = 'scoped memory for tpu_custom_call.1']
    %11 = vsyncpa [#allocation3], 0
    %12 = vsyncpa [#allocation6], 0
    %13 = vsyncpa [#allocation9], 0
    %14 = vsyncpa [#allocation4], 0
    %15 = vsyncpa [#allocation12], 0
    // Predicated region
    $region2: #{tpu_custom_call.1} parent=1 // pred_check
      _
    $region3: #{tpu_custom_call.1} parent=1 // pred_check_branch
      %17 = sbr.rel (0) target = $region5
    $region4: #{tpu_custom_call.1} parent=1 // pred_region
      %19 = vsyncadd [#allocation3], 0
      %s21 = sshll.u32 %s0, 4
      %s22 = int_to_ptr.hbm [resolvable:$true] %s21
      %s23 = sshll.u32 [#allocation2], 4
      %s24 = int_to_ptr.vmem [resolvable:$true] %s23
      %26 = dma.hbm_to_vmem [thread:$0]  %s22, 3968, %s24, [#allocation3]
    $region5: #{tpu_custom_call.1} parent=1 // pred_fallthru
      _
    // Predicated region
    $region6: #{tpu_custom_call.1} parent=1 // pred_check
      _
    $region7: #{tpu_custom_call.1} parent=1 // pred_check_branch
      %28 = sbr.rel (0) target = $region9
    $region8: #{tpu_custom_call.1} parent=1 // pred_region
      %30 = vsyncadd [#allocation6], 0
      %s31 = sshll.u32 %s1, 4
      %s32 = int_to_ptr.hbm [resolvable:$true] %s31
      %s33 = sshll.u32 [#allocation5], 4
      %s34 = int_to_ptr.vmem [resolvable:$true] %s33
      %39 = dma.hbm_to_vmem [thread:$0]  %s32, 63360, %s34, [#allocation6], 64, 64, 4
    $region9: #{tpu_custom_call.1} parent=1 // pred_fallthru
      _
    // Predicated region
    $region10: #{tpu_custom_call.1} parent=1 // pred_check
      _
    $region11: #{tpu_custom_call.1} parent=1 // pred_check_branch
      %41 = sbr.rel (0) target = $region13
    $region12: #{tpu_custom_call.1} parent=1 // pred_region
      %43 = vsyncadd [#allocation6], 0
      %s44 = sshll.u32 %s2, 4
      %s45 = int_to_ptr.hbm [resolvable:$true] %s44
      %s46 = sshll.u32 [#allocation7], 4
      %s47 = int_to_ptr.vmem [resolvable:$true] %s46
      %52 = dma.hbm_to_vmem [thread:$0]  %s45, 2048, %s47, [#allocation6], 128, 128, 8
    $region13: #{tpu_custom_call.1} parent=1 // pred_fallthru
      _
    // Predicated region
    $region14: #{tpu_custom_call.1} parent=1 // pred_check
      _
    $region15: #{tpu_custom_call.1} parent=1 // pred_check_branch
      %54 = sbr.rel (0) target = $region17
    $region16: #{tpu_custom_call.1} parent=1 // pred_region
      %56 = vsyncadd [#allocation9], 0
      %s58 = sshll.u32 %s3, 4
      %s59 = int_to_ptr.hbm [resolvable:$true] %s58
      %s60 = sshll.u32 [#allocation8], 4
      %s61 = int_to_ptr.vmem [resolvable:$true] %s60
      %63 = dma.hbm_to_vmem [thread:$0]  %s59, 128, %s61, [#allocation9]
    $region17: #{tpu_custom_call.1} parent=1 // pred_fallthru
      _
    // Predicated region
    $region18: #{tpu_custom_call.1} parent=1 // pred_check
      _
    $region19: #{tpu_custom_call.1} parent=1 // pred_check_branch
      %65 = sbr.rel (0) target = $region21
    $region20: #{tpu_custom_call.1} parent=1 // pred_region
      %67 = dma.done [#allocation3], 3968
    $region21: #{tpu_custom_call.1} parent=1 // pred_fallthru
      _
    // Predicated region
    $region22: #{tpu_custom_call.1} parent=1 // pred_check
      _
    $region23: #{tpu_custom_call.1} parent=1 // pred_check_branch
      %69 = sbr.rel (0) target = $region25
    $region24: #{tpu_custom_call.1} parent=1 // pred_region
      %71 = dma.done [#allocation6], 63360
    $region25: #{tpu_custom_call.1} parent=1 // pred_fallthru
      _
    // Predicated region
    $region26: #{tpu_custom_call.1} parent=1 // pred_check
      _
    $region27: #{tpu_custom_call.1} parent=1 // pred_check_branch
      %73 = sbr.rel (0) target = $region29
    $region28: #{tpu_custom_call.1} parent=1 // pred_region
      %75 = dma.done [#allocation6], 2048
    $region29: #{tpu_custom_call.1} parent=1 // pred_fallthru
      _
    // Predicated region
    $region30: #{tpu_custom_call.1} parent=1 // pred_check
      _
    $region31: #{tpu_custom_call.1} parent=1 // pred_check_branch
      %77 = sbr.rel (0) target = $region33
    $region32: #{tpu_custom_call.1} parent=1 // pred_region
      %79 = dma.done [#allocation9], 128
    $region33: #{tpu_custom_call.1} parent=1 // pred_fallthru
      _
    %v81 = vld [vmem:[#allocation2] sm:$0xff]
    %v82 = vld [vmem:[#allocation2 + $0x8] sm:$0xff]
    %v83 = vld [vmem:[#allocation2 + $0x10] sm:$0xff]
    %v84 = vld [vmem:[#allocation2 + $0x18] sm:$0xff]
    %v85 = vld [vmem:[#allocation2 + $0x20] sm:$0xff]
    %v86 = vld [vmem:[#allocation2 + $0x28] sm:$0xff]
    %v87 = vld [vmem:[#allocation2 + $0x30] sm:$0xff]
    %v88 = vld [vmem:[#allocation2 + $0x38] sm:$0xff]
    %v89 = vld [vmem:[#allocation2 + $0x40] sm:$0xff]
    %v90 = vld [vmem:[#allocation2 + $0x48] sm:$0xff]
    %v91 = vld [vmem:[#allocation2 + $0x50] sm:$0xff]
    %v92 = vld [vmem:[#allocation2 + $0x58] sm:$0xff]
    %v93 = vld [vmem:[#allocation2 + $0x60] sm:$0xff]
    %v94 = vld [vmem:[#allocation2 + $0x68] sm:$0xff]
    %v95 = vld [vmem:[#allocation2 + $0x70] sm:$0xff]
    %v96 = vld [vmem:[#allocation2 + $0x78] sm:$0xff]
    %v97 = vld [vmem:[#allocation2 + $0x80] sm:$0xff]
    %v98 = vld [vmem:[#allocation2 + $0x88] sm:$0xff]
    %v99 = vld [vmem:[#allocation2 + $0x90] sm:$0xff]
    %v100 = vld [vmem:[#allocation2 + $0x98] sm:$0xff]
    %v101 = vld [vmem:[#allocation2 + $0xa0] sm:$0xff]
    %v102 = vld [vmem:[#allocation2 + $0xa8] sm:$0xff]
    %v103 = vld [vmem:[#allocation2 + $0xb0] sm:$0xff]
    %v104 = vld [vmem:[#allocation2 + $0xb8] sm:$0xff]
    %v105 = vld [vmem:[#allocation2 + $0xc0] sm:$0xff]
    %v106 = vld [vmem:[#allocation2 + $0xc8] sm:$0xff]
    %v107 = vld [vmem:[#allocation2 + $0xd0] sm:$0xff]
    %v108 = vld [vmem:[#allocation2 + $0xd8] sm:$0xff]
    %v109 = vld [vmem:[#allocation2 + $0xe0] sm:$0xff]
    %v110 = vld [vmem:[#allocation2 + $0xe8] sm:$0xff]
    %v111 = vld [vmem:[#allocation2 + $0xf0] sm:$0xff]
    %v112 = vld [vmem:[#allocation5] sm:$0xf]
    %v113 = vld [vmem:[#allocation5 + $0x4] sm:$0xf]
    %v114 = vld [vmem:[#allocation5 + $0x8] sm:$0xf]
    %v115 = vld [vmem:[#allocation5 + $0xc] sm:$0xf]
    %v116 = vld [vmem:[#allocation5 + $0x10] sm:$0xf]
    %v117 = vld [vmem:[#allocation5 + $0x14] sm:$0xf]
    %v118 = vld [vmem:[#allocation5 + $0x18] sm:$0xf]
    %v119 = vld [vmem:[#allocation5 + $0x1c] sm:$0xf]
    %v120 = vld [vmem:[#allocation5 + $0x20] sm:$0xf]
    %v121 = vld [vmem:[#allocation5 + $0x24] sm:$0xf]
    %v122 = vld [vmem:[#allocation5 + $0x28] sm:$0xf]
    %v123 = vld [vmem:[#allocation5 + $0x2c] sm:$0xf]
    %v124 = vld [vmem:[#allocation5 + $0x30] sm:$0xf]
    %v125 = vld [vmem:[#allocation5 + $0x34] sm:$0xf]
    %v126 = vld [vmem:[#allocation5 + $0x38] sm:$0xf]
    %v127 = vld [vmem:[#allocation5 + $0x3c] sm:$0xf]
    %v128 = vld [vmem:[#allocation5 + $0x40] sm:$0xf]
    %v129 = vld [vmem:[#allocation5 + $0x44] sm:$0xf]
    %v130 = vld [vmem:[#allocation5 + $0x48] sm:$0xf]
    %v131 = vld [vmem:[#allocation5 + $0x4c] sm:$0xf]
    %v132 = vld [vmem:[#allocation5 + $0x50] sm:$0xf]
    %v133 = vld [vmem:[#allocation5 + $0x54] sm:$0xf]
    %v134 = vld [vmem:[#allocation5 + $0x58] sm:$0xf]
    %v135 = vld [vmem:[#allocation5 + $0x5c] sm:$0xf]
    %v136 = vld [vmem:[#allocation5 + $0x60] sm:$0xf]
    %v137 = vld [vmem:[#allocation5 + $0x64] sm:$0xf]
    %v138 = vld [vmem:[#allocation5 + $0x68] sm:$0xf]
    %v139 = vld [vmem:[#allocation5 + $0x6c] sm:$0xf]
    %v140 = vld [vmem:[#allocation5 + $0x70] sm:$0xf]
    %v141 = vld [vmem:[#allocation5 + $0x74] sm:$0xf]
    %v142 = vld [vmem:[#allocation5 + $0x78] sm:$0xf]
    %v143 = vld [vmem:[#allocation5 + $0x7c] sm:$0xf]
    %v144 = vld [vmem:[#allocation5 + $0x80] sm:$0xf]
    %v145 = vld [vmem:[#allocation5 + $0x84] sm:$0xf]
    %v146 = vld [vmem:[#allocation5 + $0x88] sm:$0xf]
    %v147 = vld [vmem:[#allocation5 + $0x8c] sm:$0xf]
    %v148 = vld [vmem:[#allocation5 + $0x90] sm:$0xf]
    %v149 = vld [vmem:[#allocation5 + $0x94] sm:$0xf]
    %v150 = vld [vmem:[#allocation5 + $0x98] sm:$0xf]
    %v151 = vld [vmem:[#allocation5 + $0x9c] sm:$0xf]
    %v152 = vld [vmem:[#allocation5 + $0xa0] sm:$0xf]
    %v153 = vld [vmem:[#allocation5 + $0xa4] sm:$0xf]
    %v154 = vld [vmem:[#allocation5 + $0xa8] sm:$0xf]
    %v155 = vld [vmem:[#allocation5 + $0xac] sm:$0xf]
    %v156 = vld [vmem:[#allocation5 + $0xb0] sm:$0xf]
    %v157 = vld [vmem:[#allocation5 + $0xb4] sm:$0xf]
    %v158 = vld [vmem:[#allocation5 + $0xb8] sm:$0xf]
    %v159 = vld [vmem:[#allocation5 + $0xbc] sm:$0xf]
    %v160 = vld [vmem:[#allocation5 + $0xc0] sm:$0xf]
    %v161 = vld [vmem:[#allocation5 + $0xc4] sm:$0xf]
    %v162 = vld [vmem:[#allocation5 + $0xc8] sm:$0xf]
    %v163 = vld [vmem:[#allocation5 + $0xcc] sm:$0xf]
    %v164 = vld [vmem:[#allocation5 + $0xd0] sm:$0xf]
    %v165 = vld [vmem:[#allocation5 + $0xd4] sm:$0xf]
    %v166 = vld [vmem:[#allocation5 + $0xd8] sm:$0xf]
    %v167 = vld [vmem:[#allocation5 + $0xdc] sm:$0xf]
    %v168 = vld [vmem:[#allocation5 + $0xe0] sm:$0xf]
    %v169 = vld [vmem:[#allocation5 + $0xe4] sm:$0xf]
    %v170 = vld [vmem:[#allocation5 + $0xe8] sm:$0xf]
    %v171 = vld [vmem:[#allocation5 + $0xec] sm:$0xf]
    %v172 = vld [vmem:[#allocation5 + $0xf0] sm:$0xf]
    %v173 = vld [vmem:[#allocation5 + $0xf4] sm:$0xf]
    %v174 = vld [vmem:[#allocation5 + $0xf8] sm:$0xf]
    %v175 = vld [vmem:[#allocation5 + $0xfc] sm:$0xf]
    %v176 = vld [vmem:[#allocation5 + $0x100] sm:$0xf]
    %v177 = vld [vmem:[#allocation5 + $0x104] sm:$0xf]
    %v178 = vld [vmem:[#allocation5 + $0x108] sm:$0xf]
    %v179 = vld [vmem:[#allocation5 + $0x10c] sm:$0xf]
    %v180 = vld [vmem:[#allocation5 + $0x110] sm:$0xf]
    %v181 = vld [vmem:[#allocation5 + $0x114] sm:$0xf]
    %v182 = vld [vmem:[#allocation5 + $0x118] sm:$0xf]
    %v183 = vld [vmem:[#allocation5 + $0x11c] sm:$0xf]
    %v184 = vld [vmem:[#allocation5 + $0x120] sm:$0xf]
    %v185 = vld [vmem:[#allocation5 + $0x124] sm:$0xf]
    %v186 = vld [vmem:[#allocation5 + $0x128] sm:$0xf]
    %v187 = vld [vmem:[#allocation5 + $0x12c] sm:$0xf]
    %v188 = vld [vmem:[#allocation5 + $0x130] sm:$0xf]
    %v189 = vld [vmem:[#allocation5 + $0x134] sm:$0xf]
    %v190 = vld [vmem:[#allocation5 + $0x138] sm:$0xf]
    %v191 = vld [vmem:[#allocation5 + $0x13c] sm:$0xf]
    %v192 = vld [vmem:[#allocation5 + $0x140] sm:$0xf]
    %v193 = vld [vmem:[#allocation5 + $0x144] sm:$0xf]
    %v194 = vld [vmem:[#allocation5 + $0x148] sm:$0xf]
    %v195 = vld [vmem:[#allocation5 + $0x14c] sm:$0xf]
    %v196 = vld [vmem:[#allocation5 + $0x150] sm:$0xf]
    %v197 = vld [vmem:[#allocation5 + $0x154] sm:$0xf]
    %v198 = vld [vmem:[#allocation5 + $0x158] sm:$0xf]
    %v199 = vld [vmem:[#allocation5 + $0x15c] sm:$0xf]
    %v200 = vld [vmem:[#allocation5 + $0x160] sm:$0xf]
    %v201 = vld [vmem:[#allocation5 + $0x164] sm:$0xf]
    %v202 = vld [vmem:[#allocation5 + $0x168] sm:$0xf]
    %v203 = vld [vmem:[#allocation5 + $0x16c] sm:$0xf]
    %v204 = vld [vmem:[#allocation5 + $0x170] sm:$0xf]
    %v205 = vld [vmem:[#allocation5 + $0x174] sm:$0xf]
    %v206 = vld [vmem:[#allocation5 + $0x178] sm:$0xf]
    %v207 = vld [vmem:[#allocation5 + $0x17c] sm:$0xf]
    %v208 = vld [vmem:[#allocation5 + $0x180] sm:$0xf]
    %v209 = vld [vmem:[#allocation5 + $0x184] sm:$0xf]
    %v210 = vld [vmem:[#allocation5 + $0x188] sm:$0xf]
    %v211 = vld [vmem:[#allocation5 + $0x18c] sm:$0xf]
    %v212 = vld [vmem:[#allocation5 + $0x190] sm:$0xf]
    %v213 = vld [vmem:[#allocation5 + $0x194] sm:$0xf]
    %v214 = vld [vmem:[#allocation5 + $0x198] sm:$0xf]
    %v215 = vld [vmem:[#allocation5 + $0x19c] sm:$0xf]
    %v216 = vld [vmem:[#allocation5 + $0x1a0] sm:$0xf]
    %v217 = vld [vmem:[#allocation5 + $0x1a4] sm:$0xf]
    %v218 = vld [vmem:[#allocation5 + $0x1a8] sm:$0xf]
    %v219 = vld [vmem:[#allocation5 + $0x1ac] sm:$0xf]
    %v220 = vld [vmem:[#allocation5 + $0x1b0] sm:$0xf]
    %v221 = vld [vmem:[#allocation5 + $0x1b4] sm:$0xf]
    %v222 = vld [vmem:[#allocation5 + $0x1b8] sm:$0xf]
    %v223 = vld [vmem:[#allocation5 + $0x1bc] sm:$0xf]
    %v224 = vld [vmem:[#allocation5 + $0x1c0] sm:$0xf]
    %v225 = vld [vmem:[#allocation5 + $0x1c4] sm:$0xf]
    %v226 = vld [vmem:[#allocation5 + $0x1c8] sm:$0xf]
    %v227 = vld [vmem:[#allocation5 + $0x1cc] sm:$0xf]
    %v228 = vld [vmem:[#allocation5 + $0x1d0] sm:$0xf]
    %v229 = vld [vmem:[#allocation5 + $0x1d4] sm:$0xf]
    %v230 = vld [vmem:[#allocation5 + $0x1d8] sm:$0xf]
    %v231 = vld [vmem:[#allocation5 + $0x1dc] sm:$0xf]
    %v232 = vld [vmem:[#allocation5 + $0x1e0] sm:$0xf]
    %v233 = vld [vmem:[#allocation5 + $0x1e4] sm:$0xf]
    %v234 = vld [vmem:[#allocation5 + $0x1e8] sm:$0xf]
    %v235 = vld [vmem:[#allocation5 + $0x1ec] sm:$0xf]
    %v236 = vld [vmem:[#allocation5 + $0x1f0] sm:$0xf]
    %v237 = vld [vmem:[#allocation5 + $0x1f4] sm:$0xf]
    %v238 = vld [vmem:[#allocation5 + $0x1f8] sm:$0xf]
    %v239 = vld [vmem:[#allocation5 + $0x1fc] sm:$0xf]
    %v240 = vld [vmem:[#allocation5 + $0x200] sm:$0xf]
    %v241 = vld [vmem:[#allocation5 + $0x204] sm:$0xf]
    %v242 = vld [vmem:[#allocation5 + $0x208] sm:$0xf]
    %v243 = vld [vmem:[#allocation5 + $0x20c] sm:$0xf]
    %v244 = vld [vmem:[#allocation5 + $0x210] sm:$0xf]
    %v245 = vld [vmem:[#allocation5 + $0x214] sm:$0xf]
    %v246 = vld [vmem:[#allocation5 + $0x218] sm:$0xf]
    %v247 = vld [vmem:[#allocation5 + $0x21c] sm:$0xf]
    %v248 = vld [vmem:[#allocation5 + $0x220] sm:$0xf]
    %v249 = vld [vmem:[#allocation5 + $0x224] sm:$0xf]
    %v250 = vld [vmem:[#allocation5 + $0x228] sm:$0xf]
    %v251 = vld [vmem:[#allocation5 + $0x22c] sm:$0xf]
    %v252 = vld [vmem:[#allocation5 + $0x230] sm:$0xf]
    %v253 = vld [vmem:[#allocation5 + $0x234] sm:$0xf]
    %v254 = vld [vmem:[#allocation5 + $0x238] sm:$0xf]
    %v255 = vld [vmem:[#allocation5 + $0x23c] sm:$0xf]
    %v256 = vld [vmem:[#allocation5 + $0x240] sm:$0xf]
    %v257 = vld [vmem:[#allocation5 + $0x244] sm:$0xf]
    %v258 = vld [vmem:[#allocation5 + $0x248] sm:$0xf]
    %v259 = vld [vmem:[#allocation5 + $0x24c] sm:$0xf]
    %v260 = vld [vmem:[#allocation5 + $0x250] sm:$0xf]
    %v261 = vld [vmem:[#allocation5 + $0x254] sm:$0xf]
    %v262 = vld [vmem:[#allocation5 + $0x258] sm:$0xf]
    %v263 = vld [vmem:[#allocation5 + $0x25c] sm:$0xf]
    %v264 = vld [vmem:[#allocation5 + $0x260] sm:$0xf]
    %v265 = vld [vmem:[#allocation5 + $0x264] sm:$0xf]
    %v266 = vld [vmem:[#allocation5 + $0x268] sm:$0xf]
    %v267 = vld [vmem:[#allocation5 + $0x26c] sm:$0xf]
    %v268 = vld [vmem:[#allocation5 + $0x270] sm:$0xf]
    %v269 = vld [vmem:[#allocation5 + $0x274] sm:$0xf]
    %v270 = vld [vmem:[#allocation5 + $0x278] sm:$0xf]
    %v271 = vld [vmem:[#allocation5 + $0x27c] sm:$0xf]
    %v272 = vld [vmem:[#allocation5 + $0x280] sm:$0xf]
    %v273 = vld [vmem:[#allocation5 + $0x284] sm:$0xf]
    %v274 = vld [vmem:[#allocation5 + $0x288] sm:$0xf]
    %v275 = vld [vmem:[#allocation5 + $0x28c] sm:$0xf]
    %v276 = vld [vmem:[#allocation5 + $0x290] sm:$0xf]
    %v277 = vld [vmem:[#allocation5 + $0x294] sm:$0xf]
    %v278 = vld [vmem:[#allocation5 + $0x298] sm:$0xf]
    %v279 = vld [vmem:[#allocation5 + $0x29c] sm:$0xf]
    %v280 = vld [vmem:[#allocation5 + $0x2a0] sm:$0xf]
    %v281 = vld [vmem:[#allocation5 + $0x2a4] sm:$0xf]
    %v282 = vld [vmem:[#allocation5 + $0x2a8] sm:$0xf]
    %v283 = vld [vmem:[#allocation5 + $0x2ac] sm:$0xf]
    %v284 = vld [vmem:[#allocation5 + $0x2b0] sm:$0xf]
    %v285 = vld [vmem:[#allocation5 + $0x2b4] sm:$0xf]
    %v286 = vld [vmem:[#allocation5 + $0x2b8] sm:$0xf]
    %v287 = vld [vmem:[#allocation5 + $0x2bc] sm:$0xf]
    %v288 = vld [vmem:[#allocation5 + $0x2c0] sm:$0xf]
    %v289 = vld [vmem:[#allocation5 + $0x2c4] sm:$0xf]
    %v290 = vld [vmem:[#allocation5 + $0x2c8] sm:$0xf]
    %v291 = vld [vmem:[#allocation5 + $0x2cc] sm:$0xf]
    %v292 = vld [vmem:[#allocation5 + $0x2d0] sm:$0xf]
    %v293 = vld [vmem:[#allocation5 + $0x2d4] sm:$0xf]
    %v294 = vld [vmem:[#allocation5 + $0x2d8] sm:$0xf]
    %v295 = vld [vmem:[#allocation5 + $0x2dc] sm:$0xf]
    %v296 = vld [vmem:[#allocation5 + $0x2e0] sm:$0xf]
    %v297 = vld [vmem:[#allocation5 + $0x2e4] sm:$0xf]
    %v298 = vld [vmem:[#allocation5 + $0x2e8] sm:$0xf]
    %v299 = vld [vmem:[#allocation5 + $0x2ec] sm:$0xf]
    %v300 = vld [vmem:[#allocation5 + $0x2f0] sm:$0xf]
    %v301 = vld [vmem:[#allocation5 + $0x2f4] sm:$0xf]
    %v302 = vld [vmem:[#allocation5 + $0x2f8] sm:$0xf]
    %v303 = vld [vmem:[#allocation5 + $0x2fc] sm:$0xf]
    %v304 = vld [vmem:[#allocation5 + $0x300] sm:$0xf]
    %v305 = vld [vmem:[#allocation5 + $0x304] sm:$0xf]
    %v306 = vld [vmem:[#allocation5 + $0x308] sm:$0xf]
    %v307 = vld [vmem:[#allocation5 + $0x30c] sm:$0xf]
    %v308 = vld [vmem:[#allocation5 + $0x310] sm:$0xf]
    %v309 = vld [vmem:[#allocation5 + $0x314] sm:$0xf]
    %v310 = vld [vmem:[#allocation5 + $0x318] sm:$0xf]
    %v311 = vld [vmem:[#allocation5 + $0x31c] sm:$0xf]
    %v312 = vld [vmem:[#allocation5 + $0x320] sm:$0xf]
    %v313 = vld [vmem:[#allocation5 + $0x324] sm:$0xf]
    %v314 = vld [vmem:[#allocation5 + $0x328] sm:$0xf]
    %v315 = vld [vmem:[#allocation5 + $0x32c] sm:$0xf]
    %v316 = vld [vmem:[#allocation5 + $0x330] sm:$0xf]
    %v317 = vld [vmem:[#allocation5 + $0x334] sm:$0xf]
    %v318 = vld [vmem:[#allocation5 + $0x338] sm:$0xf]
    %v319 = vld [vmem:[#allocation5 + $0x33c] sm:$0xf]
    %v320 = vld [vmem:[#allocation5 + $0x340] sm:$0xf]
    %v321 = vld [vmem:[#allocation5 + $0x344] sm:$0xf]
    %v322 = vld [vmem:[#allocation5 + $0x348] sm:$0xf]
    %v323 = vld [vmem:[#allocation5 + $0x34c] sm:$0xf]
    %v324 = vld [vmem:[#allocation5 + $0x350] sm:$0xf]
    %v325 = vld [vmem:[#allocation5 + $0x354] sm:$0xf]
    %v326 = vld [vmem:[#allocation5 + $0x358] sm:$0xf]
    %v327 = vld [vmem:[#allocation5 + $0x35c] sm:$0xf]
    %v328 = vld [vmem:[#allocation5 + $0x360] sm:$0xf]
    %v329 = vld [vmem:[#allocation5 + $0x364] sm:$0xf]
    %v330 = vld [vmem:[#allocation5 + $0x368] sm:$0xf]
    %v331 = vld [vmem:[#allocation5 + $0x36c] sm:$0xf]
    %v332 = vld [vmem:[#allocation5 + $0x370] sm:$0xf]
    %v333 = vld [vmem:[#allocation5 + $0x374] sm:$0xf]
    %v334 = vld [vmem:[#allocation5 + $0x378] sm:$0xf]
    %v335 = vld [vmem:[#allocation5 + $0x37c] sm:$0xf]
    %v336 = vld [vmem:[#allocation5 + $0x380] sm:$0xf]
    %v337 = vld [vmem:[#allocation5 + $0x384] sm:$0xf]
    %v338 = vld [vmem:[#allocation5 + $0x388] sm:$0xf]
    %v339 = vld [vmem:[#allocation5 + $0x38c] sm:$0xf]
    %v340 = vld [vmem:[#allocation5 + $0x390] sm:$0xf]
    %v341 = vld [vmem:[#allocation5 + $0x394] sm:$0xf]
    %v342 = vld [vmem:[#allocation5 + $0x398] sm:$0xf]
    %v343 = vld [vmem:[#allocation5 + $0x39c] sm:$0xf]
    %v344 = vld [vmem:[#allocation5 + $0x3a0] sm:$0xf]
    %v345 = vld [vmem:[#allocation5 + $0x3a4] sm:$0xf]
    %v346 = vld [vmem:[#allocation5 + $0x3a8] sm:$0xf]
    %v347 = vld [vmem:[#allocation5 + $0x3ac] sm:$0xf]
    %v348 = vld [vmem:[#allocation5 + $0x3b0] sm:$0xf]
    %v349 = vld [vmem:[#allocation5 + $0x3b4] sm:$0xf]
    %v350 = vld [vmem:[#allocation5 + $0x3b8] sm:$0xf]
    %v351 = vld [vmem:[#allocation5 + $0x3bc] sm:$0xf]
    %v352 = vld [vmem:[#allocation5 + $0x3c0] sm:$0xf]
    %v353 = vld [vmem:[#allocation5 + $0x3c4] sm:$0xf]
    %v354 = vld [vmem:[#allocation5 + $0x3c8] sm:$0xf]
    %v355 = vld [vmem:[#allocation5 + $0x3cc] sm:$0xf]
    %v356 = vld [vmem:[#allocation5 + $0x3d0] sm:$0xf]
    %v357 = vld [vmem:[#allocation5 + $0x3d4] sm:$0xf]
    %v358 = vld [vmem:[#allocation5 + $0x3d8] sm:$0xf]
    %v359 = vld [vmem:[#allocation5 + $0x3dc] sm:$0xf]
    %v360 = vld [vmem:[#allocation5 + $0x3e0] sm:$0xf]
    %v361 = vld [vmem:[#allocation5 + $0x3e4] sm:$0xf]
    %v362 = vld [vmem:[#allocation5 + $0x3e8] sm:$0xf]
    %v363 = vld [vmem:[#allocation5 + $0x3ec] sm:$0xf]
    %v364 = vld [vmem:[#allocation5 + $0x3f0] sm:$0xf]
    %v365 = vld [vmem:[#allocation5 + $0x3f4] sm:$0xf]
    %v366 = vld [vmem:[#allocation5 + $0x3f8] sm:$0xf]
    %v367 = vld [vmem:[#allocation5 + $0x3fc] sm:$0xf]
    %v368 = vld [vmem:[#allocation5 + $0x400] sm:$0xf]
    %v369 = vld [vmem:[#allocation5 + $0x404] sm:$0xf]
    %v370 = vld [vmem:[#allocation5 + $0x408] sm:$0xf]
    %v371 = vld [vmem:[#allocation5 + $0x40c] sm:$0xf]
    %v372 = vld [vmem:[#allocation5 + $0x410] sm:$0xf]
    %v373 = vld [vmem:[#allocation5 + $0x414] sm:$0xf]
    %v374 = vld [vmem:[#allocation5 + $0x418] sm:$0xf]
    %v375 = vld [vmem:[#allocation5 + $0x41c] sm:$0xf]
    %v376 = vld [vmem:[#allocation5 + $0x420] sm:$0xf]
    %v377 = vld [vmem:[#allocation5 + $0x424] sm:$0xf]
    %v378 = vld [vmem:[#allocation5 + $0x428] sm:$0xf]
    %v379 = vld [vmem:[#allocation5 + $0x42c] sm:$0xf]
    %v380 = vld [vmem:[#allocation5 + $0x430] sm:$0xf]
    %v381 = vld [vmem:[#allocation5 + $0x434] sm:$0xf]
    %v382 = vld [vmem:[#allocation5 + $0x438] sm:$0xf]
    %v383 = vld [vmem:[#allocation5 + $0x43c] sm:$0xf]
    %v384 = vld [vmem:[#allocation5 + $0x440] sm:$0xf]
    %v385 = vld [vmem:[#allocation5 + $0x444] sm:$0xf]
    %v386 = vld [vmem:[#allocation5 + $0x448] sm:$0xf]
    %v387 = vld [vmem:[#allocation5 + $0x44c] sm:$0xf]
    %v388 = vld [vmem:[#allocation5 + $0x450] sm:$0xf]
    %v389 = vld [vmem:[#allocation5 + $0x454] sm:$0xf]
    %v390 = vld [vmem:[#allocation5 + $0x458] sm:$0xf]
    %v391 = vld [vmem:[#allocation5 + $0x45c] sm:$0xf]
    %v392 = vld [vmem:[#allocation5 + $0x460] sm:$0xf]
    %v393 = vld [vmem:[#allocation5 + $0x464] sm:$0xf]
    %v394 = vld [vmem:[#allocation5 + $0x468] sm:$0xf]
    %v395 = vld [vmem:[#allocation5 + $0x46c] sm:$0xf]
    %v396 = vld [vmem:[#allocation5 + $0x470] sm:$0xf]
    %v397 = vld [vmem:[#allocation5 + $0x474] sm:$0xf]
    %v398 = vld [vmem:[#allocation5 + $0x478] sm:$0xf]
    %v399 = vld [vmem:[#allocation5 + $0x47c] sm:$0xf]
    %v400 = vld [vmem:[#allocation5 + $0x480] sm:$0xf]
    %v401 = vld [vmem:[#allocation5 + $0x484] sm:$0xf]
    %v402 = vld [vmem:[#allocation5 + $0x488] sm:$0xf]
    %v403 = vld [vmem:[#allocation5 + $0x48c] sm:$0xf]
    %v404 = vld [vmem:[#allocation5 + $0x490] sm:$0xf]
    %v405 = vld [vmem:[#allocation5 + $0x494] sm:$0xf]
    %v406 = vld [vmem:[#allocation5 + $0x498] sm:$0xf]
    %v407 = vld [vmem:[#allocation5 + $0x49c] sm:$0xf]
    %v408 = vld [vmem:[#allocation5 + $0x4a0] sm:$0xf]
    %v409 = vld [vmem:[#allocation5 + $0x4a4] sm:$0xf]
    %v410 = vld [vmem:[#allocation5 + $0x4a8] sm:$0xf]
    %v411 = vld [vmem:[#allocation5 + $0x4ac] sm:$0xf]
    %v412 = vld [vmem:[#allocation5 + $0x4b0] sm:$0xf]
    %v413 = vld [vmem:[#allocation5 + $0x4b4] sm:$0xf]
    %v414 = vld [vmem:[#allocation5 + $0x4b8] sm:$0xf]
    %v415 = vld [vmem:[#allocation5 + $0x4bc] sm:$0xf]
    %v416 = vld [vmem:[#allocation5 + $0x4c0] sm:$0xf]
    %v417 = vld [vmem:[#allocation5 + $0x4c4] sm:$0xf]
    %v418 = vld [vmem:[#allocation5 + $0x4c8] sm:$0xf]
    %v419 = vld [vmem:[#allocation5 + $0x4cc] sm:$0xf]
    %v420 = vld [vmem:[#allocation5 + $0x4d0] sm:$0xf]
    %v421 = vld [vmem:[#allocation5 + $0x4d4] sm:$0xf]
    %v422 = vld [vmem:[#allocation5 + $0x4d8] sm:$0xf]
    %v423 = vld [vmem:[#allocation5 + $0x4dc] sm:$0xf]
    %v424 = vld [vmem:[#allocation5 + $0x4e0] sm:$0xf]
    %v425 = vld [vmem:[#allocation5 + $0x4e4] sm:$0xf]
    %v426 = vld [vmem:[#allocation5 + $0x4e8] sm:$0xf]
    %v427 = vld [vmem:[#allocation5 + $0x4ec] sm:$0xf]
    %v428 = vld [vmem:[#allocation5 + $0x4f0] sm:$0xf]
    %v429 = vld [vmem:[#allocation5 + $0x4f4] sm:$0xf]
    %v430 = vld [vmem:[#allocation5 + $0x4f8] sm:$0xf]
    %v431 = vld [vmem:[#allocation5 + $0x4fc] sm:$0xf]
    %v432 = vld [vmem:[#allocation5 + $0x500] sm:$0xf]
    %v433 = vld [vmem:[#allocation5 + $0x504] sm:$0xf]
    %v434 = vld [vmem:[#allocation5 + $0x508] sm:$0xf]
    %v435 = vld [vmem:[#allocation5 + $0x50c] sm:$0xf]
    %v436 = vld [vmem:[#allocation5 + $0x510] sm:$0xf]
    %v437 = vld [vmem:[#allocation5 + $0x514] sm:$0xf]
    %v438 = vld [vmem:[#allocation5 + $0x518] sm:$0xf]
    %v439 = vld [vmem:[#allocation5 + $0x51c] sm:$0xf]
    %v440 = vld [vmem:[#allocation5 + $0x520] sm:$0xf]
    %v441 = vld [vmem:[#allocation5 + $0x524] sm:$0xf]
    %v442 = vld [vmem:[#allocation5 + $0x528] sm:$0xf]
    %v443 = vld [vmem:[#allocation5 + $0x52c] sm:$0xf]
    %v444 = vld [vmem:[#allocation5 + $0x530] sm:$0xf]
    %v445 = vld [vmem:[#allocation5 + $0x534] sm:$0xf]
    %v446 = vld [vmem:[#allocation5 + $0x538] sm:$0xf]
    %v447 = vld [vmem:[#allocation5 + $0x53c] sm:$0xf]
    %v448 = vld [vmem:[#allocation5 + $0x540] sm:$0xf]
    %v449 = vld [vmem:[#allocation5 + $0x544] sm:$0xf]
    %v450 = vld [vmem:[#allocation5 + $0x548] sm:$0xf]
    %v451 = vld [vmem:[#allocation5 + $0x54c] sm:$0xf]
    %v452 = vld [vmem:[#allocation5 + $0x550] sm:$0xf]
    %v453 = vld [vmem:[#allocation5 + $0x554] sm:$0xf]
    %v454 = vld [vmem:[#allocation5 + $0x558] sm:$0xf]
    %v455 = vld [vmem:[#allocation5 + $0x55c] sm:$0xf]
    %v456 = vld [vmem:[#allocation5 + $0x560] sm:$0xf]
    %v457 = vld [vmem:[#allocation5 + $0x564] sm:$0xf]
    %v458 = vld [vmem:[#allocation5 + $0x568] sm:$0xf]
    %v459 = vld [vmem:[#allocation5 + $0x56c] sm:$0xf]
    %v460 = vld [vmem:[#allocation5 + $0x570] sm:$0xf]
    %v461 = vld [vmem:[#allocation5 + $0x574] sm:$0xf]
    %v462 = vld [vmem:[#allocation5 + $0x578] sm:$0xf]
    %v463 = vld [vmem:[#allocation5 + $0x57c] sm:$0xf]
    %v464 = vld [vmem:[#allocation5 + $0x580] sm:$0xf]
    %v465 = vld [vmem:[#allocation5 + $0x584] sm:$0xf]
    %v466 = vld [vmem:[#allocation5 + $0x588] sm:$0xf]
    %v467 = vld [vmem:[#allocation5 + $0x58c] sm:$0xf]
    %v468 = vld [vmem:[#allocation5 + $0x590] sm:$0xf]
    %v469 = vld [vmem:[#allocation5 + $0x594] sm:$0xf]
    %v470 = vld [vmem:[#allocation5 + $0x598] sm:$0xf]
    %v471 = vld [vmem:[#allocation5 + $0x59c] sm:$0xf]
    %v472 = vld [vmem:[#allocation5 + $0x5a0] sm:$0xf]
    %v473 = vld [vmem:[#allocation5 + $0x5a4] sm:$0xf]
    %v474 = vld [vmem:[#allocation5 + $0x5a8] sm:$0xf]
    %v475 = vld [vmem:[#allocation5 + $0x5ac] sm:$0xf]
    %v476 = vld [vmem:[#allocation5 + $0x5b0] sm:$0xf]
    %v477 = vld [vmem:[#allocation5 + $0x5b4] sm:$0xf]
    %v478 = vld [vmem:[#allocation5 + $0x5b8] sm:$0xf]
    %v479 = vld [vmem:[#allocation5 + $0x5bc] sm:$0xf]
    %v480 = vld [vmem:[#allocation5 + $0x5c0] sm:$0xf]
    %v481 = vld [vmem:[#allocation5 + $0x5c4] sm:$0xf]
    %v482 = vld [vmem:[#allocation5 + $0x5c8] sm:$0xf]
    %v483 = vld [vmem:[#allocation5 + $0x5cc] sm:$0xf]
    %v484 = vld [vmem:[#allocation5 + $0x5d0] sm:$0xf]
    %v485 = vld [vmem:[#allocation5 + $0x5d4] sm:$0xf]
    %v486 = vld [vmem:[#allocation5 + $0x5d8] sm:$0xf]
    %v487 = vld [vmem:[#allocation5 + $0x5dc] sm:$0xf]
    %v488 = vld [vmem:[#allocation5 + $0x5e0] sm:$0xf]
    %v489 = vld [vmem:[#allocation5 + $0x5e4] sm:$0xf]
    %v490 = vld [vmem:[#allocation5 + $0x5e8] sm:$0xf]
    %v491 = vld [vmem:[#allocation5 + $0x5ec] sm:$0xf]
    %v492 = vld [vmem:[#allocation5 + $0x5f0] sm:$0xf]
    %v493 = vld [vmem:[#allocation5 + $0x5f4] sm:$0xf]
    %v494 = vld [vmem:[#allocation5 + $0x5f8] sm:$0xf]
    %v495 = vld [vmem:[#allocation5 + $0x5fc] sm:$0xf]
    %v496 = vld [vmem:[#allocation5 + $0x600] sm:$0xf]
    %v497 = vld [vmem:[#allocation5 + $0x604] sm:$0xf]
    %v498 = vld [vmem:[#allocation5 + $0x608] sm:$0xf]
    %v499 = vld [vmem:[#allocation5 + $0x60c] sm:$0xf]
    %v500 = vld [vmem:[#allocation5 + $0x610] sm:$0xf]
    %v501 = vld [vmem:[#allocation5 + $0x614] sm:$0xf]
    %v502 = vld [vmem:[#allocation5 + $0x618] sm:$0xf]
    %v503 = vld [vmem:[#allocation5 + $0x61c] sm:$0xf]
    %v504 = vld [vmem:[#allocation5 + $0x620] sm:$0xf]
    %v505 = vld [vmem:[#allocation5 + $0x624] sm:$0xf]
    %v506 = vld [vmem:[#allocation5 + $0x628] sm:$0xf]
    %v507 = vld [vmem:[#allocation5 + $0x62c] sm:$0xf]
    %v508 = vld [vmem:[#allocation5 + $0x630] sm:$0xf]
    %v509 = vld [vmem:[#allocation5 + $0x634] sm:$0xf]
    %v510 = vld [vmem:[#allocation5 + $0x638] sm:$0xf]
    %v511 = vld [vmem:[#allocation5 + $0x63c] sm:$0xf]
    %v512 = vld [vmem:[#allocation5 + $0x640] sm:$0xf]
    %v513 = vld [vmem:[#allocation5 + $0x644] sm:$0xf]
    %v514 = vld [vmem:[#allocation5 + $0x648] sm:$0xf]
    %v515 = vld [vmem:[#allocation5 + $0x64c] sm:$0xf]
    %v516 = vld [vmem:[#allocation5 + $0x650] sm:$0xf]
    %v517 = vld [vmem:[#allocation5 + $0x654] sm:$0xf]
    %v518 = vld [vmem:[#allocation5 + $0x658] sm:$0xf]
    %v519 = vld [vmem:[#allocation5 + $0x65c] sm:$0xf]
    %v520 = vld [vmem:[#allocation5 + $0x660] sm:$0xf]
    %v521 = vld [vmem:[#allocation5 + $0x664] sm:$0xf]
    %v522 = vld [vmem:[#allocation5 + $0x668] sm:$0xf]
    %v523 = vld [vmem:[#allocation5 + $0x66c] sm:$0xf]
    %v524 = vld [vmem:[#allocation5 + $0x670] sm:$0xf]
    %v525 = vld [vmem:[#allocation5 + $0x674] sm:$0xf]
    %v526 = vld [vmem:[#allocation5 + $0x678] sm:$0xf]
    %v527 = vld [vmem:[#allocation5 + $0x67c] sm:$0xf]
    %v528 = vld [vmem:[#allocation5 + $0x680] sm:$0xf]
    %v529 = vld [vmem:[#allocation5 + $0x684] sm:$0xf]
    %v530 = vld [vmem:[#allocation5 + $0x688] sm:$0xf]
    %v531 = vld [vmem:[#allocation5 + $0x68c] sm:$0xf]
    %v532 = vld [vmem:[#allocation5 + $0x690] sm:$0xf]
    %v533 = vld [vmem:[#allocation5 + $0x694] sm:$0xf]
    %v534 = vld [vmem:[#allocation5 + $0x698] sm:$0xf]
    %v535 = vld [vmem:[#allocation5 + $0x69c] sm:$0xf]
    %v536 = vld [vmem:[#allocation5 + $0x6a0] sm:$0xf]
    %v537 = vld [vmem:[#allocation5 + $0x6a4] sm:$0xf]
    %v538 = vld [vmem:[#allocation5 + $0x6a8] sm:$0xf]
    %v539 = vld [vmem:[#allocation5 + $0x6ac] sm:$0xf]
    %v540 = vld [vmem:[#allocation5 + $0x6b0] sm:$0xf]
    %v541 = vld [vmem:[#allocation5 + $0x6b4] sm:$0xf]
    %v542 = vld [vmem:[#allocation5 + $0x6b8] sm:$0xf]
    %v543 = vld [vmem:[#allocation5 + $0x6bc] sm:$0xf]
    %v544 = vld [vmem:[#allocation5 + $0x6c0] sm:$0xf]
    %v545 = vld [vmem:[#allocation5 + $0x6c4] sm:$0xf]
    %v546 = vld [vmem:[#allocation5 + $0x6c8] sm:$0xf]
    %v547 = vld [vmem:[#allocation5 + $0x6cc] sm:$0xf]
    %v548 = vld [vmem:[#allocation5 + $0x6d0] sm:$0xf]
    %v549 = vld [vmem:[#allocation5 + $0x6d4] sm:$0xf]
    %v550 = vld [vmem:[#allocation5 + $0x6d8] sm:$0xf]
    %v551 = vld [vmem:[#allocation5 + $0x6dc] sm:$0xf]
    %v552 = vld [vmem:[#allocation5 + $0x6e0] sm:$0xf]
    %v553 = vld [vmem:[#allocation5 + $0x6e4] sm:$0xf]
    %v554 = vld [vmem:[#allocation5 + $0x6e8] sm:$0xf]
    %v555 = vld [vmem:[#allocation5 + $0x6ec] sm:$0xf]
    %v556 = vld [vmem:[#allocation5 + $0x6f0] sm:$0xf]
    %v557 = vld [vmem:[#allocation5 + $0x6f4] sm:$0xf]
    %v558 = vld [vmem:[#allocation5 + $0x6f8] sm:$0xf]
    %v559 = vld [vmem:[#allocation5 + $0x6fc] sm:$0xf]
    %v560 = vld [vmem:[#allocation5 + $0x700] sm:$0xf]
    %v561 = vld [vmem:[#allocation5 + $0x704] sm:$0xf]
    %v562 = vld [vmem:[#allocation5 + $0x708] sm:$0xf]
    %v563 = vld [vmem:[#allocation5 + $0x70c] sm:$0xf]
    %v564 = vld [vmem:[#allocation5 + $0x710] sm:$0xf]
    %v565 = vld [vmem:[#allocation5 + $0x714] sm:$0xf]
    %v566 = vld [vmem:[#allocation5 + $0x718] sm:$0xf]
    %v567 = vld [vmem:[#allocation5 + $0x71c] sm:$0xf]
    %v568 = vld [vmem:[#allocation5 + $0x720] sm:$0xf]
    %v569 = vld [vmem:[#allocation5 + $0x724] sm:$0xf]
    %v570 = vld [vmem:[#allocation5 + $0x728] sm:$0xf]
    %v571 = vld [vmem:[#allocation5 + $0x72c] sm:$0xf]
    %v572 = vld [vmem:[#allocation5 + $0x730] sm:$0xf]
    %v573 = vld [vmem:[#allocation5 + $0x734] sm:$0xf]
    %v574 = vld [vmem:[#allocation5 + $0x738] sm:$0xf]
    %v575 = vld [vmem:[#allocation5 + $0x73c] sm:$0xf]
    %v576 = vld [vmem:[#allocation5 + $0x740] sm:$0xf]
    %v577 = vld [vmem:[#allocation5 + $0x744] sm:$0xf]
    %v578 = vld [vmem:[#allocation5 + $0x748] sm:$0xf]
    %v579 = vld [vmem:[#allocation5 + $0x74c] sm:$0xf]
    %v580 = vld [vmem:[#allocation5 + $0x750] sm:$0xf]
    %v581 = vld [vmem:[#allocation5 + $0x754] sm:$0xf]
    %v582 = vld [vmem:[#allocation5 + $0x758] sm:$0xf]
    %v583 = vld [vmem:[#allocation5 + $0x75c] sm:$0xf]
    %v584 = vld [vmem:[#allocation5 + $0x760] sm:$0xf]
    %v585 = vld [vmem:[#allocation5 + $0x764] sm:$0xf]
    %v586 = vld [vmem:[#allocation5 + $0x768] sm:$0xf]
    %v587 = vld [vmem:[#allocation5 + $0x76c] sm:$0xf]
    %v588 = vld [vmem:[#allocation5 + $0x770] sm:$0xf]
    %v589 = vld [vmem:[#allocation5 + $0x774] sm:$0xf]
    %v590 = vld [vmem:[#allocation5 + $0x778] sm:$0xf]
    %v591 = vld [vmem:[#allocation5 + $0x77c] sm:$0xf]
    %v592 = vld [vmem:[#allocation5 + $0x780] sm:$0xf]
    %v593 = vld [vmem:[#allocation5 + $0x784] sm:$0xf]
    %v594 = vld [vmem:[#allocation5 + $0x788] sm:$0xf]
    %v595 = vld [vmem:[#allocation5 + $0x78c] sm:$0xf]
    %v596 = vld [vmem:[#allocation5 + $0x790] sm:$0xf]
    %v597 = vld [vmem:[#allocation5 + $0x794] sm:$0xf]
    %v598 = vld [vmem:[#allocation5 + $0x798] sm:$0xf]
    %v599 = vld [vmem:[#allocation5 + $0x79c] sm:$0xf]
    %v600 = vld [vmem:[#allocation5 + $0x7a0] sm:$0xf]
    %v601 = vld [vmem:[#allocation5 + $0x7a4] sm:$0xf]
    %v602 = vld [vmem:[#allocation5 + $0x7a8] sm:$0xf]
    %v603 = vld [vmem:[#allocation5 + $0x7ac] sm:$0xf]
    %v604 = vld [vmem:[#allocation5 + $0x7b0] sm:$0xf]
    %v605 = vld [vmem:[#allocation5 + $0x7b4] sm:$0xf]
    %v606 = vld [vmem:[#allocation5 + $0x7b8] sm:$0xf]
    %v607 = vld [vmem:[#allocation5 + $0x7bc] sm:$0xf]
    %v608 = vld [vmem:[#allocation5 + $0x7c0] sm:$0xf]
    %v609 = vld [vmem:[#allocation5 + $0x7c4] sm:$0xf]
    %v610 = vld [vmem:[#allocation5 + $0x7c8] sm:$0xf]
    %v611 = vld [vmem:[#allocation5 + $0x7cc] sm:$0xf]
    %v612 = vld [vmem:[#allocation5 + $0x7d0] sm:$0xf]
    %v613 = vld [vmem:[#allocation5 + $0x7d4] sm:$0xf]
    %v614 = vld [vmem:[#allocation5 + $0x7d8] sm:$0xf]
    %v615 = vld [vmem:[#allocation5 + $0x7dc] sm:$0xf]
    %v616 = vld [vmem:[#allocation5 + $0x7e0] sm:$0xf]
    %v617 = vld [vmem:[#allocation5 + $0x7e4] sm:$0xf]
    %v618 = vld [vmem:[#allocation5 + $0x7e8] sm:$0xf]
    %v619 = vld [vmem:[#allocation5 + $0x7ec] sm:$0xf]
    %v620 = vld [vmem:[#allocation5 + $0x7f0] sm:$0xf]
    %v621 = vld [vmem:[#allocation5 + $0x7f4] sm:$0xf]
    %v622 = vld [vmem:[#allocation5 + $0x7f8] sm:$0xf]
    %v623 = vld [vmem:[#allocation5 + $0x7fc] sm:$0xf]
    %v624 = vld [vmem:[#allocation5 + $0x800] sm:$0xf]
    %v625 = vld [vmem:[#allocation5 + $0x804] sm:$0xf]
    %v626 = vld [vmem:[#allocation5 + $0x808] sm:$0xf]
    %v627 = vld [vmem:[#allocation5 + $0x80c] sm:$0xf]
    %v628 = vld [vmem:[#allocation5 + $0x810] sm:$0xf]
    %v629 = vld [vmem:[#allocation5 + $0x814] sm:$0xf]
    %v630 = vld [vmem:[#allocation5 + $0x818] sm:$0xf]
    %v631 = vld [vmem:[#allocation5 + $0x81c] sm:$0xf]
    %v632 = vld [vmem:[#allocation5 + $0x820] sm:$0xf]
    %v633 = vld [vmem:[#allocation5 + $0x824] sm:$0xf]
    %v634 = vld [vmem:[#allocation5 + $0x828] sm:$0xf]
    %v635 = vld [vmem:[#allocation5 + $0x82c] sm:$0xf]
    %v636 = vld [vmem:[#allocation5 + $0x830] sm:$0xf]
    %v637 = vld [vmem:[#allocation5 + $0x834] sm:$0xf]
    %v638 = vld [vmem:[#allocation5 + $0x838] sm:$0xf]
    %v639 = vld [vmem:[#allocation5 + $0x83c] sm:$0xf]
    %v640 = vld [vmem:[#allocation5 + $0x840] sm:$0xf]
    %v641 = vld [vmem:[#allocation5 + $0x844] sm:$0xf]
    %v642 = vld [vmem:[#allocation5 + $0x848] sm:$0xf]
    %v643 = vld [vmem:[#allocation5 + $0x84c] sm:$0xf]
    %v644 = vld [vmem:[#allocation5 + $0x850] sm:$0xf]
    %v645 = vld [vmem:[#allocation5 + $0x854] sm:$0xf]
    %v646 = vld [vmem:[#allocation5 + $0x858] sm:$0xf]
    %v647 = vld [vmem:[#allocation5 + $0x85c] sm:$0xf]
    %v648 = vld [vmem:[#allocation5 + $0x860] sm:$0xf]
    %v649 = vld [vmem:[#allocation5 + $0x864] sm:$0xf]
    %v650 = vld [vmem:[#allocation5 + $0x868] sm:$0xf]
    %v651 = vld [vmem:[#allocation5 + $0x86c] sm:$0xf]
    %v652 = vld [vmem:[#allocation5 + $0x870] sm:$0xf]
    %v653 = vld [vmem:[#allocation5 + $0x874] sm:$0xf]
    %v654 = vld [vmem:[#allocation5 + $0x878] sm:$0xf]
    %v655 = vld [vmem:[#allocation5 + $0x87c] sm:$0xf]
    %v656 = vld [vmem:[#allocation5 + $0x880] sm:$0xf]
    %v657 = vld [vmem:[#allocation5 + $0x884] sm:$0xf]
    %v658 = vld [vmem:[#allocation5 + $0x888] sm:$0xf]
    %v659 = vld [vmem:[#allocation5 + $0x88c] sm:$0xf]
    %v660 = vld [vmem:[#allocation5 + $0x890] sm:$0xf]
    %v661 = vld [vmem:[#allocation5 + $0x894] sm:$0xf]
    %v662 = vld [vmem:[#allocation5 + $0x898] sm:$0xf]
    %v663 = vld [vmem:[#allocation5 + $0x89c] sm:$0xf]
    %v664 = vld [vmem:[#allocation5 + $0x8a0] sm:$0xf]
    %v665 = vld [vmem:[#allocation5 + $0x8a4] sm:$0xf]
    %v666 = vld [vmem:[#allocation5 + $0x8a8] sm:$0xf]
    %v667 = vld [vmem:[#allocation5 + $0x8ac] sm:$0xf]
    %v668 = vld [vmem:[#allocation5 + $0x8b0] sm:$0xf]
    %v669 = vld [vmem:[#allocation5 + $0x8b4] sm:$0xf]
    %v670 = vld [vmem:[#allocation5 + $0x8b8] sm:$0xf]
    %v671 = vld [vmem:[#allocation5 + $0x8bc] sm:$0xf]
    %v672 = vld [vmem:[#allocation5 + $0x8c0] sm:$0xf]
    %v673 = vld [vmem:[#allocation5 + $0x8c4] sm:$0xf]
    %v674 = vld [vmem:[#allocation5 + $0x8c8] sm:$0xf]
    %v675 = vld [vmem:[#allocation5 + $0x8cc] sm:$0xf]
    %v676 = vld [vmem:[#allocation5 + $0x8d0] sm:$0xf]
    %v677 = vld [vmem:[#allocation5 + $0x8d4] sm:$0xf]
    %v678 = vld [vmem:[#allocation5 + $0x8d8] sm:$0xf]
    %v679 = vld [vmem:[#allocation5 + $0x8dc] sm:$0xf]
    %v680 = vld [vmem:[#allocation5 + $0x8e0] sm:$0xf]
    %v681 = vld [vmem:[#allocation5 + $0x8e4] sm:$0xf]
    %v682 = vld [vmem:[#allocation5 + $0x8e8] sm:$0xf]
    %v683 = vld [vmem:[#allocation5 + $0x8ec] sm:$0xf]
    %v684 = vld [vmem:[#allocation5 + $0x8f0] sm:$0xf]
    %v685 = vld [vmem:[#allocation5 + $0x8f4] sm:$0xf]
    %v686 = vld [vmem:[#allocation5 + $0x8f8] sm:$0xf]
    %v687 = vld [vmem:[#allocation5 + $0x8fc] sm:$0xf]
    %v688 = vld [vmem:[#allocation5 + $0x900] sm:$0xf]
    %v689 = vld [vmem:[#allocation5 + $0x904] sm:$0xf]
    %v690 = vld [vmem:[#allocation5 + $0x908] sm:$0xf]
    %v691 = vld [vmem:[#allocation5 + $0x90c] sm:$0xf]
    %v692 = vld [vmem:[#allocation5 + $0x910] sm:$0xf]
    %v693 = vld [vmem:[#allocation5 + $0x914] sm:$0xf]
    %v694 = vld [vmem:[#allocation5 + $0x918] sm:$0xf]
    %v695 = vld [vmem:[#allocation5 + $0x91c] sm:$0xf]
    %v696 = vld [vmem:[#allocation5 + $0x920] sm:$0xf]
    %v697 = vld [vmem:[#allocation5 + $0x924] sm:$0xf]
    %v698 = vld [vmem:[#allocation5 + $0x928] sm:$0xf]
    %v699 = vld [vmem:[#allocation5 + $0x92c] sm:$0xf]
    %v700 = vld [vmem:[#allocation5 + $0x930] sm:$0xf]
    %v701 = vld [vmem:[#allocation5 + $0x934] sm:$0xf]
    %v702 = vld [vmem:[#allocation5 + $0x938] sm:$0xf]
    %v703 = vld [vmem:[#allocation5 + $0x93c] sm:$0xf]
    %v704 = vld [vmem:[#allocation5 + $0x940] sm:$0xf]
    %v705 = vld [vmem:[#allocation5 + $0x944] sm:$0xf]
    %v706 = vld [vmem:[#allocation5 + $0x948] sm:$0xf]
    %v707 = vld [vmem:[#allocation5 + $0x94c] sm:$0xf]
    %v708 = vld [vmem:[#allocation5 + $0x950] sm:$0xf]
    %v709 = vld [vmem:[#allocation5 + $0x954] sm:$0xf]
    %v710 = vld [vmem:[#allocation5 + $0x958] sm:$0xf]
    %v711 = vld [vmem:[#allocation5 + $0x95c] sm:$0xf]
    %v712 = vld [vmem:[#allocation5 + $0x960] sm:$0xf]
    %v713 = vld [vmem:[#allocation5 + $0x964] sm:$0xf]
    %v714 = vld [vmem:[#allocation5 + $0x968] sm:$0xf]
    %v715 = vld [vmem:[#allocation5 + $0x96c] sm:$0xf]
    %v716 = vld [vmem:[#allocation5 + $0x970] sm:$0xf]
    %v717 = vld [vmem:[#allocation5 + $0x974] sm:$0xf]
    %v718 = vld [vmem:[#allocation5 + $0x978] sm:$0xf]
    %v719 = vld [vmem:[#allocation5 + $0x97c] sm:$0xf]
    %v720 = vld [vmem:[#allocation5 + $0x980] sm:$0xf]
    %v721 = vld [vmem:[#allocation5 + $0x984] sm:$0xf]
    %v722 = vld [vmem:[#allocation5 + $0x988] sm:$0xf]
    %v723 = vld [vmem:[#allocation5 + $0x98c] sm:$0xf]
    %v724 = vld [vmem:[#allocation5 + $0x990] sm:$0xf]
    %v725 = vld [vmem:[#allocation5 + $0x994] sm:$0xf]
    %v726 = vld [vmem:[#allocation5 + $0x998] sm:$0xf]
    %v727 = vld [vmem:[#allocation5 + $0x99c] sm:$0xf]
    %v728 = vld [vmem:[#allocation5 + $0x9a0] sm:$0xf]
    %v729 = vld [vmem:[#allocation5 + $0x9a4] sm:$0xf]
    %v730 = vld [vmem:[#allocation5 + $0x9a8] sm:$0xf]
    %v731 = vld [vmem:[#allocation5 + $0x9ac] sm:$0xf]
    %v732 = vld [vmem:[#allocation5 + $0x9b0] sm:$0xf]
    %v733 = vld [vmem:[#allocation5 + $0x9b4] sm:$0xf]
    %v734 = vld [vmem:[#allocation5 + $0x9b8] sm:$0xf]
    %v735 = vld [vmem:[#allocation5 + $0x9bc] sm:$0xf]
    %v736 = vld [vmem:[#allocation5 + $0x9c0] sm:$0xf]
    %v737 = vld [vmem:[#allocation5 + $0x9c4] sm:$0xf]
    %v738 = vld [vmem:[#allocation5 + $0x9c8] sm:$0xf]
    %v739 = vld [vmem:[#allocation5 + $0x9cc] sm:$0xf]
    %v740 = vld [vmem:[#allocation5 + $0x9d0] sm:$0xf]
    %v741 = vld [vmem:[#allocation5 + $0x9d4] sm:$0xf]
    %v742 = vld [vmem:[#allocation5 + $0x9d8] sm:$0xf]
    %v743 = vld [vmem:[#allocation5 + $0x9dc] sm:$0xf]
    %v744 = vld [vmem:[#allocation5 + $0x9e0] sm:$0xf]
    %v745 = vld [vmem:[#allocation5 + $0x9e4] sm:$0xf]
    %v746 = vld [vmem:[#allocation5 + $0x9e8] sm:$0xf]
    %v747 = vld [vmem:[#allocation5 + $0x9ec] sm:$0xf]
    %v748 = vld [vmem:[#allocation5 + $0x9f0] sm:$0xf]
    %v749 = vld [vmem:[#allocation5 + $0x9f4] sm:$0xf]
    %v750 = vld [vmem:[#allocation5 + $0x9f8] sm:$0xf]
    %v751 = vld [vmem:[#allocation5 + $0x9fc] sm:$0xf]
    %v752 = vld [vmem:[#allocation5 + $0xa00] sm:$0xf]
    %v753 = vld [vmem:[#allocation5 + $0xa04] sm:$0xf]
    %v754 = vld [vmem:[#allocation5 + $0xa08] sm:$0xf]
    %v755 = vld [vmem:[#allocation5 + $0xa0c] sm:$0xf]
    %v756 = vld [vmem:[#allocation5 + $0xa10] sm:$0xf]
    %v757 = vld [vmem:[#allocation5 + $0xa14] sm:$0xf]
    %v758 = vld [vmem:[#allocation5 + $0xa18] sm:$0xf]
    %v759 = vld [vmem:[#allocation5 + $0xa1c] sm:$0xf]
    %v760 = vld [vmem:[#allocation5 + $0xa20] sm:$0xf]
    %v761 = vld [vmem:[#allocation5 + $0xa24] sm:$0xf]
    %v762 = vld [vmem:[#allocation5 + $0xa28] sm:$0xf]
    %v763 = vld [vmem:[#allocation5 + $0xa2c] sm:$0xf]
    %v764 = vld [vmem:[#allocation5 + $0xa30] sm:$0xf]
    %v765 = vld [vmem:[#allocation5 + $0xa34] sm:$0xf]
    %v766 = vld [vmem:[#allocation5 + $0xa38] sm:$0xf]
    %v767 = vld [vmem:[#allocation5 + $0xa3c] sm:$0xf]
    %v768 = vld [vmem:[#allocation5 + $0xa40] sm:$0xf]
    %v769 = vld [vmem:[#allocation5 + $0xa44] sm:$0xf]
    %v770 = vld [vmem:[#allocation5 + $0xa48] sm:$0xf]
    %v771 = vld [vmem:[#allocation5 + $0xa4c] sm:$0xf]
    %v772 = vld [vmem:[#allocation5 + $0xa50] sm:$0xf]
    %v773 = vld [vmem:[#allocation5 + $0xa54] sm:$0xf]
    %v774 = vld [vmem:[#allocation5 + $0xa58] sm:$0xf]
    %v775 = vld [vmem:[#allocation5 + $0xa5c] sm:$0xf]
    %v776 = vld [vmem:[#allocation5 + $0xa60] sm:$0xf]
    %v777 = vld [vmem:[#allocation5 + $0xa64] sm:$0xf]
    %v778 = vld [vmem:[#allocation5 + $0xa68] sm:$0xf]
    %v779 = vld [vmem:[#allocation5 + $0xa6c] sm:$0xf]
    %v780 = vld [vmem:[#allocation5 + $0xa70] sm:$0xf]
    %v781 = vld [vmem:[#allocation5 + $0xa74] sm:$0xf]
    %v782 = vld [vmem:[#allocation5 + $0xa78] sm:$0xf]
    %v783 = vld [vmem:[#allocation5 + $0xa7c] sm:$0xf]
    %v784 = vld [vmem:[#allocation5 + $0xa80] sm:$0xf]
    %v785 = vld [vmem:[#allocation5 + $0xa84] sm:$0xf]
    %v786 = vld [vmem:[#allocation5 + $0xa88] sm:$0xf]
    %v787 = vld [vmem:[#allocation5 + $0xa8c] sm:$0xf]
    %v788 = vld [vmem:[#allocation5 + $0xa90] sm:$0xf]
    %v789 = vld [vmem:[#allocation5 + $0xa94] sm:$0xf]
    %v790 = vld [vmem:[#allocation5 + $0xa98] sm:$0xf]
    %v791 = vld [vmem:[#allocation5 + $0xa9c] sm:$0xf]
    %v792 = vld [vmem:[#allocation5 + $0xaa0] sm:$0xf]
    %v793 = vld [vmem:[#allocation5 + $0xaa4] sm:$0xf]
    %v794 = vld [vmem:[#allocation5 + $0xaa8] sm:$0xf]
    %v795 = vld [vmem:[#allocation5 + $0xaac] sm:$0xf]
    %v796 = vld [vmem:[#allocation5 + $0xab0] sm:$0xf]
    %v797 = vld [vmem:[#allocation5 + $0xab4] sm:$0xf]
    %v798 = vld [vmem:[#allocation5 + $0xab8] sm:$0xf]
    %v799 = vld [vmem:[#allocation5 + $0xabc] sm:$0xf]
    %v800 = vld [vmem:[#allocation5 + $0xac0] sm:$0xf]
    %v801 = vld [vmem:[#allocation5 + $0xac4] sm:$0xf]
    %v802 = vld [vmem:[#allocation5 + $0xac8] sm:$0xf]
    %v803 = vld [vmem:[#allocation5 + $0xacc] sm:$0xf]
    %v804 = vld [vmem:[#allocation5 + $0xad0] sm:$0xf]
    %v805 = vld [vmem:[#allocation5 + $0xad4] sm:$0xf]
    %v806 = vld [vmem:[#allocation5 + $0xad8] sm:$0xf]
    %v807 = vld [vmem:[#allocation5 + $0xadc] sm:$0xf]
    %v808 = vld [vmem:[#allocation5 + $0xae0] sm:$0xf]
    %v809 = vld [vmem:[#allocation5 + $0xae4] sm:$0xf]
    %v810 = vld [vmem:[#allocation5 + $0xae8] sm:$0xf]
    %v811 = vld [vmem:[#allocation5 + $0xaec] sm:$0xf]
    %v812 = vld [vmem:[#allocation5 + $0xaf0] sm:$0xf]
    %v813 = vld [vmem:[#allocation5 + $0xaf4] sm:$0xf]
    %v814 = vld [vmem:[#allocation5 + $0xaf8] sm:$0xf]
    %v815 = vld [vmem:[#allocation5 + $0xafc] sm:$0xf]
    %v816 = vld [vmem:[#allocation5 + $0xb00] sm:$0xf]
    %v817 = vld [vmem:[#allocation5 + $0xb04] sm:$0xf]
    %v818 = vld [vmem:[#allocation5 + $0xb08] sm:$0xf]
    %v819 = vld [vmem:[#allocation5 + $0xb0c] sm:$0xf]
    %v820 = vld [vmem:[#allocation5 + $0xb10] sm:$0xf]
    %v821 = vld [vmem:[#allocation5 + $0xb14] sm:$0xf]
    %v822 = vld [vmem:[#allocation5 + $0xb18] sm:$0xf]
    %v823 = vld [vmem:[#allocation5 + $0xb1c] sm:$0xf]
    %v824 = vld [vmem:[#allocation5 + $0xb20] sm:$0xf]
    %v825 = vld [vmem:[#allocation5 + $0xb24] sm:$0xf]
    %v826 = vld [vmem:[#allocation5 + $0xb28] sm:$0xf]
    %v827 = vld [vmem:[#allocation5 + $0xb2c] sm:$0xf]
    %v828 = vld [vmem:[#allocation5 + $0xb30] sm:$0xf]
    %v829 = vld [vmem:[#allocation5 + $0xb34] sm:$0xf]
    %v830 = vld [vmem:[#allocation5 + $0xb38] sm:$0xf]
    %v831 = vld [vmem:[#allocation5 + $0xb3c] sm:$0xf]
    %v832 = vld [vmem:[#allocation5 + $0xb40] sm:$0xf]
    %v833 = vld [vmem:[#allocation5 + $0xb44] sm:$0xf]
    %v834 = vld [vmem:[#allocation5 + $0xb48] sm:$0xf]
    %v835 = vld [vmem:[#allocation5 + $0xb4c] sm:$0xf]
    %v836 = vld [vmem:[#allocation5 + $0xb50] sm:$0xf]
    %v837 = vld [vmem:[#allocation5 + $0xb54] sm:$0xf]
    %v838 = vld [vmem:[#allocation5 + $0xb58] sm:$0xf]
    %v839 = vld [vmem:[#allocation5 + $0xb5c] sm:$0xf]
    %v840 = vld [vmem:[#allocation5 + $0xb60] sm:$0xf]
    %v841 = vld [vmem:[#allocation5 + $0xb64] sm:$0xf]
    %v842 = vld [vmem:[#allocation5 + $0xb68] sm:$0xf]
    %v843 = vld [vmem:[#allocation5 + $0xb6c] sm:$0xf]
    %v844 = vld [vmem:[#allocation5 + $0xb70] sm:$0xf]
    %v845 = vld [vmem:[#allocation5 + $0xb74] sm:$0xf]
    %v846 = vld [vmem:[#allocation5 + $0xb78] sm:$0xf]
    %v847 = vld [vmem:[#allocation5 + $0xb7c] sm:$0xf]
    %v848 = vld [vmem:[#allocation5 + $0xb80] sm:$0xf]
    %v849 = vld [vmem:[#allocation5 + $0xb84] sm:$0xf]
    %v850 = vld [vmem:[#allocation5 + $0xb88] sm:$0xf]
    %v851 = vld [vmem:[#allocation5 + $0xb8c] sm:$0xf]
    %v852 = vld [vmem:[#allocation5 + $0xb90] sm:$0xf]
    %v853 = vld [vmem:[#allocation5 + $0xb94] sm:$0xf]
    %v854 = vld [vmem:[#allocation5 + $0xb98] sm:$0xf]
    %v855 = vld [vmem:[#allocation5 + $0xb9c] sm:$0xf]
    %v856 = vld [vmem:[#allocation5 + $0xba0] sm:$0xf]
    %v857 = vld [vmem:[#allocation5 + $0xba4] sm:$0xf]
    %v858 = vld [vmem:[#allocation5 + $0xba8] sm:$0xf]
    %v859 = vld [vmem:[#allocation5 + $0xbac] sm:$0xf]
    %v860 = vld [vmem:[#allocation5 + $0xbb0] sm:$0xf]
    %v861 = vld [vmem:[#allocation5 + $0xbb4] sm:$0xf]
    %v862 = vld [vmem:[#allocation5 + $0xbb8] sm:$0xf]
    %v863 = vld [vmem:[#allocation5 + $0xbbc] sm:$0xf]
    %v864 = vld [vmem:[#allocation5 + $0xbc0] sm:$0xf]
    %v865 = vld [vmem:[#allocation5 + $0xbc4] sm:$0xf]
    %v866 = vld [vmem:[#allocation5 + $0xbc8] sm:$0xf]
    %v867 = vld [vmem:[#allocation5 + $0xbcc] sm:$0xf]
    %v868 = vld [vmem:[#allocation5 + $0xbd0] sm:$0xf]
    %v869 = vld [vmem:[#allocation5 + $0xbd4] sm:$0xf]
    %v870 = vld [vmem:[#allocation5 + $0xbd8] sm:$0xf]
    %v871 = vld [vmem:[#allocation5 + $0xbdc] sm:$0xf]
    %v872 = vld [vmem:[#allocation5 + $0xbe0] sm:$0xf]
    %v873 = vld [vmem:[#allocation5 + $0xbe4] sm:$0xf]
    %v874 = vld [vmem:[#allocation5 + $0xbe8] sm:$0xf]
    %v875 = vld [vmem:[#allocation5 + $0xbec] sm:$0xf]
    %v876 = vld [vmem:[#allocation5 + $0xbf0] sm:$0xf]
    %v877 = vld [vmem:[#allocation5 + $0xbf4] sm:$0xf]
    %v878 = vld [vmem:[#allocation5 + $0xbf8] sm:$0xf]
    %v879 = vld [vmem:[#allocation5 + $0xbfc] sm:$0xf]
    %v880 = vld [vmem:[#allocation5 + $0xc00] sm:$0xf]
    %v881 = vld [vmem:[#allocation5 + $0xc04] sm:$0xf]
    %v882 = vld [vmem:[#allocation5 + $0xc08] sm:$0xf]
    %v883 = vld [vmem:[#allocation5 + $0xc0c] sm:$0xf]
    %v884 = vld [vmem:[#allocation5 + $0xc10] sm:$0xf]
    %v885 = vld [vmem:[#allocation5 + $0xc14] sm:$0xf]
    %v886 = vld [vmem:[#allocation5 + $0xc18] sm:$0xf]
    %v887 = vld [vmem:[#allocation5 + $0xc1c] sm:$0xf]
    %v888 = vld [vmem:[#allocation5 + $0xc20] sm:$0xf]
    %v889 = vld [vmem:[#allocation5 + $0xc24] sm:$0xf]
    %v890 = vld [vmem:[#allocation5 + $0xc28] sm:$0xf]
    %v891 = vld [vmem:[#allocation5 + $0xc2c] sm:$0xf]
    %v892 = vld [vmem:[#allocation5 + $0xc30] sm:$0xf]
    %v893 = vld [vmem:[#allocation5 + $0xc34] sm:$0xf]
    %v894 = vld [vmem:[#allocation5 + $0xc38] sm:$0xf]
    %v895 = vld [vmem:[#allocation5 + $0xc3c] sm:$0xf]
    %v896 = vld [vmem:[#allocation5 + $0xc40] sm:$0xf]
    %v897 = vld [vmem:[#allocation5 + $0xc44] sm:$0xf]
    %v898 = vld [vmem:[#allocation5 + $0xc48] sm:$0xf]
    %v899 = vld [vmem:[#allocation5 + $0xc4c] sm:$0xf]
    %v900 = vld [vmem:[#allocation5 + $0xc50] sm:$0xf]
    %v901 = vld [vmem:[#allocation5 + $0xc54] sm:$0xf]
    %v902 = vld [vmem:[#allocation5 + $0xc58] sm:$0xf]
    %v903 = vld [vmem:[#allocation5 + $0xc5c] sm:$0xf]
    %v904 = vld [vmem:[#allocation5 + $0xc60] sm:$0xf]
    %v905 = vld [vmem:[#allocation5 + $0xc64] sm:$0xf]
    %v906 = vld [vmem:[#allocation5 + $0xc68] sm:$0xf]
    %v907 = vld [vmem:[#allocation5 + $0xc6c] sm:$0xf]
    %v908 = vld [vmem:[#allocation5 + $0xc70] sm:$0xf]
    %v909 = vld [vmem:[#allocation5 + $0xc74] sm:$0xf]
    %v910 = vld [vmem:[#allocation5 + $0xc78] sm:$0xf]
    %v911 = vld [vmem:[#allocation5 + $0xc7c] sm:$0xf]
    %v912 = vld [vmem:[#allocation5 + $0xc80] sm:$0xf]
    %v913 = vld [vmem:[#allocation5 + $0xc84] sm:$0xf]
    %v914 = vld [vmem:[#allocation5 + $0xc88] sm:$0xf]
    %v915 = vld [vmem:[#allocation5 + $0xc8c] sm:$0xf]
    %v916 = vld [vmem:[#allocation5 + $0xc90] sm:$0xf]
    %v917 = vld [vmem:[#allocation5 + $0xc94] sm:$0xf]
    %v918 = vld [vmem:[#allocation5 + $0xc98] sm:$0xf]
    %v919 = vld [vmem:[#allocation5 + $0xc9c] sm:$0xf]
    %v920 = vld [vmem:[#allocation5 + $0xca0] sm:$0xf]
    %v921 = vld [vmem:[#allocation5 + $0xca4] sm:$0xf]
    %v922 = vld [vmem:[#allocation5 + $0xca8] sm:$0xf]
    %v923 = vld [vmem:[#allocation5 + $0xcac] sm:$0xf]
    %v924 = vld [vmem:[#allocation5 + $0xcb0] sm:$0xf]
    %v925 = vld [vmem:[#allocation5 + $0xcb4] sm:$0xf]
    %v926 = vld [vmem:[#allocation5 + $0xcb8] sm:$0xf]
    %v927 = vld [vmem:[#allocation5 + $0xcbc] sm:$0xf]
    %v928 = vld [vmem:[#allocation5 + $0xcc0] sm:$0xf]
    %v929 = vld [vmem:[#allocation5 + $0xcc4] sm:$0xf]
    %v930 = vld [vmem:[#allocation5 + $0xcc8] sm:$0xf]
    %v931 = vld [vmem:[#allocation5 + $0xccc] sm:$0xf]
    %v932 = vld [vmem:[#allocation5 + $0xcd0] sm:$0xf]
    %v933 = vld [vmem:[#allocation5 + $0xcd4] sm:$0xf]
    %v934 = vld [vmem:[#allocation5 + $0xcd8] sm:$0xf]
    %v935 = vld [vmem:[#allocation5 + $0xcdc] sm:$0xf]
    %v936 = vld [vmem:[#allocation5 + $0xce0] sm:$0xf]
    %v937 = vld [vmem:[#allocation5 + $0xce4] sm:$0xf]
    %v938 = vld [vmem:[#allocation5 + $0xce8] sm:$0xf]
    %v939 = vld [vmem:[#allocation5 + $0xcec] sm:$0xf]
    %v940 = vld [vmem:[#allocation5 + $0xcf0] sm:$0xf]
    %v941 = vld [vmem:[#allocation5 + $0xcf4] sm:$0xf]
    %v942 = vld [vmem:[#allocation5 + $0xcf8] sm:$0xf]
    %v943 = vld [vmem:[#allocation5 + $0xcfc] sm:$0xf]
    %v944 = vld [vmem:[#allocation5 + $0xd00] sm:$0xf]
    %v945 = vld [vmem:[#allocation5 + $0xd04] sm:$0xf]
    %v946 = vld [vmem:[#allocation5 + $0xd08] sm:$0xf]
    %v947 = vld [vmem:[#allocation5 + $0xd0c] sm:$0xf]
    %v948 = vld [vmem:[#allocation5 + $0xd10] sm:$0xf]
    %v949 = vld [vmem:[#allocation5 + $0xd14] sm:$0xf]
    %v950 = vld [vmem:[#allocation5 + $0xd18] sm:$0xf]
    %v951 = vld [vmem:[#allocation5 + $0xd1c] sm:$0xf]
    %v952 = vld [vmem:[#allocation5 + $0xd20] sm:$0xf]
    %v953 = vld [vmem:[#allocation5 + $0xd24] sm:$0xf]
    %v954 = vld [vmem:[#allocation5 + $0xd28] sm:$0xf]
    %v955 = vld [vmem:[#allocation5 + $0xd2c] sm:$0xf]
    %v956 = vld [vmem:[#allocation5 + $0xd30] sm:$0xf]
    %v957 = vld [vmem:[#allocation5 + $0xd34] sm:$0xf]
    %v958 = vld [vmem:[#allocation5 + $0xd38] sm:$0xf]
    %v959 = vld [vmem:[#allocation5 + $0xd3c] sm:$0xf]
    %v960 = vld [vmem:[#allocation5 + $0xd40] sm:$0xf]
    %v961 = vld [vmem:[#allocation5 + $0xd44] sm:$0xf]
    %v962 = vld [vmem:[#allocation5 + $0xd48] sm:$0xf]
    %v963 = vld [vmem:[#allocation5 + $0xd4c] sm:$0xf]
    %v964 = vld [vmem:[#allocation5 + $0xd50] sm:$0xf]
    %v965 = vld [vmem:[#allocation5 + $0xd54] sm:$0xf]
    %v966 = vld [vmem:[#allocation5 + $0xd58] sm:$0xf]
    %v967 = vld [vmem:[#allocation5 + $0xd5c] sm:$0xf]
    %v968 = vld [vmem:[#allocation5 + $0xd60] sm:$0xf]
    %v969 = vld [vmem:[#allocation5 + $0xd64] sm:$0xf]
    %v970 = vld [vmem:[#allocation5 + $0xd68] sm:$0xf]
    %v971 = vld [vmem:[#allocation5 + $0xd6c] sm:$0xf]
    %v972 = vld [vmem:[#allocation5 + $0xd70] sm:$0xf]
    %v973 = vld [vmem:[#allocation5 + $0xd74] sm:$0xf]
    %v974 = vld [vmem:[#allocation5 + $0xd78] sm:$0xf]
    %v975 = vld [vmem:[#allocation5 + $0xd7c] sm:$0xf]
    %v976 = vld [vmem:[#allocation5 + $0xd80] sm:$0xf]
    %v977 = vld [vmem:[#allocation5 + $0xd84] sm:$0xf]
    %v978 = vld [vmem:[#allocation5 + $0xd88] sm:$0xf]
    %v979 = vld [vmem:[#allocation5 + $0xd8c] sm:$0xf]
    %v980 = vld [vmem:[#allocation5 + $0xd90] sm:$0xf]
    %v981 = vld [vmem:[#allocation5 + $0xd94] sm:$0xf]
    %v982 = vld [vmem:[#allocation5 + $0xd98] sm:$0xf]
    %v983 = vld [vmem:[#allocation5 + $0xd9c] sm:$0xf]
    %v984 = vld [vmem:[#allocation5 + $0xda0] sm:$0xf]
    %v985 = vld [vmem:[#allocation5 + $0xda4] sm:$0xf]
    %v986 = vld [vmem:[#allocation5 + $0xda8] sm:$0xf]
    %v987 = vld [vmem:[#allocation5 + $0xdac] sm:$0xf]
    %v988 = vld [vmem:[#allocation5 + $0xdb0] sm:$0xf]
    %v989 = vld [vmem:[#allocation5 + $0xdb4] sm:$0xf]
    %v990 = vld [vmem:[#allocation5 + $0xdb8] sm:$0xf]
    %v991 = vld [vmem:[#allocation5 + $0xdbc] sm:$0xf]
    %v992 = vld [vmem:[#allocation5 + $0xdc0] sm:$0xf]
    %v993 = vld [vmem:[#allocation5 + $0xdc4] sm:$0xf]
    %v994 = vld [vmem:[#allocation5 + $0xdc8] sm:$0xf]
    %v995 = vld [vmem:[#allocation5 + $0xdcc] sm:$0xf]
    %v996 = vld [vmem:[#allocation5 + $0xdd0] sm:$0xf]
    %v997 = vld [vmem:[#allocation5 + $0xdd4] sm:$0xf]
    %v998 = vld [vmem:[#allocation5 + $0xdd8] sm:$0xf]
    %v999 = vld [vmem:[#allocation5 + $0xddc] sm:$0xf]
    %v1000 = vld [vmem:[#allocation5 + $0xde0] sm:$0xf]
    %v1001 = vld [vmem:[#allocation5 + $0xde4] sm:$0xf]
    %v1002 = vld [vmem:[#allocation5 + $0xde8] sm:$0xf]
    %v1003 = vld [vmem:[#allocation5 + $0xdec] sm:$0xf]
    %v1004 = vld [vmem:[#allocation5 + $0xdf0] sm:$0xf]
    %v1005 = vld [vmem:[#allocation5 + $0xdf4] sm:$0xf]
    %v1006 = vld [vmem:[#allocation5 + $0xdf8] sm:$0xf]
    %v1007 = vld [vmem:[#allocation5 + $0xdfc] sm:$0xf]
    %v1008 = vld [vmem:[#allocation5 + $0xe00] sm:$0xf]
    %v1009 = vld [vmem:[#allocation5 + $0xe04] sm:$0xf]
    %v1010 = vld [vmem:[#allocation5 + $0xe08] sm:$0xf]
    %v1011 = vld [vmem:[#allocation5 + $0xe0c] sm:$0xf]
    %v1012 = vld [vmem:[#allocation5 + $0xe10] sm:$0xf]
    %v1013 = vld [vmem:[#allocation5 + $0xe14] sm:$0xf]
    %v1014 = vld [vmem:[#allocation5 + $0xe18] sm:$0xf]
    %v1015 = vld [vmem:[#allocation5 + $0xe1c] sm:$0xf]
    %v1016 = vld [vmem:[#allocation5 + $0xe20] sm:$0xf]
    %v1017 = vld [vmem:[#allocation5 + $0xe24] sm:$0xf]
    %v1018 = vld [vmem:[#allocation5 + $0xe28] sm:$0xf]
    %v1019 = vld [vmem:[#allocation5 + $0xe2c] sm:$0xf]
    %v1020 = vld [vmem:[#allocation5 + $0xe30] sm:$0xf]
    %v1021 = vld [vmem:[#allocation5 + $0xe34] sm:$0xf]
    %v1022 = vld [vmem:[#allocation5 + $0xe38] sm:$0xf]
    %v1023 = vld [vmem:[#allocation5 + $0xe3c] sm:$0xf]
    %v1024 = vld [vmem:[#allocation5 + $0xe40] sm:$0xf]
    %v1025 = vld [vmem:[#allocation5 + $0xe44] sm:$0xf]
    %v1026 = vld [vmem:[#allocation5 + $0xe48] sm:$0xf]
    %v1027 = vld [vmem:[#allocation5 + $0xe4c] sm:$0xf]
    %v1028 = vld [vmem:[#allocation5 + $0xe50] sm:$0xf]
    %v1029 = vld [vmem:[#allocation5 + $0xe54] sm:$0xf]
    %v1030 = vld [vmem:[#allocation5 + $0xe58] sm:$0xf]
    %v1031 = vld [vmem:[#allocation5 + $0xe5c] sm:$0xf]
    %v1032 = vld [vmem:[#allocation5 + $0xe60] sm:$0xf]
    %v1033 = vld [vmem:[#allocation5 + $0xe64] sm:$0xf]
    %v1034 = vld [vmem:[#allocation5 + $0xe68] sm:$0xf]
    %v1035 = vld [vmem:[#allocation5 + $0xe6c] sm:$0xf]
    %v1036 = vld [vmem:[#allocation5 + $0xe70] sm:$0xf]
    %v1037 = vld [vmem:[#allocation5 + $0xe74] sm:$0xf]
    %v1038 = vld [vmem:[#allocation5 + $0xe78] sm:$0xf]
    %v1039 = vld [vmem:[#allocation5 + $0xe7c] sm:$0xf]
    %v1040 = vld [vmem:[#allocation5 + $0xe80] sm:$0xf]
    %v1041 = vld [vmem:[#allocation5 + $0xe84] sm:$0xf]
    %v1042 = vld [vmem:[#allocation5 + $0xe88] sm:$0xf]
    %v1043 = vld [vmem:[#allocation5 + $0xe8c] sm:$0xf]
    %v1044 = vld [vmem:[#allocation5 + $0xe90] sm:$0xf]
    %v1045 = vld [vmem:[#allocation5 + $0xe94] sm:$0xf]
    %v1046 = vld [vmem:[#allocation5 + $0xe98] sm:$0xf]
    %v1047 = vld [vmem:[#allocation5 + $0xe9c] sm:$0xf]
    %v1048 = vld [vmem:[#allocation5 + $0xea0] sm:$0xf]
    %v1049 = vld [vmem:[#allocation5 + $0xea4] sm:$0xf]
    %v1050 = vld [vmem:[#allocation5 + $0xea8] sm:$0xf]
    %v1051 = vld [vmem:[#allocation5 + $0xeac] sm:$0xf]
    %v1052 = vld [vmem:[#allocation5 + $0xeb0] sm:$0xf]
    %v1053 = vld [vmem:[#allocation5 + $0xeb4] sm:$0xf]
    %v1054 = vld [vmem:[#allocation5 + $0xeb8] sm:$0xf]
    %v1055 = vld [vmem:[#allocation5 + $0xebc] sm:$0xf]
    %v1056 = vld [vmem:[#allocation5 + $0xec0] sm:$0xf]
    %v1057 = vld [vmem:[#allocation5 + $0xec4] sm:$0xf]
    %v1058 = vld [vmem:[#allocation5 + $0xec8] sm:$0xf]
    %v1059 = vld [vmem:[#allocation5 + $0xecc] sm:$0xf]
    %v1060 = vld [vmem:[#allocation5 + $0xed0] sm:$0xf]
    %v1061 = vld [vmem:[#allocation5 + $0xed4] sm:$0xf]
    %v1062 = vld [vmem:[#allocation5 + $0xed8] sm:$0xf]
    %v1063 = vld [vmem:[#allocation5 + $0xedc] sm:$0xf]
    %v1064 = vld [vmem:[#allocation5 + $0xee0] sm:$0xf]
    %v1065 = vld [vmem:[#allocation5 + $0xee4] sm:$0xf]
    %v1066 = vld [vmem:[#allocation5 + $0xee8] sm:$0xf]
    %v1067 = vld [vmem:[#allocation5 + $0xeec] sm:$0xf]
    %v1068 = vld [vmem:[#allocation5 + $0xef0] sm:$0xf]
    %v1069 = vld [vmem:[#allocation5 + $0xef4] sm:$0xf]
    %v1070 = vld [vmem:[#allocation5 + $0xef8] sm:$0xf]
    %v1071 = vld [vmem:[#allocation5 + $0xefc] sm:$0xf]
    %v1072 = vld [vmem:[#allocation5 + $0xf00] sm:$0xf]
    %v1073 = vld [vmem:[#allocation5 + $0xf04] sm:$0xf]
    %v1074 = vld [vmem:[#allocation5 + $0xf08] sm:$0xf]
    %v1075 = vld [vmem:[#allocation5 + $0xf0c] sm:$0xf]
    %v1076 = vld [vmem:[#allocation5 + $0xf10] sm:$0xf]
    %v1077 = vld [vmem:[#allocation5 + $0xf14] sm:$0xf]
    %v1078 = vld [vmem:[#allocation5 + $0xf18] sm:$0xf]
    %v1079 = vld [vmem:[#allocation5 + $0xf1c] sm:$0xf]
    %v1080 = vld [vmem:[#allocation5 + $0xf20] sm:$0xf]
    %v1081 = vld [vmem:[#allocation5 + $0xf24] sm:$0xf]
    %v1082 = vld [vmem:[#allocation5 + $0xf28] sm:$0xf]
    %v1083 = vld [vmem:[#allocation5 + $0xf2c] sm:$0xf]
    %v1084 = vld [vmem:[#allocation5 + $0xf30] sm:$0xf]
    %v1085 = vld [vmem:[#allocation5 + $0xf34] sm:$0xf]
    %v1086 = vld [vmem:[#allocation5 + $0xf38] sm:$0xf]
    %v1087 = vld [vmem:[#allocation5 + $0xf3c] sm:$0xf]
    %v1088 = vld [vmem:[#allocation5 + $0xf40] sm:$0xf]
    %v1089 = vld [vmem:[#allocation5 + $0xf44] sm:$0xf]
    %v1090 = vld [vmem:[#allocation5 + $0xf48] sm:$0xf]
    %v1091 = vld [vmem:[#allocation5 + $0xf4c] sm:$0xf]
    %v1092 = vld [vmem:[#allocation5 + $0xf50] sm:$0xf]
    %v1093 = vld [vmem:[#allocation5 + $0xf54] sm:$0xf]
    %v1094 = vld [vmem:[#allocation5 + $0xf58] sm:$0xf]
    %v1095 = vld [vmem:[#allocation5 + $0xf5c] sm:$0xf]
    %v1096 = vld [vmem:[#allocation5 + $0xf60] sm:$0xf]
    %v1097 = vld [vmem:[#allocation5 + $0xf64] sm:$0xf]
    %v1098 = vld [vmem:[#allocation5 + $0xf68] sm:$0xf]
    %v1099 = vld [vmem:[#allocation5 + $0xf6c] sm:$0xf]
    %v1100 = vld [vmem:[#allocation5 + $0xf70] sm:$0xf]
    %v1101 = vld [vmem:[#allocation5 + $0xf74] sm:$0xf]
    %v1102 = vld [vmem:[#allocation8] sm:$0x1]
    %v1103 = vperm.slane %v1102, 0
    %v1135 = vunpack.c.l.b16 %v81
    %v1136 = vunpack.c.h.b16 %v81
    %v1137 = vunpack.c.l.b16 %v82
    %v1138 = vunpack.c.h.b16 %v82
    %v1139 = vunpack.c.l.b16 %v83
    %v1140 = vunpack.c.h.b16 %v83
    %v1141 = vunpack.c.l.b16 %v84
    %v1142 = vunpack.c.h.b16 %v84
    %v1143 = vunpack.c.l.b16 %v85
    %v1144 = vunpack.c.h.b16 %v85
    %v1145 = vunpack.c.l.b16 %v86
    %v1146 = vunpack.c.h.b16 %v86
    %v1147 = vunpack.c.l.b16 %v87
    %v1148 = vunpack.c.h.b16 %v87
    %v1149 = vunpack.c.l.b16 %v88
    %v1150 = vunpack.c.h.b16 %v88
    %v1151 = vunpack.c.l.b16 %v89
    %v1152 = vunpack.c.h.b16 %v89
    %v1153 = vunpack.c.l.b16 %v90
    %v1154 = vunpack.c.h.b16 %v90
    %v1155 = vunpack.c.l.b16 %v91
    %v1156 = vunpack.c.h.b16 %v91
    %v1157 = vunpack.c.l.b16 %v92
    %v1158 = vunpack.c.h.b16 %v92
    %v1159 = vunpack.c.l.b16 %v93
    %v1160 = vunpack.c.h.b16 %v93
    %v1161 = vunpack.c.l.b16 %v94
    %v1162 = vunpack.c.h.b16 %v94
    %v1163 = vunpack.c.l.b16 %v95
    %v1164 = vunpack.c.h.b16 %v95
    %v1165 = vunpack.c.l.b16 %v96
    %v1166 = vunpack.c.h.b16 %v96
    %v1167 = vunpack.c.l.b16 %v97
    %v1168 = vunpack.c.h.b16 %v97
    %v1169 = vunpack.c.l.b16 %v98
    %v1170 = vunpack.c.h.b16 %v98
    %v1171 = vunpack.c.l.b16 %v99
    %v1172 = vunpack.c.h.b16 %v99
    %v1173 = vunpack.c.l.b16 %v100
    %v1174 = vunpack.c.h.b16 %v100
    %v1175 = vunpack.c.l.b16 %v101
    %v1176 = vunpack.c.h.b16 %v101
    %v1177 = vunpack.c.l.b16 %v102
    %v1178 = vunpack.c.h.b16 %v102
    %v1179 = vunpack.c.l.b16 %v103
    %v1180 = vunpack.c.h.b16 %v103
    %v1181 = vunpack.c.l.b16 %v104
    %v1182 = vunpack.c.h.b16 %v104
    %v1183 = vunpack.c.l.b16 %v105
    %v1184 = vunpack.c.h.b16 %v105
    %v1185 = vunpack.c.l.b16 %v106
    %v1186 = vunpack.c.h.b16 %v106
    %v1187 = vunpack.c.l.b16 %v107
    %v1188 = vunpack.c.h.b16 %v107
    %v1189 = vunpack.c.l.b16 %v108
    %v1190 = vunpack.c.h.b16 %v108
    %v1191 = vunpack.c.l.b16 %v109
    %v1192 = vunpack.c.h.b16 %v109
    %v1193 = vunpack.c.l.b16 %v110
    %v1194 = vunpack.c.h.b16 %v110
    %v1195 = vunpack.c.l.b16 %v111
    %v1196 = vunpack.c.h.b16 %v111
    %v1197 = vpack.c.b16 %v1135, %v1135
    %v1198 = vpack.c.b16 %v1136, %v1136
    %v1199 = vpack.c.b16 %v1137, %v1137
    %v1200 = vpack.c.b16 %v1138, %v1138
    %v1201 = vpack.c.b16 %v1139, %v1139
    %v1202 = vpack.c.b16 %v1140, %v1140
    %v1203 = vpack.c.b16 %v1141, %v1141
    %v1204 = vpack.c.b16 %v1142, %v1142
    %v1205 = vpack.c.b16 %v1143, %v1143
    %v1206 = vpack.c.b16 %v1144, %v1144
    %v1207 = vpack.c.b16 %v1145, %v1145
    %v1208 = vpack.c.b16 %v1146, %v1146
    %v1209 = vpack.c.b16 %v1147, %v1147
    %v1210 = vpack.c.b16 %v1148, %v1148
    %v1211 = vpack.c.b16 %v1149, %v1149
    %v1212 = vpack.c.b16 %v1150, %v1150
    %v1213 = vpack.c.b16 %v1151, %v1151
    %v1214 = vpack.c.b16 %v1152, %v1152
    %v1215 = vpack.c.b16 %v1153, %v1153
    %v1216 = vpack.c.b16 %v1154, %v1154
    %v1217 = vpack.c.b16 %v1155, %v1155
    %v1218 = vpack.c.b16 %v1156, %v1156
    %v1219 = vpack.c.b16 %v1157, %v1157
    %v1220 = vpack.c.b16 %v1158, %v1158
    %v1221 = vpack.c.b16 %v1159, %v1159
    %v1222 = vpack.c.b16 %v1160, %v1160
    %v1223 = vpack.c.b16 %v1161, %v1161
    %v1224 = vpack.c.b16 %v1162, %v1162
    %v1225 = vpack.c.b16 %v1163, %v1163
    %v1226 = vpack.c.b16 %v1164, %v1164
    %v1227 = vpack.c.b16 %v1165, %v1165
    %v1228 = vpack.c.b16 %v1166, %v1166
    %v1229 = vpack.c.b16 %v1167, %v1167
    %v1230 = vpack.c.b16 %v1168, %v1168
    %v1231 = vpack.c.b16 %v1169, %v1169
    %v1232 = vpack.c.b16 %v1170, %v1170
    %v1233 = vpack.c.b16 %v1171, %v1171
    %v1234 = vpack.c.b16 %v1172, %v1172
    %v1235 = vpack.c.b16 %v1173, %v1173
    %v1236 = vpack.c.b16 %v1174, %v1174
    %v1237 = vpack.c.b16 %v1175, %v1175
    %v1238 = vpack.c.b16 %v1176, %v1176
    %v1239 = vpack.c.b16 %v1177, %v1177
    %v1240 = vpack.c.b16 %v1178, %v1178
    %v1241 = vpack.c.b16 %v1179, %v1179
    %v1242 = vpack.c.b16 %v1180, %v1180
    %v1243 = vpack.c.b16 %v1181, %v1181
    %v1244 = vpack.c.b16 %v1182, %v1182
    %v1245 = vpack.c.b16 %v1183, %v1183
    %v1246 = vpack.c.b16 %v1184, %v1184
    %v1247 = vpack.c.b16 %v1185, %v1185
    %v1248 = vpack.c.b16 %v1186, %v1186
    %v1249 = vpack.c.b16 %v1187, %v1187
    %v1250 = vpack.c.b16 %v1188, %v1188
    %v1251 = vpack.c.b16 %v1189, %v1189
    %v1252 = vpack.c.b16 %v1190, %v1190
    %v1253 = vpack.c.b16 %v1191, %v1191
    %v1254 = vpack.c.b16 %v1192, %v1192
    %v1255 = vpack.c.b16 %v1193, %v1193
    %v1256 = vpack.c.b16 %v1194, %v1194
    %v1257 = vpack.c.b16 %v1195, %v1195
    %v1258 = vpack.c.b16 %v1196, %v1196
    %v2310 = vunpack.c.l.b16 %v112
    %v2311 = vunpack.c.l.b16 %v113
    %v2312 = vunpack.c.l.b16 %v114
    %v2313 = vunpack.c.l.b16 %v115
    %v2314 = vunpack.c.l.b16 %v116
    %v2315 = vunpack.c.l.b16 %v117
    %v2316 = vunpack.c.l.b16 %v118
    %v2317 = vunpack.c.l.b16 %v119
    %v2318 = vunpack.c.l.b16 %v120
    %v2319 = vunpack.c.l.b16 %v121
    %v2320 = vunpack.c.l.b16 %v122
    %v2321 = vunpack.c.l.b16 %v123
    %v2322 = vunpack.c.l.b16 %v124
    %v2323 = vunpack.c.l.b16 %v125
    %v2324 = vunpack.c.l.b16 %v126
    %v2325 = vunpack.c.l.b16 %v127
    %v2326 = vunpack.c.l.b16 %v128
    %v2327 = vunpack.c.l.b16 %v129
    %v2328 = vunpack.c.l.b16 %v130
    %v2329 = vunpack.c.l.b16 %v131
    %v2330 = vunpack.c.l.b16 %v132
    %v2331 = vunpack.c.l.b16 %v133
    %v2332 = vunpack.c.l.b16 %v134
    %v2333 = vunpack.c.l.b16 %v135
    %v2334 = vunpack.c.l.b16 %v136
    %v2335 = vunpack.c.l.b16 %v137
    %v2336 = vunpack.c.l.b16 %v138
    %v2337 = vunpack.c.l.b16 %v139
    %v2338 = vunpack.c.l.b16 %v140
    %v2339 = vunpack.c.l.b16 %v141
    %v2340 = vunpack.c.l.b16 %v142
    %v2341 = vunpack.c.l.b16 %v143
    %v2342 = vunpack.c.l.b16 %v144
    %v2343 = vunpack.c.l.b16 %v145
    %v2344 = vunpack.c.l.b16 %v146
    %v2345 = vunpack.c.l.b16 %v147
    %v2346 = vunpack.c.l.b16 %v148
    %v2347 = vunpack.c.l.b16 %v149
    %v2348 = vunpack.c.l.b16 %v150
    %v2349 = vunpack.c.l.b16 %v151
    %v2350 = vunpack.c.l.b16 %v152
    %v2351 = vunpack.c.l.b16 %v153
    %v2352 = vunpack.c.l.b16 %v154
    %v2353 = vunpack.c.l.b16 %v155
    %v2354 = vunpack.c.l.b16 %v156
    %v2355 = vunpack.c.l.b16 %v157
    %v2356 = vunpack.c.l.b16 %v158
    %v2357 = vunpack.c.l.b16 %v159
    %v2358 = vunpack.c.l.b16 %v160
    %v2359 = vunpack.c.l.b16 %v161
    %v2360 = vunpack.c.l.b16 %v162
    %v2361 = vunpack.c.l.b16 %v163
    %v2362 = vunpack.c.l.b16 %v164
    %v2363 = vunpack.c.l.b16 %v165
    %v2364 = vunpack.c.l.b16 %v166
    %v2365 = vunpack.c.l.b16 %v167
    %v2366 = vunpack.c.l.b16 %v168
    %v2367 = vunpack.c.l.b16 %v169
    %v2368 = vunpack.c.l.b16 %v170
    %v2369 = vunpack.c.l.b16 %v171
    %v2370 = vunpack.c.l.b16 %v172
    %v2371 = vunpack.c.l.b16 %v173
    %v2372 = vunpack.c.l.b16 %v174
    %v2373 = vunpack.c.l.b16 %v175
    %v2374 = vunpack.c.l.b16 %v176
    %v2375 = vunpack.c.l.b16 %v177
    %v2376 = vunpack.c.l.b16 %v178
    %v2377 = vunpack.c.l.b16 %v179
    %v2378 = vunpack.c.l.b16 %v180
    %v2379 = vunpack.c.l.b16 %v181
    %v2380 = vunpack.c.l.b16 %v182
    %v2381 = vunpack.c.l.b16 %v183
    %v2382 = vunpack.c.l.b16 %v184
    %v2383 = vunpack.c.l.b16 %v185
    %v2384 = vunpack.c.l.b16 %v186
    %v2385 = vunpack.c.l.b16 %v187
    %v2386 = vunpack.c.l.b16 %v188
    %v2387 = vunpack.c.l.b16 %v189
    %v2388 = vunpack.c.l.b16 %v190
    %v2389 = vunpack.c.l.b16 %v191
    %v2390 = vunpack.c.l.b16 %v192
    %v2391 = vunpack.c.l.b16 %v193
    %v2392 = vunpack.c.l.b16 %v194
    %v2393 = vunpack.c.l.b16 %v195
    %v2394 = vunpack.c.l.b16 %v196
    %v2395 = vunpack.c.l.b16 %v197
    %v2396 = vunpack.c.l.b16 %v198
    %v2397 = vunpack.c.l.b16 %v199
    %v2398 = vunpack.c.l.b16 %v200
    %v2399 = vunpack.c.l.b16 %v201
    %v2400 = vunpack.c.l.b16 %v202
    %v2401 = vunpack.c.l.b16 %v203
    %v2402 = vunpack.c.l.b16 %v204
    %v2403 = vunpack.c.l.b16 %v205
    %v2404 = vunpack.c.l.b16 %v206
    %v2405 = vunpack.c.l.b16 %v207
    %v2406 = vunpack.c.l.b16 %v208
    %v2407 = vunpack.c.l.b16 %v209
    %v2408 = vunpack.c.l.b16 %v210
    %v2409 = vunpack.c.l.b16 %v211
    %v2410 = vunpack.c.l.b16 %v212
    %v2411 = vunpack.c.l.b16 %v213
    %v2412 = vunpack.c.l.b16 %v214
    %v2413 = vunpack.c.l.b16 %v215
    %v2414 = vunpack.c.l.b16 %v216
    %v2415 = vunpack.c.l.b16 %v217
    %v2416 = vunpack.c.l.b16 %v218
    %v2417 = vunpack.c.l.b16 %v219
    %v2418 = vunpack.c.l.b16 %v220
    %v2419 = vunpack.c.l.b16 %v221
    %v2420 = vunpack.c.l.b16 %v222
    %v2421 = vunpack.c.l.b16 %v223
    %v2422 = vunpack.c.l.b16 %v224
    %v2423 = vunpack.c.l.b16 %v225
    %v2424 = vunpack.c.l.b16 %v226
    %v2425 = vunpack.c.l.b16 %v227
    %v2426 = vunpack.c.l.b16 %v228
    %v2427 = vunpack.c.l.b16 %v229
    %v2428 = vunpack.c.l.b16 %v230
    %v2429 = vunpack.c.l.b16 %v231
    %v2430 = vunpack.c.l.b16 %v232
    %v2431 = vunpack.c.l.b16 %v233
    %v2432 = vunpack.c.l.b16 %v234
    %v2433 = vunpack.c.l.b16 %v235
    %v2434 = vunpack.c.l.b16 %v236
    %v2435 = vunpack.c.l.b16 %v237
    %v2436 = vunpack.c.l.b16 %v238
    %v2437 = vunpack.c.l.b16 %v239
    %v2438 = vunpack.c.l.b16 %v240
    %v2439 = vunpack.c.l.b16 %v241
    %v2440 = vunpack.c.l.b16 %v242
    %v2441 = vunpack.c.l.b16 %v243
    %v2442 = vunpack.c.l.b16 %v244
    %v2443 = vunpack.c.l.b16 %v245
    %v2444 = vunpack.c.l.b16 %v246
    %v2445 = vunpack.c.l.b16 %v247
    %v2446 = vunpack.c.l.b16 %v248
    %v2447 = vunpack.c.l.b16 %v249
    %v2448 = vunpack.c.l.b16 %v250
    %v2449 = vunpack.c.l.b16 %v251
    %v2450 = vunpack.c.l.b16 %v252
    %v2451 = vunpack.c.l.b16 %v253
    %v2452 = vunpack.c.l.b16 %v254
    %v2453 = vunpack.c.l.b16 %v255
    %v2454 = vunpack.c.l.b16 %v256
    %v2455 = vunpack.c.l.b16 %v257
    %v2456 = vunpack.c.l.b16 %v258
    %v2457 = vunpack.c.l.b16 %v259
    %v2458 = vunpack.c.l.b16 %v260
    %v2459 = vunpack.c.l.b16 %v261
    %v2460 = vunpack.c.l.b16 %v262
    %v2461 = vunpack.c.l.b16 %v263
    %v2462 = vunpack.c.l.b16 %v264
    %v2463 = vunpack.c.l.b16 %v265
    %v2464 = vunpack.c.l.b16 %v266
    %v2465 = vunpack.c.l.b16 %v267
    %v2466 = vunpack.c.l.b16 %v268
    %v2467 = vunpack.c.l.b16 %v269
    %v2468 = vunpack.c.l.b16 %v270
    %v2469 = vunpack.c.l.b16 %v271
    %v2470 = vunpack.c.l.b16 %v272
    %v2471 = vunpack.c.l.b16 %v273
    %v2472 = vunpack.c.l.b16 %v274
    %v2473 = vunpack.c.l.b16 %v275
    %v2474 = vunpack.c.l.b16 %v276
    %v2475 = vunpack.c.l.b16 %v277
    %v2476 = vunpack.c.l.b16 %v278
    %v2477 = vunpack.c.l.b16 %v279
    %v2478 = vunpack.c.l.b16 %v280
    %v2479 = vunpack.c.l.b16 %v281
    %v2480 = vunpack.c.l.b16 %v282
    %v2481 = vunpack.c.l.b16 %v283
    %v2482 = vunpack.c.l.b16 %v284
    %v2483 = vunpack.c.l.b16 %v285
    %v2484 = vunpack.c.l.b16 %v286
    %v2485 = vunpack.c.l.b16 %v287
    %v2486 = vunpack.c.l.b16 %v288
    %v2487 = vunpack.c.l.b16 %v289
    %v2488 = vunpack.c.l.b16 %v290
    %v2489 = vunpack.c.l.b16 %v291
    %v2490 = vunpack.c.l.b16 %v292
    %v2491 = vunpack.c.l.b16 %v293
    %v2492 = vunpack.c.l.b16 %v294
    %v2493 = vunpack.c.l.b16 %v295
    %v2494 = vunpack.c.l.b16 %v296
    %v2495 = vunpack.c.l.b16 %v297
    %v2496 = vunpack.c.l.b16 %v298
    %v2497 = vunpack.c.l.b16 %v299
    %v2498 = vunpack.c.l.b16 %v300
    %v2499 = vunpack.c.l.b16 %v301
    %v2500 = vunpack.c.l.b16 %v302
    %v2501 = vunpack.c.l.b16 %v303
    %v2502 = vunpack.c.l.b16 %v304
    %v2503 = vunpack.c.l.b16 %v305
    %v2504 = vunpack.c.l.b16 %v306
    %v2505 = vunpack.c.l.b16 %v307
    %v2506 = vunpack.c.l.b16 %v308
    %v2507 = vunpack.c.l.b16 %v309
    %v2508 = vunpack.c.l.b16 %v310
    %v2509 = vunpack.c.l.b16 %v311
    %v2510 = vunpack.c.l.b16 %v312
    %v2511 = vunpack.c.l.b16 %v313
    %v2512 = vunpack.c.l.b16 %v314
    %v2513 = vunpack.c.l.b16 %v315
    %v2514 = vunpack.c.l.b16 %v316
    %v2515 = vunpack.c.l.b16 %v317
    %v2516 = vunpack.c.l.b16 %v318
    %v2517 = vunpack.c.l.b16 %v319
    %v2518 = vunpack.c.l.b16 %v320
    %v2519 = vunpack.c.l.b16 %v321
    %v2520 = vunpack.c.l.b16 %v322
    %v2521 = vunpack.c.l.b16 %v323
    %v2522 = vunpack.c.l.b16 %v324
    %v2523 = vunpack.c.l.b16 %v325
    %v2524 = vunpack.c.l.b16 %v326
    %v2525 = vunpack.c.l.b16 %v327
    %v2526 = vunpack.c.l.b16 %v328
    %v2527 = vunpack.c.l.b16 %v329
    %v2528 = vunpack.c.l.b16 %v330
    %v2529 = vunpack.c.l.b16 %v331
    %v2530 = vunpack.c.l.b16 %v332
    %v2531 = vunpack.c.l.b16 %v333
    %v2532 = vunpack.c.l.b16 %v334
    %v2533 = vunpack.c.l.b16 %v335
    %v2534 = vunpack.c.l.b16 %v336
    %v2535 = vunpack.c.l.b16 %v337
    %v2536 = vunpack.c.l.b16 %v338
    %v2537 = vunpack.c.l.b16 %v339
    %v2538 = vunpack.c.l.b16 %v340
    %v2539 = vunpack.c.l.b16 %v341
    %v2540 = vunpack.c.l.b16 %v342
    %v2541 = vunpack.c.l.b16 %v343
    %v2542 = vunpack.c.l.b16 %v344
    %v2543 = vunpack.c.l.b16 %v345
    %v2544 = vunpack.c.l.b16 %v346
    %v2545 = vunpack.c.l.b16 %v347
    %v2546 = vunpack.c.l.b16 %v348
    %v2547 = vunpack.c.l.b16 %v349
    %v2548 = vunpack.c.l.b16 %v350
    %v2549 = vunpack.c.l.b16 %v351
    %v2550 = vunpack.c.l.b16 %v352
    %v2551 = vunpack.c.l.b16 %v353
    %v2552 = vunpack.c.l.b16 %v354
    %v2553 = vunpack.c.l.b16 %v355
    %v2554 = vunpack.c.l.b16 %v356
    %v2555 = vunpack.c.l.b16 %v357
    %v2556 = vunpack.c.l.b16 %v358
    %v2557 = vunpack.c.l.b16 %v359
    %v2558 = vunpack.c.l.b16 %v360
    %v2559 = vunpack.c.l.b16 %v361
    %v2560 = vunpack.c.l.b16 %v362
    %v2561 = vunpack.c.l.b16 %v363
    %v2562 = vunpack.c.l.b16 %v364
    %v2563 = vunpack.c.l.b16 %v365
    %v2564 = vunpack.c.l.b16 %v366
    %v2565 = vunpack.c.l.b16 %v367
    %v2566 = vunpack.c.l.b16 %v368
    %v2567 = vunpack.c.l.b16 %v369
    %v2568 = vunpack.c.l.b16 %v370
    %v2569 = vunpack.c.l.b16 %v371
    %v2570 = vunpack.c.l.b16 %v372
    %v2571 = vunpack.c.l.b16 %v373
    %v2572 = vunpack.c.l.b16 %v374
    %v2573 = vunpack.c.l.b16 %v375
    %v2574 = vunpack.c.l.b16 %v376
    %v2575 = vunpack.c.l.b16 %v377
    %v2576 = vunpack.c.l.b16 %v378
    %v2577 = vunpack.c.l.b16 %v379
    %v2578 = vunpack.c.l.b16 %v380
    %v2579 = vunpack.c.l.b16 %v381
    %v2580 = vunpack.c.l.b16 %v382
    %v2581 = vunpack.c.l.b16 %v383
    %v2582 = vunpack.c.l.b16 %v384
    %v2583 = vunpack.c.l.b16 %v385
    %v2584 = vunpack.c.l.b16 %v386
    %v2585 = vunpack.c.l.b16 %v387
    %v2586 = vunpack.c.l.b16 %v388
    %v2587 = vunpack.c.l.b16 %v389
    %v2588 = vunpack.c.l.b16 %v390
    %v2589 = vunpack.c.l.b16 %v391
    %v2590 = vunpack.c.l.b16 %v392
    %v2591 = vunpack.c.l.b16 %v393
    %v2592 = vunpack.c.l.b16 %v394
    %v2593 = vunpack.c.l.b16 %v395
    %v2594 = vunpack.c.l.b16 %v396
    %v2595 = vunpack.c.l.b16 %v397
    %v2596 = vunpack.c.l.b16 %v398
    %v2597 = vunpack.c.l.b16 %v399
    %v2598 = vunpack.c.l.b16 %v400
    %v2599 = vunpack.c.l.b16 %v401
    %v2600 = vunpack.c.l.b16 %v402
    %v2601 = vunpack.c.l.b16 %v403
    %v2602 = vunpack.c.l.b16 %v404
    %v2603 = vunpack.c.l.b16 %v405
    %v2604 = vunpack.c.l.b16 %v406
    %v2605 = vunpack.c.l.b16 %v407
    %v2606 = vunpack.c.l.b16 %v408
    %v2607 = vunpack.c.l.b16 %v409
    %v2608 = vunpack.c.l.b16 %v410
    %v2609 = vunpack.c.l.b16 %v411
    %v2610 = vunpack.c.l.b16 %v412
    %v2611 = vunpack.c.l.b16 %v413
    %v2612 = vunpack.c.l.b16 %v414
    %v2613 = vunpack.c.l.b16 %v415
    %v2614 = vunpack.c.l.b16 %v416
    %v2615 = vunpack.c.l.b16 %v417
    %v2616 = vunpack.c.l.b16 %v418
    %v2617 = vunpack.c.l.b16 %v419
    %v2618 = vunpack.c.l.b16 %v420
    %v2619 = vunpack.c.l.b16 %v421
    %v2620 = vunpack.c.l.b16 %v422
    %v2621 = vunpack.c.l.b16 %v423
    %v2622 = vunpack.c.l.b16 %v424
    %v2623 = vunpack.c.l.b16 %v425
    %v2624 = vunpack.c.l.b16 %v426
    %v2625 = vunpack.c.l.b16 %v427
    %v2626 = vunpack.c.l.b16 %v428
    %v2627 = vunpack.c.l.b16 %v429
    %v2628 = vunpack.c.l.b16 %v430
    %v2629 = vunpack.c.l.b16 %v431
    %v2630 = vunpack.c.l.b16 %v432
    %v2631 = vunpack.c.l.b16 %v433
    %v2632 = vunpack.c.l.b16 %v434
    %v2633 = vunpack.c.l.b16 %v435
    %v2634 = vunpack.c.l.b16 %v436
    %v2635 = vunpack.c.l.b16 %v437
    %v2636 = vunpack.c.l.b16 %v438
    %v2637 = vunpack.c.l.b16 %v439
    %v2638 = vunpack.c.l.b16 %v440
    %v2639 = vunpack.c.l.b16 %v441
    %v2640 = vunpack.c.l.b16 %v442
    %v2641 = vunpack.c.l.b16 %v443
    %v2642 = vunpack.c.l.b16 %v444
    %v2643 = vunpack.c.l.b16 %v445
    %v2644 = vunpack.c.l.b16 %v446
    %v2645 = vunpack.c.l.b16 %v447
    %v2646 = vunpack.c.l.b16 %v448
    %v2647 = vunpack.c.l.b16 %v449
    %v2648 = vunpack.c.l.b16 %v450
    %v2649 = vunpack.c.l.b16 %v451
    %v2650 = vunpack.c.l.b16 %v452
    %v2651 = vunpack.c.l.b16 %v453
    %v2652 = vunpack.c.l.b16 %v454
    %v2653 = vunpack.c.l.b16 %v455
    %v2654 = vunpack.c.l.b16 %v456
    %v2655 = vunpack.c.l.b16 %v457
    %v2656 = vunpack.c.l.b16 %v458
    %v2657 = vunpack.c.l.b16 %v459
    %v2658 = vunpack.c.l.b16 %v460
    %v2659 = vunpack.c.l.b16 %v461
    %v2660 = vunpack.c.l.b16 %v462
    %v2661 = vunpack.c.l.b16 %v463
    %v2662 = vunpack.c.l.b16 %v464
    %v2663 = vunpack.c.l.b16 %v465
    %v2664 = vunpack.c.l.b16 %v466
    %v2665 = vunpack.c.l.b16 %v467
    %v2666 = vunpack.c.l.b16 %v468
    %v2667 = vunpack.c.l.b16 %v469
    %v2668 = vunpack.c.l.b16 %v470
    %v2669 = vunpack.c.l.b16 %v471
    %v2670 = vunpack.c.l.b16 %v472
    %v2671 = vunpack.c.l.b16 %v473
    %v2672 = vunpack.c.l.b16 %v474
    %v2673 = vunpack.c.l.b16 %v475
    %v2674 = vunpack.c.l.b16 %v476
    %v2675 = vunpack.c.l.b16 %v477
    %v2676 = vunpack.c.l.b16 %v478
    %v2677 = vunpack.c.l.b16 %v479
    %v2678 = vunpack.c.l.b16 %v480
    %v2679 = vunpack.c.l.b16 %v481
    %v2680 = vunpack.c.l.b16 %v482
    %v2681 = vunpack.c.l.b16 %v483
    %v2682 = vunpack.c.l.b16 %v484
    %v2683 = vunpack.c.l.b16 %v485
    %v2684 = vunpack.c.l.b16 %v486
    %v2685 = vunpack.c.l.b16 %v487
    %v2686 = vunpack.c.l.b16 %v488
    %v2687 = vunpack.c.l.b16 %v489
    %v2688 = vunpack.c.l.b16 %v490
    %v2689 = vunpack.c.l.b16 %v491
    %v2690 = vunpack.c.l.b16 %v492
    %v2691 = vunpack.c.l.b16 %v493
    %v2692 = vunpack.c.l.b16 %v494
    %v2693 = vunpack.c.l.b16 %v495
    %v2694 = vunpack.c.l.b16 %v496
    %v2695 = vunpack.c.l.b16 %v497
    %v2696 = vunpack.c.l.b16 %v498
    %v2697 = vunpack.c.l.b16 %v499
    %v2698 = vunpack.c.l.b16 %v500
    %v2699 = vunpack.c.l.b16 %v501
    %v2700 = vunpack.c.l.b16 %v502
    %v2701 = vunpack.c.l.b16 %v503
    %v2702 = vunpack.c.l.b16 %v504
    %v2703 = vunpack.c.l.b16 %v505
    %v2704 = vunpack.c.l.b16 %v506
    %v2705 = vunpack.c.l.b16 %v507
    %v2706 = vunpack.c.l.b16 %v508
    %v2707 = vunpack.c.l.b16 %v509
    %v2708 = vunpack.c.l.b16 %v510
    %v2709 = vunpack.c.l.b16 %v511
    %v2710 = vunpack.c.l.b16 %v512
    %v2711 = vunpack.c.l.b16 %v513
    %v2712 = vunpack.c.l.b16 %v514
    %v2713 = vunpack.c.l.b16 %v515
    %v2714 = vunpack.c.l.b16 %v516
    %v2715 = vunpack.c.l.b16 %v517
    %v2716 = vunpack.c.l.b16 %v518
    %v2717 = vunpack.c.l.b16 %v519
    %v2718 = vunpack.c.l.b16 %v520
    %v2719 = vunpack.c.l.b16 %v521
    %v2720 = vunpack.c.l.b16 %v522
    %v2721 = vunpack.c.l.b16 %v523
    %v2722 = vunpack.c.l.b16 %v524
    %v2723 = vunpack.c.l.b16 %v525
    %v2724 = vunpack.c.l.b16 %v526
    %v2725 = vunpack.c.l.b16 %v527
    %v2726 = vunpack.c.l.b16 %v528
    %v2727 = vunpack.c.l.b16 %v529
    %v2728 = vunpack.c.l.b16 %v530
    %v2729 = vunpack.c.l.b16 %v531
    %v2730 = vunpack.c.l.b16 %v532
    %v2731 = vunpack.c.l.b16 %v533
    %v2732 = vunpack.c.l.b16 %v534
    %v2733 = vunpack.c.l.b16 %v535
    %v2734 = vunpack.c.l.b16 %v536
    %v2735 = vunpack.c.l.b16 %v537
    %v2736 = vunpack.c.l.b16 %v538
    %v2737 = vunpack.c.l.b16 %v539
    %v2738 = vunpack.c.l.b16 %v540
    %v2739 = vunpack.c.l.b16 %v541
    %v2740 = vunpack.c.l.b16 %v542
    %v2741 = vunpack.c.l.b16 %v543
    %v2742 = vunpack.c.l.b16 %v544
    %v2743 = vunpack.c.l.b16 %v545
    %v2744 = vunpack.c.l.b16 %v546
    %v2745 = vunpack.c.l.b16 %v547
    %v2746 = vunpack.c.l.b16 %v548
    %v2747 = vunpack.c.l.b16 %v549
    %v2748 = vunpack.c.l.b16 %v550
    %v2749 = vunpack.c.l.b16 %v551
    %v2750 = vunpack.c.l.b16 %v552
    %v2751 = vunpack.c.l.b16 %v553
    %v2752 = vunpack.c.l.b16 %v554
    %v2753 = vunpack.c.l.b16 %v555
    %v2754 = vunpack.c.l.b16 %v556
    %v2755 = vunpack.c.l.b16 %v557
    %v2756 = vunpack.c.l.b16 %v558
    %v2757 = vunpack.c.l.b16 %v559
    %v2758 = vunpack.c.l.b16 %v560
    %v2759 = vunpack.c.l.b16 %v561
    %v2760 = vunpack.c.l.b16 %v562
    %v2761 = vunpack.c.l.b16 %v563
    %v2762 = vunpack.c.l.b16 %v564
    %v2763 = vunpack.c.l.b16 %v565
    %v2764 = vunpack.c.l.b16 %v566
    %v2765 = vunpack.c.l.b16 %v567
    %v2766 = vunpack.c.l.b16 %v568
    %v2767 = vunpack.c.l.b16 %v569
    %v2768 = vunpack.c.l.b16 %v570
    %v2769 = vunpack.c.l.b16 %v571
    %v2770 = vunpack.c.l.b16 %v572
    %v2771 = vunpack.c.l.b16 %v573
    %v2772 = vunpack.c.l.b16 %v574
    %v2773 = vunpack.c.l.b16 %v575
    %v2774 = vunpack.c.l.b16 %v576
    %v2775 = vunpack.c.l.b16 %v577
    %v2776 = vunpack.c.l.b16 %v578
    %v2777 = vunpack.c.l.b16 %v579
    %v2778 = vunpack.c.l.b16 %v580
    %v2779 = vunpack.c.l.b16 %v581
    %v2780 = vunpack.c.l.b16 %v582
    %v2781 = vunpack.c.l.b16 %v583
    %v2782 = vunpack.c.l.b16 %v584
    %v2783 = vunpack.c.l.b16 %v585
    %v2784 = vunpack.c.l.b16 %v586
    %v2785 = vunpack.c.l.b16 %v587
    %v2786 = vunpack.c.l.b16 %v588
    %v2787 = vunpack.c.l.b16 %v589
    %v2788 = vunpack.c.l.b16 %v590
    %v2789 = vunpack.c.l.b16 %v591
    %v2790 = vunpack.c.l.b16 %v592
    %v2791 = vunpack.c.l.b16 %v593
    %v2792 = vunpack.c.l.b16 %v594
    %v2793 = vunpack.c.l.b16 %v595
    %v2794 = vunpack.c.l.b16 %v596
    %v2795 = vunpack.c.l.b16 %v597
    %v2796 = vunpack.c.l.b16 %v598
    %v2797 = vunpack.c.l.b16 %v599
    %v2798 = vunpack.c.l.b16 %v600
    %v2799 = vunpack.c.l.b16 %v601
    %v2800 = vunpack.c.l.b16 %v602
    %v2801 = vunpack.c.l.b16 %v603
    %v2802 = vunpack.c.l.b16 %v604
    %v2803 = vunpack.c.l.b16 %v605
    %v2804 = vunpack.c.l.b16 %v606
    %v2805 = vunpack.c.l.b16 %v607
    %v2806 = vunpack.c.l.b16 %v608
    %v2807 = vunpack.c.l.b16 %v609
    %v2808 = vunpack.c.l.b16 %v610
    %v2809 = vunpack.c.l.b16 %v611
    %v2810 = vunpack.c.l.b16 %v612
    %v2811 = vunpack.c.l.b16 %v613
    %v2812 = vunpack.c.l.b16 %v614
    %v2813 = vunpack.c.l.b16 %v615
    %v2814 = vunpack.c.l.b16 %v616
    %v2815 = vunpack.c.l.b16 %v617
    %v2816 = vunpack.c.l.b16 %v618
    %v2817 = vunpack.c.l.b16 %v619
    %v2818 = vunpack.c.l.b16 %v620
    %v2819 = vunpack.c.l.b16 %v621
    %v2820 = vunpack.c.l.b16 %v622
    %v2821 = vunpack.c.l.b16 %v623
    %v2822 = vunpack.c.l.b16 %v624
    %v2823 = vunpack.c.l.b16 %v625
    %v2824 = vunpack.c.l.b16 %v626
    %v2825 = vunpack.c.l.b16 %v627
    %v2826 = vunpack.c.l.b16 %v628
    %v2827 = vunpack.c.l.b16 %v629
    %v2828 = vunpack.c.l.b16 %v630
    %v2829 = vunpack.c.l.b16 %v631
    %v2830 = vunpack.c.l.b16 %v632
    %v2831 = vunpack.c.l.b16 %v633
    %v2832 = vunpack.c.l.b16 %v634
    %v2833 = vunpack.c.l.b16 %v635
    %v2834 = vunpack.c.l.b16 %v636
    %v2835 = vunpack.c.l.b16 %v637
    %v2836 = vunpack.c.l.b16 %v638
    %v2837 = vunpack.c.l.b16 %v639
    %v2838 = vunpack.c.l.b16 %v640
    %v2839 = vunpack.c.l.b16 %v641
    %v2840 = vunpack.c.l.b16 %v642
    %v2841 = vunpack.c.l.b16 %v643
    %v2842 = vunpack.c.l.b16 %v644
    %v2843 = vunpack.c.l.b16 %v645
    %v2844 = vunpack.c.l.b16 %v646
    %v2845 = vunpack.c.l.b16 %v647
    %v2846 = vunpack.c.l.b16 %v648
    %v2847 = vunpack.c.l.b16 %v649
    %v2848 = vunpack.c.l.b16 %v650
    %v2849 = vunpack.c.l.b16 %v651
    %v2850 = vunpack.c.l.b16 %v652
    %v2851 = vunpack.c.l.b16 %v653
    %v2852 = vunpack.c.l.b16 %v654
    %v2853 = vunpack.c.l.b16 %v655
    %v2854 = vunpack.c.l.b16 %v656
    %v2855 = vunpack.c.l.b16 %v657
    %v2856 = vunpack.c.l.b16 %v658
    %v2857 = vunpack.c.l.b16 %v659
    %v2858 = vunpack.c.l.b16 %v660
    %v2859 = vunpack.c.l.b16 %v661
    %v2860 = vunpack.c.l.b16 %v662
    %v2861 = vunpack.c.l.b16 %v663
    %v2862 = vunpack.c.l.b16 %v664
    %v2863 = vunpack.c.l.b16 %v665
    %v2864 = vunpack.c.l.b16 %v666
    %v2865 = vunpack.c.l.b16 %v667
    %v2866 = vunpack.c.l.b16 %v668
    %v2867 = vunpack.c.l.b16 %v669
    %v2868 = vunpack.c.l.b16 %v670
    %v2869 = vunpack.c.l.b16 %v671
    %v2870 = vunpack.c.l.b16 %v672
    %v2871 = vunpack.c.l.b16 %v673
    %v2872 = vunpack.c.l.b16 %v674
    %v2873 = vunpack.c.l.b16 %v675
    %v2874 = vunpack.c.l.b16 %v676
    %v2875 = vunpack.c.l.b16 %v677
    %v2876 = vunpack.c.l.b16 %v678
    %v2877 = vunpack.c.l.b16 %v679
    %v2878 = vunpack.c.l.b16 %v680
    %v2879 = vunpack.c.l.b16 %v681
    %v2880 = vunpack.c.l.b16 %v682
    %v2881 = vunpack.c.l.b16 %v683
    %v2882 = vunpack.c.l.b16 %v684
    %v2883 = vunpack.c.l.b16 %v685
    %v2884 = vunpack.c.l.b16 %v686
    %v2885 = vunpack.c.l.b16 %v687
    %v2886 = vunpack.c.l.b16 %v688
    %v2887 = vunpack.c.l.b16 %v689
    %v2888 = vunpack.c.l.b16 %v690
    %v2889 = vunpack.c.l.b16 %v691
    %v2890 = vunpack.c.l.b16 %v692
    %v2891 = vunpack.c.l.b16 %v693
    %v2892 = vunpack.c.l.b16 %v694
    %v2893 = vunpack.c.l.b16 %v695
    %v2894 = vunpack.c.l.b16 %v696
    %v2895 = vunpack.c.l.b16 %v697
    %v2896 = vunpack.c.l.b16 %v698
    %v2897 = vunpack.c.l.b16 %v699
    %v2898 = vunpack.c.l.b16 %v700
    %v2899 = vunpack.c.l.b16 %v701
    %v2900 = vunpack.c.l.b16 %v702
    %v2901 = vunpack.c.l.b16 %v703
    %v2902 = vunpack.c.l.b16 %v704
    %v2903 = vunpack.c.l.b16 %v705
    %v2904 = vunpack.c.l.b16 %v706
    %v2905 = vunpack.c.l.b16 %v707
    %v2906 = vunpack.c.l.b16 %v708
    %v2907 = vunpack.c.l.b16 %v709
    %v2908 = vunpack.c.l.b16 %v710
    %v2909 = vunpack.c.l.b16 %v711
    %v2910 = vunpack.c.l.b16 %v712
    %v2911 = vunpack.c.l.b16 %v713
    %v2912 = vunpack.c.l.b16 %v714
    %v2913 = vunpack.c.l.b16 %v715
    %v2914 = vunpack.c.l.b16 %v716
    %v2915 = vunpack.c.l.b16 %v717
    %v2916 = vunpack.c.l.b16 %v718
    %v2917 = vunpack.c.l.b16 %v719
    %v2918 = vunpack.c.l.b16 %v720
    %v2919 = vunpack.c.l.b16 %v721
    %v2920 = vunpack.c.l.b16 %v722
    %v2921 = vunpack.c.l.b16 %v723
    %v2922 = vunpack.c.l.b16 %v724
    %v2923 = vunpack.c.l.b16 %v725
    %v2924 = vunpack.c.l.b16 %v726
    %v2925 = vunpack.c.l.b16 %v727
    %v2926 = vunpack.c.l.b16 %v728
    %v2927 = vunpack.c.l.b16 %v729
    %v2928 = vunpack.c.l.b16 %v730
    %v2929 = vunpack.c.l.b16 %v731
    %v2930 = vunpack.c.l.b16 %v732
    %v2931 = vunpack.c.l.b16 %v733
    %v2932 = vunpack.c.l.b16 %v734
    %v2933 = vunpack.c.l.b16 %v735
    %v2934 = vunpack.c.l.b16 %v736
    %v2935 = vunpack.c.l.b16 %v737
    %v2936 = vunpack.c.l.b16 %v738
    %v2937 = vunpack.c.l.b16 %v739
    %v2938 = vunpack.c.l.b16 %v740
    %v2939 = vunpack.c.l.b16 %v741
    %v2940 = vunpack.c.l.b16 %v742
    %v2941 = vunpack.c.l.b16 %v743
    %v2942 = vunpack.c.l.b16 %v744
    %v2943 = vunpack.c.l.b16 %v745
    %v2944 = vunpack.c.l.b16 %v746
    %v2945 = vunpack.c.l.b16 %v747
    %v2946 = vunpack.c.l.b16 %v748
    %v2947 = vunpack.c.l.b16 %v749
    %v2948 = vunpack.c.l.b16 %v750
    %v2949 = vunpack.c.l.b16 %v751
    %v2950 = vunpack.c.l.b16 %v752
    %v2951 = vunpack.c.l.b16 %v753
    %v2952 = vunpack.c.l.b16 %v754
    %v2953 = vunpack.c.l.b16 %v755
    %v2954 = vunpack.c.l.b16 %v756
    %v2955 = vunpack.c.l.b16 %v757
    %v2956 = vunpack.c.l.b16 %v758
    %v2957 = vunpack.c.l.b16 %v759
    %v2958 = vunpack.c.l.b16 %v760
    %v2959 = vunpack.c.l.b16 %v761
    %v2960 = vunpack.c.l.b16 %v762
    %v2961 = vunpack.c.l.b16 %v763
    %v2962 = vunpack.c.l.b16 %v764
    %v2963 = vunpack.c.l.b16 %v765
    %v2964 = vunpack.c.l.b16 %v766
    %v2965 = vunpack.c.l.b16 %v767
    %v2966 = vunpack.c.l.b16 %v768
    %v2967 = vunpack.c.l.b16 %v769
    %v2968 = vunpack.c.l.b16 %v770
    %v2969 = vunpack.c.l.b16 %v771
    %v2970 = vunpack.c.l.b16 %v772
    %v2971 = vunpack.c.l.b16 %v773
    %v2972 = vunpack.c.l.b16 %v774
    %v2973 = vunpack.c.l.b16 %v775
    %v2974 = vunpack.c.l.b16 %v776
    %v2975 = vunpack.c.l.b16 %v777
    %v2976 = vunpack.c.l.b16 %v778
    %v2977 = vunpack.c.l.b16 %v779
    %v2978 = vunpack.c.l.b16 %v780
    %v2979 = vunpack.c.l.b16 %v781
    %v2980 = vunpack.c.l.b16 %v782
    %v2981 = vunpack.c.l.b16 %v783
    %v2982 = vunpack.c.l.b16 %v784
    %v2983 = vunpack.c.l.b16 %v785
    %v2984 = vunpack.c.l.b16 %v786
    %v2985 = vunpack.c.l.b16 %v787
    %v2986 = vunpack.c.l.b16 %v788
    %v2987 = vunpack.c.l.b16 %v789
    %v2988 = vunpack.c.l.b16 %v790
    %v2989 = vunpack.c.l.b16 %v791
    %v2990 = vunpack.c.l.b16 %v792
    %v2991 = vunpack.c.l.b16 %v793
    %v2992 = vunpack.c.l.b16 %v794
    %v2993 = vunpack.c.l.b16 %v795
    %v2994 = vunpack.c.l.b16 %v796
    %v2995 = vunpack.c.l.b16 %v797
    %v2996 = vunpack.c.l.b16 %v798
    %v2997 = vunpack.c.l.b16 %v799
    %v2998 = vunpack.c.l.b16 %v800
    %v2999 = vunpack.c.l.b16 %v801
    %v3000 = vunpack.c.l.b16 %v802
    %v3001 = vunpack.c.l.b16 %v803
    %v3002 = vunpack.c.l.b16 %v804
    %v3003 = vunpack.c.l.b16 %v805
    %v3004 = vunpack.c.l.b16 %v806
    %v3005 = vunpack.c.l.b16 %v807
    %v3006 = vunpack.c.l.b16 %v808
    %v3007 = vunpack.c.l.b16 %v809
    %v3008 = vunpack.c.l.b16 %v810
    %v3009 = vunpack.c.l.b16 %v811
    %v3010 = vunpack.c.l.b16 %v812
    %v3011 = vunpack.c.l.b16 %v813
    %v3012 = vunpack.c.l.b16 %v814
    %v3013 = vunpack.c.l.b16 %v815
    %v3014 = vunpack.c.l.b16 %v816
    %v3015 = vunpack.c.l.b16 %v817
    %v3016 = vunpack.c.l.b16 %v818
    %v3017 = vunpack.c.l.b16 %v819
    %v3018 = vunpack.c.l.b16 %v820
    %v3019 = vunpack.c.l.b16 %v821
    %v3020 = vunpack.c.l.b16 %v822
    %v3021 = vunpack.c.l.b16 %v823
    %v3022 = vunpack.c.l.b16 %v824
    %v3023 = vunpack.c.l.b16 %v825
    %v3024 = vunpack.c.l.b16 %v826
    %v3025 = vunpack.c.l.b16 %v827
    %v3026 = vunpack.c.l.b16 %v828
    %v3027 = vunpack.c.l.b16 %v829
    %v3028 = vunpack.c.l.b16 %v830
    %v3029 = vunpack.c.l.b16 %v831
    %v3030 = vunpack.c.l.b16 %v832
    %v3031 = vunpack.c.l.b16 %v833
    %v3032 = vunpack.c.l.b16 %v834
    %v3033 = vunpack.c.l.b16 %v835
    %v3034 = vunpack.c.l.b16 %v836
    %v3035 = vunpack.c.l.b16 %v837
    %v3036 = vunpack.c.l.b16 %v838
    %v3037 = vunpack.c.l.b16 %v839
    %v3038 = vunpack.c.l.b16 %v840
    %v3039 = vunpack.c.l.b16 %v841
    %v3040 = vunpack.c.l.b16 %v842
    %v3041 = vunpack.c.l.b16 %v843
    %v3042 = vunpack.c.l.b16 %v844
    %v3043 = vunpack.c.l.b16 %v845
    %v3044 = vunpack.c.l.b16 %v846
    %v3045 = vunpack.c.l.b16 %v847
    %v3046 = vunpack.c.l.b16 %v848
    %v3047 = vunpack.c.l.b16 %v849
    %v3048 = vunpack.c.l.b16 %v850
    %v3049 = vunpack.c.l.b16 %v851
    %v3050 = vunpack.c.l.b16 %v852
    %v3051 = vunpack.c.l.b16 %v853
    %v3052 = vunpack.c.l.b16 %v854
    %v3053 = vunpack.c.l.b16 %v855
    %v3054 = vunpack.c.l.b16 %v856
    %v3055 = vunpack.c.l.b16 %v857
    %v3056 = vunpack.c.l.b16 %v858
    %v3057 = vunpack.c.l.b16 %v859
    %v3058 = vunpack.c.l.b16 %v860
    %v3059 = vunpack.c.l.b16 %v861
    %v3060 = vunpack.c.l.b16 %v862
    %v3061 = vunpack.c.l.b16 %v863
    %v3062 = vunpack.c.l.b16 %v864
    %v3063 = vunpack.c.l.b16 %v865
    %v3064 = vunpack.c.l.b16 %v866
    %v3065 = vunpack.c.l.b16 %v867
    %v3066 = vunpack.c.l.b16 %v868
    %v3067 = vunpack.c.l.b16 %v869
    %v3068 = vunpack.c.l.b16 %v870
    %v3069 = vunpack.c.l.b16 %v871
    %v3070 = vunpack.c.l.b16 %v872
    %v3071 = vunpack.c.l.b16 %v873
    %v3072 = vunpack.c.l.b16 %v874
    %v3073 = vunpack.c.l.b16 %v875
    %v3074 = vunpack.c.l.b16 %v876
    %v3075 = vunpack.c.l.b16 %v877
    %v3076 = vunpack.c.l.b16 %v878
    %v3077 = vunpack.c.l.b16 %v879
    %v3078 = vunpack.c.l.b16 %v880
    %v3079 = vunpack.c.l.b16 %v881
    %v3080 = vunpack.c.l.b16 %v882
    %v3081 = vunpack.c.l.b16 %v883
    %v3082 = vunpack.c.l.b16 %v884
    %v3083 = vunpack.c.l.b16 %v885
    %v3084 = vunpack.c.l.b16 %v886
    %v3085 = vunpack.c.l.b16 %v887
    %v3086 = vunpack.c.l.b16 %v888
    %v3087 = vunpack.c.l.b16 %v889
    %v3088 = vunpack.c.l.b16 %v890
    %v3089 = vunpack.c.l.b16 %v891
    %v3090 = vunpack.c.l.b16 %v892
    %v3091 = vunpack.c.l.b16 %v893
    %v3092 = vunpack.c.l.b16 %v894
    %v3093 = vunpack.c.l.b16 %v895
    %v3094 = vunpack.c.l.b16 %v896
    %v3095 = vunpack.c.l.b16 %v897
    %v3096 = vunpack.c.l.b16 %v898
    %v3097 = vunpack.c.l.b16 %v899
    %v3098 = vunpack.c.l.b16 %v900
    %v3099 = vunpack.c.l.b16 %v901
    %v3100 = vunpack.c.l.b16 %v902
    %v3101 = vunpack.c.l.b16 %v903
    %v3102 = vunpack.c.l.b16 %v904
    %v3103 = vunpack.c.l.b16 %v905
    %v3104 = vunpack.c.l.b16 %v906
    %v3105 = vunpack.c.l.b16 %v907
    %v3106 = vunpack.c.l.b16 %v908
    %v3107 = vunpack.c.l.b16 %v909
    %v3108 = vunpack.c.l.b16 %v910
    %v3109 = vunpack.c.l.b16 %v911
    %v3110 = vunpack.c.l.b16 %v912
    %v3111 = vunpack.c.l.b16 %v913
    %v3112 = vunpack.c.l.b16 %v914
    %v3113 = vunpack.c.l.b16 %v915
    %v3114 = vunpack.c.l.b16 %v916
    %v3115 = vunpack.c.l.b16 %v917
    %v3116 = vunpack.c.l.b16 %v918
    %v3117 = vunpack.c.l.b16 %v919
    %v3118 = vunpack.c.l.b16 %v920
    %v3119 = vunpack.c.l.b16 %v921
    %v3120 = vunpack.c.l.b16 %v922
    %v3121 = vunpack.c.l.b16 %v923
    %v3122 = vunpack.c.l.b16 %v924
    %v3123 = vunpack.c.l.b16 %v925
    %v3124 = vunpack.c.l.b16 %v926
    %v3125 = vunpack.c.l.b16 %v927
    %v3126 = vunpack.c.l.b16 %v928
    %v3127 = vunpack.c.l.b16 %v929
    %v3128 = vunpack.c.l.b16 %v930
    %v3129 = vunpack.c.l.b16 %v931
    %v3130 = vunpack.c.l.b16 %v932
    %v3131 = vunpack.c.l.b16 %v933
    %v3132 = vunpack.c.l.b16 %v934
    %v3133 = vunpack.c.l.b16 %v935
    %v3134 = vunpack.c.l.b16 %v936
    %v3135 = vunpack.c.l.b16 %v937
    %v3136 = vunpack.c.l.b16 %v938
    %v3137 = vunpack.c.l.b16 %v939
    %v3138 = vunpack.c.l.b16 %v940
    %v3139 = vunpack.c.l.b16 %v941
    %v3140 = vunpack.c.l.b16 %v942
    %v3141 = vunpack.c.l.b16 %v943
    %v3142 = vunpack.c.l.b16 %v944
    %v3143 = vunpack.c.l.b16 %v945
    %v3144 = vunpack.c.l.b16 %v946
    %v3145 = vunpack.c.l.b16 %v947
    %v3146 = vunpack.c.l.b16 %v948
    %v3147 = vunpack.c.l.b16 %v949
    %v3148 = vunpack.c.l.b16 %v950
    %v3149 = vunpack.c.l.b16 %v951
    %v3150 = vunpack.c.l.b16 %v952
    %v3151 = vunpack.c.l.b16 %v953
    %v3152 = vunpack.c.l.b16 %v954
    %v3153 = vunpack.c.l.b16 %v955
    %v3154 = vunpack.c.l.b16 %v956
    %v3155 = vunpack.c.l.b16 %v957
    %v3156 = vunpack.c.l.b16 %v958
    %v3157 = vunpack.c.l.b16 %v959
    %v3158 = vunpack.c.l.b16 %v960
    %v3159 = vunpack.c.l.b16 %v961
    %v3160 = vunpack.c.l.b16 %v962
    %v3161 = vunpack.c.l.b16 %v963
    %v3162 = vunpack.c.l.b16 %v964
    %v3163 = vunpack.c.l.b16 %v965
    %v3164 = vunpack.c.l.b16 %v966
    %v3165 = vunpack.c.l.b16 %v967
    %v3166 = vunpack.c.l.b16 %v968
    %v3167 = vunpack.c.l.b16 %v969
    %v3168 = vunpack.c.l.b16 %v970
    %v3169 = vunpack.c.l.b16 %v971
    %v3170 = vunpack.c.l.b16 %v972
    %v3171 = vunpack.c.l.b16 %v973
    %v3172 = vunpack.c.l.b16 %v974
    %v3173 = vunpack.c.l.b16 %v975
    %v3174 = vunpack.c.l.b16 %v976
    %v3175 = vunpack.c.l.b16 %v977
    %v3176 = vunpack.c.l.b16 %v978
    %v3177 = vunpack.c.l.b16 %v979
    %v3178 = vunpack.c.l.b16 %v980
    %v3179 = vunpack.c.l.b16 %v981
    %v3180 = vunpack.c.l.b16 %v982
    %v3181 = vunpack.c.l.b16 %v983
    %v3182 = vunpack.c.l.b16 %v984
    %v3183 = vunpack.c.l.b16 %v985
    %v3184 = vunpack.c.l.b16 %v986
    %v3185 = vunpack.c.l.b16 %v987
    %v3186 = vunpack.c.l.b16 %v988
    %v3187 = vunpack.c.l.b16 %v989
    %v3188 = vunpack.c.l.b16 %v990
    %v3189 = vunpack.c.l.b16 %v991
    %v3190 = vunpack.c.l.b16 %v992
    %v3191 = vunpack.c.l.b16 %v993
    %v3192 = vunpack.c.l.b16 %v994
    %v3193 = vunpack.c.l.b16 %v995
    %v3194 = vunpack.c.l.b16 %v996
    %v3195 = vunpack.c.l.b16 %v997
    %v3196 = vunpack.c.l.b16 %v998
    %v3197 = vunpack.c.l.b16 %v999
    %v3198 = vunpack.c.l.b16 %v1000
    %v3199 = vunpack.c.l.b16 %v1001
    %v3200 = vunpack.c.l.b16 %v1002
    %v3201 = vunpack.c.l.b16 %v1003
    %v3202 = vunpack.c.l.b16 %v1004
    %v3203 = vunpack.c.l.b16 %v1005
    %v3204 = vunpack.c.l.b16 %v1006
    %v3205 = vunpack.c.l.b16 %v1007
    %v3206 = vunpack.c.l.b16 %v1008
    %v3207 = vunpack.c.l.b16 %v1009
    %v3208 = vunpack.c.l.b16 %v1010
    %v3209 = vunpack.c.l.b16 %v1011
    %v3210 = vunpack.c.l.b16 %v1012
    %v3211 = vunpack.c.l.b16 %v1013
    %v3212 = vunpack.c.l.b16 %v1014
    %v3213 = vunpack.c.l.b16 %v1015
    %v3214 = vunpack.c.l.b16 %v1016
    %v3215 = vunpack.c.l.b16 %v1017
    %v3216 = vunpack.c.l.b16 %v1018
    %v3217 = vunpack.c.l.b16 %v1019
    %v3218 = vunpack.c.l.b16 %v1020
    %v3219 = vunpack.c.l.b16 %v1021
    %v3220 = vunpack.c.l.b16 %v1022
    %v3221 = vunpack.c.l.b16 %v1023
    %v3222 = vunpack.c.l.b16 %v1024
    %v3223 = vunpack.c.l.b16 %v1025
    %v3224 = vunpack.c.l.b16 %v1026
    %v3225 = vunpack.c.l.b16 %v1027
    %v3226 = vunpack.c.l.b16 %v1028
    %v3227 = vunpack.c.l.b16 %v1029
    %v3228 = vunpack.c.l.b16 %v1030
    %v3229 = vunpack.c.l.b16 %v1031
    %v3230 = vunpack.c.l.b16 %v1032
    %v3231 = vunpack.c.l.b16 %v1033
    %v3232 = vunpack.c.l.b16 %v1034
    %v3233 = vunpack.c.l.b16 %v1035
    %v3234 = vunpack.c.l.b16 %v1036
    %v3235 = vunpack.c.l.b16 %v1037
    %v3236 = vunpack.c.l.b16 %v1038
    %v3237 = vunpack.c.l.b16 %v1039
    %v3238 = vunpack.c.l.b16 %v1040
    %v3239 = vunpack.c.l.b16 %v1041
    %v3240 = vunpack.c.l.b16 %v1042
    %v3241 = vunpack.c.l.b16 %v1043
    %v3242 = vunpack.c.l.b16 %v1044
    %v3243 = vunpack.c.l.b16 %v1045
    %v3244 = vunpack.c.l.b16 %v1046
    %v3245 = vunpack.c.l.b16 %v1047
    %v3246 = vunpack.c.l.b16 %v1048
    %v3247 = vunpack.c.l.b16 %v1049
    %v3248 = vunpack.c.l.b16 %v1050
    %v3249 = vunpack.c.l.b16 %v1051
    %v3250 = vunpack.c.l.b16 %v1052
    %v3251 = vunpack.c.l.b16 %v1053
    %v3252 = vunpack.c.l.b16 %v1054
    %v3253 = vunpack.c.l.b16 %v1055
    %v3254 = vunpack.c.l.b16 %v1056
    %v3255 = vunpack.c.l.b16 %v1057
    %v3256 = vunpack.c.l.b16 %v1058
    %v3257 = vunpack.c.l.b16 %v1059
    %v3258 = vunpack.c.l.b16 %v1060
    %v3259 = vunpack.c.l.b16 %v1061
    %v3260 = vunpack.c.l.b16 %v1062
    %v3261 = vunpack.c.l.b16 %v1063
    %v3262 = vunpack.c.l.b16 %v1064
    %v3263 = vunpack.c.l.b16 %v1065
    %v3264 = vunpack.c.l.b16 %v1066
    %v3265 = vunpack.c.l.b16 %v1067
    %v3266 = vunpack.c.l.b16 %v1068
    %v3267 = vunpack.c.l.b16 %v1069
    %v3268 = vunpack.c.l.b16 %v1070
    %v3269 = vunpack.c.l.b16 %v1071
    %v3270 = vunpack.c.l.b16 %v1072
    %v3271 = vunpack.c.l.b16 %v1073
    %v3272 = vunpack.c.l.b16 %v1074
    %v3273 = vunpack.c.l.b16 %v1075
    %v3274 = vunpack.c.l.b16 %v1076
    %v3275 = vunpack.c.l.b16 %v1077
    %v3276 = vunpack.c.l.b16 %v1078
    %v3277 = vunpack.c.l.b16 %v1079
    %v3278 = vunpack.c.l.b16 %v1080
    %v3279 = vunpack.c.l.b16 %v1081
    %v3280 = vunpack.c.l.b16 %v1082
    %v3281 = vunpack.c.l.b16 %v1083
    %v3282 = vunpack.c.l.b16 %v1084
    %v3283 = vunpack.c.l.b16 %v1085
    %v3284 = vunpack.c.l.b16 %v1086
    %v3285 = vunpack.c.l.b16 %v1087
    %v3286 = vunpack.c.l.b16 %v1088
    %v3287 = vunpack.c.l.b16 %v1089
    %v3288 = vunpack.c.l.b16 %v1090
    %v3289 = vunpack.c.l.b16 %v1091
    %v3290 = vunpack.c.l.b16 %v1092
    %v3291 = vunpack.c.l.b16 %v1093
    %v3292 = vunpack.c.l.b16 %v1094
    %v3293 = vunpack.c.l.b16 %v1095
    %v3294 = vunpack.c.l.b16 %v1096
    %v3295 = vunpack.c.l.b16 %v1097
    %v3296 = vunpack.c.l.b16 %v1098
    %v3297 = vunpack.c.l.b16 %v1099
    %v3298 = vunpack.c.l.b16 %v1100
    %v3299 = vunpack.c.l.b16 %v1101
    %v3300 = vpack.c.b16 %v2311, %v2310
    %v3301 = vpack.c.b16 %v2313, %v2312
    %v3302 = vpack.c.b16 %v2315, %v2314
    %v3303 = vpack.c.b16 %v2317, %v2316
    %v3304 = vpack.c.b16 %v2319, %v2318
    %v3305 = vpack.c.b16 %v2321, %v2320
    %v3306 = vpack.c.b16 %v2323, %v2322
    %v3307 = vpack.c.b16 %v2325, %v2324
    %v3308 = vpack.c.b16 %v2327, %v2326
    %v3309 = vpack.c.b16 %v2329, %v2328
    %v3310 = vpack.c.b16 %v2331, %v2330
    %v3311 = vpack.c.b16 %v2333, %v2332
    %v3312 = vpack.c.b16 %v2335, %v2334
    %v3313 = vpack.c.b16 %v2337, %v2336
    %v3314 = vpack.c.b16 %v2339, %v2338
    %v3315 = vpack.c.b16 %v2341, %v2340
    %v3316 = vpack.c.b16 %v2343, %v2342
    %v3317 = vpack.c.b16 %v2345, %v2344
    %v3318 = vpack.c.b16 %v2347, %v2346
    %v3319 = vpack.c.b16 %v2349, %v2348
    %v3320 = vpack.c.b16 %v2351, %v2350
    %v3321 = vpack.c.b16 %v2353, %v2352
    %v3322 = vpack.c.b16 %v2355, %v2354
    %v3323 = vpack.c.b16 %v2357, %v2356
    %v3324 = vpack.c.b16 %v2359, %v2358
    %v3325 = vpack.c.b16 %v2361, %v2360
    %v3326 = vpack.c.b16 %v2363, %v2362
    %v3327 = vpack.c.b16 %v2365, %v2364
    %v3328 = vpack.c.b16 %v2367, %v2366
    %v3329 = vpack.c.b16 %v2369, %v2368
    %v3330 = vpack.c.b16 %v2371, %v2370
    %v3331 = vpack.c.b16 %v2373, %v2372
    %v3332 = vpack.c.b16 %v2375, %v2374
    %v3333 = vpack.c.b16 %v2377, %v2376
    %v3334 = vpack.c.b16 %v2379, %v2378
    %v3335 = vpack.c.b16 %v2381, %v2380
    %v3336 = vpack.c.b16 %v2383, %v2382
    %v3337 = vpack.c.b16 %v2385, %v2384
    %v3338 = vpack.c.b16 %v2387, %v2386
    %v3339 = vpack.c.b16 %v2389, %v2388
    %v3340 = vpack.c.b16 %v2391, %v2390
    %v3341 = vpack.c.b16 %v2393, %v2392
    %v3342 = vpack.c.b16 %v2395, %v2394
    %v3343 = vpack.c.b16 %v2397, %v2396
    %v3344 = vpack.c.b16 %v2399, %v2398
    %v3345 = vpack.c.b16 %v2401, %v2400
    %v3346 = vpack.c.b16 %v2403, %v2402
    %v3347 = vpack.c.b16 %v2405, %v2404
    %v3348 = vpack.c.b16 %v2407, %v2406
    %v3349 = vpack.c.b16 %v2409, %v2408
    %v3350 = vpack.c.b16 %v2411, %v2410
    %v3351 = vpack.c.b16 %v2413, %v2412
    %v3352 = vpack.c.b16 %v2415, %v2414
    %v3353 = vpack.c.b16 %v2417, %v2416
    %v3354 = vpack.c.b16 %v2419, %v2418
    %v3355 = vpack.c.b16 %v2421, %v2420
    %v3356 = vpack.c.b16 %v2423, %v2422
    %v3357 = vpack.c.b16 %v2425, %v2424
    %v3358 = vpack.c.b16 %v2427, %v2426
    %v3359 = vpack.c.b16 %v2429, %v2428
    %v3360 = vpack.c.b16 %v2431, %v2430
    %v3361 = vpack.c.b16 %v2433, %v2432
    %v3362 = vpack.c.b16 %v2435, %v2434
    %v3363 = vpack.c.b16 %v2437, %v2436
    %v3364 = vpack.c.b16 %v2439, %v2438
    %v3365 = vpack.c.b16 %v2441, %v2440
    %v3366 = vpack.c.b16 %v2443, %v2442
    %v3367 = vpack.c.b16 %v2445, %v2444
    %v3368 = vpack.c.b16 %v2447, %v2446
    %v3369 = vpack.c.b16 %v2449, %v2448
    %v3370 = vpack.c.b16 %v2451, %v2450
    %v3371 = vpack.c.b16 %v2453, %v2452
    %v3372 = vpack.c.b16 %v2455, %v2454
    %v3373 = vpack.c.b16 %v2457, %v2456
    %v3374 = vpack.c.b16 %v2459, %v2458
    %v3375 = vpack.c.b16 %v2461, %v2460
    %v3376 = vpack.c.b16 %v2463, %v2462
    %v3377 = vpack.c.b16 %v2465, %v2464
    %v3378 = vpack.c.b16 %v2467, %v2466
    %v3379 = vpack.c.b16 %v2469, %v2468
    %v3380 = vpack.c.b16 %v2471, %v2470
    %v3381 = vpack.c.b16 %v2473, %v2472
    %v3382 = vpack.c.b16 %v2475, %v2474
    %v3383 = vpack.c.b16 %v2477, %v2476
    %v3384 = vpack.c.b16 %v2479, %v2478
    %v3385 = vpack.c.b16 %v2481, %v2480
    %v3386 = vpack.c.b16 %v2483, %v2482
    %v3387 = vpack.c.b16 %v2485, %v2484
    %v3388 = vpack.c.b16 %v2487, %v2486
    %v3389 = vpack.c.b16 %v2489, %v2488
    %v3390 = vpack.c.b16 %v2491, %v2490
    %v3391 = vpack.c.b16 %v2493, %v2492
    %v3392 = vpack.c.b16 %v2495, %v2494
    %v3393 = vpack.c.b16 %v2497, %v2496
    %v3394 = vpack.c.b16 %v2499, %v2498
    %v3395 = vpack.c.b16 %v2501, %v2500
    %v3396 = vpack.c.b16 %v2503, %v2502
    %v3397 = vpack.c.b16 %v2505, %v2504
    %v3398 = vpack.c.b16 %v2507, %v2506
    %v3399 = vpack.c.b16 %v2509, %v2508
    %v3400 = vpack.c.b16 %v2511, %v2510
    %v3401 = vpack.c.b16 %v2513, %v2512
    %v3402 = vpack.c.b16 %v2515, %v2514
    %v3403 = vpack.c.b16 %v2517, %v2516
    %v3404 = vpack.c.b16 %v2519, %v2518
    %v3405 = vpack.c.b16 %v2521, %v2520
    %v3406 = vpack.c.b16 %v2523, %v2522
    %v3407 = vpack.c.b16 %v2525, %v2524
    %v3408 = vpack.c.b16 %v2527, %v2526
    %v3409 = vpack.c.b16 %v2529, %v2528
    %v3410 = vpack.c.b16 %v2531, %v2530
    %v3411 = vpack.c.b16 %v2533, %v2532
    %v3412 = vpack.c.b16 %v2535, %v2534
    %v3413 = vpack.c.b16 %v2537, %v2536
    %v3414 = vpack.c.b16 %v2539, %v2538
    %v3415 = vpack.c.b16 %v2541, %v2540
    %v3416 = vpack.c.b16 %v2543, %v2542
    %v3417 = vpack.c.b16 %v2545, %v2544
    %v3418 = vpack.c.b16 %v2547, %v2546
    %v3419 = vpack.c.b16 %v2549, %v2548
    %v3420 = vpack.c.b16 %v2551, %v2550
    %v3421 = vpack.c.b16 %v2553, %v2552
    %v3422 = vpack.c.b16 %v2555, %v2554
    %v3423 = vpack.c.b16 %v2557, %v2556
    %v3424 = vpack.c.b16 %v2559, %v2558
    %v3425 = vpack.c.b16 %v2561, %v2560
    %v3426 = vpack.c.b16 %v2563, %v2562
    %v3427 = vpack.c.b16 %v2565, %v2564
    %v3428 = vpack.c.b16 %v2567, %v2566
    %v3429 = vpack.c.b16 %v2569, %v2568
    %v3430 = vpack.c.b16 %v2571, %v2570
    %v3431 = vpack.c.b16 %v2573, %v2572
    %v3432 = vpack.c.b16 %v2575, %v2574
    %v3433 = vpack.c.b16 %v2577, %v2576
    %v3434 = vpack.c.b16 %v2579, %v2578
    %v3435 = vpack.c.b16 %v2581, %v2580
    %v3436 = vpack.c.b16 %v2583, %v2582
    %v3437 = vpack.c.b16 %v2585, %v2584
    %v3438 = vpack.c.b16 %v2587, %v2586
    %v3439 = vpack.c.b16 %v2589, %v2588
    %v3440 = vpack.c.b16 %v2591, %v2590
    %v3441 = vpack.c.b16 %v2593, %v2592
    %v3442 = vpack.c.b16 %v2595, %v2594
    %v3443 = vpack.c.b16 %v2597, %v2596
    %v3444 = vpack.c.b16 %v2599, %v2598
    %v3445 = vpack.c.b16 %v2601, %v2600
    %v3446 = vpack.c.b16 %v2603, %v2602
    %v3447 = vpack.c.b16 %v2605, %v2604
    %v3448 = vpack.c.b16 %v2607, %v2606
    %v3449 = vpack.c.b16 %v2609, %v2608
    %v3450 = vpack.c.b16 %v2611, %v2610
    %v3451 = vpack.c.b16 %v2613, %v2612
    %v3452 = vpack.c.b16 %v2615, %v2614
    %v3453 = vpack.c.b16 %v2617, %v2616
    %v3454 = vpack.c.b16 %v2619, %v2618
    %v3455 = vpack.c.b16 %v2621, %v2620
    %v3456 = vpack.c.b16 %v2623, %v2622
    %v3457 = vpack.c.b16 %v2625, %v2624
    %v3458 = vpack.c.b16 %v2627, %v2626
    %v3459 = vpack.c.b16 %v2629, %v2628
    %v3460 = vpack.c.b16 %v2631, %v2630
    %v3461 = vpack.c.b16 %v2633, %v2632
    %v3462 = vpack.c.b16 %v2635, %v2634
    %v3463 = vpack.c.b16 %v2637, %v2636
    %v3464 = vpack.c.b16 %v2639, %v2638
    %v3465 = vpack.c.b16 %v2641, %v2640
    %v3466 = vpack.c.b16 %v2643, %v2642
    %v3467 = vpack.c.b16 %v2645, %v2644
    %v3468 = vpack.c.b16 %v2647, %v2646
    %v3469 = vpack.c.b16 %v2649, %v2648
    %v3470 = vpack.c.b16 %v2651, %v2650
    %v3471 = vpack.c.b16 %v2653, %v2652
    %v3472 = vpack.c.b16 %v2655, %v2654
    %v3473 = vpack.c.b16 %v2657, %v2656
    %v3474 = vpack.c.b16 %v2659, %v2658
    %v3475 = vpack.c.b16 %v2661, %v2660
    %v3476 = vpack.c.b16 %v2663, %v2662
    %v3477 = vpack.c.b16 %v2665, %v2664
    %v3478 = vpack.c.b16 %v2667, %v2666
    %v3479 = vpack.c.b16 %v2669, %v2668
    %v3480 = vpack.c.b16 %v2671, %v2670
    %v3481 = vpack.c.b16 %v2673, %v2672
    %v3482 = vpack.c.b16 %v2675, %v2674
    %v3483 = vpack.c.b16 %v2677, %v2676
    %v3484 = vpack.c.b16 %v2679, %v2678
    %v3485 = vpack.c.b16 %v2681, %v2680
    %v3486 = vpack.c.b16 %v2683, %v2682
    %v3487 = vpack.c.b16 %v2685, %v2684
    %v3488 = vpack.c.b16 %v2687, %v2686
    %v3489 = vpack.c.b16 %v2689, %v2688
    %v3490 = vpack.c.b16 %v2691, %v2690
    %v3491 = vpack.c.b16 %v2693, %v2692
    %v3492 = vpack.c.b16 %v2695, %v2694
    %v3493 = vpack.c.b16 %v2697, %v2696
    %v3494 = vpack.c.b16 %v2699, %v2698
    %v3495 = vpack.c.b16 %v2701, %v2700
    %v3496 = vpack.c.b16 %v2703, %v2702
    %v3497 = vpack.c.b16 %v2705, %v2704
    %v3498 = vpack.c.b16 %v2707, %v2706
    %v3499 = vpack.c.b16 %v2709, %v2708
    %v3500 = vpack.c.b16 %v2711, %v2710
    %v3501 = vpack.c.b16 %v2713, %v2712
    %v3502 = vpack.c.b16 %v2715, %v2714
    %v3503 = vpack.c.b16 %v2717, %v2716
    %v3504 = vpack.c.b16 %v2719, %v2718
    %v3505 = vpack.c.b16 %v2721, %v2720
    %v3506 = vpack.c.b16 %v2723, %v2722
    %v3507 = vpack.c.b16 %v2725, %v2724
    %v3508 = vpack.c.b16 %v2727, %v2726
    %v3509 = vpack.c.b16 %v2729, %v2728
    %v3510 = vpack.c.b16 %v2731, %v2730
    %v3511 = vpack.c.b16 %v2733, %v2732
    %v3512 = vpack.c.b16 %v2735, %v2734
    %v3513 = vpack.c.b16 %v2737, %v2736
    %v3514 = vpack.c.b16 %v2739, %v2738
    %v3515 = vpack.c.b16 %v2741, %v2740
    %v3516 = vpack.c.b16 %v2743, %v2742
    %v3517 = vpack.c.b16 %v2745, %v2744
    %v3518 = vpack.c.b16 %v2747, %v2746
    %v3519 = vpack.c.b16 %v2749, %v2748
    %v3520 = vpack.c.b16 %v2751, %v2750
    %v3521 = vpack.c.b16 %v2753, %v2752
    %v3522 = vpack.c.b16 %v2755, %v2754
    %v3523 = vpack.c.b16 %v2757, %v2756
    %v3524 = vpack.c.b16 %v2759, %v2758
    %v3525 = vpack.c.b16 %v2761, %v2760
    %v3526 = vpack.c.b16 %v2763, %v2762
    %v3527 = vpack.c.b16 %v2765, %v2764
    %v3528 = vpack.c.b16 %v2767, %v2766
    %v3529 = vpack.c.b16 %v2769, %v2768
    %v3530 = vpack.c.b16 %v2771, %v2770
    %v3531 = vpack.c.b16 %v2773, %v2772
    %v3532 = vpack.c.b16 %v2775, %v2774
    %v3533 = vpack.c.b16 %v2777, %v2776
    %v3534 = vpack.c.b16 %v2779, %v2778
    %v3535 = vpack.c.b16 %v2781, %v2780
    %v3536 = vpack.c.b16 %v2783, %v2782
    %v3537 = vpack.c.b16 %v2785, %v2784
    %v3538 = vpack.c.b16 %v2787, %v2786
    %v3539 = vpack.c.b16 %v2789, %v2788
    %v3540 = vpack.c.b16 %v2791, %v2790
    %v3541 = vpack.c.b16 %v2793, %v2792
    %v3542 = vpack.c.b16 %v2795, %v2794
    %v3543 = vpack.c.b16 %v2797, %v2796
    %v3544 = vpack.c.b16 %v2799, %v2798
    %v3545 = vpack.c.b16 %v2801, %v2800
    %v3546 = vpack.c.b16 %v2803, %v2802
    %v3547 = vpack.c.b16 %v2805, %v2804
    %v3548 = vpack.c.b16 %v2807, %v2806
    %v3549 = vpack.c.b16 %v2809, %v2808
    %v3550 = vpack.c.b16 %v2811, %v2810
    %v3551 = vpack.c.b16 %v2813, %v2812
    %v3552 = vpack.c.b16 %v2815, %v2814
    %v3553 = vpack.c.b16 %v2817, %v2816
    %v3554 = vpack.c.b16 %v2819, %v2818
    %v3555 = vpack.c.b16 %v2821, %v2820
    %v3556 = vpack.c.b16 %v2823, %v2822
    %v3557 = vpack.c.b16 %v2825, %v2824
    %v3558 = vpack.c.b16 %v2827, %v2826
    %v3559 = vpack.c.b16 %v2829, %v2828
    %v3560 = vpack.c.b16 %v2831, %v2830
    %v3561 = vpack.c.b16 %v2833, %v2832
    %v3562 = vpack.c.b16 %v2835, %v2834
    %v3563 = vpack.c.b16 %v2837, %v2836
    %v3564 = vpack.c.b16 %v2839, %v2838
    %v3565 = vpack.c.b16 %v2841, %v2840
    %v3566 = vpack.c.b16 %v2843, %v2842
    %v3567 = vpack.c.b16 %v2845, %v2844
    %v3568 = vpack.c.b16 %v2847, %v2846
    %v3569 = vpack.c.b16 %v2849, %v2848
    %v3570 = vpack.c.b16 %v2851, %v2850
    %v3571 = vpack.c.b16 %v2853, %v2852
    %v3572 = vpack.c.b16 %v2855, %v2854
    %v3573 = vpack.c.b16 %v2857, %v2856
    %v3574 = vpack.c.b16 %v2859, %v2858
    %v3575 = vpack.c.b16 %v2861, %v2860
    %v3576 = vpack.c.b16 %v2863, %v2862
    %v3577 = vpack.c.b16 %v2865, %v2864
    %v3578 = vpack.c.b16 %v2867, %v2866
    %v3579 = vpack.c.b16 %v2869, %v2868
    %v3580 = vpack.c.b16 %v2871, %v2870
    %v3581 = vpack.c.b16 %v2873, %v2872
    %v3582 = vpack.c.b16 %v2875, %v2874
    %v3583 = vpack.c.b16 %v2877, %v2876
    %v3584 = vpack.c.b16 %v2879, %v2878
    %v3585 = vpack.c.b16 %v2881, %v2880
    %v3586 = vpack.c.b16 %v2883, %v2882
    %v3587 = vpack.c.b16 %v2885, %v2884
    %v3588 = vpack.c.b16 %v2887, %v2886
    %v3589 = vpack.c.b16 %v2889, %v2888
    %v3590 = vpack.c.b16 %v2891, %v2890
    %v3591 = vpack.c.b16 %v2893, %v2892
    %v3592 = vpack.c.b16 %v2895, %v2894
    %v3593 = vpack.c.b16 %v2897, %v2896
    %v3594 = vpack.c.b16 %v2899, %v2898
    %v3595 = vpack.c.b16 %v2901, %v2900
    %v3596 = vpack.c.b16 %v2903, %v2902
    %v3597 = vpack.c.b16 %v2905, %v2904
    %v3598 = vpack.c.b16 %v2907, %v2906
    %v3599 = vpack.c.b16 %v2909, %v2908
    %v3600 = vpack.c.b16 %v2911, %v2910
    %v3601 = vpack.c.b16 %v2913, %v2912
    %v3602 = vpack.c.b16 %v2915, %v2914
    %v3603 = vpack.c.b16 %v2917, %v2916
    %v3604 = vpack.c.b16 %v2919, %v2918
    %v3605 = vpack.c.b16 %v2921, %v2920
    %v3606 = vpack.c.b16 %v2923, %v2922
    %v3607 = vpack.c.b16 %v2925, %v2924
    %v3608 = vpack.c.b16 %v2927, %v2926
    %v3609 = vpack.c.b16 %v2929, %v2928
    %v3610 = vpack.c.b16 %v2931, %v2930
    %v3611 = vpack.c.b16 %v2933, %v2932
    %v3612 = vpack.c.b16 %v2935, %v2934
    %v3613 = vpack.c.b16 %v2937, %v2936
    %v3614 = vpack.c.b16 %v2939, %v2938
    %v3615 = vpack.c.b16 %v2941, %v2940
    %v3616 = vpack.c.b16 %v2943, %v2942
    %v3617 = vpack.c.b16 %v2945, %v2944
    %v3618 = vpack.c.b16 %v2947, %v2946
    %v3619 = vpack.c.b16 %v2949, %v2948
    %v3620 = vpack.c.b16 %v2951, %v2950
    %v3621 = vpack.c.b16 %v2953, %v2952
    %v3622 = vpack.c.b16 %v2955, %v2954
    %v3623 = vpack.c.b16 %v2957, %v2956
    %v3624 = vpack.c.b16 %v2959, %v2958
    %v3625 = vpack.c.b16 %v2961, %v2960
    %v3626 = vpack.c.b16 %v2963, %v2962
    %v3627 = vpack.c.b16 %v2965, %v2964
    %v3628 = vpack.c.b16 %v2967, %v2966
    %v3629 = vpack.c.b16 %v2969, %v2968
    %v3630 = vpack.c.b16 %v2971, %v2970
    %v3631 = vpack.c.b16 %v2973, %v2972
    %v3632 = vpack.c.b16 %v2975, %v2974
    %v3633 = vpack.c.b16 %v2977, %v2976
    %v3634 = vpack.c.b16 %v2979, %v2978
    %v3635 = vpack.c.b16 %v2981, %v2980
    %v3636 = vpack.c.b16 %v2983, %v2982
    %v3637 = vpack.c.b16 %v2985, %v2984
    %v3638 = vpack.c.b16 %v2987, %v2986
    %v3639 = vpack.c.b16 %v2989, %v2988
    %v3640 = vpack.c.b16 %v2991, %v2990
    %v3641 = vpack.c.b16 %v2993, %v2992
    %v3642 = vpack.c.b16 %v2995, %v2994
    %v3643 = vpack.c.b16 %v2997, %v2996
    %v3644 = vpack.c.b16 %v2999, %v2998
    %v3645 = vpack.c.b16 %v3001, %v3000
    %v3646 = vpack.c.b16 %v3003, %v3002
    %v3647 = vpack.c.b16 %v3005, %v3004
    %v3648 = vpack.c.b16 %v3007, %v3006
    %v3649 = vpack.c.b16 %v3009, %v3008
    %v3650 = vpack.c.b16 %v3011, %v3010
    %v3651 = vpack.c.b16 %v3013, %v3012
    %v3652 = vpack.c.b16 %v3015, %v3014
    %v3653 = vpack.c.b16 %v3017, %v3016
    %v3654 = vpack.c.b16 %v3019, %v3018
    %v3655 = vpack.c.b16 %v3021, %v3020
    %v3656 = vpack.c.b16 %v3023, %v3022
    %v3657 = vpack.c.b16 %v3025, %v3024
    %v3658 = vpack.c.b16 %v3027, %v3026
    %v3659 = vpack.c.b16 %v3029, %v3028
    %v3660 = vpack.c.b16 %v3031, %v3030
    %v3661 = vpack.c.b16 %v3033, %v3032
    %v3662 = vpack.c.b16 %v3035, %v3034
    %v3663 = vpack.c.b16 %v3037, %v3036
    %v3664 = vpack.c.b16 %v3039, %v3038
    %v3665 = vpack.c.b16 %v3041, %v3040
    %v3666 = vpack.c.b16 %v3043, %v3042
    %v3667 = vpack.c.b16 %v3045, %v3044
    %v3668 = vpack.c.b16 %v3047, %v3046
    %v3669 = vpack.c.b16 %v3049, %v3048
    %v3670 = vpack.c.b16 %v3051, %v3050
    %v3671 = vpack.c.b16 %v3053, %v3052
    %v3672 = vpack.c.b16 %v3055, %v3054
    %v3673 = vpack.c.b16 %v3057, %v3056
    %v3674 = vpack.c.b16 %v3059, %v3058
    %v3675 = vpack.c.b16 %v3061, %v3060
    %v3676 = vpack.c.b16 %v3063, %v3062
    %v3677 = vpack.c.b16 %v3065, %v3064
    %v3678 = vpack.c.b16 %v3067, %v3066
    %v3679 = vpack.c.b16 %v3069, %v3068
    %v3680 = vpack.c.b16 %v3071, %v3070
    %v3681 = vpack.c.b16 %v3073, %v3072
    %v3682 = vpack.c.b16 %v3075, %v3074
    %v3683 = vpack.c.b16 %v3077, %v3076
    %v3684 = vpack.c.b16 %v3079, %v3078
    %v3685 = vpack.c.b16 %v3081, %v3080
    %v3686 = vpack.c.b16 %v3083, %v3082
    %v3687 = vpack.c.b16 %v3085, %v3084
    %v3688 = vpack.c.b16 %v3087, %v3086
    %v3689 = vpack.c.b16 %v3089, %v3088
    %v3690 = vpack.c.b16 %v3091, %v3090
    %v3691 = vpack.c.b16 %v3093, %v3092
    %v3692 = vpack.c.b16 %v3095, %v3094
    %v3693 = vpack.c.b16 %v3097, %v3096
    %v3694 = vpack.c.b16 %v3099, %v3098
    %v3695 = vpack.c.b16 %v3101, %v3100
    %v3696 = vpack.c.b16 %v3103, %v3102
    %v3697 = vpack.c.b16 %v3105, %v3104
    %v3698 = vpack.c.b16 %v3107, %v3106
    %v3699 = vpack.c.b16 %v3109, %v3108
    %v3700 = vpack.c.b16 %v3111, %v3110
    %v3701 = vpack.c.b16 %v3113, %v3112
    %v3702 = vpack.c.b16 %v3115, %v3114
    %v3703 = vpack.c.b16 %v3117, %v3116
    %v3704 = vpack.c.b16 %v3119, %v3118
    %v3705 = vpack.c.b16 %v3121, %v3120
    %v3706 = vpack.c.b16 %v3123, %v3122
    %v3707 = vpack.c.b16 %v3125, %v3124
    %v3708 = vpack.c.b16 %v3127, %v3126
    %v3709 = vpack.c.b16 %v3129, %v3128
    %v3710 = vpack.c.b16 %v3131, %v3130
    %v3711 = vpack.c.b16 %v3133, %v3132
    %v3712 = vpack.c.b16 %v3135, %v3134
    %v3713 = vpack.c.b16 %v3137, %v3136
    %v3714 = vpack.c.b16 %v3139, %v3138
    %v3715 = vpack.c.b16 %v3141, %v3140
    %v3716 = vpack.c.b16 %v3143, %v3142
    %v3717 = vpack.c.b16 %v3145, %v3144
    %v3718 = vpack.c.b16 %v3147, %v3146
    %v3719 = vpack.c.b16 %v3149, %v3148
    %v3720 = vpack.c.b16 %v3151, %v3150
    %v3721 = vpack.c.b16 %v3153, %v3152
    %v3722 = vpack.c.b16 %v3155, %v3154
    %v3723 = vpack.c.b16 %v3157, %v3156
    %v3724 = vpack.c.b16 %v3159, %v3158
    %v3725 = vpack.c.b16 %v3161, %v3160
    %v3726 = vpack.c.b16 %v3163, %v3162
    %v3727 = vpack.c.b16 %v3165, %v3164
    %v3728 = vpack.c.b16 %v3167, %v3166
    %v3729 = vpack.c.b16 %v3169, %v3168
    %v3730 = vpack.c.b16 %v3171, %v3170
    %v3731 = vpack.c.b16 %v3173, %v3172
    %v3732 = vpack.c.b16 %v3175, %v3174
    %v3733 = vpack.c.b16 %v3177, %v3176
    %v3734 = vpack.c.b16 %v3179, %v3178
    %v3735 = vpack.c.b16 %v3181, %v3180
    %v3736 = vpack.c.b16 %v3183, %v3182
    %v3737 = vpack.c.b16 %v3185, %v3184
    %v3738 = vpack.c.b16 %v3187, %v3186
    %v3739 = vpack.c.b16 %v3189, %v3188
    %v3740 = vpack.c.b16 %v3191, %v3190
    %v3741 = vpack.c.b16 %v3193, %v3192
    %v3742 = vpack.c.b16 %v3195, %v3194
    %v3743 = vpack.c.b16 %v3197, %v3196
    %v3744 = vpack.c.b16 %v3199, %v3198
    %v3745 = vpack.c.b16 %v3201, %v3200
    %v3746 = vpack.c.b16 %v3203, %v3202
    %v3747 = vpack.c.b16 %v3205, %v3204
    %v3748 = vpack.c.b16 %v3207, %v3206
    %v3749 = vpack.c.b16 %v3209, %v3208
    %v3750 = vpack.c.b16 %v3211, %v3210
    %v3751 = vpack.c.b16 %v3213, %v3212
    %v3752 = vpack.c.b16 %v3215, %v3214
    %v3753 = vpack.c.b16 %v3217, %v3216
    %v3754 = vpack.c.b16 %v3219, %v3218
    %v3755 = vpack.c.b16 %v3221, %v3220
    %v3756 = vpack.c.b16 %v3223, %v3222
    %v3757 = vpack.c.b16 %v3225, %v3224
    %v3758 = vpack.c.b16 %v3227, %v3226
    %v3759 = vpack.c.b16 %v3229, %v3228
    %v3760 = vpack.c.b16 %v3231, %v3230
    %v3761 = vpack.c.b16 %v3233, %v3232
    %v3762 = vpack.c.b16 %v3235, %v3234
    %v3763 = vpack.c.b16 %v3237, %v3236
    %v3764 = vpack.c.b16 %v3239, %v3238
    %v3765 = vpack.c.b16 %v3241, %v3240
    %v3766 = vpack.c.b16 %v3243, %v3242
    %v3767 = vpack.c.b16 %v3245, %v3244
    %v3768 = vpack.c.b16 %v3247, %v3246
    %v3769 = vpack.c.b16 %v3249, %v3248
    %v3770 = vpack.c.b16 %v3251, %v3250
    %v3771 = vpack.c.b16 %v3253, %v3252
    %v3772 = vpack.c.b16 %v3255, %v3254
    %v3773 = vpack.c.b16 %v3257, %v3256
    %v3774 = vpack.c.b16 %v3259, %v3258
    %v3775 = vpack.c.b16 %v3261, %v3260
    %v3776 = vpack.c.b16 %v3263, %v3262
    %v3777 = vpack.c.b16 %v3265, %v3264
    %v3778 = vpack.c.b16 %v3267, %v3266
    %v3779 = vpack.c.b16 %v3269, %v3268
    %v3780 = vpack.c.b16 %v3271, %v3270
    %v3781 = vpack.c.b16 %v3273, %v3272
    %v3782 = vpack.c.b16 %v3275, %v3274
    %v3783 = vpack.c.b16 %v3277, %v3276
    %v3784 = vpack.c.b16 %v3279, %v3278
    %v3785 = vpack.c.b16 %v3281, %v3280
    %v3786 = vpack.c.b16 %v3283, %v3282
    %v3787 = vpack.c.b16 %v3285, %v3284
    %v3788 = vpack.c.b16 %v3287, %v3286
    %v3789 = vpack.c.b16 %v3289, %v3288
    %v3790 = vpack.c.b16 %v3291, %v3290
    %v3791 = vpack.c.b16 %v3293, %v3292
    %v3792 = vpack.c.b16 %v3295, %v3294
    %v3793 = vpack.c.b16 %v3297, %v3296
    %v3794 = vpack.c.b16 %v3299, %v3298
    %vm4290 = vcmask 916480
    %v4292 = vsel %vm4290, %v1258, 0
    %4294 = vmatpush.bf16.msra.mxu0 %v3307
    %4295 = vmatpush.bf16.msra.mxu0 %v3306
    %4296 = vmatpush.bf16.msra.mxu0 %v3305
    %4297 = vmatpush.bf16.msra.mxu0 %v3304
    %4298 = vmatpush.bf16.msra.mxu0 %v3303
    %4299 = vmatpush.bf16.msra.mxu0 %v3302
    %4300 = vmatpush.bf16.msra.mxu0 %v3301
    %4301 = vmatpush.bf16.msra.mxu0 %v3300
    %4302 = vmatmul.bf16.gmra.mxu0 %v1197
    %v4303 = vpop.f32.mrf.mxu0
    %v4304 = vadd.f32 %v1103, %v4303
    %v4305 = vpop.f32.mrf.mxu0
    %4306 = vdwg.mxu0
    %4307 = vmatpush.bf16.msra.mxu0 %v3315
    %4308 = vmatpush.bf16.msra.mxu0 %v3314
    %4309 = vmatpush.bf16.msra.mxu0 %v3313
    %4310 = vmatpush.bf16.msra.mxu0 %v3312
    %4311 = vmatpush.bf16.msra.mxu0 %v3311
    %4312 = vmatpush.bf16.msra.mxu0 %v3310
    %4313 = vmatpush.bf16.msra.mxu0 %v3309
    %4314 = vmatpush.bf16.msra.mxu0 %v3308
    %4315 = vmatmul.bf16.gmra.mxu0 %v1198
    %v4316 = vpop.f32.mrf.mxu0
    %v4317 = vadd.f32 %v4304, %v4316
    %v4318 = vpop.f32.mrf.mxu0
    %4319 = vdwg.mxu0
    %4320 = vmatpush.bf16.msra.mxu0 %v3323
    %4321 = vmatpush.bf16.msra.mxu0 %v3322
    %4322 = vmatpush.bf16.msra.mxu0 %v3321
    %4323 = vmatpush.bf16.msra.mxu0 %v3320
    %4324 = vmatpush.bf16.msra.mxu0 %v3319
    %4325 = vmatpush.bf16.msra.mxu0 %v3318
    %4326 = vmatpush.bf16.msra.mxu0 %v3317
    %4327 = vmatpush.bf16.msra.mxu0 %v3316
    %4328 = vmatmul.bf16.gmra.mxu0 %v1199
    %v4329 = vpop.f32.mrf.mxu0
    %v4330 = vadd.f32 %v4317, %v4329
    %v4331 = vpop.f32.mrf.mxu0
    %4332 = vdwg.mxu0
    %4333 = vmatpush.bf16.msra.mxu0 %v3331
    %4334 = vmatpush.bf16.msra.mxu0 %v3330
    %4335 = vmatpush.bf16.msra.mxu0 %v3329
    %4336 = vmatpush.bf16.msra.mxu0 %v3328
    %4337 = vmatpush.bf16.msra.mxu0 %v3327
    %4338 = vmatpush.bf16.msra.mxu0 %v3326
    %4339 = vmatpush.bf16.msra.mxu0 %v3325
    %4340 = vmatpush.bf16.msra.mxu0 %v3324
    %4341 = vmatmul.bf16.gmra.mxu0 %v1200
    %v4342 = vpop.f32.mrf.mxu0
    %v4343 = vadd.f32 %v4330, %v4342
    %v4344 = vpop.f32.mrf.mxu0
    %4345 = vdwg.mxu0
    %4346 = vmatpush.bf16.msra.mxu0 %v3339
    %4347 = vmatpush.bf16.msra.mxu0 %v3338
    %4348 = vmatpush.bf16.msra.mxu0 %v3337
    %4349 = vmatpush.bf16.msra.mxu0 %v3336
    %4350 = vmatpush.bf16.msra.mxu0 %v3335
    %4351 = vmatpush.bf16.msra.mxu0 %v3334
    %4352 = vmatpush.bf16.msra.mxu0 %v3333
    %4353 = vmatpush.bf16.msra.mxu0 %v3332
    %4354 = vmatmul.bf16.gmra.mxu0 %v1201
    %v4355 = vpop.f32.mrf.mxu0
    %v4356 = vadd.f32 %v4343, %v4355
    %v4357 = vpop.f32.mrf.mxu0
    %4358 = vdwg.mxu0
    %4359 = vmatpush.bf16.msra.mxu0 %v3347
    %4360 = vmatpush.bf16.msra.mxu0 %v3346
    %4361 = vmatpush.bf16.msra.mxu0 %v3345
    %4362 = vmatpush.bf16.msra.mxu0 %v3344
    %4363 = vmatpush.bf16.msra.mxu0 %v3343
    %4364 = vmatpush.bf16.msra.mxu0 %v3342
    %4365 = vmatpush.bf16.msra.mxu0 %v3341
    %4366 = vmatpush.bf16.msra.mxu0 %v3340
    %4367 = vmatmul.bf16.gmra.mxu0 %v1202
    %v4368 = vpop.f32.mrf.mxu0
    %v4369 = vadd.f32 %v4356, %v4368
    %v4370 = vpop.f32.mrf.mxu0
    %4371 = vdwg.mxu0
    %4372 = vmatpush.bf16.msra.mxu0 %v3355
    %4373 = vmatpush.bf16.msra.mxu0 %v3354
    %4374 = vmatpush.bf16.msra.mxu0 %v3353
    %4375 = vmatpush.bf16.msra.mxu0 %v3352
    %4376 = vmatpush.bf16.msra.mxu0 %v3351
    %4377 = vmatpush.bf16.msra.mxu0 %v3350
    %4378 = vmatpush.bf16.msra.mxu0 %v3349
    %4379 = vmatpush.bf16.msra.mxu0 %v3348
    %4380 = vmatmul.bf16.gmra.mxu0 %v1203
    %v4381 = vpop.f32.mrf.mxu0
    %v4382 = vadd.f32 %v4369, %v4381
    %v4383 = vpop.f32.mrf.mxu0
    %4384 = vdwg.mxu0
    %4385 = vmatpush.bf16.msra.mxu0 %v3363
    %4386 = vmatpush.bf16.msra.mxu0 %v3362
    %4387 = vmatpush.bf16.msra.mxu0 %v3361
    %4388 = vmatpush.bf16.msra.mxu0 %v3360
    %4389 = vmatpush.bf16.msra.mxu0 %v3359
    %4390 = vmatpush.bf16.msra.mxu0 %v3358
    %4391 = vmatpush.bf16.msra.mxu0 %v3357
    %4392 = vmatpush.bf16.msra.mxu0 %v3356
    %4393 = vmatmul.bf16.gmra.mxu0 %v1204
    %v4394 = vpop.f32.mrf.mxu0
    %v4395 = vadd.f32 %v4382, %v4394
    %v4396 = vpop.f32.mrf.mxu0
    %4397 = vdwg.mxu0
    %4398 = vmatpush.bf16.msra.mxu0 %v3371
    %4399 = vmatpush.bf16.msra.mxu0 %v3370
    %4400 = vmatpush.bf16.msra.mxu0 %v3369
    %4401 = vmatpush.bf16.msra.mxu0 %v3368
    %4402 = vmatpush.bf16.msra.mxu0 %v3367
    %4403 = vmatpush.bf16.msra.mxu0 %v3366
    %4404 = vmatpush.bf16.msra.mxu0 %v3365
    %4405 = vmatpush.bf16.msra.mxu0 %v3364
    %4406 = vmatmul.bf16.gmra.mxu0 %v1205
    %v4407 = vpop.f32.mrf.mxu0
    %v4408 = vadd.f32 %v4395, %v4407
    %v4409 = vpop.f32.mrf.mxu0
    %4410 = vdwg.mxu0
    %4411 = vmatpush.bf16.msra.mxu0 %v3379
    %4412 = vmatpush.bf16.msra.mxu0 %v3378
    %4413 = vmatpush.bf16.msra.mxu0 %v3377
    %4414 = vmatpush.bf16.msra.mxu0 %v3376
    %4415 = vmatpush.bf16.msra.mxu0 %v3375
    %4416 = vmatpush.bf16.msra.mxu0 %v3374
    %4417 = vmatpush.bf16.msra.mxu0 %v3373
    %4418 = vmatpush.bf16.msra.mxu0 %v3372
    %4419 = vmatmul.bf16.gmra.mxu0 %v1206
    %v4420 = vpop.f32.mrf.mxu0
    %v4421 = vadd.f32 %v4408, %v4420
    %v4422 = vpop.f32.mrf.mxu0
    %4423 = vdwg.mxu0
    %4424 = vmatpush.bf16.msra.mxu0 %v3387
    %4425 = vmatpush.bf16.msra.mxu0 %v3386
    %4426 = vmatpush.bf16.msra.mxu0 %v3385
    %4427 = vmatpush.bf16.msra.mxu0 %v3384
    %4428 = vmatpush.bf16.msra.mxu0 %v3383
    %4429 = vmatpush.bf16.msra.mxu0 %v3382
    %4430 = vmatpush.bf16.msra.mxu0 %v3381
    %4431 = vmatpush.bf16.msra.mxu0 %v3380
    %4432 = vmatmul.bf16.gmra.mxu0 %v1207
    %v4433 = vpop.f32.mrf.mxu0
    %v4434 = vadd.f32 %v4421, %v4433
    %v4435 = vpop.f32.mrf.mxu0
    %4436 = vdwg.mxu0
    %4437 = vmatpush.bf16.msra.mxu0 %v3395
    %4438 = vmatpush.bf16.msra.mxu0 %v3394
    %4439 = vmatpush.bf16.msra.mxu0 %v3393
    %4440 = vmatpush.bf16.msra.mxu0 %v3392
    %4441 = vmatpush.bf16.msra.mxu0 %v3391
    %4442 = vmatpush.bf16.msra.mxu0 %v3390
    %4443 = vmatpush.bf16.msra.mxu0 %v3389
    %4444 = vmatpush.bf16.msra.mxu0 %v3388
    %4445 = vmatmul.bf16.gmra.mxu0 %v1208
    %v4446 = vpop.f32.mrf.mxu0
    %v4447 = vadd.f32 %v4434, %v4446
    %v4448 = vpop.f32.mrf.mxu0
    %4449 = vdwg.mxu0
    %4450 = vmatpush.bf16.msra.mxu0 %v3403
    %4451 = vmatpush.bf16.msra.mxu0 %v3402
    %4452 = vmatpush.bf16.msra.mxu0 %v3401
    %4453 = vmatpush.bf16.msra.mxu0 %v3400
    %4454 = vmatpush.bf16.msra.mxu0 %v3399
    %4455 = vmatpush.bf16.msra.mxu0 %v3398
    %4456 = vmatpush.bf16.msra.mxu0 %v3397
    %4457 = vmatpush.bf16.msra.mxu0 %v3396
    %4458 = vmatmul.bf16.gmra.mxu0 %v1209
    %v4459 = vpop.f32.mrf.mxu0
    %v4460 = vadd.f32 %v4447, %v4459
    %v4461 = vpop.f32.mrf.mxu0
    %4462 = vdwg.mxu0
    %4463 = vmatpush.bf16.msra.mxu0 %v3411
    %4464 = vmatpush.bf16.msra.mxu0 %v3410
    %4465 = vmatpush.bf16.msra.mxu0 %v3409
    %4466 = vmatpush.bf16.msra.mxu0 %v3408
    %4467 = vmatpush.bf16.msra.mxu0 %v3407
    %4468 = vmatpush.bf16.msra.mxu0 %v3406
    %4469 = vmatpush.bf16.msra.mxu0 %v3405
    %4470 = vmatpush.bf16.msra.mxu0 %v3404
    %4471 = vmatmul.bf16.gmra.mxu0 %v1210
    %v4472 = vpop.f32.mrf.mxu0
    %v4473 = vadd.f32 %v4460, %v4472
    %v4474 = vpop.f32.mrf.mxu0
    %4475 = vdwg.mxu0
    %4476 = vmatpush.bf16.msra.mxu0 %v3419
    %4477 = vmatpush.bf16.msra.mxu0 %v3418
    %4478 = vmatpush.bf16.msra.mxu0 %v3417
    %4479 = vmatpush.bf16.msra.mxu0 %v3416
    %4480 = vmatpush.bf16.msra.mxu0 %v3415
    %4481 = vmatpush.bf16.msra.mxu0 %v3414
    %4482 = vmatpush.bf16.msra.mxu0 %v3413
    %4483 = vmatpush.bf16.msra.mxu0 %v3412
    %4484 = vmatmul.bf16.gmra.mxu0 %v1211
    %v4485 = vpop.f32.mrf.mxu0
    %v4486 = vadd.f32 %v4473, %v4485
    %v4487 = vpop.f32.mrf.mxu0
    %4488 = vdwg.mxu0
    %4489 = vmatpush.bf16.msra.mxu0 %v3427
    %4490 = vmatpush.bf16.msra.mxu0 %v3426
    %4491 = vmatpush.bf16.msra.mxu0 %v3425
    %4492 = vmatpush.bf16.msra.mxu0 %v3424
    %4493 = vmatpush.bf16.msra.mxu0 %v3423
    %4494 = vmatpush.bf16.msra.mxu0 %v3422
    %4495 = vmatpush.bf16.msra.mxu0 %v3421
    %4496 = vmatpush.bf16.msra.mxu0 %v3420
    %4497 = vmatmul.bf16.gmra.mxu0 %v1212
    %v4498 = vpop.f32.mrf.mxu0
    %v4499 = vadd.f32 %v4486, %v4498
    %v4500 = vpop.f32.mrf.mxu0
    %4501 = vdwg.mxu0
    %4502 = vmatpush.bf16.msra.mxu0 %v3435
    %4503 = vmatpush.bf16.msra.mxu0 %v3434
    %4504 = vmatpush.bf16.msra.mxu0 %v3433
    %4505 = vmatpush.bf16.msra.mxu0 %v3432
    %4506 = vmatpush.bf16.msra.mxu0 %v3431
    %4507 = vmatpush.bf16.msra.mxu0 %v3430
    %4508 = vmatpush.bf16.msra.mxu0 %v3429
    %4509 = vmatpush.bf16.msra.mxu0 %v3428
    %4510 = vmatmul.bf16.gmra.mxu0 %v1213
    %v4511 = vpop.f32.mrf.mxu0
    %v4512 = vadd.f32 %v4499, %v4511
    %v4513 = vpop.f32.mrf.mxu0
    %4514 = vdwg.mxu0
    %4515 = vmatpush.bf16.msra.mxu0 %v3443
    %4516 = vmatpush.bf16.msra.mxu0 %v3442
    %4517 = vmatpush.bf16.msra.mxu0 %v3441
    %4518 = vmatpush.bf16.msra.mxu0 %v3440
    %4519 = vmatpush.bf16.msra.mxu0 %v3439
    %4520 = vmatpush.bf16.msra.mxu0 %v3438
    %4521 = vmatpush.bf16.msra.mxu0 %v3437
    %4522 = vmatpush.bf16.msra.mxu0 %v3436
    %4523 = vmatmul.bf16.gmra.mxu0 %v1214
    %v4524 = vpop.f32.mrf.mxu0
    %v4525 = vadd.f32 %v4512, %v4524
    %v4526 = vpop.f32.mrf.mxu0
    %4527 = vdwg.mxu0
    %4528 = vmatpush.bf16.msra.mxu0 %v3451
    %4529 = vmatpush.bf16.msra.mxu0 %v3450
    %4530 = vmatpush.bf16.msra.mxu0 %v3449
    %4531 = vmatpush.bf16.msra.mxu0 %v3448
    %4532 = vmatpush.bf16.msra.mxu0 %v3447
    %4533 = vmatpush.bf16.msra.mxu0 %v3446
    %4534 = vmatpush.bf16.msra.mxu0 %v3445
    %4535 = vmatpush.bf16.msra.mxu0 %v3444
    %4536 = vmatmul.bf16.gmra.mxu0 %v1215
    %v4537 = vpop.f32.mrf.mxu0
    %v4538 = vadd.f32 %v4525, %v4537
    %v4539 = vpop.f32.mrf.mxu0
    %4540 = vdwg.mxu0
    %4541 = vmatpush.bf16.msra.mxu0 %v3459
    %4542 = vmatpush.bf16.msra.mxu0 %v3458
    %4543 = vmatpush.bf16.msra.mxu0 %v3457
    %4544 = vmatpush.bf16.msra.mxu0 %v3456
    %4545 = vmatpush.bf16.msra.mxu0 %v3455
    %4546 = vmatpush.bf16.msra.mxu0 %v3454
    %4547 = vmatpush.bf16.msra.mxu0 %v3453
    %4548 = vmatpush.bf16.msra.mxu0 %v3452
    %4549 = vmatmul.bf16.gmra.mxu0 %v1216
    %v4550 = vpop.f32.mrf.mxu0
    %v4551 = vadd.f32 %v4538, %v4550
    %v4552 = vpop.f32.mrf.mxu0
    %4553 = vdwg.mxu0
    %4554 = vmatpush.bf16.msra.mxu0 %v3467
    %4555 = vmatpush.bf16.msra.mxu0 %v3466
    %4556 = vmatpush.bf16.msra.mxu0 %v3465
    %4557 = vmatpush.bf16.msra.mxu0 %v3464
    %4558 = vmatpush.bf16.msra.mxu0 %v3463
    %4559 = vmatpush.bf16.msra.mxu0 %v3462
    %4560 = vmatpush.bf16.msra.mxu0 %v3461
    %4561 = vmatpush.bf16.msra.mxu0 %v3460
    %4562 = vmatmul.bf16.gmra.mxu0 %v1217
    %v4563 = vpop.f32.mrf.mxu0
    %v4564 = vadd.f32 %v4551, %v4563
    %v4565 = vpop.f32.mrf.mxu0
    %4566 = vdwg.mxu0
    %4567 = vmatpush.bf16.msra.mxu0 %v3475
    %4568 = vmatpush.bf16.msra.mxu0 %v3474
    %4569 = vmatpush.bf16.msra.mxu0 %v3473
    %4570 = vmatpush.bf16.msra.mxu0 %v3472
    %4571 = vmatpush.bf16.msra.mxu0 %v3471
    %4572 = vmatpush.bf16.msra.mxu0 %v3470
    %4573 = vmatpush.bf16.msra.mxu0 %v3469
    %4574 = vmatpush.bf16.msra.mxu0 %v3468
    %4575 = vmatmul.bf16.gmra.mxu0 %v1218
    %v4576 = vpop.f32.mrf.mxu0
    %v4577 = vadd.f32 %v4564, %v4576
    %v4578 = vpop.f32.mrf.mxu0
    %4579 = vdwg.mxu0
    %4580 = vmatpush.bf16.msra.mxu0 %v3483
    %4581 = vmatpush.bf16.msra.mxu0 %v3482
    %4582 = vmatpush.bf16.msra.mxu0 %v3481
    %4583 = vmatpush.bf16.msra.mxu0 %v3480
    %4584 = vmatpush.bf16.msra.mxu0 %v3479
    %4585 = vmatpush.bf16.msra.mxu0 %v3478
    %4586 = vmatpush.bf16.msra.mxu0 %v3477
    %4587 = vmatpush.bf16.msra.mxu0 %v3476
    %4588 = vmatmul.bf16.gmra.mxu0 %v1219
    %v4589 = vpop.f32.mrf.mxu0
    %v4590 = vadd.f32 %v4577, %v4589
    %v4591 = vpop.f32.mrf.mxu0
    %4592 = vdwg.mxu0
    %4593 = vmatpush.bf16.msra.mxu0 %v3491
    %4594 = vmatpush.bf16.msra.mxu0 %v3490
    %4595 = vmatpush.bf16.msra.mxu0 %v3489
    %4596 = vmatpush.bf16.msra.mxu0 %v3488
    %4597 = vmatpush.bf16.msra.mxu0 %v3487
    %4598 = vmatpush.bf16.msra.mxu0 %v3486
    %4599 = vmatpush.bf16.msra.mxu0 %v3485
    %4600 = vmatpush.bf16.msra.mxu0 %v3484
    %4601 = vmatmul.bf16.gmra.mxu0 %v1220
    %v4602 = vpop.f32.mrf.mxu0
    %v4603 = vadd.f32 %v4590, %v4602
    %v4604 = vpop.f32.mrf.mxu0
    %4605 = vdwg.mxu0
    %4606 = vmatpush.bf16.msra.mxu0 %v3499
    %4607 = vmatpush.bf16.msra.mxu0 %v3498
    %4608 = vmatpush.bf16.msra.mxu0 %v3497
    %4609 = vmatpush.bf16.msra.mxu0 %v3496
    %4610 = vmatpush.bf16.msra.mxu0 %v3495
    %4611 = vmatpush.bf16.msra.mxu0 %v3494
    %4612 = vmatpush.bf16.msra.mxu0 %v3493
    %4613 = vmatpush.bf16.msra.mxu0 %v3492
    %4614 = vmatmul.bf16.gmra.mxu0 %v1221
    %v4615 = vpop.f32.mrf.mxu0
    %v4616 = vadd.f32 %v4603, %v4615
    %v4617 = vpop.f32.mrf.mxu0
    %4618 = vdwg.mxu0
    %4619 = vmatpush.bf16.msra.mxu0 %v3507
    %4620 = vmatpush.bf16.msra.mxu0 %v3506
    %4621 = vmatpush.bf16.msra.mxu0 %v3505
    %4622 = vmatpush.bf16.msra.mxu0 %v3504
    %4623 = vmatpush.bf16.msra.mxu0 %v3503
    %4624 = vmatpush.bf16.msra.mxu0 %v3502
    %4625 = vmatpush.bf16.msra.mxu0 %v3501
    %4626 = vmatpush.bf16.msra.mxu0 %v3500
    %4627 = vmatmul.bf16.gmra.mxu0 %v1222
    %v4628 = vpop.f32.mrf.mxu0
    %v4629 = vadd.f32 %v4616, %v4628
    %v4630 = vpop.f32.mrf.mxu0
    %4631 = vdwg.mxu0
    %4632 = vmatpush.bf16.msra.mxu0 %v3515
    %4633 = vmatpush.bf16.msra.mxu0 %v3514
    %4634 = vmatpush.bf16.msra.mxu0 %v3513
    %4635 = vmatpush.bf16.msra.mxu0 %v3512
    %4636 = vmatpush.bf16.msra.mxu0 %v3511
    %4637 = vmatpush.bf16.msra.mxu0 %v3510
    %4638 = vmatpush.bf16.msra.mxu0 %v3509
    %4639 = vmatpush.bf16.msra.mxu0 %v3508
    %4640 = vmatmul.bf16.gmra.mxu0 %v1223
    %v4641 = vpop.f32.mrf.mxu0
    %v4642 = vadd.f32 %v4629, %v4641
    %v4643 = vpop.f32.mrf.mxu0
    %4644 = vdwg.mxu0
    %4645 = vmatpush.bf16.msra.mxu0 %v3523
    %4646 = vmatpush.bf16.msra.mxu0 %v3522
    %4647 = vmatpush.bf16.msra.mxu0 %v3521
    %4648 = vmatpush.bf16.msra.mxu0 %v3520
    %4649 = vmatpush.bf16.msra.mxu0 %v3519
    %4650 = vmatpush.bf16.msra.mxu0 %v3518
    %4651 = vmatpush.bf16.msra.mxu0 %v3517
    %4652 = vmatpush.bf16.msra.mxu0 %v3516
    %4653 = vmatmul.bf16.gmra.mxu0 %v1224
    %v4654 = vpop.f32.mrf.mxu0
    %v4655 = vadd.f32 %v4642, %v4654
    %v4656 = vpop.f32.mrf.mxu0
    %4657 = vdwg.mxu0
    %4658 = vmatpush.bf16.msra.mxu0 %v3531
    %4659 = vmatpush.bf16.msra.mxu0 %v3530
    %4660 = vmatpush.bf16.msra.mxu0 %v3529
    %4661 = vmatpush.bf16.msra.mxu0 %v3528
    %4662 = vmatpush.bf16.msra.mxu0 %v3527
    %4663 = vmatpush.bf16.msra.mxu0 %v3526
    %4664 = vmatpush.bf16.msra.mxu0 %v3525
    %4665 = vmatpush.bf16.msra.mxu0 %v3524
    %4666 = vmatmul.bf16.gmra.mxu0 %v1225
    %v4667 = vpop.f32.mrf.mxu0
    %v4668 = vadd.f32 %v4655, %v4667
    %v4669 = vpop.f32.mrf.mxu0
    %4670 = vdwg.mxu0
    %4671 = vmatpush.bf16.msra.mxu0 %v3539
    %4672 = vmatpush.bf16.msra.mxu0 %v3538
    %4673 = vmatpush.bf16.msra.mxu0 %v3537
    %4674 = vmatpush.bf16.msra.mxu0 %v3536
    %4675 = vmatpush.bf16.msra.mxu0 %v3535
    %4676 = vmatpush.bf16.msra.mxu0 %v3534
    %4677 = vmatpush.bf16.msra.mxu0 %v3533
    %4678 = vmatpush.bf16.msra.mxu0 %v3532
    %4679 = vmatmul.bf16.gmra.mxu0 %v1226
    %v4680 = vpop.f32.mrf.mxu0
    %v4681 = vadd.f32 %v4668, %v4680
    %v4682 = vpop.f32.mrf.mxu0
    %4683 = vdwg.mxu0
    %4684 = vmatpush.bf16.msra.mxu0 %v3547
    %4685 = vmatpush.bf16.msra.mxu0 %v3546
    %4686 = vmatpush.bf16.msra.mxu0 %v3545
    %4687 = vmatpush.bf16.msra.mxu0 %v3544
    %4688 = vmatpush.bf16.msra.mxu0 %v3543
    %4689 = vmatpush.bf16.msra.mxu0 %v3542
    %4690 = vmatpush.bf16.msra.mxu0 %v3541
    %4691 = vmatpush.bf16.msra.mxu0 %v3540
    %4692 = vmatmul.bf16.gmra.mxu0 %v1227
    %v4693 = vpop.f32.mrf.mxu0
    %v4694 = vadd.f32 %v4681, %v4693
    %v4695 = vpop.f32.mrf.mxu0
    %4696 = vdwg.mxu0
    %4697 = vmatpush.bf16.msra.mxu0 %v3555
    %4698 = vmatpush.bf16.msra.mxu0 %v3554
    %4699 = vmatpush.bf16.msra.mxu0 %v3553
    %4700 = vmatpush.bf16.msra.mxu0 %v3552
    %4701 = vmatpush.bf16.msra.mxu0 %v3551
    %4702 = vmatpush.bf16.msra.mxu0 %v3550
    %4703 = vmatpush.bf16.msra.mxu0 %v3549
    %4704 = vmatpush.bf16.msra.mxu0 %v3548
    %4705 = vmatmul.bf16.gmra.mxu0 %v1228
    %v4706 = vpop.f32.mrf.mxu0
    %v4707 = vadd.f32 %v4694, %v4706
    %v4708 = vpop.f32.mrf.mxu0
    %4709 = vdwg.mxu0
    %4710 = vmatpush.bf16.msra.mxu0 %v3563
    %4711 = vmatpush.bf16.msra.mxu0 %v3562
    %4712 = vmatpush.bf16.msra.mxu0 %v3561
    %4713 = vmatpush.bf16.msra.mxu0 %v3560
    %4714 = vmatpush.bf16.msra.mxu0 %v3559
    %4715 = vmatpush.bf16.msra.mxu0 %v3558
    %4716 = vmatpush.bf16.msra.mxu0 %v3557
    %4717 = vmatpush.bf16.msra.mxu0 %v3556
    %4718 = vmatmul.bf16.gmra.mxu0 %v1229
    %v4719 = vpop.f32.mrf.mxu0
    %v4720 = vadd.f32 %v4707, %v4719
    %v4721 = vpop.f32.mrf.mxu0
    %4722 = vdwg.mxu0
    %4723 = vmatpush.bf16.msra.mxu0 %v3571
    %4724 = vmatpush.bf16.msra.mxu0 %v3570
    %4725 = vmatpush.bf16.msra.mxu0 %v3569
    %4726 = vmatpush.bf16.msra.mxu0 %v3568
    %4727 = vmatpush.bf16.msra.mxu0 %v3567
    %4728 = vmatpush.bf16.msra.mxu0 %v3566
    %4729 = vmatpush.bf16.msra.mxu0 %v3565
    %4730 = vmatpush.bf16.msra.mxu0 %v3564
    %4731 = vmatmul.bf16.gmra.mxu0 %v1230
    %v4732 = vpop.f32.mrf.mxu0
    %v4733 = vadd.f32 %v4720, %v4732
    %v4734 = vpop.f32.mrf.mxu0
    %4735 = vdwg.mxu0
    %4736 = vmatpush.bf16.msra.mxu0 %v3579
    %4737 = vmatpush.bf16.msra.mxu0 %v3578
    %4738 = vmatpush.bf16.msra.mxu0 %v3577
    %4739 = vmatpush.bf16.msra.mxu0 %v3576
    %4740 = vmatpush.bf16.msra.mxu0 %v3575
    %4741 = vmatpush.bf16.msra.mxu0 %v3574
    %4742 = vmatpush.bf16.msra.mxu0 %v3573
    %4743 = vmatpush.bf16.msra.mxu0 %v3572
    %4744 = vmatmul.bf16.gmra.mxu0 %v1231
    %v4745 = vpop.f32.mrf.mxu0
    %v4746 = vadd.f32 %v4733, %v4745
    %v4747 = vpop.f32.mrf.mxu0
    %4748 = vdwg.mxu0
    %4749 = vmatpush.bf16.msra.mxu0 %v3587
    %4750 = vmatpush.bf16.msra.mxu0 %v3586
    %4751 = vmatpush.bf16.msra.mxu0 %v3585
    %4752 = vmatpush.bf16.msra.mxu0 %v3584
    %4753 = vmatpush.bf16.msra.mxu0 %v3583
    %4754 = vmatpush.bf16.msra.mxu0 %v3582
    %4755 = vmatpush.bf16.msra.mxu0 %v3581
    %4756 = vmatpush.bf16.msra.mxu0 %v3580
    %4757 = vmatmul.bf16.gmra.mxu0 %v1232
    %v4758 = vpop.f32.mrf.mxu0
    %v4759 = vadd.f32 %v4746, %v4758
    %v4760 = vpop.f32.mrf.mxu0
    %4761 = vdwg.mxu0
    %4762 = vmatpush.bf16.msra.mxu0 %v3595
    %4763 = vmatpush.bf16.msra.mxu0 %v3594
    %4764 = vmatpush.bf16.msra.mxu0 %v3593
    %4765 = vmatpush.bf16.msra.mxu0 %v3592
    %4766 = vmatpush.bf16.msra.mxu0 %v3591
    %4767 = vmatpush.bf16.msra.mxu0 %v3590
    %4768 = vmatpush.bf16.msra.mxu0 %v3589
    %4769 = vmatpush.bf16.msra.mxu0 %v3588
    %4770 = vmatmul.bf16.gmra.mxu0 %v1233
    %v4771 = vpop.f32.mrf.mxu0
    %v4772 = vadd.f32 %v4759, %v4771
    %v4773 = vpop.f32.mrf.mxu0
    %4774 = vdwg.mxu0
    %4775 = vmatpush.bf16.msra.mxu0 %v3603
    %4776 = vmatpush.bf16.msra.mxu0 %v3602
    %4777 = vmatpush.bf16.msra.mxu0 %v3601
    %4778 = vmatpush.bf16.msra.mxu0 %v3600
    %4779 = vmatpush.bf16.msra.mxu0 %v3599
    %4780 = vmatpush.bf16.msra.mxu0 %v3598
    %4781 = vmatpush.bf16.msra.mxu0 %v3597
    %4782 = vmatpush.bf16.msra.mxu0 %v3596
    %4783 = vmatmul.bf16.gmra.mxu0 %v1234
    %v4784 = vpop.f32.mrf.mxu0
    %v4785 = vadd.f32 %v4772, %v4784
    %v4786 = vpop.f32.mrf.mxu0
    %4787 = vdwg.mxu0
    %4788 = vmatpush.bf16.msra.mxu0 %v3611
    %4789 = vmatpush.bf16.msra.mxu0 %v3610
    %4790 = vmatpush.bf16.msra.mxu0 %v3609
    %4791 = vmatpush.bf16.msra.mxu0 %v3608
    %4792 = vmatpush.bf16.msra.mxu0 %v3607
    %4793 = vmatpush.bf16.msra.mxu0 %v3606
    %4794 = vmatpush.bf16.msra.mxu0 %v3605
    %4795 = vmatpush.bf16.msra.mxu0 %v3604
    %4796 = vmatmul.bf16.gmra.mxu0 %v1235
    %v4797 = vpop.f32.mrf.mxu0
    %v4798 = vadd.f32 %v4785, %v4797
    %v4799 = vpop.f32.mrf.mxu0
    %4800 = vdwg.mxu0
    %4801 = vmatpush.bf16.msra.mxu0 %v3619
    %4802 = vmatpush.bf16.msra.mxu0 %v3618
    %4803 = vmatpush.bf16.msra.mxu0 %v3617
    %4804 = vmatpush.bf16.msra.mxu0 %v3616
    %4805 = vmatpush.bf16.msra.mxu0 %v3615
    %4806 = vmatpush.bf16.msra.mxu0 %v3614
    %4807 = vmatpush.bf16.msra.mxu0 %v3613
    %4808 = vmatpush.bf16.msra.mxu0 %v3612
    %4809 = vmatmul.bf16.gmra.mxu0 %v1236
    %v4810 = vpop.f32.mrf.mxu0
    %v4811 = vadd.f32 %v4798, %v4810
    %v4812 = vpop.f32.mrf.mxu0
    %4813 = vdwg.mxu0
    %4814 = vmatpush.bf16.msra.mxu0 %v3627
    %4815 = vmatpush.bf16.msra.mxu0 %v3626
    %4816 = vmatpush.bf16.msra.mxu0 %v3625
    %4817 = vmatpush.bf16.msra.mxu0 %v3624
    %4818 = vmatpush.bf16.msra.mxu0 %v3623
    %4819 = vmatpush.bf16.msra.mxu0 %v3622
    %4820 = vmatpush.bf16.msra.mxu0 %v3621
    %4821 = vmatpush.bf16.msra.mxu0 %v3620
    %4822 = vmatmul.bf16.gmra.mxu0 %v1237
    %v4823 = vpop.f32.mrf.mxu0
    %v4824 = vadd.f32 %v4811, %v4823
    %v4825 = vpop.f32.mrf.mxu0
    %4826 = vdwg.mxu0
    %4827 = vmatpush.bf16.msra.mxu0 %v3635
    %4828 = vmatpush.bf16.msra.mxu0 %v3634
    %4829 = vmatpush.bf16.msra.mxu0 %v3633
    %4830 = vmatpush.bf16.msra.mxu0 %v3632
    %4831 = vmatpush.bf16.msra.mxu0 %v3631
    %4832 = vmatpush.bf16.msra.mxu0 %v3630
    %4833 = vmatpush.bf16.msra.mxu0 %v3629
    %4834 = vmatpush.bf16.msra.mxu0 %v3628
    %4835 = vmatmul.bf16.gmra.mxu0 %v1238
    %v4836 = vpop.f32.mrf.mxu0
    %v4837 = vadd.f32 %v4824, %v4836
    %v4838 = vpop.f32.mrf.mxu0
    %4839 = vdwg.mxu0
    %4840 = vmatpush.bf16.msra.mxu0 %v3643
    %4841 = vmatpush.bf16.msra.mxu0 %v3642
    %4842 = vmatpush.bf16.msra.mxu0 %v3641
    %4843 = vmatpush.bf16.msra.mxu0 %v3640
    %4844 = vmatpush.bf16.msra.mxu0 %v3639
    %4845 = vmatpush.bf16.msra.mxu0 %v3638
    %4846 = vmatpush.bf16.msra.mxu0 %v3637
    %4847 = vmatpush.bf16.msra.mxu0 %v3636
    %4848 = vmatmul.bf16.gmra.mxu0 %v1239
    %v4849 = vpop.f32.mrf.mxu0
    %v4850 = vadd.f32 %v4837, %v4849
    %v4851 = vpop.f32.mrf.mxu0
    %4852 = vdwg.mxu0
    %4853 = vmatpush.bf16.msra.mxu0 %v3651
    %4854 = vmatpush.bf16.msra.mxu0 %v3650
    %4855 = vmatpush.bf16.msra.mxu0 %v3649
    %4856 = vmatpush.bf16.msra.mxu0 %v3648
    %4857 = vmatpush.bf16.msra.mxu0 %v3647
    %4858 = vmatpush.bf16.msra.mxu0 %v3646
    %4859 = vmatpush.bf16.msra.mxu0 %v3645
    %4860 = vmatpush.bf16.msra.mxu0 %v3644
    %4861 = vmatmul.bf16.gmra.mxu0 %v1240
    %v4862 = vpop.f32.mrf.mxu0
    %v4863 = vadd.f32 %v4850, %v4862
    %v4864 = vpop.f32.mrf.mxu0
    %4865 = vdwg.mxu0
    %4866 = vmatpush.bf16.msra.mxu0 %v3659
    %4867 = vmatpush.bf16.msra.mxu0 %v3658
    %4868 = vmatpush.bf16.msra.mxu0 %v3657
    %4869 = vmatpush.bf16.msra.mxu0 %v3656
    %4870 = vmatpush.bf16.msra.mxu0 %v3655
    %4871 = vmatpush.bf16.msra.mxu0 %v3654
    %4872 = vmatpush.bf16.msra.mxu0 %v3653
    %4873 = vmatpush.bf16.msra.mxu0 %v3652
    %4874 = vmatmul.bf16.gmra.mxu0 %v1241
    %v4875 = vpop.f32.mrf.mxu0
    %v4876 = vadd.f32 %v4863, %v4875
    %v4877 = vpop.f32.mrf.mxu0
    %4878 = vdwg.mxu0
    %4879 = vmatpush.bf16.msra.mxu0 %v3667
    %4880 = vmatpush.bf16.msra.mxu0 %v3666
    %4881 = vmatpush.bf16.msra.mxu0 %v3665
    %4882 = vmatpush.bf16.msra.mxu0 %v3664
    %4883 = vmatpush.bf16.msra.mxu0 %v3663
    %4884 = vmatpush.bf16.msra.mxu0 %v3662
    %4885 = vmatpush.bf16.msra.mxu0 %v3661
    %4886 = vmatpush.bf16.msra.mxu0 %v3660
    %4887 = vmatmul.bf16.gmra.mxu0 %v1242
    %v4888 = vpop.f32.mrf.mxu0
    %v4889 = vadd.f32 %v4876, %v4888
    %v4890 = vpop.f32.mrf.mxu0
    %4891 = vdwg.mxu0
    %4892 = vmatpush.bf16.msra.mxu0 %v3675
    %4893 = vmatpush.bf16.msra.mxu0 %v3674
    %4894 = vmatpush.bf16.msra.mxu0 %v3673
    %4895 = vmatpush.bf16.msra.mxu0 %v3672
    %4896 = vmatpush.bf16.msra.mxu0 %v3671
    %4897 = vmatpush.bf16.msra.mxu0 %v3670
    %4898 = vmatpush.bf16.msra.mxu0 %v3669
    %4899 = vmatpush.bf16.msra.mxu0 %v3668
    %4900 = vmatmul.bf16.gmra.mxu0 %v1243
    %v4901 = vpop.f32.mrf.mxu0
    %v4902 = vadd.f32 %v4889, %v4901
    %v4903 = vpop.f32.mrf.mxu0
    %4904 = vdwg.mxu0
    %4905 = vmatpush.bf16.msra.mxu0 %v3683
    %4906 = vmatpush.bf16.msra.mxu0 %v3682
    %4907 = vmatpush.bf16.msra.mxu0 %v3681
    %4908 = vmatpush.bf16.msra.mxu0 %v3680
    %4909 = vmatpush.bf16.msra.mxu0 %v3679
    %4910 = vmatpush.bf16.msra.mxu0 %v3678
    %4911 = vmatpush.bf16.msra.mxu0 %v3677
    %4912 = vmatpush.bf16.msra.mxu0 %v3676
    %4913 = vmatmul.bf16.gmra.mxu0 %v1244
    %v4914 = vpop.f32.mrf.mxu0
    %v4915 = vadd.f32 %v4902, %v4914
    %v4916 = vpop.f32.mrf.mxu0
    %4917 = vdwg.mxu0
    %4918 = vmatpush.bf16.msra.mxu0 %v3691
    %4919 = vmatpush.bf16.msra.mxu0 %v3690
    %4920 = vmatpush.bf16.msra.mxu0 %v3689
    %4921 = vmatpush.bf16.msra.mxu0 %v3688
    %4922 = vmatpush.bf16.msra.mxu0 %v3687
    %4923 = vmatpush.bf16.msra.mxu0 %v3686
    %4924 = vmatpush.bf16.msra.mxu0 %v3685
    %4925 = vmatpush.bf16.msra.mxu0 %v3684
    %4926 = vmatmul.bf16.gmra.mxu0 %v1245
    %v4927 = vpop.f32.mrf.mxu0
    %v4928 = vadd.f32 %v4915, %v4927
    %v4929 = vpop.f32.mrf.mxu0
    %4930 = vdwg.mxu0
    %4931 = vmatpush.bf16.msra.mxu0 %v3699
    %4932 = vmatpush.bf16.msra.mxu0 %v3698
    %4933 = vmatpush.bf16.msra.mxu0 %v3697
    %4934 = vmatpush.bf16.msra.mxu0 %v3696
    %4935 = vmatpush.bf16.msra.mxu0 %v3695
    %4936 = vmatpush.bf16.msra.mxu0 %v3694
    %4937 = vmatpush.bf16.msra.mxu0 %v3693
    %4938 = vmatpush.bf16.msra.mxu0 %v3692
    %4939 = vmatmul.bf16.gmra.mxu0 %v1246
    %v4940 = vpop.f32.mrf.mxu0
    %v4941 = vadd.f32 %v4928, %v4940
    %v4942 = vpop.f32.mrf.mxu0
    %4943 = vdwg.mxu0
    %4944 = vmatpush.bf16.msra.mxu0 %v3707
    %4945 = vmatpush.bf16.msra.mxu0 %v3706
    %4946 = vmatpush.bf16.msra.mxu0 %v3705
    %4947 = vmatpush.bf16.msra.mxu0 %v3704
    %4948 = vmatpush.bf16.msra.mxu0 %v3703
    %4949 = vmatpush.bf16.msra.mxu0 %v3702
    %4950 = vmatpush.bf16.msra.mxu0 %v3701
    %4951 = vmatpush.bf16.msra.mxu0 %v3700
    %4952 = vmatmul.bf16.gmra.mxu0 %v1247
    %v4953 = vpop.f32.mrf.mxu0
    %v4954 = vadd.f32 %v4941, %v4953
    %v4955 = vpop.f32.mrf.mxu0
    %4956 = vdwg.mxu0
    %4957 = vmatpush.bf16.msra.mxu0 %v3715
    %4958 = vmatpush.bf16.msra.mxu0 %v3714
    %4959 = vmatpush.bf16.msra.mxu0 %v3713
    %4960 = vmatpush.bf16.msra.mxu0 %v3712
    %4961 = vmatpush.bf16.msra.mxu0 %v3711
    %4962 = vmatpush.bf16.msra.mxu0 %v3710
    %4963 = vmatpush.bf16.msra.mxu0 %v3709
    %4964 = vmatpush.bf16.msra.mxu0 %v3708
    %4965 = vmatmul.bf16.gmra.mxu0 %v1248
    %v4966 = vpop.f32.mrf.mxu0
    %v4967 = vadd.f32 %v4954, %v4966
    %v4968 = vpop.f32.mrf.mxu0
    %4969 = vdwg.mxu0
    %4970 = vmatpush.bf16.msra.mxu0 %v3723
    %4971 = vmatpush.bf16.msra.mxu0 %v3722
    %4972 = vmatpush.bf16.msra.mxu0 %v3721
    %4973 = vmatpush.bf16.msra.mxu0 %v3720
    %4974 = vmatpush.bf16.msra.mxu0 %v3719
    %4975 = vmatpush.bf16.msra.mxu0 %v3718
    %4976 = vmatpush.bf16.msra.mxu0 %v3717
    %4977 = vmatpush.bf16.msra.mxu0 %v3716
    %4978 = vmatmul.bf16.gmra.mxu0 %v1249
    %v4979 = vpop.f32.mrf.mxu0
    %v4980 = vadd.f32 %v4967, %v4979
    %v4981 = vpop.f32.mrf.mxu0
    %4982 = vdwg.mxu0
    %4983 = vmatpush.bf16.msra.mxu0 %v3731
    %4984 = vmatpush.bf16.msra.mxu0 %v3730
    %4985 = vmatpush.bf16.msra.mxu0 %v3729
    %4986 = vmatpush.bf16.msra.mxu0 %v3728
    %4987 = vmatpush.bf16.msra.mxu0 %v3727
    %4988 = vmatpush.bf16.msra.mxu0 %v3726
    %4989 = vmatpush.bf16.msra.mxu0 %v3725
    %4990 = vmatpush.bf16.msra.mxu0 %v3724
    %4991 = vmatmul.bf16.gmra.mxu0 %v1250
    %v4992 = vpop.f32.mrf.mxu0
    %v4993 = vadd.f32 %v4980, %v4992
    %v4994 = vpop.f32.mrf.mxu0
    %4995 = vdwg.mxu0
    %4996 = vmatpush.bf16.msra.mxu0 %v3739
    %4997 = vmatpush.bf16.msra.mxu0 %v3738
    %4998 = vmatpush.bf16.msra.mxu0 %v3737
    %4999 = vmatpush.bf16.msra.mxu0 %v3736
    %5000 = vmatpush.bf16.msra.mxu0 %v3735
    %5001 = vmatpush.bf16.msra.mxu0 %v3734
    %5002 = vmatpush.bf16.msra.mxu0 %v3733
    %5003 = vmatpush.bf16.msra.mxu0 %v3732
    %5004 = vmatmul.bf16.gmra.mxu0 %v1251
    %v5005 = vpop.f32.mrf.mxu0
    %v5006 = vadd.f32 %v4993, %v5005
    %v5007 = vpop.f32.mrf.mxu0
    %5008 = vdwg.mxu0
    %5009 = vmatpush.bf16.msra.mxu0 %v3747
    %5010 = vmatpush.bf16.msra.mxu0 %v3746
    %5011 = vmatpush.bf16.msra.mxu0 %v3745
    %5012 = vmatpush.bf16.msra.mxu0 %v3744
    %5013 = vmatpush.bf16.msra.mxu0 %v3743
    %5014 = vmatpush.bf16.msra.mxu0 %v3742
    %5015 = vmatpush.bf16.msra.mxu0 %v3741
    %5016 = vmatpush.bf16.msra.mxu0 %v3740
    %5017 = vmatmul.bf16.gmra.mxu0 %v1252
    %v5018 = vpop.f32.mrf.mxu0
    %v5019 = vadd.f32 %v5006, %v5018
    %v5020 = vpop.f32.mrf.mxu0
    %5021 = vdwg.mxu0
    %5022 = vmatpush.bf16.msra.mxu0 %v3755
    %5023 = vmatpush.bf16.msra.mxu0 %v3754
    %5024 = vmatpush.bf16.msra.mxu0 %v3753
    %5025 = vmatpush.bf16.msra.mxu0 %v3752
    %5026 = vmatpush.bf16.msra.mxu0 %v3751
    %5027 = vmatpush.bf16.msra.mxu0 %v3750
    %5028 = vmatpush.bf16.msra.mxu0 %v3749
    %5029 = vmatpush.bf16.msra.mxu0 %v3748
    %5030 = vmatmul.bf16.gmra.mxu0 %v1253
    %v5031 = vpop.f32.mrf.mxu0
    %v5032 = vadd.f32 %v5019, %v5031
    %v5033 = vpop.f32.mrf.mxu0
    %5034 = vdwg.mxu0
    %5035 = vmatpush.bf16.msra.mxu0 %v3763
    %5036 = vmatpush.bf16.msra.mxu0 %v3762
    %5037 = vmatpush.bf16.msra.mxu0 %v3761
    %5038 = vmatpush.bf16.msra.mxu0 %v3760
    %5039 = vmatpush.bf16.msra.mxu0 %v3759
    %5040 = vmatpush.bf16.msra.mxu0 %v3758
    %5041 = vmatpush.bf16.msra.mxu0 %v3757
    %5042 = vmatpush.bf16.msra.mxu0 %v3756
    %5043 = vmatmul.bf16.gmra.mxu0 %v1254
    %v5044 = vpop.f32.mrf.mxu0
    %v5045 = vadd.f32 %v5032, %v5044
    %v5046 = vpop.f32.mrf.mxu0
    %5047 = vdwg.mxu0
    %5048 = vmatpush.bf16.msra.mxu0 %v3771
    %5049 = vmatpush.bf16.msra.mxu0 %v3770
    %5050 = vmatpush.bf16.msra.mxu0 %v3769
    %5051 = vmatpush.bf16.msra.mxu0 %v3768
    %5052 = vmatpush.bf16.msra.mxu0 %v3767
    %5053 = vmatpush.bf16.msra.mxu0 %v3766
    %5054 = vmatpush.bf16.msra.mxu0 %v3765
    %5055 = vmatpush.bf16.msra.mxu0 %v3764
    %5056 = vmatmul.bf16.gmra.mxu0 %v1255
    %v5057 = vpop.f32.mrf.mxu0
    %v5058 = vadd.f32 %v5045, %v5057
    %v5059 = vpop.f32.mrf.mxu0
    %5060 = vdwg.mxu0
    %5061 = vmatpush.bf16.msra.mxu0 %v3779
    %5062 = vmatpush.bf16.msra.mxu0 %v3778
    %5063 = vmatpush.bf16.msra.mxu0 %v3777
    %5064 = vmatpush.bf16.msra.mxu0 %v3776
    %5065 = vmatpush.bf16.msra.mxu0 %v3775
    %5066 = vmatpush.bf16.msra.mxu0 %v3774
    %5067 = vmatpush.bf16.msra.mxu0 %v3773
    %5068 = vmatpush.bf16.msra.mxu0 %v3772
    %5069 = vmatmul.bf16.gmra.mxu0 %v1256
    %v5070 = vpop.f32.mrf.mxu0
    %v5071 = vadd.f32 %v5058, %v5070
    %v5072 = vpop.f32.mrf.mxu0
    %5073 = vdwg.mxu0
    %5074 = vmatpush.bf16.msra.mxu0 %v3787
    %5075 = vmatpush.bf16.msra.mxu0 %v3786
    %5076 = vmatpush.bf16.msra.mxu0 %v3785
    %5077 = vmatpush.bf16.msra.mxu0 %v3784
    %5078 = vmatpush.bf16.msra.mxu0 %v3783
    %5079 = vmatpush.bf16.msra.mxu0 %v3782
    %5080 = vmatpush.bf16.msra.mxu0 %v3781
    %5081 = vmatpush.bf16.msra.mxu0 %v3780
    %5082 = vmatmul.bf16.gmra.mxu0 %v1257
    %v5083 = vpop.f32.mrf.mxu0
    %v5084 = vadd.f32 %v5071, %v5083
    %v5085 = vpop.f32.mrf.mxu0
    %5086 = vdwg.mxu0
    %5087 = vmatpush.bf16.msra.mxu0 0
    %5088 = vmatpush.bf16.msra.mxu0 %v3794
    %5089 = vmatpush.bf16.msra.mxu0 %v3793
    %5090 = vmatpush.bf16.msra.mxu0 %v3792
    %5091 = vmatpush.bf16.msra.mxu0 %v3791
    %5092 = vmatpush.bf16.msra.mxu0 %v3790
    %5093 = vmatpush.bf16.msra.mxu0 %v3789
    %5094 = vmatpush.bf16.msra.mxu0 %v3788
    %5095 = vmatmul.bf16.gmra.mxu0 %v4292
    %v5096 = vpop.f32.mrf.mxu0
    %v5097 = vadd.f32 %v5084, %v5096
    %v5098 = vpop.f32.mrf.mxu0
    %5099 = vdwg.mxu0
    %v5100 = vsub.f32 0.0, %v5097
    %v5101 = vmul.f32 %v5100, 1.442695
    %v5102 = vpow.pop %v5101
    %v5103 = vadd.f32 %v5102, 1.0
    %v5104 = vrcp.pop %v5103
    %v5105 = vmul.f32 %v5103, %v5104
    %v5106 = vsub.f32 1.0, %v5105
    %v5107 = vmul.f32 %v5104, %v5106
    %v5108 = vadd.f32 %v5104, %v5107
    %vm5109 = vweird.f32 %v5103
    %vm5110 = vweird.f32 %v5104
    %vm5111 = vmor %vm5109, %vm5110
    %v5112 = vsel %vm5111, %v5104, %v5108
    %v5113 = vand.u32 2147483647, %v5103
    %vm5114 = vcmp.eq.f32.partialorder %v5113, 8.507059e+37
    %v5115 = vand.u32 %v5103, 2147483648
    %v5116 = vor.u32 1.1754944e-38, %v5115
    %v5117 = vsel %vm5114, %v5116, %v5112
    %v5118 = vmul.f32 1.0, %v5117
    %v5119 = vld [vmem:[#allocation7] sm:$0xff]
    %v5120 = vld [vmem:[#allocation7 + $0x8] sm:$0xff]
    %v5121 = vld [vmem:[#allocation7 + $0x10] sm:$0xff]
    %v5122 = vld [vmem:[#allocation7 + $0x18] sm:$0xff]
    %v5123 = vld [vmem:[#allocation7 + $0x20] sm:$0xff]
    %v5124 = vld [vmem:[#allocation7 + $0x28] sm:$0xff]
    %v5125 = vld [vmem:[#allocation7 + $0x30] sm:$0xff]
    %v5126 = vld [vmem:[#allocation7 + $0x38] sm:$0xff]
    %v5127 = vld [vmem:[#allocation7 + $0x40] sm:$0xff]
    %v5128 = vld [vmem:[#allocation7 + $0x48] sm:$0xff]
    %v5129 = vld [vmem:[#allocation7 + $0x50] sm:$0xff]
    %v5130 = vld [vmem:[#allocation7 + $0x58] sm:$0xff]
    %v5131 = vld [vmem:[#allocation7 + $0x60] sm:$0xff]
    %v5132 = vld [vmem:[#allocation7 + $0x68] sm:$0xff]
    %v5133 = vld [vmem:[#allocation7 + $0x70] sm:$0xff]
    %v5134 = vld [vmem:[#allocation7 + $0x78] sm:$0xff]
    %v5135 = vld [vmem:[#allocation8 + $0x1] sm:$0x1]
    %v5136 = vperm.slane %v5135, 0
    %5137 = vmatpush.msra.mxu0 %v5134
    %5138 = vmatpush.msra.mxu0 %v5133
    %5139 = vmatpush.msra.mxu0 %v5132
    %5140 = vmatpush.msra.mxu0 %v5131
    %5141 = vmatpush.msra.mxu0 %v5130
    %5142 = vmatpush.msra.mxu0 %v5129
    %5143 = vmatpush.msra.mxu0 %v5128
    %5144 = vmatpush.msra.mxu0 %v5127
    %5145 = vmatpush.msra.mxu0 %v5126
    %5146 = vmatpush.msra.mxu0 %v5125
    %5147 = vmatpush.msra.mxu0 %v5124
    %5148 = vmatpush.msra.mxu0 %v5123
    %5149 = vmatpush.msra.mxu0 %v5122
    %5150 = vmatpush.msra.mxu0 %v5121
    %5151 = vmatpush.msra.mxu0 %v5120
    %5152 = vmatpush.msra.mxu0 %v5119
    %5153 = vmatmul.f32.gmra.mxu0 %v5118
    %v5154 = vpop.f32.mrf.mxu0
    %v5155 = vadd.f32 %v5136, %v5154
    %5156 = vdwg.mxu0
    %5157 = vmax.xlane.f32.xlu0 %v5155
    %v5158 = vpop.xlane.xlu0 %5157
    %v5159 = vsub.f32 %v5155, %v5158
    %v5160 = vmul.f32 %v5159, 1.442695
    %v5161 = vpow.pop %v5160
    %5162 = vadd.xlane.f32.xlu0 %v5161
    %v5163 = vpop.xlane.xlu0 %5162
    %v5164 = vrcp.pop %v5163
    %v5165 = vmul.f32 %v5161, %v5164
    %5166 = vst [vmem:[#allocation10] sm:$0xff] %v5165
    %5167 = vst [vmem:[#allocation11] sm:$0xff] %v5155
    // Predicated region
    $region34: #{tpu_custom_call.1} parent=1 // pred_check
      _
    $region35: #{tpu_custom_call.1} parent=1 // pred_check_branch
      %5169 = sbr.rel (0) target = $region37
    $region36: #{tpu_custom_call.1} parent=1 // pred_region
      %5171 = vsyncadd [#allocation4], 0
      %s5173 = sshll.u32 [#allocation10], 4
      %s5174 = int_to_ptr.vmem [resolvable:$true] %s5173
      %s5175 = sshll.u32 %s4, 4
      %s5176 = int_to_ptr.hbm [resolvable:$true] %s5175
      %5178 = dma.vmem_to_hbm [thread:$0]  %s5174, 128, %s5176, [#allocation4]
    $region37: #{tpu_custom_call.1} parent=1 // pred_fallthru
      _
    // Predicated region
    $region38: #{tpu_custom_call.1} parent=1 // pred_check
      _
    $region39: #{tpu_custom_call.1} parent=1 // pred_check_branch
      %5180 = sbr.rel (0) target = $region41
    $region40: #{tpu_custom_call.1} parent=1 // pred_region
      %5182 = vsyncadd [#allocation12], 0
      %s5184 = sshll.u32 [#allocation11], 4
      %s5185 = int_to_ptr.vmem [resolvable:$true] %s5184
      %s5186 = sshll.u32 %s5, 4
      %s5187 = int_to_ptr.hbm [resolvable:$true] %s5186
      %5189 = dma.vmem_to_hbm [thread:$0]  %s5185, 128, %s5187, [#allocation12]
    $region41: #{tpu_custom_call.1} parent=1 // pred_fallthru
      _
    // Predicated region
    $region42: #{tpu_custom_call.1} parent=1 // pred_check
      _
    $region43: #{tpu_custom_call.1} parent=1 // pred_check_branch
      %5191 = sbr.rel (0) target = $region45
    $region44: #{tpu_custom_call.1} parent=1 // pred_region
      %5193 = dma.done [#allocation4], 128
    $region45: #{tpu_custom_call.1} parent=1 // pred_fallthru
      _
    // Predicated region
    $region46: #{tpu_custom_call.1} parent=1 // pred_check
      _
    $region47: #{tpu_custom_call.1} parent=1 // pred_check_branch
      %5195 = sbr.rel (0) target = $region49
    $region48: #{tpu_custom_call.1} parent=1 // pred_region
      %5197 = dma.done [#allocation12], 128
    $region49: #{tpu_custom_call.1} parent=1 // pred_fallthru
      _
    %5198 = vsyncpa [#allocation3], 1
    %5199 = vsyncpa [#allocation6], 1
    %5200 = vsyncpa [#allocation9], 1
    %5201 = vsyncpa [#allocation4], 1
    %5202 = vsyncpa [#allocation12], 1

</llo_original>
